<compile_context>
chip_gen: v7x
topology: tpu7x:2x2x1
jax: 0.10.0
libtpu: 0.0.40
codegen_flags: <defaults>
</compile_context>

<pallas_src>
import jax
import jax.numpy as jnp
from jax import lax
from jax.experimental import pallas as pl
from jax.experimental.pallas import tpu as pltpu


def se_basic_block_kernel(xp_ref, wt1_ref, wt2_ref, bn_ref, pool_ref, unfold_ref,
                          fc1_ref, fc2_ref, o_ref, pad_ref):
    # xp_ref : (nb, H+2, W*C) f32, zero halo rows pre-padded in the wrapper.
    # o_ref  : (nb, H,   W*C) f32, lane-dense output store (W*C multiple of 128).
    # pad_ref: (nb, H+2, W*C) f32 scratch holding the padded conv1 output.
    nb, Hp, WC = xp_ref.shape
    H = Hp - 2
    M = nb * H

    def conv3x3(slab, wt_ref):
        # Three accumulating K=WC matmuls (one per kh row offset); the
        # W-direction 'same' padding is encoded in the block-Toeplitz weights.
        acc = jnp.dot(slab(0), wt_ref[0], preferred_element_type=jnp.float32)
        acc += jnp.dot(slab(1), wt_ref[1], preferred_element_type=jnp.float32)
        acc += jnp.dot(slab(2), wt_ref[2], preferred_element_type=jnp.float32)
        return acc                                              # (M, WC) f32

    # ---- conv1 -> BN1 -> ReLU: slabs straight from the pre-padded input ----
    def x_slab(kh):
        return xp_ref[:, kh:kh + H, :].reshape(M, WC).astype(jnp.bfloat16)

    out1 = jnp.maximum(conv3x3(x_slab, wt1_ref) * bn_ref[0:1, :] + bn_ref[1:2, :],
                       0.0)                                     # (M, WC) f32

    # ---- stage padded conv1 output for conv2 ----
    # Halo rows are re-zeroed every step so grid steps stay independent
    # ("parallel" semantics / v7x megacore safe) -- do not move behind pl.when.
    zrow = jnp.zeros((nb, 1, WC), jnp.float32)
    pad_ref[:, 0:1, :] = zrow
    pad_ref[:, H + 1:H + 2, :] = zrow
    pad_ref[:, 1:H + 1, :] = out1.reshape(nb, H, WC)

    # ---- conv2 -> BN2 ----
    def o1_slab(kh):
        return pad_ref[:, kh:kh + H, :].reshape(M, WC).astype(jnp.bfloat16)

    out2 = conv3x3(o1_slab, wt2_ref) * bn_ref[2:3, :] + bn_ref[3:4, :]
    out2 = out2.reshape(nb, H, WC)

    # ---- SE: avg-pool -> fc1 -> ReLU -> fc2 -> sigmoid -> channel scale ----
    y = jnp.dot(jnp.sum(out2, axis=1), pool_ref[...],
                preferred_element_type=jnp.float32)             # (nb, C)
    h = jnp.maximum(jnp.dot(y, fc1_ref[...],
                            preferred_element_type=jnp.float32), 0.0)
    s = jax.nn.sigmoid(jnp.dot(h, fc2_ref[...],
                               preferred_element_type=jnp.float32))  # (nb, C)
    sf = jnp.dot(s, unfold_ref[...],
                 preferred_element_type=jnp.float32)            # (nb, WC)

    # ---- SE scale + residual (interior rows of the padded input) + ReLU ----
    resid = xp_ref[:, 1:H + 1, :]
    o_ref[...] = jnp.maximum(out2 * sf[:, None, :] + resid, 0.0).astype(o_ref.dtype)


def _toeplitz_conv_weights(w, W):
    """HWIO (3,3,Ci,Co) conv weights -> (3, W*Ci, W*Co) stack of matrices so a
    stride-1 'same' 3x3 conv over the W-folded row layout is three accumulating
    matmuls (one per kh).  Row index = (w_in, ci); column = (w_out, co); the
    zero entries encode the W-direction zero padding."""
    KH, KW, Ci, Co = w.shape
    wt = jnp.zeros((KH, W, Ci, W, Co), w.dtype)
    for kw in range(KW):
        for wo in range(W):
            wi = wo + kw - 1
            if 0 <= wi < W:
                wt = wt.at[:, wi, :, wo, :].set(w[:, kw, :, :])
    return wt.reshape(KH, W * Ci, W * Co)


def _default_nb(N, H):
    """Images per grid step: fill the MXU M dimension (nb*H >= 256 rows on
    v6e/v7x; v5e needs only 128) while keeping the grid even and >= 2 so both
    v7x TensorCores get equal work under dimension_semantics=("parallel",)."""
    divisors = [d for d in range(1, N + 1) if N % d == 0]
    full = [d for d in divisors if d * H >= 256 and N // d >= 2]
    even = [d for d in full if (N // d) % 2 == 0]
    if even:
        return min(even)          # smallest block that fills the MXU, even grid
    if full:
        return min(full)
    even_any = [d for d in divisors if N // d >= 2 and (N // d) % 2 == 0]
    if even_any:
        return max(even_any)      # cannot fill the MXU: maximize rows per step
    return N


def _block_pallas_call(args, *, nb, cost, vmem_limit, single_buffer_consts):
    xp, wt1, wt2, bnf, pool, unfold, fc1, fc2 = args
    N, Hp, WC = xp.shape
    H = Hp - 2

    # Grid-invariant operands: double-buffering only doubles their resident
    # VMEM, so request a single buffer (matters once W*C grows).
    const_kw = {"pipeline_mode": pl.Buffered(1)} if single_buffer_consts else {}

    def cspec(arr):
        zeros = (0,) * arr.ndim
        return pl.BlockSpec(arr.shape, lambda n, _z=zeros: _z, **const_kw)

    grid_spec = pltpu.PrefetchScalarGridSpec(
        num_scalar_prefetch=0,
        grid=(N // nb,),
        in_specs=[
            pl.BlockSpec((nb, Hp, WC), lambda n: (n, 0, 0)),   # pre-padded x
            cspec(wt1), cspec(wt2), cspec(bnf),
            cspec(pool), cspec(unfold), cspec(fc1), cspec(fc2),
        ],
        out_specs=pl.BlockSpec((nb, H, WC), lambda n: (n, 0, 0)),
        scratch_shapes=[pltpu.VMEM((nb, Hp, WC), jnp.float32)],
    )
    return pl.pallas_call(
        se_basic_block_kernel,
        out_shape=jax.ShapeDtypeStruct((N, H, WC), jnp.float32),
        grid_spec=grid_spec,
        compiler_params=pltpu.CompilerParams(
            dimension_semantics=("parallel",),
            vmem_limit_bytes=vmem_limit),
        cost_estimate=cost,
    )(xp, wt1, wt2, bnf, pool, unfold, fc1, fc2)


def se_basic_block_folded(x_fold, params, *, nb=None):
    """One SE basic block on W-folded activations.

    x_fold: (N, H, W*C) float32 (NHWC with W folded into the lane axis).
    Returns the same layout so stacked blocks chain without transposes.
    params = (w1, w2, s1, b1, s2, b2, fc1, fc2); w* HWIO, s*/b* folded BN.
    Perf guard (not correctness): W*C should be a multiple of 128 for
    lane-dense, unmasked output stores.
    """
    w1, w2, s1, b1, s2, b2, fc1, fc2 = params
    N, H, WC = x_fold.shape
    Cin, C = w1.shape[2], w1.shape[3]
    Cr = fc1.shape[1]
    assert Cin == C and w2.shape[2] == C and w2.shape[3] == C, \
        "stride-1 SE block without downsample requires inplanes == planes"
    W = WC // C
    assert W * C == WC
    if nb is None:
        nb = _default_nb(N, H)
    assert N % nb == 0

    # H-pre-pad with zero halo rows; conv1 and the residual read straight from
    # this, and only conv1's output is staged in the VMEM scratch.
    xp = jnp.pad(x_fold, ((0, 0), (1, 1), (0, 0)))

    wt1 = _toeplitz_conv_weights(w1, W).astype(jnp.bfloat16)       # (3, WC, WC)
    wt2 = _toeplitz_conv_weights(w2, W).astype(jnp.bfloat16)       # (3, WC, WC)
    bnf = jnp.concatenate(
        [jnp.tile(v.reshape(1, C), (1, W)) for v in (s1, b1, s2, b2)], axis=0)
    eye = jnp.eye(C, dtype=jnp.float32)
    pool = jnp.tile(eye, (W, 1)) / float(H * W)                    # (WC, C)
    unfold = jnp.tile(eye, (1, W))                                 # (C, WC)

    flops = (2 * 2 * N * H * (3 * WC) * WC
             + 2 * N * (WC * C + C * Cr + Cr * C + C * WC)
             + 8 * N * H * WC)
    bytes_accessed = int((xp.size + N * H * WC) * 4 + (wt1.size + wt2.size) * 2
                         + (bnf.size + pool.size + unfold.size
                            + fc1.size + fc2.size) * 4)
    cost = pl.CostEstimate(flops=int(flops), transcendentals=int(N * C),
                           bytes_accessed=bytes_accessed)

    block_bytes = (3 * nb * (H + 2) * WC * 4          # x blocks (x2) + scratch
                   + 2 * nb * H * WC * 4              # output blocks (x2)
                   + 2 * 2 * 3 * WC * WC * 2          # Toeplitz weights
                   + 8 * (4 * WC + WC * C + C * WC + C * Cr + Cr * C))
    vmem_limit = int(min(64 << 20, max(32 << 20, 2 * block_bytes)))

    args = (xp, wt1, wt2, bnf, pool, unfold, fc1, fc2)
    try:
        return _block_pallas_call(args, nb=nb, cost=cost, vmem_limit=vmem_limit,
                                  single_buffer_consts=True)
    except Exception:
        # pl.Buffered(1) on constant operands not supported by this JAX/libtpu:
        # fall back to the default double-buffered pipeline.
        return _block_pallas_call(args, nb=nb, cost=cost, vmem_limit=vmem_limit,
                                  single_buffer_consts=False)


def se_basic_block(x_nchw, params, *, nb=None):
    """NCHW adapter.  For stacked layers keep activations in the folded
    (N, H, W*C) layout (se_basic_block_folded) and convert only at the network
    stem/head -- each per-block transpose is a full HBM round trip."""
    N, Cin, H, W = x_nchw.shape
    x_fold = jnp.transpose(x_nchw, (0, 2, 3, 1)).reshape(N, H, W * Cin)
    out = se_basic_block_folded(x_fold, params, nb=nb)
    return jnp.transpose(out.reshape(N, H, W, -1), (0, 3, 1, 2))


def ref_forward(x_nchw, params):
    """Pure-JAX reference of the PyTorch forward (BN in eval mode); conv
    operands cast to bf16 with f32 accumulation to mirror the kernel's MXU
    precision."""
    w1, w2, s1, b1, s2, b2, fc1, fc2 = params
    x = jnp.transpose(x_nchw, (0, 2, 3, 1))

    def conv(a, w):
        return lax.conv_general_dilated(
            a.astype(jnp.bfloat16), w.astype(jnp.bfloat16), (1, 1), ((1, 1), (1, 1)),
            dimension_numbers=('NHWC', 'HWIO', 'NHWC'),
            preferred_element_type=jnp.float32)

    o1 = jnp.maximum(conv(x, w1) * s1 + b1, 0.0)
    o2 = conv(o1, w2) * s2 + b2
    y = jnp.mean(o2, axis=(1, 2))                                 # (N, C)
    h = jnp.maximum(y @ fc1, 0.0)
    s = jax.nn.sigmoid(h @ fc2)
    o2 = o2 * s[:, None, None, :]
    out = jnp.maximum(o2 + x, 0.0)
    return jnp.transpose(out, (0, 3, 1, 2))


def make_params(key, inplanes, planes, reduction):
    ks = jax.random.split(key, 10)
    cr = planes // reduction
    w1 = jax.random.normal(ks[0], (3, 3, inplanes, planes), jnp.float32) * 0.1
    w2 = jax.random.normal(ks[1], (3, 3, planes, planes), jnp.float32) * 0.1
    # BatchNorm (eval mode) parameters, folded into per-channel scale/bias.
    eps = 1e-5
    g1 = 1.0 + 0.1 * jax.random.normal(ks[2], (planes,), jnp.float32)
    be1 = 0.1 * jax.random.normal(ks[3], (planes,), jnp.float32)
    m1 = 0.1 * jax.random.normal(ks[4], (planes,), jnp.float32)
    v1 = 0.5 + jnp.abs(jax.random.normal(ks[5], (planes,), jnp.float32))
    g2 = 1.0 + 0.1 * jax.random.normal(ks[6], (planes,), jnp.float32)
    be2 = 0.1 * jax.random.normal(ks[7], (planes,), jnp.float32)
    m2 = 0.1 * jax.random.normal(ks[8], (planes,), jnp.float32)
    v2 = 0.5 + jnp.abs(jax.random.normal(ks[9], (planes,), jnp.float32))
    s1 = (g1 / jnp.sqrt(v1 + eps)).reshape(1, planes)
    b1 = (be1 - m1 * g1 / jnp.sqrt(v1 + eps)).reshape(1, planes)
    s2 = (g2 / jnp.sqrt(v2 + eps)).reshape(1, planes)
    b2 = (be2 - m2 * g2 / jnp.sqrt(v2 + eps)).reshape(1, planes)
    # SE fc weights (bias=False), stored as (in, out).
    kf1, kf2 = jax.random.split(jax.random.fold_in(key, 123))
    fc1 = jax.random.normal(kf1, (planes, cr), jnp.float32) * 0.2
    fc2 = jax.random.normal(kf2, (cr, planes), jnp.float32) * 0.2
    return (w1, w2, s1, b1, s2, b2, fc1, fc2)


if __name__ == "__main__":
    # inplanes == planes (downsample=None), stride=1; W*C = 128 lanes per row.
    # N=64 lets the auto-picked nb=32 fill the MXU (M = nb*H = 256 rows) with an
    # even grid of 2 for v7x megacore.
    N, C, H, W = 64, 16, 8, 8
    reduction = 4
    key = jax.random.PRNGKey(0)
    kx, kp = jax.random.split(key)
    x = jax.random.normal(kx, (N, C, H, W), jnp.float32)
    params = make_params(kp, C, C, reduction)

    out = jax.block_until_ready(se_basic_block(x, params))
    ref = jax.block_until_ready(ref_forward(x, params))
    assert out.shape == (N, C, H, W)
    err = jnp.max(jnp.abs(out - ref))
    assert jnp.allclose(out, ref, atol=5e-3, rtol=5e-3), f"max err {err}"
    print("KERNEL_OK")
</pallas_src>

<mosaic_0001>
module attributes {stable_mosaic.version = 11 : i64} {
  func.func @se_basic_block_kernel(%arg0: i32, %arg1: memref<32x10x128xf32, #tpu.memory_space<vmem>>, %arg2: memref<3x128x128xbf16, #tpu.memory_space<vmem>>, %arg3: memref<3x128x128xbf16, #tpu.memory_space<vmem>>, %arg4: memref<4x128xf32, #tpu.memory_space<vmem>>, %arg5: memref<128x16xf32, #tpu.memory_space<vmem>>, %arg6: memref<16x128xf32, #tpu.memory_space<vmem>>, %arg7: memref<16x4xf32, #tpu.memory_space<vmem>>, %arg8: memref<4x16xf32, #tpu.memory_space<vmem>>, %arg9: memref<32x8x128xf32, #tpu.memory_space<vmem>>, %arg10: memref<32x10x128xf32, #tpu.memory_space<vmem>>) attributes {dimension_semantics = [#tpu.dimension_semantics<parallel>], iteration_bounds = array<i64: 2>, scalar_prefetch = 0 : i64, scratch_operands = 1 : i64, tpu.core_type = #tpu.core_type<tc>, window_params = [{transform_indices = @transform_0, window_bounds = array<i64: 32, 10, 128>}, {pipeline_mode = #tpu.pipeline_mode<synchronous>, transform_indices = @transform_1, window_bounds = array<i64: 3, 128, 128>}, {pipeline_mode = #tpu.pipeline_mode<synchronous>, transform_indices = @transform_2, window_bounds = array<i64: 3, 128, 128>}, {pipeline_mode = #tpu.pipeline_mode<synchronous>, transform_indices = @transform_3, window_bounds = array<i64: 4, 128>}, {pipeline_mode = #tpu.pipeline_mode<synchronous>, transform_indices = @transform_4, window_bounds = array<i64: 128, 16>}, {pipeline_mode = #tpu.pipeline_mode<synchronous>, transform_indices = @transform_5, window_bounds = array<i64: 16, 128>}, {pipeline_mode = #tpu.pipeline_mode<synchronous>, transform_indices = @transform_6, window_bounds = array<i64: 16, 4>}, {pipeline_mode = #tpu.pipeline_mode<synchronous>, transform_indices = @transform_7, window_bounds = array<i64: 4, 16>}, {transform_indices = @transform_8, window_bounds = array<i64: 32, 8, 128>}]} {
    %c0 = arith.constant 0 : index
    %c0_0 = arith.constant 0 : index
    %c0_1 = arith.constant 0 : index
    %0 = vector.load %arg1[%c0, %c0_0, %c0_1] : memref<32x10x128xf32, #tpu.memory_space<vmem>>, vector<32x8x128xf32>
    %1 = vector.shape_cast %0 : vector<32x8x128xf32> to vector<256x128xf32>
    %2 = arith.truncf %1 : vector<256x128xf32> to vector<256x128xbf16>
    %c0_2 = arith.constant 0 : index
    %c0_3 = arith.constant 0 : index
    %c0_4 = arith.constant 0 : index
    %3 = vector.load %arg2[%c0_2, %c0_3, %c0_4] : memref<3x128x128xbf16, #tpu.memory_space<vmem>>, vector<1x128x128xbf16>
    %4 = vector.shape_cast %3 : vector<1x128x128xbf16> to vector<128x128xbf16>
    %cst = arith.constant dense<0.000000e+00> : vector<256x128xf32>
    %5 = tpu.matmul %2, %4, %cst {dimension_numbers = #tpu.dot_dimension_numbers<[1], [0], [0], [1], [0, 0, 1, 1], [], []>} : vector<256x128xbf16>, vector<128x128xbf16>, vector<256x128xf32> -> vector<256x128xf32>
    %c0_5 = arith.constant 0 : index
    %c1 = arith.constant 1 : index
    %c0_6 = arith.constant 0 : index
    %6 = vector.load %arg1[%c0_5, %c1, %c0_6] : memref<32x10x128xf32, #tpu.memory_space<vmem>>, vector<32x8x128xf32>
    %7 = vector.shape_cast %6 : vector<32x8x128xf32> to vector<256x128xf32>
    %8 = arith.truncf %7 : vector<256x128xf32> to vector<256x128xbf16>
    %c1_7 = arith.constant 1 : index
    %c0_8 = arith.constant 0 : index
    %c0_9 = arith.constant 0 : index
    %9 = vector.load %arg2[%c1_7, %c0_8, %c0_9] : memref<3x128x128xbf16, #tpu.memory_space<vmem>>, vector<1x128x128xbf16>
    %10 = vector.shape_cast %9 : vector<1x128x128xbf16> to vector<128x128xbf16>
    %cst_10 = arith.constant dense<0.000000e+00> : vector<256x128xf32>
    %11 = tpu.matmul %8, %10, %cst_10 {dimension_numbers = #tpu.dot_dimension_numbers<[1], [0], [0], [1], [0, 0, 1, 1], [], []>} : vector<256x128xbf16>, vector<128x128xbf16>, vector<256x128xf32> -> vector<256x128xf32>
    %12 = arith.addf %5, %11 : vector<256x128xf32>
    %c0_11 = arith.constant 0 : index
    %c2 = arith.constant 2 : index
    %c0_12 = arith.constant 0 : index
    %13 = vector.load %arg1[%c0_11, %c2, %c0_12] : memref<32x10x128xf32, #tpu.memory_space<vmem>>, vector<32x8x128xf32>
    %14 = vector.shape_cast %13 : vector<32x8x128xf32> to vector<256x128xf32>
    %15 = arith.truncf %14 : vector<256x128xf32> to vector<256x128xbf16>
    %c2_13 = arith.constant 2 : index
    %c0_14 = arith.constant 0 : index
    %c0_15 = arith.constant 0 : index
    %16 = vector.load %arg2[%c2_13, %c0_14, %c0_15] : memref<3x128x128xbf16, #tpu.memory_space<vmem>>, vector<1x128x128xbf16>
    %17 = vector.shape_cast %16 : vector<1x128x128xbf16> to vector<128x128xbf16>
    %cst_16 = arith.constant dense<0.000000e+00> : vector<256x128xf32>
    %18 = tpu.matmul %15, %17, %cst_16 {dimension_numbers = #tpu.dot_dimension_numbers<[1], [0], [0], [1], [0, 0, 1, 1], [], []>} : vector<256x128xbf16>, vector<128x128xbf16>, vector<256x128xf32> -> vector<256x128xf32>
    %19 = arith.addf %12, %18 : vector<256x128xf32>
    %c0_17 = arith.constant 0 : index
    %c0_18 = arith.constant 0 : index
    %20 = vector.load %arg4[%c0_17, %c0_18] : memref<4x128xf32, #tpu.memory_space<vmem>>, vector<1x128xf32>
    %21 = vector.broadcast %20 : vector<1x128xf32> to vector<256x128xf32>
    %22 = arith.mulf %19, %21 : vector<256x128xf32>
    %c1_19 = arith.constant 1 : index
    %c0_20 = arith.constant 0 : index
    %23 = vector.load %arg4[%c1_19, %c0_20] : memref<4x128xf32, #tpu.memory_space<vmem>>, vector<1x128xf32>
    %24 = vector.broadcast %23 : vector<1x128xf32> to vector<256x128xf32>
    %25 = arith.addf %22, %24 : vector<256x128xf32>
    %cst_21 = arith.constant 0.000000e+00 : f32
    %26 = vector.broadcast %cst_21 : f32 to vector<256x128xf32>
    %27 = arith.maximumf %25, %26 : vector<256x128xf32>
    %cst_22 = arith.constant 0.000000e+00 : f32
    %28 = vector.broadcast %cst_22 : f32 to vector<32x1x128xf32>
    %c0_23 = arith.constant 0 : index
    %c0_24 = arith.constant 0 : index
    %c0_25 = arith.constant 0 : index
    %29 = vector.load %arg10[%c0_23, %c0_24, %c0_25] : memref<32x10x128xf32, #tpu.memory_space<vmem>>, vector<32x1x128xf32>
    tpu.vector_store %arg10[%c0_23, %c0_24, %c0_25], %28 {strides = array<i32>} : memref<32x10x128xf32, #tpu.memory_space<vmem>>, vector<32x1x128xf32>,
    %c0_26 = arith.constant 0 : index
    %c9 = arith.constant 9 : index
    %c0_27 = arith.constant 0 : index
    %30 = vector.load %arg10[%c0_26, %c9, %c0_27] : memref<32x10x128xf32, #tpu.memory_space<vmem>>, vector<32x1x128xf32>
    tpu.vector_store %arg10[%c0_26, %c9, %c0_27], %28 {strides = array<i32>} : memref<32x10x128xf32, #tpu.memory_space<vmem>>, vector<32x1x128xf32>,
    %31 = vector.shape_cast %27 : vector<256x128xf32> to vector<32x8x128xf32>
    %c0_28 = arith.constant 0 : index
    %c1_29 = arith.constant 1 : index
    %c0_30 = arith.constant 0 : index
    %32 = vector.load %arg10[%c0_28, %c1_29, %c0_30] : memref<32x10x128xf32, #tpu.memory_space<vmem>>, vector<32x8x128xf32>
    tpu.vector_store %arg10[%c0_28, %c1_29, %c0_30], %31 {strides = array<i32>} : memref<32x10x128xf32, #tpu.memory_space<vmem>>, vector<32x8x128xf32>,
    %c0_31 = arith.constant 0 : index
    %c0_32 = arith.constant 0 : index
    %c0_33 = arith.constant 0 : index
    %33 = vector.load %arg10[%c0_31, %c0_32, %c0_33] : memref<32x10x128xf32, #tpu.memory_space<vmem>>, vector<32x8x128xf32>
    %34 = vector.shape_cast %33 : vector<32x8x128xf32> to vector<256x128xf32>
    %35 = arith.truncf %34 : vector<256x128xf32> to vector<256x128xbf16>
    %c0_34 = arith.constant 0 : index
    %c0_35 = arith.constant 0 : index
    %c0_36 = arith.constant 0 : index
    %36 = vector.load %arg3[%c0_34, %c0_35, %c0_36] : memref<3x128x128xbf16, #tpu.memory_space<vmem>>, vector<1x128x128xbf16>
    %37 = vector.shape_cast %36 : vector<1x128x128xbf16> to vector<128x128xbf16>
    %cst_37 = arith.constant dense<0.000000e+00> : vector<256x128xf32>
    %38 = tpu.matmul %35, %37, %cst_37 {dimension_numbers = #tpu.dot_dimension_numbers<[1], [0], [0], [1], [0, 0, 1, 1], [], []>} : vector<256x128xbf16>, vector<128x128xbf16>, vector<256x128xf32> -> vector<256x128xf32>
    %c0_38 = arith.constant 0 : index
    %c1_39 = arith.constant 1 : index
    %c0_40 = arith.constant 0 : index
    %39 = vector.load %arg10[%c0_38, %c1_39, %c0_40] : memref<32x10x128xf32, #tpu.memory_space<vmem>>, vector<32x8x128xf32>
    %40 = vector.shape_cast %39 : vector<32x8x128xf32> to vector<256x128xf32>
    %41 = arith.truncf %40 : vector<256x128xf32> to vector<256x128xbf16>
    %c1_41 = arith.constant 1 : index
    %c0_42 = arith.constant 0 : index
    %c0_43 = arith.constant 0 : index
    %42 = vector.load %arg3[%c1_41, %c0_42, %c0_43] : memref<3x128x128xbf16, #tpu.memory_space<vmem>>, vector<1x128x128xbf16>
    %43 = vector.shape_cast %42 : vector<1x128x128xbf16> to vector<128x128xbf16>
    %cst_44 = arith.constant dense<0.000000e+00> : vector<256x128xf32>
    %44 = tpu.matmul %41, %43, %cst_44 {dimension_numbers = #tpu.dot_dimension_numbers<[1], [0], [0], [1], [0, 0, 1, 1], [], []>} : vector<256x128xbf16>, vector<128x128xbf16>, vector<256x128xf32> -> vector<256x128xf32>
    %45 = arith.addf %38, %44 : vector<256x128xf32>
    %c0_45 = arith.constant 0 : index
    %c2_46 = arith.constant 2 : index
    %c0_47 = arith.constant 0 : index
    %46 = vector.load %arg10[%c0_45, %c2_46, %c0_47] : memref<32x10x128xf32, #tpu.memory_space<vmem>>, vector<32x8x128xf32>
    %47 = vector.shape_cast %46 : vector<32x8x128xf32> to vector<256x128xf32>
    %48 = arith.truncf %47 : vector<256x128xf32> to vector<256x128xbf16>
    %c2_48 = arith.constant 2 : index
    %c0_49 = arith.constant 0 : index
    %c0_50 = arith.constant 0 : index
    %49 = vector.load %arg3[%c2_48, %c0_49, %c0_50] : memref<3x128x128xbf16, #tpu.memory_space<vmem>>, vector<1x128x128xbf16>
    %50 = vector.shape_cast %49 : vector<1x128x128xbf16> to vector<128x128xbf16>
    %cst_51 = arith.constant dense<0.000000e+00> : vector<256x128xf32>
    %51 = tpu.matmul %48, %50, %cst_51 {dimension_numbers = #tpu.dot_dimension_numbers<[1], [0], [0], [1], [0, 0, 1, 1], [], []>} : vector<256x128xbf16>, vector<128x128xbf16>, vector<256x128xf32> -> vector<256x128xf32>
    %52 = arith.addf %45, %51 : vector<256x128xf32>
    %c2_52 = arith.constant 2 : index
    %c0_53 = arith.constant 0 : index
    %53 = vector.load %arg4[%c2_52, %c0_53] : memref<4x128xf32, #tpu.memory_space<vmem>>, vector<1x128xf32>
    %54 = vector.broadcast %53 : vector<1x128xf32> to vector<256x128xf32>
    %55 = arith.mulf %52, %54 : vector<256x128xf32>
    %c3 = arith.constant 3 : index
    %c0_54 = arith.constant 0 : index
    %56 = vector.load %arg4[%c3, %c0_54] : memref<4x128xf32, #tpu.memory_space<vmem>>, vector<1x128xf32>
    %57 = vector.broadcast %56 : vector<1x128xf32> to vector<256x128xf32>
    %58 = arith.addf %55, %57 : vector<256x128xf32>
    %59 = vector.shape_cast %58 : vector<256x128xf32> to vector<32x8x128xf32>
    %cst_55 = arith.constant dense<0.000000e+00> : vector<32x128xf32>
    %60 = vector.multi_reduction <add>, %59, %cst_55 [1] : vector<32x8x128xf32> to vector<32x128xf32>
    %c0_56 = arith.constant 0 : index
    %c0_57 = arith.constant 0 : index
    %61 = vector.load %arg5[%c0_56, %c0_57] : memref<128x16xf32, #tpu.memory_space<vmem>>, vector<128x16xf32>
    %cst_58 = arith.constant dense<0.000000e+00> : vector<32x16xf32>
    %62 = tpu.matmul %60, %61, %cst_58 {dimension_numbers = #tpu.dot_dimension_numbers<[1], [0], [0], [1], [0, 0, 1, 1], [], []>} : vector<32x128xf32>, vector<128x16xf32>, vector<32x16xf32> -> vector<32x16xf32>
    %c0_59 = arith.constant 0 : index
    %c0_60 = arith.constant 0 : index
    %63 = vector.load %arg7[%c0_59, %c0_60] : memref<16x4xf32, #tpu.memory_space<vmem>>, vector<16x4xf32>
    %cst_61 = arith.constant dense<0.000000e+00> : vector<32x4xf32>
    %64 = tpu.matmul %62, %63, %cst_61 {dimension_numbers = #tpu.dot_dimension_numbers<[1], [0], [0], [1], [0, 0, 1, 1], [], []>} : vector<32x16xf32>, vector<16x4xf32>, vector<32x4xf32> -> vector<32x4xf32>
    %cst_62 = arith.constant 0.000000e+00 : f32
    %65 = vector.broadcast %cst_62 : f32 to vector<32x4xf32>
    %66 = arith.maximumf %64, %65 : vector<32x4xf32>
    %c0_63 = arith.constant 0 : index
    %c0_64 = arith.constant 0 : index
    %67 = vector.load %arg8[%c0_63, %c0_64] : memref<4x16xf32, #tpu.memory_space<vmem>>, vector<4x16xf32>
    %cst_65 = arith.constant dense<0.000000e+00> : vector<32x16xf32>
    %68 = tpu.matmul %66, %67, %cst_65 {dimension_numbers = #tpu.dot_dimension_numbers<[1], [0], [0], [1], [0, 0, 1, 1], [], []>} : vector<32x4xf32>, vector<4x16xf32>, vector<32x16xf32> -> vector<32x16xf32>
    %69 = arith.negf %68 : vector<32x16xf32>
    %70 = math.exp %69 : vector<32x16xf32>
    %cst_66 = arith.constant 1.000000e+00 : f32
    %71 = vector.broadcast %cst_66 : f32 to vector<32x16xf32>
    %72 = arith.addf %71, %70 : vector<32x16xf32>
    %73 = arith.divf %71, %72 : vector<32x16xf32>
    %c0_67 = arith.constant 0 : index
    %c0_68 = arith.constant 0 : index
    %74 = vector.load %arg6[%c0_67, %c0_68] : memref<16x128xf32, #tpu.memory_space<vmem>>, vector<16x128xf32>
    %cst_69 = arith.constant dense<0.000000e+00> : vector<32x128xf32>
    %75 = tpu.matmul %73, %74, %cst_69 {dimension_numbers = #tpu.dot_dimension_numbers<[1], [0], [0], [1], [0, 0, 1, 1], [], []>} : vector<32x16xf32>, vector<16x128xf32>, vector<32x128xf32> -> vector<32x128xf32>
    %c0_70 = arith.constant 0 : index
    %c1_71 = arith.constant 1 : index
    %c0_72 = arith.constant 0 : index
    %76 = vector.load %arg1[%c0_70, %c1_71, %c0_72] : memref<32x10x128xf32, #tpu.memory_space<vmem>>, vector<32x8x128xf32>
    %77 = vector.shape_cast %75 : vector<32x128xf32> to vector<32x1x128xf32>
    %78 = vector.broadcast %77 : vector<32x1x128xf32> to vector<32x8x128xf32>
    %79 = arith.mulf %59, %78 : vector<32x8x128xf32>
    %80 = arith.addf %79, %76 : vector<32x8x128xf32>
    %cst_73 = arith.constant 0.000000e+00 : f32
    %81 = vector.broadcast %cst_73 : f32 to vector<32x8x128xf32>
    %82 = arith.maximumf %80, %81 : vector<32x8x128xf32>
    %c0_74 = arith.constant 0 : index
    %c0_75 = arith.constant 0 : index
    %c0_76 = arith.constant 0 : index
    %83 = vector.load %arg9[%c0_74, %c0_75, %c0_76] : memref<32x8x128xf32, #tpu.memory_space<vmem>>, vector<32x8x128xf32>
    tpu.vector_store %arg9[%c0_74, %c0_75, %c0_76], %82 {strides = array<i32>} : memref<32x8x128xf32, #tpu.memory_space<vmem>>, vector<32x8x128xf32>,
    return
  }
  func.func @transform_0(%arg0: i32) -> (i32, i32, i32) {
    %c0_i32 = arith.constant 0 : i32
    %c0_i32_0 = arith.constant 0 : i32
    %c0_i32_1 = arith.constant 0 : i32
    return %arg0, %c0_i32, %c0_i32_0 : i32, i32, i32
  }
  func.func @transform_1(%arg0: i32) -> (i32, i32, i32) {
    %c0_i32 = arith.constant 0 : i32
    %c0_i32_0 = arith.constant 0 : i32
    %c0_i32_1 = arith.constant 0 : i32
    %c0_i32_2 = arith.constant 0 : i32
    return %c0_i32, %c0_i32_0, %c0_i32_1 : i32, i32, i32
  }
  func.func @transform_2(%arg0: i32) -> (i32, i32, i32) {
    %c0_i32 = arith.constant 0 : i32
    %c0_i32_0 = arith.constant 0 : i32
    %c0_i32_1 = arith.constant 0 : i32
    %c0_i32_2 = arith.constant 0 : i32
    return %c0_i32, %c0_i32_0, %c0_i32_1 : i32, i32, i32
  }
  func.func @transform_3(%arg0: i32) -> (i32, i32) {
    %c0_i32 = arith.constant 0 : i32
    %c0_i32_0 = arith.constant 0 : i32
    %c0_i32_1 = arith.constant 0 : i32
    return %c0_i32, %c0_i32_0 : i32, i32
  }
  func.func @transform_4(%arg0: i32) -> (i32, i32) {
    %c0_i32 = arith.constant 0 : i32
    %c0_i32_0 = arith.constant 0 : i32
    %c0_i32_1 = arith.constant 0 : i32
    return %c0_i32, %c0_i32_0 : i32, i32
  }
  func.func @transform_5(%arg0: i32) -> (i32, i32) {
    %c0_i32 = arith.constant 0 : i32
    %c0_i32_0 = arith.constant 0 : i32
    %c0_i32_1 = arith.constant 0 : i32
    return %c0_i32, %c0_i32_0 : i32, i32
  }
  func.func @transform_6(%arg0: i32) -> (i32, i32) {
    %c0_i32 = arith.constant 0 : i32
    %c0_i32_0 = arith.constant 0 : i32
    %c0_i32_1 = arith.constant 0 : i32
    return %c0_i32, %c0_i32_0 : i32, i32
  }
  func.func @transform_7(%arg0: i32) -> (i32, i32) {
    %c0_i32 = arith.constant 0 : i32
    %c0_i32_0 = arith.constant 0 : i32
    %c0_i32_1 = arith.constant 0 : i32
    return %c0_i32, %c0_i32_0 : i32, i32
  }
  func.func @transform_8(%arg0: i32) -> (i32, i32, i32) {
    %c0_i32 = arith.constant 0 : i32
    %c0_i32_0 = arith.constant 0 : i32
    %c0_i32_1 = arith.constant 0 : i32
    return %arg0, %c0_i32, %c0_i32_0 : i32, i32, i32
  }
}

module attributes {stable_mosaic.version = 11 : i64} {
  func.func @se_basic_block_kernel(%arg0: i32, %arg1: memref<32x10x128xf32, #tpu.memory_space<vmem>>, %arg2: memref<3x128x128xbf16, #tpu.memory_space<vmem>>, %arg3: memref<3x128x128xbf16, #tpu.memory_space<vmem>>, %arg4: memref<4x128xf32, #tpu.memory_space<vmem>>, %arg5: memref<128x16xf32, #tpu.memory_space<vmem>>, %arg6: memref<16x128xf32, #tpu.memory_space<vmem>>, %arg7: memref<16x4xf32, #tpu.memory_space<vmem>>, %arg8: memref<4x16xf32, #tpu.memory_space<vmem>>, %arg9: memref<32x8x128xf32, #tpu.memory_space<vmem>>, %arg10: memref<32x10x128xf32, #tpu.memory_space<vmem>>) attributes {dimension_semantics = [#tpu.dimension_semantics<parallel>], iteration_bounds = array<i64: 2>, scalar_prefetch = 0 : i64, scratch_operands = 1 : i64, tpu.core_type = #tpu.core_type<tc>, window_params = [{transform_indices = @transform_0, window_bounds = array<i64: 32, 10, 128>}, {pipeline_mode = #tpu.pipeline_mode<synchronous>, transform_indices = @transform_1, window_bounds = array<i64: 3, 128, 128>}, {pipeline_mode = #tpu.pipeline_mode<synchronous>, transform_indices = @transform_2, window_bounds = array<i64: 3, 128, 128>}, {pipeline_mode = #tpu.pipeline_mode<synchronous>, transform_indices = @transform_3, window_bounds = array<i64: 4, 128>}, {pipeline_mode = #tpu.pipeline_mode<synchronous>, transform_indices = @transform_4, window_bounds = array<i64: 128, 16>}, {pipeline_mode = #tpu.pipeline_mode<synchronous>, transform_indices = @transform_5, window_bounds = array<i64: 16, 128>}, {pipeline_mode = #tpu.pipeline_mode<synchronous>, transform_indices = @transform_6, window_bounds = array<i64: 16, 4>}, {pipeline_mode = #tpu.pipeline_mode<synchronous>, transform_indices = @transform_7, window_bounds = array<i64: 4, 16>}, {transform_indices = @transform_8, window_bounds = array<i64: 32, 8, 128>}]} {
    %c0 = arith.constant 0 : index
    %c0_0 = arith.constant 0 : index
    %c0_1 = arith.constant 0 : index
    %0 = vector.load %arg1[%c0, %c0_0, %c0_1] : memref<32x10x128xf32, #tpu.memory_space<vmem>>, vector<32x8x128xf32>
    %1 = vector.shape_cast %0 : vector<32x8x128xf32> to vector<256x128xf32>
    %2 = arith.truncf %1 : vector<256x128xf32> to vector<256x128xbf16>
    %c0_2 = arith.constant 0 : index
    %c0_3 = arith.constant 0 : index
    %c0_4 = arith.constant 0 : index
    %3 = vector.load %arg2[%c0_2, %c0_3, %c0_4] : memref<3x128x128xbf16, #tpu.memory_space<vmem>>, vector<1x128x128xbf16>
    %4 = vector.shape_cast %3 : vector<1x128x128xbf16> to vector<128x128xbf16>
    %cst = arith.constant dense<0.000000e+00> : vector<256x128xf32>
    %5 = tpu.matmul %2, %4, %cst {dimension_numbers = #tpu.dot_dimension_numbers<[1], [0], [0], [1], [0, 0, 1, 1], [], []>} : vector<256x128xbf16>, vector<128x128xbf16>, vector<256x128xf32> -> vector<256x128xf32>
    %c0_5 = arith.constant 0 : index
    %c1 = arith.constant 1 : index
    %c0_6 = arith.constant 0 : index
    %6 = vector.load %arg1[%c0_5, %c1, %c0_6] : memref<32x10x128xf32, #tpu.memory_space<vmem>>, vector<32x8x128xf32>
    %7 = vector.shape_cast %6 : vector<32x8x128xf32> to vector<256x128xf32>
    %8 = arith.truncf %7 : vector<256x128xf32> to vector<256x128xbf16>
    %c1_7 = arith.constant 1 : index
    %c0_8 = arith.constant 0 : index
    %c0_9 = arith.constant 0 : index
    %9 = vector.load %arg2[%c1_7, %c0_8, %c0_9] : memref<3x128x128xbf16, #tpu.memory_space<vmem>>, vector<1x128x128xbf16>
    %10 = vector.shape_cast %9 : vector<1x128x128xbf16> to vector<128x128xbf16>
    %cst_10 = arith.constant dense<0.000000e+00> : vector<256x128xf32>
    %11 = tpu.matmul %8, %10, %cst_10 {dimension_numbers = #tpu.dot_dimension_numbers<[1], [0], [0], [1], [0, 0, 1, 1], [], []>} : vector<256x128xbf16>, vector<128x128xbf16>, vector<256x128xf32> -> vector<256x128xf32>
    %12 = arith.addf %5, %11 : vector<256x128xf32>
    %c0_11 = arith.constant 0 : index
    %c2 = arith.constant 2 : index
    %c0_12 = arith.constant 0 : index
    %13 = vector.load %arg1[%c0_11, %c2, %c0_12] : memref<32x10x128xf32, #tpu.memory_space<vmem>>, vector<32x8x128xf32>
    %14 = vector.shape_cast %13 : vector<32x8x128xf32> to vector<256x128xf32>
    %15 = arith.truncf %14 : vector<256x128xf32> to vector<256x128xbf16>
    %c2_13 = arith.constant 2 : index
    %c0_14 = arith.constant 0 : index
    %c0_15 = arith.constant 0 : index
    %16 = vector.load %arg2[%c2_13, %c0_14, %c0_15] : memref<3x128x128xbf16, #tpu.memory_space<vmem>>, vector<1x128x128xbf16>
    %17 = vector.shape_cast %16 : vector<1x128x128xbf16> to vector<128x128xbf16>
    %cst_16 = arith.constant dense<0.000000e+00> : vector<256x128xf32>
    %18 = tpu.matmul %15, %17, %cst_16 {dimension_numbers = #tpu.dot_dimension_numbers<[1], [0], [0], [1], [0, 0, 1, 1], [], []>} : vector<256x128xbf16>, vector<128x128xbf16>, vector<256x128xf32> -> vector<256x128xf32>
    %19 = arith.addf %12, %18 : vector<256x128xf32>
    %c0_17 = arith.constant 0 : index
    %c0_18 = arith.constant 0 : index
    %20 = vector.load %arg4[%c0_17, %c0_18] : memref<4x128xf32, #tpu.memory_space<vmem>>, vector<1x128xf32>
    %21 = vector.broadcast %20 : vector<1x128xf32> to vector<256x128xf32>
    %22 = arith.mulf %19, %21 : vector<256x128xf32>
    %c1_19 = arith.constant 1 : index
    %c0_20 = arith.constant 0 : index
    %23 = vector.load %arg4[%c1_19, %c0_20] : memref<4x128xf32, #tpu.memory_space<vmem>>, vector<1x128xf32>
    %24 = vector.broadcast %23 : vector<1x128xf32> to vector<256x128xf32>
    %25 = arith.addf %22, %24 : vector<256x128xf32>
    %cst_21 = arith.constant 0.000000e+00 : f32
    %26 = vector.broadcast %cst_21 : f32 to vector<256x128xf32>
    %27 = arith.maximumf %25, %26 : vector<256x128xf32>
    %cst_22 = arith.constant 0.000000e+00 : f32
    %28 = vector.broadcast %cst_22 : f32 to vector<32x1x128xf32>
    %c0_23 = arith.constant 0 : index
    %c0_24 = arith.constant 0 : index
    %c0_25 = arith.constant 0 : index
    %29 = vector.load %arg10[%c0_23, %c0_24, %c0_25] : memref<32x10x128xf32, #tpu.memory_space<vmem>>, vector<32x1x128xf32>
    tpu.vector_store %arg10[%c0_23, %c0_24, %c0_25], %28 {strides = array<i32>} : memref<32x10x128xf32, #tpu.memory_space<vmem>>, vector<32x1x128xf32>,
    %c0_26 = arith.constant 0 : index
    %c9 = arith.constant 9 : index
    %c0_27 = arith.constant 0 : index
    %30 = vector.load %arg10[%c0_26, %c9, %c0_27] : memref<32x10x128xf32, #tpu.memory_space<vmem>>, vector<32x1x128xf32>
    tpu.vector_store %arg10[%c0_26, %c9, %c0_27], %28 {strides = array<i32>} : memref<32x10x128xf32, #tpu.memory_space<vmem>>, vector<32x1x128xf32>,
    %31 = vector.shape_cast %27 : vector<256x128xf32> to vector<32x8x128xf32>
    %c0_28 = arith.constant 0 : index
    %c1_29 = arith.constant 1 : index
    %c0_30 = arith.constant 0 : index
    %32 = vector.load %arg10[%c0_28, %c1_29, %c0_30] : memref<32x10x128xf32, #tpu.memory_space<vmem>>, vector<32x8x128xf32>
    tpu.vector_store %arg10[%c0_28, %c1_29, %c0_30], %31 {strides = array<i32>} : memref<32x10x128xf32, #tpu.memory_space<vmem>>, vector<32x8x128xf32>,
    %c0_31 = arith.constant 0 : index
    %c0_32 = arith.constant 0 : index
    %c0_33 = arith.constant 0 : index
    %33 = vector.load %arg10[%c0_31, %c0_32, %c0_33] : memref<32x10x128xf32, #tpu.memory_space<vmem>>, vector<32x8x128xf32>
    %34 = vector.shape_cast %33 : vector<32x8x128xf32> to vector<256x128xf32>
    %35 = arith.truncf %34 : vector<256x128xf32> to vector<256x128xbf16>
    %c0_34 = arith.constant 0 : index
    %c0_35 = arith.constant 0 : index
    %c0_36 = arith.constant 0 : index
    %36 = vector.load %arg3[%c0_34, %c0_35, %c0_36] : memref<3x128x128xbf16, #tpu.memory_space<vmem>>, vector<1x128x128xbf16>
    %37 = vector.shape_cast %36 : vector<1x128x128xbf16> to vector<128x128xbf16>
    %cst_37 = arith.constant dense<0.000000e+00> : vector<256x128xf32>
    %38 = tpu.matmul %35, %37, %cst_37 {dimension_numbers = #tpu.dot_dimension_numbers<[1], [0], [0], [1], [0, 0, 1, 1], [], []>} : vector<256x128xbf16>, vector<128x128xbf16>, vector<256x128xf32> -> vector<256x128xf32>
    %c0_38 = arith.constant 0 : index
    %c1_39 = arith.constant 1 : index
    %c0_40 = arith.constant 0 : index
    %39 = vector.load %arg10[%c0_38, %c1_39, %c0_40] : memref<32x10x128xf32, #tpu.memory_space<vmem>>, vector<32x8x128xf32>
    %40 = vector.shape_cast %39 : vector<32x8x128xf32> to vector<256x128xf32>
    %41 = arith.truncf %40 : vector<256x128xf32> to vector<256x128xbf16>
    %c1_41 = arith.constant 1 : index
    %c0_42 = arith.constant 0 : index
    %c0_43 = arith.constant 0 : index
    %42 = vector.load %arg3[%c1_41, %c0_42, %c0_43] : memref<3x128x128xbf16, #tpu.memory_space<vmem>>, vector<1x128x128xbf16>
    %43 = vector.shape_cast %42 : vector<1x128x128xbf16> to vector<128x128xbf16>
    %cst_44 = arith.constant dense<0.000000e+00> : vector<256x128xf32>
    %44 = tpu.matmul %41, %43, %cst_44 {dimension_numbers = #tpu.dot_dimension_numbers<[1], [0], [0], [1], [0, 0, 1, 1], [], []>} : vector<256x128xbf16>, vector<128x128xbf16>, vector<256x128xf32> -> vector<256x128xf32>
    %45 = arith.addf %38, %44 : vector<256x128xf32>
    %c0_45 = arith.constant 0 : index
    %c2_46 = arith.constant 2 : index
    %c0_47 = arith.constant 0 : index
    %46 = vector.load %arg10[%c0_45, %c2_46, %c0_47] : memref<32x10x128xf32, #tpu.memory_space<vmem>>, vector<32x8x128xf32>
    %47 = vector.shape_cast %46 : vector<32x8x128xf32> to vector<256x128xf32>
    %48 = arith.truncf %47 : vector<256x128xf32> to vector<256x128xbf16>
    %c2_48 = arith.constant 2 : index
    %c0_49 = arith.constant 0 : index
    %c0_50 = arith.constant 0 : index
    %49 = vector.load %arg3[%c2_48, %c0_49, %c0_50] : memref<3x128x128xbf16, #tpu.memory_space<vmem>>, vector<1x128x128xbf16>
    %50 = vector.shape_cast %49 : vector<1x128x128xbf16> to vector<128x128xbf16>
    %cst_51 = arith.constant dense<0.000000e+00> : vector<256x128xf32>
    %51 = tpu.matmul %48, %50, %cst_51 {dimension_numbers = #tpu.dot_dimension_numbers<[1], [0], [0], [1], [0, 0, 1, 1], [], []>} : vector<256x128xbf16>, vector<128x128xbf16>, vector<256x128xf32> -> vector<256x128xf32>
    %52 = arith.addf %45, %51 : vector<256x128xf32>
    %c2_52 = arith.constant 2 : index
    %c0_53 = arith.constant 0 : index
    %53 = vector.load %arg4[%c2_52, %c0_53] : memref<4x128xf32, #tpu.memory_space<vmem>>, vector<1x128xf32>
    %54 = vector.broadcast %53 : vector<1x128xf32> to vector<256x128xf32>
    %55 = arith.mulf %52, %54 : vector<256x128xf32>
    %c3 = arith.constant 3 : index
    %c0_54 = arith.constant 0 : index
    %56 = vector.load %arg4[%c3, %c0_54] : memref<4x128xf32, #tpu.memory_space<vmem>>, vector<1x128xf32>
    %57 = vector.broadcast %56 : vector<1x128xf32> to vector<256x128xf32>
    %58 = arith.addf %55, %57 : vector<256x128xf32>
    %59 = vector.shape_cast %58 : vector<256x128xf32> to vector<32x8x128xf32>
    %cst_55 = arith.constant dense<0.000000e+00> : vector<32x128xf32>
    %60 = vector.multi_reduction <add>, %59, %cst_55 [1] : vector<32x8x128xf32> to vector<32x128xf32>
    %c0_56 = arith.constant 0 : index
    %c0_57 = arith.constant 0 : index
    %61 = vector.load %arg5[%c0_56, %c0_57] : memref<128x16xf32, #tpu.memory_space<vmem>>, vector<128x16xf32>
    %cst_58 = arith.constant dense<0.000000e+00> : vector<32x16xf32>
    %62 = tpu.matmul %60, %61, %cst_58 {dimension_numbers = #tpu.dot_dimension_numbers<[1], [0], [0], [1], [0, 0, 1, 1], [], []>} : vector<32x128xf32>, vector<128x16xf32>, vector<32x16xf32> -> vector<32x16xf32>
    %c0_59 = arith.constant 0 : index
    %c0_60 = arith.constant 0 : index
    %63 = vector.load %arg7[%c0_59, %c0_60] : memref<16x4xf32, #tpu.memory_space<vmem>>, vector<16x4xf32>
    %cst_61 = arith.constant dense<0.000000e+00> : vector<32x4xf32>
    %64 = tpu.matmul %62, %63, %cst_61 {dimension_numbers = #tpu.dot_dimension_numbers<[1], [0], [0], [1], [0, 0, 1, 1], [], []>} : vector<32x16xf32>, vector<16x4xf32>, vector<32x4xf32> -> vector<32x4xf32>
    %cst_62 = arith.constant 0.000000e+00 : f32
    %65 = vector.broadcast %cst_62 : f32 to vector<32x4xf32>
    %66 = arith.maximumf %64, %65 : vector<32x4xf32>
    %c0_63 = arith.constant 0 : index
    %c0_64 = arith.constant 0 : index
    %67 = vector.load %arg8[%c0_63, %c0_64] : memref<4x16xf32, #tpu.memory_space<vmem>>, vector<4x16xf32>
    %cst_65 = arith.constant dense<0.000000e+00> : vector<32x16xf32>
    %68 = tpu.matmul %66, %67, %cst_65 {dimension_numbers = #tpu.dot_dimension_numbers<[1], [0], [0], [1], [0, 0, 1, 1], [], []>} : vector<32x4xf32>, vector<4x16xf32>, vector<32x16xf32> -> vector<32x16xf32>
    %69 = arith.negf %68 : vector<32x16xf32>
    %70 = math.exp %69 : vector<32x16xf32>
    %cst_66 = arith.constant 1.000000e+00 : f32
    %71 = vector.broadcast %cst_66 : f32 to vector<32x16xf32>
    %72 = arith.addf %71, %70 : vector<32x16xf32>
    %73 = arith.divf %71, %72 : vector<32x16xf32>
    %c0_67 = arith.constant 0 : index
    %c0_68 = arith.constant 0 : index
    %74 = vector.load %arg6[%c0_67, %c0_68] : memref<16x128xf32, #tpu.memory_space<vmem>>, vector<16x128xf32>
    %cst_69 = arith.constant dense<0.000000e+00> : vector<32x128xf32>
    %75 = tpu.matmul %73, %74, %cst_69 {dimension_numbers = #tpu.dot_dimension_numbers<[1], [0], [0], [1], [0, 0, 1, 1], [], []>} : vector<32x16xf32>, vector<16x128xf32>, vector<32x128xf32> -> vector<32x128xf32>
    %c0_70 = arith.constant 0 : index
    %c1_71 = arith.constant 1 : index
    %c0_72 = arith.constant 0 : index
    %76 = vector.load %arg1[%c0_70, %c1_71, %c0_72] : memref<32x10x128xf32, #tpu.memory_space<vmem>>, vector<32x8x128xf32>
    %77 = vector.shape_cast %75 : vector<32x128xf32> to vector<32x1x128xf32>
    %78 = vector.broadcast %77 : vector<32x1x128xf32> to vector<32x8x128xf32>
    %79 = arith.mulf %59, %78 : vector<32x8x128xf32>
    %80 = arith.addf %79, %76 : vector<32x8x128xf32>
    %cst_73 = arith.constant 0.000000e+00 : f32
    %81 = vector.broadcast %cst_73 : f32 to vector<32x8x128xf32>
    %82 = arith.maximumf %80, %81 : vector<32x8x128xf32>
    %c0_74 = arith.constant 0 : index
    %c0_75 = arith.constant 0 : index
    %c0_76 = arith.constant 0 : index
    %83 = vector.load %arg9[%c0_74, %c0_75, %c0_76] : memref<32x8x128xf32, #tpu.memory_space<vmem>>, vector<32x8x128xf32>
    tpu.vector_store %arg9[%c0_74, %c0_75, %c0_76], %82 {strides = array<i32>} : memref<32x8x128xf32, #tpu.memory_space<vmem>>, vector<32x8x128xf32>,
    return
  }
  func.func @transform_0(%arg0: i32) -> (i32, i32, i32) {
    %c0_i32 = arith.constant 0 : i32
    %c0_i32_0 = arith.constant 0 : i32
    %c0_i32_1 = arith.constant 0 : i32
    return %arg0, %c0_i32, %c0_i32_0 : i32, i32, i32
  }
  func.func @transform_1(%arg0: i32) -> (i32, i32, i32) {
    %c0_i32 = arith.constant 0 : i32
    %c0_i32_0 = arith.constant 0 : i32
    %c0_i32_1 = arith.constant 0 : i32
    %c0_i32_2 = arith.constant 0 : i32
    return %c0_i32, %c0_i32_0, %c0_i32_1 : i32, i32, i32
  }
  func.func @transform_2(%arg0: i32) -> (i32, i32, i32) {
    %c0_i32 = arith.constant 0 : i32
    %c0_i32_0 = arith.constant 0 : i32
    %c0_i32_1 = arith.constant 0 : i32
    %c0_i32_2 = arith.constant 0 : i32
    return %c0_i32, %c0_i32_0, %c0_i32_1 : i32, i32, i32
  }
  func.func @transform_3(%arg0: i32) -> (i32, i32) {
    %c0_i32 = arith.constant 0 : i32
    %c0_i32_0 = arith.constant 0 : i32
    %c0_i32_1 = arith.constant 0 : i32
    return %c0_i32, %c0_i32_0 : i32, i32
  }
  func.func @transform_4(%arg0: i32) -> (i32, i32) {
    %c0_i32 = arith.constant 0 : i32
    %c0_i32_0 = arith.constant 0 : i32
    %c0_i32_1 = arith.constant 0 : i32
    return %c0_i32, %c0_i32_0 : i32, i32
  }
  func.func @transform_5(%arg0: i32) -> (i32, i32) {
    %c0_i32 = arith.constant 0 : i32
    %c0_i32_0 = arith.constant 0 : i32
    %c0_i32_1 = arith.constant 0 : i32
    return %c0_i32, %c0_i32_0 : i32, i32
  }
  func.func @transform_6(%arg0: i32) -> (i32, i32) {
    %c0_i32 = arith.constant 0 : i32
    %c0_i32_0 = arith.constant 0 : i32
    %c0_i32_1 = arith.constant 0 : i32
    return %c0_i32, %c0_i32_0 : i32, i32
  }
  func.func @transform_7(%arg0: i32) -> (i32, i32) {
    %c0_i32 = arith.constant 0 : i32
    %c0_i32_0 = arith.constant 0 : i32
    %c0_i32_1 = arith.constant 0 : i32
    return %c0_i32, %c0_i32_0 : i32, i32
  }
  func.func @transform_8(%arg0: i32) -> (i32, i32, i32) {
    %c0_i32 = arith.constant 0 : i32
    %c0_i32_0 = arith.constant 0 : i32
    %c0_i32_1 = arith.constant 0 : i32
    return %arg0, %c0_i32, %c0_i32_0 : i32, i32, i32
  }
}

</mosaic_0001>

<llo_original>
// kernel: tpu_custom_call.1
$region0: #{tpu_custom_call.1}
  #allocation0 [shape = 'u32[]', space=smem, size = 0x4, offset = 0x4, fixed_abs, tag = 'smem constant byte address 0x4 - core index']
  #allocation1 [shape = 'u32[144,128]{1,0:T(1,128)}', space=vmem, size = 0x12000, scoped, tag = 'internal scratch']
  #allocation2 [shape = 'f32[32,10,128]{2,1,0:T(8,128)}', space=vmem, size = 0x40000, scoped, tag = 'scratch operand']
  %s0 = inlined_call_operand.vmem [shape: f32[64,10,128], index: 0, kind: input, shape index: {}]
  %s1 = inlined_call_operand.vmem [shape: bf16[3,128,128], index: 1, kind: input, shape index: {}]
  %s2 = inlined_call_operand.vmem [shape: bf16[3,128,128], index: 2, kind: input, shape index: {}]
  %s3 = inlined_call_operand.vmem [shape: f32[4,128], index: 3, kind: input, shape index: {}]
  %s4 = inlined_call_operand.vmem [shape: f32[128,16], index: 4, kind: input, shape index: {}]
  %s5 = inlined_call_operand.vmem [shape: f32[16,128], index: 5, kind: input, shape index: {}]
  %s6 = inlined_call_operand.vmem [shape: f32[16,4], index: 6, kind: input, shape index: {}]
  %s7 = inlined_call_operand.vmem [shape: f32[4,16], index: 7, kind: input, shape index: {}]
  %s8 = inlined_call_operand.hbm [shape: f32[64,8,128], index: 8, kind: output, shape index: {}]
  %s9 = sld [smem:[#allocation0]]
  $region65: #{tpu_custom_call.1} parent=0
    _
  %s11 = ssub.s32 1, %s9
  %s12 = scalar_select 0, %s11, %s9
  $region1: #{tpu_custom_call.1} parent=0
    #allocation3 [shape = 'u8[262144]{0}', space=vmem, size = 0x40000, scoped, tag = 'output window, operand 0']
    #allocation4 [shape = 's32[2]{0}', space=sflag, size = 0x8, scoped, tag = 'scoped memory for tpu_custom_call.1']
    %13 = vsyncpa [#allocation4], 0
    %s14 = scalar_lea.sflag [#allocation4], 1
    %15 = vsyncpa %s14, 0
    loop: start=0, step=1, limit=4
    $region2: #{tpu_custom_call.1} parent=1 // loop_pre_header
      _
    $region3: #{tpu_custom_call.1} parent=1 // loop_header
      %s17 = sphi 0, %s21
      %p18 = scmp.ge.s32.totalorder %s17, 4
      %s27 = sphi 0, %s29
      %s30 = sphi 0, %s27
      %s31 = sphi 0, %s30
      %s47 = sphi 0, %s31
      %s51 = sphi 0, %s51
      %s53 = sphi 0, %s51
      %s54 = sphi 0, %s53
      %s68 = sphi 0, %s54
      %s72 = sphi 0, %s72
      %s74 = sphi 0, %s72
      %s75 = sphi 0, %s74
      %s89 = sphi 0, %s75
      %s93 = sphi 0, %s93
      %s95 = sphi 0, %s93
      %s96 = sphi 0, %s95
      %s110 = sphi 0, %s96
      %s114 = sphi 0, %s114
      %s116 = sphi 0, %s114
      %s117 = sphi 0, %s116
      %s131 = sphi 0, %s117
      %s135 = sphi 0, %s135
      %s137 = sphi 0, %s135
      %s138 = sphi 0, %s137
      %s152 = sphi 0, %s138
      %s156 = sphi 0, %s156
      %s158 = sphi 0, %s156
      %s159 = sphi 0, %s158
      %s173 = sphi 0, %s159
      %s177 = sphi 0, %s177
      %s179 = sphi 0, %s177
      %s180 = sphi 0, %s179
      %s194 = sphi 0, %s180
      %s200 = sphi 0, %s202
      %s203 = sphi 0, %s200
      %s204 = sphi 0, %s203
      %s220 = sphi 0, %s204
    $region4: #{tpu_custom_call.1} parent=1 // loop_header_branch
      %20 = sbr.rel (%p18) target = $region8
    $region5: #{tpu_custom_call.1} parent=1 // loop_body
      %s22 = ssub.s32 %s17, 1
      %s23 = ssub.s32 %s17, 2
      %s24 = sadd.s32 %s17, 1
      %s25 = ssub.s32 %s17, %s24
      %p26 = scmp.eq.s32.totalorder %s25, 0
      %s28 = sadd.s32 %s27, 1
      %s29 = scalar_select %p26, %s27, %s28
      %p32 = pneg %p26
      %p33 = scmp.eq.s32.totalorder %s17, 1
      %p34 = por %p32, %p33
      %p35 = scmp.ne.s32.totalorder %s27, %s30
      %p36 = scmp.eq.s32.totalorder %s17, 0
      %p37 = por %p35, %p36
      %p38 = scmp.ne.s32.totalorder %s27, %s30
      %p39 = scmp.eq.s32.totalorder %s22, 1
      %p40 = por %p38, %p39
      %p41 = scmp.ne.s32.totalorder %s30, %s31
      %p42 = scmp.eq.s32.totalorder %s22, 0
      %p43 = por %p41, %p42
      %p44 = scmp.ne.s32.totalorder %s30, %s31
      %p45 = scmp.eq.s32.totalorder %s23, 1
      %p46 = por %p44, %p45
      %p48 = scmp.ne.s32.totalorder %s31, %s47
      %p49 = scmp.eq.s32.totalorder %s23, 0
      %p50 = por %p48, %p49
      %s52 = sadd.s32 %s51, 1
      %p55 = scmp.eq.s32.totalorder %s17, 1
      %p56 = scmp.ne.s32.totalorder %s51, %s53
      %p57 = scmp.eq.s32.totalorder %s17, 0
      %p58 = por %p56, %p57
      %p59 = scmp.ne.s32.totalorder %s51, %s53
      %p60 = scmp.eq.s32.totalorder %s22, 1
      %p61 = por %p59, %p60
      %p62 = scmp.ne.s32.totalorder %s53, %s54
      %p63 = scmp.eq.s32.totalorder %s22, 0
      %p64 = por %p62, %p63
      %p65 = scmp.ne.s32.totalorder %s53, %s54
      %p66 = scmp.eq.s32.totalorder %s23, 1
      %p67 = por %p65, %p66
      %p69 = scmp.ne.s32.totalorder %s54, %s68
      %p70 = scmp.eq.s32.totalorder %s23, 0
      %p71 = por %p69, %p70
      %s73 = sadd.s32 %s72, 1
      %p76 = scmp.eq.s32.totalorder %s17, 1
      %p77 = scmp.ne.s32.totalorder %s72, %s74
      %p78 = scmp.eq.s32.totalorder %s17, 0
      %p79 = por %p77, %p78
      %p80 = scmp.ne.s32.totalorder %s72, %s74
      %p81 = scmp.eq.s32.totalorder %s22, 1
      %p82 = por %p80, %p81
      %p83 = scmp.ne.s32.totalorder %s74, %s75
      %p84 = scmp.eq.s32.totalorder %s22, 0
      %p85 = por %p83, %p84
      %p86 = scmp.ne.s32.totalorder %s74, %s75
      %p87 = scmp.eq.s32.totalorder %s23, 1
      %p88 = por %p86, %p87
      %p90 = scmp.ne.s32.totalorder %s75, %s89
      %p91 = scmp.eq.s32.totalorder %s23, 0
      %p92 = por %p90, %p91
      %s94 = sadd.s32 %s93, 1
      %p97 = scmp.eq.s32.totalorder %s17, 1
      %p98 = scmp.ne.s32.totalorder %s93, %s95
      %p99 = scmp.eq.s32.totalorder %s17, 0
      %p100 = por %p98, %p99
      %p101 = scmp.ne.s32.totalorder %s93, %s95
      %p102 = scmp.eq.s32.totalorder %s22, 1
      %p103 = por %p101, %p102
      %p104 = scmp.ne.s32.totalorder %s95, %s96
      %p105 = scmp.eq.s32.totalorder %s22, 0
      %p106 = por %p104, %p105
      %p107 = scmp.ne.s32.totalorder %s95, %s96
      %p108 = scmp.eq.s32.totalorder %s23, 1
      %p109 = por %p107, %p108
      %p111 = scmp.ne.s32.totalorder %s96, %s110
      %p112 = scmp.eq.s32.totalorder %s23, 0
      %p113 = por %p111, %p112
      %s115 = sadd.s32 %s114, 1
      %p118 = scmp.eq.s32.totalorder %s17, 1
      %p119 = scmp.ne.s32.totalorder %s114, %s116
      %p120 = scmp.eq.s32.totalorder %s17, 0
      %p121 = por %p119, %p120
      %p122 = scmp.ne.s32.totalorder %s114, %s116
      %p123 = scmp.eq.s32.totalorder %s22, 1
      %p124 = por %p122, %p123
      %p125 = scmp.ne.s32.totalorder %s116, %s117
      %p126 = scmp.eq.s32.totalorder %s22, 0
      %p127 = por %p125, %p126
      %p128 = scmp.ne.s32.totalorder %s116, %s117
      %p129 = scmp.eq.s32.totalorder %s23, 1
      %p130 = por %p128, %p129
      %p132 = scmp.ne.s32.totalorder %s117, %s131
      %p133 = scmp.eq.s32.totalorder %s23, 0
      %p134 = por %p132, %p133
      %s136 = sadd.s32 %s135, 1
      %p139 = scmp.eq.s32.totalorder %s17, 1
      %p140 = scmp.ne.s32.totalorder %s135, %s137
      %p141 = scmp.eq.s32.totalorder %s17, 0
      %p142 = por %p140, %p141
      %p143 = scmp.ne.s32.totalorder %s135, %s137
      %p144 = scmp.eq.s32.totalorder %s22, 1
      %p145 = por %p143, %p144
      %p146 = scmp.ne.s32.totalorder %s137, %s138
      %p147 = scmp.eq.s32.totalorder %s22, 0
      %p148 = por %p146, %p147
      %p149 = scmp.ne.s32.totalorder %s137, %s138
      %p150 = scmp.eq.s32.totalorder %s23, 1
      %p151 = por %p149, %p150
      %p153 = scmp.ne.s32.totalorder %s138, %s152
      %p154 = scmp.eq.s32.totalorder %s23, 0
      %p155 = por %p153, %p154
      %s157 = sadd.s32 %s156, 1
      %p160 = scmp.eq.s32.totalorder %s17, 1
      %p161 = scmp.ne.s32.totalorder %s156, %s158
      %p162 = scmp.eq.s32.totalorder %s17, 0
      %p163 = por %p161, %p162
      %p164 = scmp.ne.s32.totalorder %s156, %s158
      %p165 = scmp.eq.s32.totalorder %s22, 1
      %p166 = por %p164, %p165
      %p167 = scmp.ne.s32.totalorder %s158, %s159
      %p168 = scmp.eq.s32.totalorder %s22, 0
      %p169 = por %p167, %p168
      %p170 = scmp.ne.s32.totalorder %s158, %s159
      %p171 = scmp.eq.s32.totalorder %s23, 1
      %p172 = por %p170, %p171
      %p174 = scmp.ne.s32.totalorder %s159, %s173
      %p175 = scmp.eq.s32.totalorder %s23, 0
      %p176 = por %p174, %p175
      %s178 = sadd.s32 %s177, 1
      %p181 = scmp.eq.s32.totalorder %s17, 1
      %p182 = scmp.ne.s32.totalorder %s177, %s179
      %p183 = scmp.eq.s32.totalorder %s17, 0
      %p184 = por %p182, %p183
      %p185 = scmp.ne.s32.totalorder %s177, %s179
      %p186 = scmp.eq.s32.totalorder %s22, 1
      %p187 = por %p185, %p186
      %p188 = scmp.ne.s32.totalorder %s179, %s180
      %p189 = scmp.eq.s32.totalorder %s22, 0
      %p190 = por %p188, %p189
      %p191 = scmp.ne.s32.totalorder %s179, %s180
      %p192 = scmp.eq.s32.totalorder %s23, 1
      %p193 = por %p191, %p192
      %p195 = scmp.ne.s32.totalorder %s180, %s194
      %p196 = scmp.eq.s32.totalorder %s23, 0
      %p197 = por %p195, %p196
      %s198 = ssub.s32 %s17, %s24
      %p199 = scmp.eq.s32.totalorder %s198, 0
      %s201 = sadd.s32 %s200, 1
      %s202 = scalar_select %p199, %s200, %s201
      %p205 = pneg %p199
      %p206 = scmp.eq.s32.totalorder %s17, 1
      %p207 = por %p205, %p206
      %p208 = scmp.ne.s32.totalorder %s200, %s203
      %p209 = scmp.eq.s32.totalorder %s17, 0
      %p210 = por %p208, %p209
      %p211 = scmp.ne.s32.totalorder %s200, %s203
      %p212 = scmp.eq.s32.totalorder %s22, 1
      %p213 = por %p211, %p212
      %p214 = scmp.ne.s32.totalorder %s203, %s204
      %p215 = scmp.eq.s32.totalorder %s22, 0
      %p216 = por %p214, %p215
      %p217 = scmp.ne.s32.totalorder %s203, %s204
      %p218 = scmp.eq.s32.totalorder %s23, 1
      %p219 = por %p217, %p218
      %p221 = scmp.ne.s32.totalorder %s204, %s220
      %p222 = scmp.eq.s32.totalorder %s23, 0
      %p223 = por %p221, %p222
      %p224 = scmp.le.s32.totalorder 1, %s17
      %p225 = scmp.lt.s32.totalorder %s17, 3
      %p226 = pnand %p224, %p225
      %p227 = pneg %p226
      // Predicated region
      $region9: #{tpu_custom_call.1} parent=5 // pred_check
        _
      $region10: #{tpu_custom_call.1} parent=5 // pred_check_branch
        %229 = sbr.rel (%p226) target = $region12
      $region11: #{tpu_custom_call.1} parent=5 // pred_region
        %s230 = ssub.s32 %s17, 1
        // Predicated region
        $region13: #{tpu_custom_call.1} parent=11 // pred_check
          %p231 = pneg %p64
        $region14: #{tpu_custom_call.1} parent=11 // pred_check_branch
          %233 = sbr.rel (%p231) target = $region16
        $region15: #{tpu_custom_call.1} parent=11 // pred_region
          _
        $region16: #{tpu_custom_call.1} parent=11 // pred_fallthru
          _
        // Predicated region
        $region17: #{tpu_custom_call.1} parent=11 // pred_check
          %p234 = pneg %p85
        $region18: #{tpu_custom_call.1} parent=11 // pred_check_branch
          %236 = sbr.rel (%p234) target = $region20
        $region19: #{tpu_custom_call.1} parent=11 // pred_region
          _
        $region20: #{tpu_custom_call.1} parent=11 // pred_fallthru
          _
        // Predicated region
        $region21: #{tpu_custom_call.1} parent=11 // pred_check
          %p237 = pneg %p106
        $region22: #{tpu_custom_call.1} parent=11 // pred_check_branch
          %239 = sbr.rel (%p237) target = $region24
        $region23: #{tpu_custom_call.1} parent=11 // pred_region
          _
        $region24: #{tpu_custom_call.1} parent=11 // pred_fallthru
          _
        // Predicated region
        $region25: #{tpu_custom_call.1} parent=11 // pred_check
          %p240 = pneg %p127
        $region26: #{tpu_custom_call.1} parent=11 // pred_check_branch
          %242 = sbr.rel (%p240) target = $region28
        $region27: #{tpu_custom_call.1} parent=11 // pred_region
          _
        $region28: #{tpu_custom_call.1} parent=11 // pred_fallthru
          _
        // Predicated region
        $region29: #{tpu_custom_call.1} parent=11 // pred_check
          %p243 = pneg %p148
        $region30: #{tpu_custom_call.1} parent=11 // pred_check_branch
          %245 = sbr.rel (%p243) target = $region32
        $region31: #{tpu_custom_call.1} parent=11 // pred_region
          _
        $region32: #{tpu_custom_call.1} parent=11 // pred_fallthru
          _
        // Predicated region
        $region33: #{tpu_custom_call.1} parent=11 // pred_check
          %p246 = pneg %p169
        $region34: #{tpu_custom_call.1} parent=11 // pred_check_branch
          %248 = sbr.rel (%p246) target = $region36
        $region35: #{tpu_custom_call.1} parent=11 // pred_region
          _
        $region36: #{tpu_custom_call.1} parent=11 // pred_fallthru
          _
        // Predicated region
        $region37: #{tpu_custom_call.1} parent=11 // pred_check
          %p249 = pneg %p190
        $region38: #{tpu_custom_call.1} parent=11 // pred_check_branch
          %251 = sbr.rel (%p249) target = $region40
        $region39: #{tpu_custom_call.1} parent=11 // pred_region
          _
        $region40: #{tpu_custom_call.1} parent=11 // pred_fallthru
          _
      $region12: #{tpu_custom_call.1} parent=5 // pred_fallthru
        _
      %p252 = scmp.lt.s32.totalorder %s17, 2
      // Predicated region
      $region41: #{tpu_custom_call.1} parent=5 // pred_check
        %p253 = pneg %p252
      $region42: #{tpu_custom_call.1} parent=5 // pred_check_branch
        %255 = sbr.rel (%p253) target = $region44
      $region43: #{tpu_custom_call.1} parent=5 // pred_region
        // Predicated region
        $region45: #{tpu_custom_call.1} parent=43 // pred_check
          %p256 = pneg %p37
        $region46: #{tpu_custom_call.1} parent=43 // pred_check_branch
          %258 = sbr.rel (%p256) target = $region48
        $region47: #{tpu_custom_call.1} parent=43 // pred_region
          %s259 = smul.u32 32, %s17
          %p260 = scmp.lt.s32.totalorder %s259, 63
          %s261 = scalar_select %p260, %s259, 63
          %s262 = smul.addr %s261, 2
          %s263 = smul.addr %s262, 8
          %s264 = scalar_lea.vmem %s0, %s263
          %s265 = smul.u32 32, %s17
        $region48: #{tpu_custom_call.1} parent=43 // pred_fallthru
          _
      $region44: #{tpu_custom_call.1} parent=5 // pred_fallthru
        _
      %p266 = scmp.le.s32.totalorder 1, %s17
      %p267 = scmp.lt.s32.totalorder %s17, 3
      %p268 = pnand %p266, %p267
      %p269 = pneg %p268
      // Predicated region
      $region49: #{tpu_custom_call.1} parent=5 // pred_check
        _
      $region50: #{tpu_custom_call.1} parent=5 // pred_check_branch
        %271 = sbr.rel (%p268) target = $region52
      $region51: #{tpu_custom_call.1} parent=5 // pred_region
        %s272 = ssub.s32 %s17, 1
        %s273 = smul.u32 32, %s22
        %p274 = scmp.lt.s32.totalorder %s273, 63
        %s275 = scalar_select %p274, %s273, 63
        %s276 = smul.addr %s275, 2
        %s277 = smul.addr %s276, 8
        %s278 = scalar_lea.vmem %s0, %s277
        %p279 = pneg %p43
        %p280 = pneg %p40
        %p281 = pneg %p64
        %p282 = pneg %p61
        %p283 = pneg %p85
        %p284 = pneg %p82
        %p285 = pneg %p106
        %p286 = pneg %p103
        %p287 = pneg %p127
        %p288 = pneg %p124
        %p289 = pneg %p148
        %p290 = pneg %p145
        %p291 = pneg %p169
        %p292 = pneg %p166
        %p293 = pneg %p190
        %p294 = pneg %p187
        %p295 = pneg %p216
        %p296 = pneg %p213
        %s297 = sand.u32 %s203, 1
        %s298 = scalar_lea.sflag [#allocation4], %s297
        %s299 = sand.u32 %s203, 1
        %s300 = smul.addr %s299, 256
        %s301 = scalar_lea.vmem [#allocation3], %s300
        %s302 = smul.u32 32, %s22
        %p303 = scmp.lt.s32.totalorder %s302, 63
        %s304 = scalar_select %p303, %s302, 63
        %s305 = smul.addr %s304, 2
        %s306 = smul.addr %s305, 8
        %s307 = scalar_lea.vmem %s0, %s306
        %s308 = smul.u32 32, %s22
        %s309 = smul.u32 32, %s22
        %v311 = vld [vmem:[%s307] sm:$0xff]
        %v312 = vld [vmem:[%s307 + $0x10] sm:$0xff]
        %v313 = vld [vmem:[%s307 + $0x20] sm:$0xff]
        %v314 = vld [vmem:[%s307 + $0x30] sm:$0xff]
        %v315 = vld [vmem:[%s307 + $0x40] sm:$0xff]
        %v316 = vld [vmem:[%s307 + $0x50] sm:$0xff]
        %v317 = vld [vmem:[%s307 + $0x60] sm:$0xff]
        %v318 = vld [vmem:[%s307 + $0x70] sm:$0xff]
        %v319 = vld [vmem:[%s307 + $0x80] sm:$0xff]
        %v320 = vld [vmem:[%s307 + $0x90] sm:$0xff]
        %v321 = vld [vmem:[%s307 + $0xa0] sm:$0xff]
        %v322 = vld [vmem:[%s307 + $0xb0] sm:$0xff]
        %v323 = vld [vmem:[%s307 + $0xc0] sm:$0xff]
        %v324 = vld [vmem:[%s307 + $0xd0] sm:$0xff]
        %v325 = vld [vmem:[%s307 + $0xe0] sm:$0xff]
        %v326 = vld [vmem:[%s307 + $0xf0] sm:$0xff]
        %v327 = vld [vmem:[%s307 + $0x100] sm:$0xff]
        %v328 = vld [vmem:[%s307 + $0x110] sm:$0xff]
        %v329 = vld [vmem:[%s307 + $0x120] sm:$0xff]
        %v330 = vld [vmem:[%s307 + $0x130] sm:$0xff]
        %v331 = vld [vmem:[%s307 + $0x140] sm:$0xff]
        %v332 = vld [vmem:[%s307 + $0x150] sm:$0xff]
        %v333 = vld [vmem:[%s307 + $0x160] sm:$0xff]
        %v334 = vld [vmem:[%s307 + $0x170] sm:$0xff]
        %v335 = vld [vmem:[%s307 + $0x180] sm:$0xff]
        %v336 = vld [vmem:[%s307 + $0x190] sm:$0xff]
        %v337 = vld [vmem:[%s307 + $0x1a0] sm:$0xff]
        %v338 = vld [vmem:[%s307 + $0x1b0] sm:$0xff]
        %v339 = vld [vmem:[%s307 + $0x1c0] sm:$0xff]
        %v340 = vld [vmem:[%s307 + $0x1d0] sm:$0xff]
        %v341 = vld [vmem:[%s307 + $0x1e0] sm:$0xff]
        %v342 = vld [vmem:[%s307 + $0x1f0] sm:$0xff]
        %v343 = vpack.c.bf16 %v312, %v311
        %v344 = vpack.c.bf16 %v314, %v313
        %v345 = vpack.c.bf16 %v316, %v315
        %v346 = vpack.c.bf16 %v318, %v317
        %v347 = vpack.c.bf16 %v320, %v319
        %v348 = vpack.c.bf16 %v322, %v321
        %v349 = vpack.c.bf16 %v324, %v323
        %v350 = vpack.c.bf16 %v326, %v325
        %v351 = vpack.c.bf16 %v328, %v327
        %v352 = vpack.c.bf16 %v330, %v329
        %v353 = vpack.c.bf16 %v332, %v331
        %v354 = vpack.c.bf16 %v334, %v333
        %v355 = vpack.c.bf16 %v336, %v335
        %v356 = vpack.c.bf16 %v338, %v337
        %v357 = vpack.c.bf16 %v340, %v339
        %v358 = vpack.c.bf16 %v342, %v341
        %v359 = vld [vmem:[%s1] sm:$0xf]
        %v360 = vld [vmem:[%s1 + $0x4] sm:$0xf]
        %v361 = vld [vmem:[%s1 + $0x8] sm:$0xf]
        %v362 = vld [vmem:[%s1 + $0xc] sm:$0xf]
        %v363 = vld [vmem:[%s1 + $0x10] sm:$0xf]
        %v364 = vld [vmem:[%s1 + $0x14] sm:$0xf]
        %v365 = vld [vmem:[%s1 + $0x18] sm:$0xf]
        %v366 = vld [vmem:[%s1 + $0x1c] sm:$0xf]
        %v367 = vld [vmem:[%s1 + $0x20] sm:$0xf]
        %v368 = vld [vmem:[%s1 + $0x24] sm:$0xf]
        %v369 = vld [vmem:[%s1 + $0x28] sm:$0xf]
        %v370 = vld [vmem:[%s1 + $0x2c] sm:$0xf]
        %v371 = vld [vmem:[%s1 + $0x30] sm:$0xf]
        %v372 = vld [vmem:[%s1 + $0x34] sm:$0xf]
        %v373 = vld [vmem:[%s1 + $0x38] sm:$0xf]
        %v374 = vld [vmem:[%s1 + $0x3c] sm:$0xf]
        %v375 = vld [vmem:[%s307 + $0x1] sm:$0xff]
        %v376 = vld [vmem:[%s307 + $0x11] sm:$0xff]
        %v377 = vld [vmem:[%s307 + $0x21] sm:$0xff]
        %v378 = vld [vmem:[%s307 + $0x31] sm:$0xff]
        %v379 = vld [vmem:[%s307 + $0x41] sm:$0xff]
        %v380 = vld [vmem:[%s307 + $0x51] sm:$0xff]
        %v381 = vld [vmem:[%s307 + $0x61] sm:$0xff]
        %v382 = vld [vmem:[%s307 + $0x71] sm:$0xff]
        %v383 = vld [vmem:[%s307 + $0x81] sm:$0xff]
        %v384 = vld [vmem:[%s307 + $0x91] sm:$0xff]
        %v385 = vld [vmem:[%s307 + $0xa1] sm:$0xff]
        %v386 = vld [vmem:[%s307 + $0xb1] sm:$0xff]
        %v387 = vld [vmem:[%s307 + $0xc1] sm:$0xff]
        %v388 = vld [vmem:[%s307 + $0xd1] sm:$0xff]
        %v389 = vld [vmem:[%s307 + $0xe1] sm:$0xff]
        %v390 = vld [vmem:[%s307 + $0xf1] sm:$0xff]
        %v391 = vld [vmem:[%s307 + $0x101] sm:$0xff]
        %v392 = vld [vmem:[%s307 + $0x111] sm:$0xff]
        %v393 = vld [vmem:[%s307 + $0x121] sm:$0xff]
        %v394 = vld [vmem:[%s307 + $0x131] sm:$0xff]
        %v395 = vld [vmem:[%s307 + $0x141] sm:$0xff]
        %v396 = vld [vmem:[%s307 + $0x151] sm:$0xff]
        %v397 = vld [vmem:[%s307 + $0x161] sm:$0xff]
        %v398 = vld [vmem:[%s307 + $0x171] sm:$0xff]
        %v399 = vld [vmem:[%s307 + $0x181] sm:$0xff]
        %v400 = vld [vmem:[%s307 + $0x191] sm:$0xff]
        %v401 = vld [vmem:[%s307 + $0x1a1] sm:$0xff]
        %v402 = vld [vmem:[%s307 + $0x1b1] sm:$0xff]
        %v403 = vld [vmem:[%s307 + $0x1c1] sm:$0xff]
        %v404 = vld [vmem:[%s307 + $0x1d1] sm:$0xff]
        %v405 = vld [vmem:[%s307 + $0x1e1] sm:$0xff]
        %v406 = vld [vmem:[%s307 + $0x1f1] sm:$0xff]
        %v407 = vpack.c.bf16 %v376, %v375
        %v408 = vpack.c.bf16 %v378, %v377
        %v409 = vpack.c.bf16 %v380, %v379
        %v410 = vpack.c.bf16 %v382, %v381
        %v411 = vpack.c.bf16 %v384, %v383
        %v412 = vpack.c.bf16 %v386, %v385
        %v413 = vpack.c.bf16 %v388, %v387
        %v414 = vpack.c.bf16 %v390, %v389
        %v415 = vpack.c.bf16 %v392, %v391
        %v416 = vpack.c.bf16 %v394, %v393
        %v417 = vpack.c.bf16 %v396, %v395
        %v418 = vpack.c.bf16 %v398, %v397
        %v419 = vpack.c.bf16 %v400, %v399
        %v420 = vpack.c.bf16 %v402, %v401
        %v421 = vpack.c.bf16 %v404, %v403
        %v422 = vpack.c.bf16 %v406, %v405
        %s423 = scalar_lea.vmem %s1, 64
        %v424 = vld [vmem:[%s423] sm:$0xf]
        %v425 = vld [vmem:[%s423 + $0x4] sm:$0xf]
        %v426 = vld [vmem:[%s423 + $0x8] sm:$0xf]
        %v427 = vld [vmem:[%s423 + $0xc] sm:$0xf]
        %v428 = vld [vmem:[%s423 + $0x10] sm:$0xf]
        %v429 = vld [vmem:[%s423 + $0x14] sm:$0xf]
        %v430 = vld [vmem:[%s423 + $0x18] sm:$0xf]
        %v431 = vld [vmem:[%s423 + $0x1c] sm:$0xf]
        %v432 = vld [vmem:[%s423 + $0x20] sm:$0xf]
        %v433 = vld [vmem:[%s423 + $0x24] sm:$0xf]
        %v434 = vld [vmem:[%s423 + $0x28] sm:$0xf]
        %v435 = vld [vmem:[%s423 + $0x2c] sm:$0xf]
        %v436 = vld [vmem:[%s423 + $0x30] sm:$0xf]
        %v437 = vld [vmem:[%s423 + $0x34] sm:$0xf]
        %v438 = vld [vmem:[%s423 + $0x38] sm:$0xf]
        %v439 = vld [vmem:[%s423 + $0x3c] sm:$0xf]
        %v456 = vunpack.c.l.b16 %v424
        %v457 = vunpack.c.l.b16 %v425
        %v458 = vunpack.c.l.b16 %v426
        %v459 = vunpack.c.l.b16 %v427
        %v460 = vunpack.c.l.b16 %v428
        %v461 = vunpack.c.l.b16 %v429
        %v462 = vunpack.c.l.b16 %v430
        %v463 = vunpack.c.l.b16 %v431
        %v464 = vunpack.c.l.b16 %v432
        %v465 = vunpack.c.l.b16 %v433
        %v466 = vunpack.c.l.b16 %v434
        %v467 = vunpack.c.l.b16 %v435
        %v468 = vunpack.c.l.b16 %v436
        %v469 = vunpack.c.l.b16 %v437
        %v470 = vunpack.c.l.b16 %v438
        %v471 = vunpack.c.l.b16 %v439
        %v472 = vpack.c.b16 %v457, %v456
        %v473 = vpack.c.b16 %v459, %v458
        %v474 = vpack.c.b16 %v461, %v460
        %v475 = vpack.c.b16 %v463, %v462
        %v476 = vpack.c.b16 %v465, %v464
        %v477 = vpack.c.b16 %v467, %v466
        %v478 = vpack.c.b16 %v469, %v468
        %v479 = vpack.c.b16 %v471, %v470
        %488 = vmatprep.subr.bf16.mxu0 0
        %489 = vmatpush1.bf16.msra.mxu0 %v472
        %490 = vmatprep.subr.bf16.mxu0 0
        %491 = vmatpush1.bf16.msra.mxu0 %v473
        %492 = vmatprep.subr.bf16.mxu0 0
        %493 = vmatpush1.bf16.msra.mxu0 %v474
        %494 = vmatprep.subr.bf16.mxu0 0
        %495 = vmatpush1.bf16.msra.mxu0 %v475
        %496 = vmatprep.subr.bf16.mxu0 0
        %497 = vmatpush1.bf16.msra.mxu0 %v476
        %498 = vmatprep.subr.bf16.mxu0 0
        %499 = vmatpush1.bf16.msra.mxu0 %v477
        %500 = vmatprep.subr.bf16.mxu0 0
        %501 = vmatpush1.bf16.msra.mxu0 %v478
        %502 = vmatprep.subr.bf16.mxu0 0
        %503 = vmatpush1.bf16.msra.mxu0 %v479
        %504 = vmatprep.subr.bf16.mxu0 0
        %505 = vmatpush1.bf16.msra.mxu0 0
        %506 = vmatprep.subr.bf16.mxu0 0
        %507 = vmatpush1.bf16.msra.mxu0 0
        %508 = vmatprep.subr.bf16.mxu0 0
        %509 = vmatpush1.bf16.msra.mxu0 0
        %510 = vmatprep.subr.bf16.mxu0 0
        %511 = vmatpush1.bf16.msra.mxu0 0
        %512 = vmatprep.subr.bf16.mxu0 0
        %513 = vmatpush1.bf16.msra.mxu0 0
        %514 = vmatprep.subr.bf16.mxu0 0
        %515 = vmatpush1.bf16.msra.mxu0 0
        %516 = vmatprep.subr.bf16.mxu0 0
        %517 = vmatpush1.bf16.msra.mxu0 0
        %518 = vmatprep.subr.bf16.mxu0 0
        %519 = vmatpush1.bf16.msra.mxu0 0
        %520 = vmatprep.mubr.bf16.mxu0 0
        %521 = vmatmul.mubr.bf16.gmra.mrb[0].mxu0 %v407
        %v522 = vpop.f32.mrb[0].mxu0
        %v523 = vadd.f32 0.0, %v522
        %v524 = vpop.f32.mrb[0].mxu0
        %v525 = vpop.f32.mrb[0].mxu0
        %v526 = vadd.f32 0.0, %v525
        %v527 = vpop.f32.mrb[0].mxu0
        %528 = vmatprep.mubr.bf16.mxu0 0
        %529 = vmatmul.mubr.bf16.gmra.mrb[0].mxu0 %v408
        %v530 = vpop.f32.mrb[0].mxu0
        %v531 = vadd.f32 0.0, %v530
        %v532 = vpop.f32.mrb[0].mxu0
        %v533 = vpop.f32.mrb[0].mxu0
        %v534 = vadd.f32 0.0, %v533
        %v535 = vpop.f32.mrb[0].mxu0
        %536 = vmatprep.mubr.bf16.mxu0 0
        %537 = vmatmul.mubr.bf16.gmra.mrb[0].mxu0 %v409
        %v538 = vpop.f32.mrb[0].mxu0
        %v539 = vadd.f32 0.0, %v538
        %v540 = vpop.f32.mrb[0].mxu0
        %v541 = vpop.f32.mrb[0].mxu0
        %v542 = vadd.f32 0.0, %v541
        %v543 = vpop.f32.mrb[0].mxu0
        %544 = vmatprep.mubr.bf16.mxu0 0
        %545 = vmatmul.mubr.bf16.gmra.mrb[0].mxu0 %v410
        %v546 = vpop.f32.mrb[0].mxu0
        %v547 = vadd.f32 0.0, %v546
        %v548 = vpop.f32.mrb[0].mxu0
        %v549 = vpop.f32.mrb[0].mxu0
        %v550 = vadd.f32 0.0, %v549
        %v551 = vpop.f32.mrb[0].mxu0
        %552 = vmatprep.mubr.bf16.mxu0 0
        %553 = vmatmul.mubr.bf16.gmra.mrb[0].mxu0 %v411
        %v554 = vpop.f32.mrb[0].mxu0
        %v555 = vadd.f32 0.0, %v554
        %v556 = vpop.f32.mrb[0].mxu0
        %v557 = vpop.f32.mrb[0].mxu0
        %v558 = vadd.f32 0.0, %v557
        %v559 = vpop.f32.mrb[0].mxu0
        %560 = vmatprep.mubr.bf16.mxu0 0
        %561 = vmatmul.mubr.bf16.gmra.mrb[0].mxu0 %v412
        %v562 = vpop.f32.mrb[0].mxu0
        %v563 = vadd.f32 0.0, %v562
        %v564 = vpop.f32.mrb[0].mxu0
        %v565 = vpop.f32.mrb[0].mxu0
        %v566 = vadd.f32 0.0, %v565
        %v567 = vpop.f32.mrb[0].mxu0
        %568 = vmatprep.mubr.bf16.mxu0 0
        %569 = vmatmul.mubr.bf16.gmra.mrb[0].mxu0 %v413
        %v570 = vpop.f32.mrb[0].mxu0
        %v571 = vadd.f32 0.0, %v570
        %v572 = vpop.f32.mrb[0].mxu0
        %v573 = vpop.f32.mrb[0].mxu0
        %v574 = vadd.f32 0.0, %v573
        %v575 = vpop.f32.mrb[0].mxu0
        %576 = vmatprep.mubr.bf16.mxu0 0
        %577 = vmatmul.mubr.bf16.gmra.mrb[0].mxu0 %v414
        %v578 = vpop.f32.mrb[0].mxu0
        %v579 = vadd.f32 0.0, %v578
        %v580 = vpop.f32.mrb[0].mxu0
        %v581 = vpop.f32.mrb[0].mxu0
        %v582 = vadd.f32 0.0, %v581
        %v583 = vpop.f32.mrb[0].mxu0
        %584 = vmatprep.mubr.bf16.mxu0 0
        %585 = vmatmul.mubr.bf16.gmra.mrb[0].mxu0 %v415
        %v586 = vpop.f32.mrb[0].mxu0
        %v587 = vadd.f32 0.0, %v586
        %v588 = vpop.f32.mrb[0].mxu0
        %v589 = vpop.f32.mrb[0].mxu0
        %v590 = vadd.f32 0.0, %v589
        %v591 = vpop.f32.mrb[0].mxu0
        %592 = vmatprep.mubr.bf16.mxu0 0
        %593 = vmatmul.mubr.bf16.gmra.mrb[0].mxu0 %v416
        %v594 = vpop.f32.mrb[0].mxu0
        %v595 = vadd.f32 0.0, %v594
        %v596 = vpop.f32.mrb[0].mxu0
        %v597 = vpop.f32.mrb[0].mxu0
        %v598 = vadd.f32 0.0, %v597
        %v599 = vpop.f32.mrb[0].mxu0
        %600 = vmatprep.mubr.bf16.mxu0 0
        %601 = vmatmul.mubr.bf16.gmra.mrb[0].mxu0 %v417
        %v602 = vpop.f32.mrb[0].mxu0
        %v603 = vadd.f32 0.0, %v602
        %v604 = vpop.f32.mrb[0].mxu0
        %v605 = vpop.f32.mrb[0].mxu0
        %v606 = vadd.f32 0.0, %v605
        %v607 = vpop.f32.mrb[0].mxu0
        %608 = vmatprep.mubr.bf16.mxu0 0
        %609 = vmatmul.mubr.bf16.gmra.mrb[0].mxu0 %v418
        %v610 = vpop.f32.mrb[0].mxu0
        %v611 = vadd.f32 0.0, %v610
        %v612 = vpop.f32.mrb[0].mxu0
        %v613 = vpop.f32.mrb[0].mxu0
        %v614 = vadd.f32 0.0, %v613
        %v615 = vpop.f32.mrb[0].mxu0
        %616 = vmatprep.mubr.bf16.mxu0 0
        %617 = vmatmul.mubr.bf16.gmra.mrb[0].mxu0 %v419
        %v618 = vpop.f32.mrb[0].mxu0
        %v619 = vadd.f32 0.0, %v618
        %v620 = vpop.f32.mrb[0].mxu0
        %v621 = vpop.f32.mrb[0].mxu0
        %v622 = vadd.f32 0.0, %v621
        %v623 = vpop.f32.mrb[0].mxu0
        %624 = vmatprep.mubr.bf16.mxu0 0
        %625 = vmatmul.mubr.bf16.gmra.mrb[0].mxu0 %v420
        %v626 = vpop.f32.mrb[0].mxu0
        %v627 = vadd.f32 0.0, %v626
        %v628 = vpop.f32.mrb[0].mxu0
        %v629 = vpop.f32.mrb[0].mxu0
        %v630 = vadd.f32 0.0, %v629
        %v631 = vpop.f32.mrb[0].mxu0
        %632 = vmatprep.mubr.bf16.mxu0 0
        %633 = vmatmul.mubr.bf16.gmra.mrb[0].mxu0 %v421
        %v634 = vpop.f32.mrb[0].mxu0
        %v635 = vadd.f32 0.0, %v634
        %v636 = vpop.f32.mrb[0].mxu0
        %v637 = vpop.f32.mrb[0].mxu0
        %v638 = vadd.f32 0.0, %v637
        %v639 = vpop.f32.mrb[0].mxu0
        %640 = vmatprep.mubr.bf16.mxu0 0
        %641 = vmatmul.mubr.bf16.gmra.mrb[0].mxu0 %v422
        %v642 = vpop.f32.mrb[0].mxu0
        %v643 = vadd.f32 0.0, %v642
        %v644 = vpop.f32.mrb[0].mxu0
        %v645 = vpop.f32.mrb[0].mxu0
        %v646 = vadd.f32 0.0, %v645
        %v647 = vpop.f32.mrb[0].mxu0
        %648 = vdwg.mxu0
        %v665 = vunpack.c.l.b16 %v359
        %v666 = vunpack.c.l.b16 %v360
        %v667 = vunpack.c.l.b16 %v361
        %v668 = vunpack.c.l.b16 %v362
        %v669 = vunpack.c.l.b16 %v363
        %v670 = vunpack.c.l.b16 %v364
        %v671 = vunpack.c.l.b16 %v365
        %v672 = vunpack.c.l.b16 %v366
        %v673 = vunpack.c.l.b16 %v367
        %v674 = vunpack.c.l.b16 %v368
        %v675 = vunpack.c.l.b16 %v369
        %v676 = vunpack.c.l.b16 %v370
        %v677 = vunpack.c.l.b16 %v371
        %v678 = vunpack.c.l.b16 %v372
        %v679 = vunpack.c.l.b16 %v373
        %v680 = vunpack.c.l.b16 %v374
        %v681 = vpack.c.b16 %v666, %v665
        %v682 = vpack.c.b16 %v668, %v667
        %v683 = vpack.c.b16 %v670, %v669
        %v684 = vpack.c.b16 %v672, %v671
        %v685 = vpack.c.b16 %v674, %v673
        %v686 = vpack.c.b16 %v676, %v675
        %v687 = vpack.c.b16 %v678, %v677
        %v688 = vpack.c.b16 %v680, %v679
        %697 = vmatprep.subr.bf16.mxu0 0
        %698 = vmatpush1.bf16.msra.mxu0 %v681
        %699 = vmatprep.subr.bf16.mxu0 0
        %700 = vmatpush1.bf16.msra.mxu0 %v682
        %701 = vmatprep.subr.bf16.mxu0 0
        %702 = vmatpush1.bf16.msra.mxu0 %v683
        %703 = vmatprep.subr.bf16.mxu0 0
        %704 = vmatpush1.bf16.msra.mxu0 %v684
        %705 = vmatprep.subr.bf16.mxu0 0
        %706 = vmatpush1.bf16.msra.mxu0 %v685
        %707 = vmatprep.subr.bf16.mxu0 0
        %708 = vmatpush1.bf16.msra.mxu0 %v686
        %709 = vmatprep.subr.bf16.mxu0 0
        %710 = vmatpush1.bf16.msra.mxu0 %v687
        %711 = vmatprep.subr.bf16.mxu0 0
        %712 = vmatpush1.bf16.msra.mxu0 %v688
        %713 = vmatprep.subr.bf16.mxu0 0
        %714 = vmatpush1.bf16.msra.mxu0 0
        %715 = vmatprep.subr.bf16.mxu0 0
        %716 = vmatpush1.bf16.msra.mxu0 0
        %717 = vmatprep.subr.bf16.mxu0 0
        %718 = vmatpush1.bf16.msra.mxu0 0
        %719 = vmatprep.subr.bf16.mxu0 0
        %720 = vmatpush1.bf16.msra.mxu0 0
        %721 = vmatprep.subr.bf16.mxu0 0
        %722 = vmatpush1.bf16.msra.mxu0 0
        %723 = vmatprep.subr.bf16.mxu0 0
        %724 = vmatpush1.bf16.msra.mxu0 0
        %725 = vmatprep.subr.bf16.mxu0 0
        %726 = vmatpush1.bf16.msra.mxu0 0
        %727 = vmatprep.subr.bf16.mxu0 0
        %728 = vmatpush1.bf16.msra.mxu0 0
        %729 = vmatprep.mubr.bf16.mxu0 0
        %730 = vmatmul.mubr.bf16.gmra.mrb[0].mxu0 %v343
        %v731 = vpop.f32.mrb[0].mxu0
        %v732 = vadd.f32 %v523, %v731
        %v733 = vpop.f32.mrb[0].mxu0
        %v734 = vpop.f32.mrb[0].mxu0
        %v735 = vadd.f32 %v526, %v734
        %v736 = vpop.f32.mrb[0].mxu0
        %737 = vmatprep.mubr.bf16.mxu0 0
        %738 = vmatmul.mubr.bf16.gmra.mrb[0].mxu0 %v344
        %v739 = vpop.f32.mrb[0].mxu0
        %v740 = vadd.f32 %v531, %v739
        %v741 = vpop.f32.mrb[0].mxu0
        %v742 = vpop.f32.mrb[0].mxu0
        %v743 = vadd.f32 %v534, %v742
        %v744 = vpop.f32.mrb[0].mxu0
        %745 = vmatprep.mubr.bf16.mxu0 0
        %746 = vmatmul.mubr.bf16.gmra.mrb[0].mxu0 %v345
        %v747 = vpop.f32.mrb[0].mxu0
        %v748 = vadd.f32 %v539, %v747
        %v749 = vpop.f32.mrb[0].mxu0
        %v750 = vpop.f32.mrb[0].mxu0
        %v751 = vadd.f32 %v542, %v750
        %v752 = vpop.f32.mrb[0].mxu0
        %753 = vmatprep.mubr.bf16.mxu0 0
        %754 = vmatmul.mubr.bf16.gmra.mrb[0].mxu0 %v346
        %v755 = vpop.f32.mrb[0].mxu0
        %v756 = vadd.f32 %v547, %v755
        %v757 = vpop.f32.mrb[0].mxu0
        %v758 = vpop.f32.mrb[0].mxu0
        %v759 = vadd.f32 %v550, %v758
        %v760 = vpop.f32.mrb[0].mxu0
        %761 = vmatprep.mubr.bf16.mxu0 0
        %762 = vmatmul.mubr.bf16.gmra.mrb[0].mxu0 %v347
        %v763 = vpop.f32.mrb[0].mxu0
        %v764 = vadd.f32 %v555, %v763
        %v765 = vpop.f32.mrb[0].mxu0
        %v766 = vpop.f32.mrb[0].mxu0
        %v767 = vadd.f32 %v558, %v766
        %v768 = vpop.f32.mrb[0].mxu0
        %769 = vmatprep.mubr.bf16.mxu0 0
        %770 = vmatmul.mubr.bf16.gmra.mrb[0].mxu0 %v348
        %v771 = vpop.f32.mrb[0].mxu0
        %v772 = vadd.f32 %v563, %v771
        %v773 = vpop.f32.mrb[0].mxu0
        %v774 = vpop.f32.mrb[0].mxu0
        %v775 = vadd.f32 %v566, %v774
        %v776 = vpop.f32.mrb[0].mxu0
        %777 = vmatprep.mubr.bf16.mxu0 0
        %778 = vmatmul.mubr.bf16.gmra.mrb[0].mxu0 %v349
        %v779 = vpop.f32.mrb[0].mxu0
        %v780 = vadd.f32 %v571, %v779
        %v781 = vpop.f32.mrb[0].mxu0
        %v782 = vpop.f32.mrb[0].mxu0
        %v783 = vadd.f32 %v574, %v782
        %v784 = vpop.f32.mrb[0].mxu0
        %785 = vmatprep.mubr.bf16.mxu0 0
        %786 = vmatmul.mubr.bf16.gmra.mrb[0].mxu0 %v350
        %v787 = vpop.f32.mrb[0].mxu0
        %v788 = vadd.f32 %v579, %v787
        %v789 = vpop.f32.mrb[0].mxu0
        %v790 = vpop.f32.mrb[0].mxu0
        %v791 = vadd.f32 %v582, %v790
        %v792 = vpop.f32.mrb[0].mxu0
        %793 = vmatprep.mubr.bf16.mxu0 0
        %794 = vmatmul.mubr.bf16.gmra.mrb[0].mxu0 %v351
        %v795 = vpop.f32.mrb[0].mxu0
        %v796 = vadd.f32 %v587, %v795
        %v797 = vpop.f32.mrb[0].mxu0
        %v798 = vpop.f32.mrb[0].mxu0
        %v799 = vadd.f32 %v590, %v798
        %v800 = vpop.f32.mrb[0].mxu0
        %801 = vmatprep.mubr.bf16.mxu0 0
        %802 = vmatmul.mubr.bf16.gmra.mrb[0].mxu0 %v352
        %v803 = vpop.f32.mrb[0].mxu0
        %v804 = vadd.f32 %v595, %v803
        %v805 = vpop.f32.mrb[0].mxu0
        %v806 = vpop.f32.mrb[0].mxu0
        %v807 = vadd.f32 %v598, %v806
        %v808 = vpop.f32.mrb[0].mxu0
        %809 = vmatprep.mubr.bf16.mxu0 0
        %810 = vmatmul.mubr.bf16.gmra.mrb[0].mxu0 %v353
        %v811 = vpop.f32.mrb[0].mxu0
        %v812 = vadd.f32 %v603, %v811
        %v813 = vpop.f32.mrb[0].mxu0
        %v814 = vpop.f32.mrb[0].mxu0
        %v815 = vadd.f32 %v606, %v814
        %v816 = vpop.f32.mrb[0].mxu0
        %817 = vmatprep.mubr.bf16.mxu0 0
        %818 = vmatmul.mubr.bf16.gmra.mrb[0].mxu0 %v354
        %v819 = vpop.f32.mrb[0].mxu0
        %v820 = vadd.f32 %v611, %v819
        %v821 = vpop.f32.mrb[0].mxu0
        %v822 = vpop.f32.mrb[0].mxu0
        %v823 = vadd.f32 %v614, %v822
        %v824 = vpop.f32.mrb[0].mxu0
        %825 = vmatprep.mubr.bf16.mxu0 0
        %826 = vmatmul.mubr.bf16.gmra.mrb[0].mxu0 %v355
        %v827 = vpop.f32.mrb[0].mxu0
        %v828 = vadd.f32 %v619, %v827
        %v829 = vpop.f32.mrb[0].mxu0
        %v830 = vpop.f32.mrb[0].mxu0
        %v831 = vadd.f32 %v622, %v830
        %v832 = vpop.f32.mrb[0].mxu0
        %833 = vmatprep.mubr.bf16.mxu0 0
        %834 = vmatmul.mubr.bf16.gmra.mrb[0].mxu0 %v356
        %v835 = vpop.f32.mrb[0].mxu0
        %v836 = vadd.f32 %v627, %v835
        %v837 = vpop.f32.mrb[0].mxu0
        %v838 = vpop.f32.mrb[0].mxu0
        %v839 = vadd.f32 %v630, %v838
        %v840 = vpop.f32.mrb[0].mxu0
        %841 = vmatprep.mubr.bf16.mxu0 0
        %842 = vmatmul.mubr.bf16.gmra.mrb[0].mxu0 %v357
        %v843 = vpop.f32.mrb[0].mxu0
        %v844 = vadd.f32 %v635, %v843
        %v845 = vpop.f32.mrb[0].mxu0
        %v846 = vpop.f32.mrb[0].mxu0
        %v847 = vadd.f32 %v638, %v846
        %v848 = vpop.f32.mrb[0].mxu0
        %849 = vmatprep.mubr.bf16.mxu0 0
        %850 = vmatmul.mubr.bf16.gmra.mrb[0].mxu0 %v358
        %v851 = vpop.f32.mrb[0].mxu0
        %v852 = vadd.f32 %v643, %v851
        %v853 = vpop.f32.mrb[0].mxu0
        %v854 = vpop.f32.mrb[0].mxu0
        %v855 = vadd.f32 %v646, %v854
        %v856 = vpop.f32.mrb[0].mxu0
        %857 = vdwg.mxu0
        %v858 = vld [vmem:[%s307 + $0x2] sm:$0xff]
        %v859 = vld [vmem:[%s307 + $0x12] sm:$0xff]
        %v860 = vld [vmem:[%s307 + $0x22] sm:$0xff]
        %v861 = vld [vmem:[%s307 + $0x32] sm:$0xff]
        %v862 = vld [vmem:[%s307 + $0x42] sm:$0xff]
        %v863 = vld [vmem:[%s307 + $0x52] sm:$0xff]
        %v864 = vld [vmem:[%s307 + $0x62] sm:$0xff]
        %v865 = vld [vmem:[%s307 + $0x72] sm:$0xff]
        %v866 = vld [vmem:[%s307 + $0x82] sm:$0xff]
        %v867 = vld [vmem:[%s307 + $0x92] sm:$0xff]
        %v868 = vld [vmem:[%s307 + $0xa2] sm:$0xff]
        %v869 = vld [vmem:[%s307 + $0xb2] sm:$0xff]
        %v870 = vld [vmem:[%s307 + $0xc2] sm:$0xff]
        %v871 = vld [vmem:[%s307 + $0xd2] sm:$0xff]
        %v872 = vld [vmem:[%s307 + $0xe2] sm:$0xff]
        %v873 = vld [vmem:[%s307 + $0xf2] sm:$0xff]
        %v874 = vld [vmem:[%s307 + $0x102] sm:$0xff]
        %v875 = vld [vmem:[%s307 + $0x112] sm:$0xff]
        %v876 = vld [vmem:[%s307 + $0x122] sm:$0xff]
        %v877 = vld [vmem:[%s307 + $0x132] sm:$0xff]
        %v878 = vld [vmem:[%s307 + $0x142] sm:$0xff]
        %v879 = vld [vmem:[%s307 + $0x152] sm:$0xff]
        %v880 = vld [vmem:[%s307 + $0x162] sm:$0xff]
        %v881 = vld [vmem:[%s307 + $0x172] sm:$0xff]
        %v882 = vld [vmem:[%s307 + $0x182] sm:$0xff]
        %v883 = vld [vmem:[%s307 + $0x192] sm:$0xff]
        %v884 = vld [vmem:[%s307 + $0x1a2] sm:$0xff]
        %v885 = vld [vmem:[%s307 + $0x1b2] sm:$0xff]
        %v886 = vld [vmem:[%s307 + $0x1c2] sm:$0xff]
        %v887 = vld [vmem:[%s307 + $0x1d2] sm:$0xff]
        %v888 = vld [vmem:[%s307 + $0x1e2] sm:$0xff]
        %v889 = vld [vmem:[%s307 + $0x1f2] sm:$0xff]
        %v890 = vpack.c.bf16 %v859, %v858
        %v891 = vpack.c.bf16 %v861, %v860
        %v892 = vpack.c.bf16 %v863, %v862
        %v893 = vpack.c.bf16 %v865, %v864
        %v894 = vpack.c.bf16 %v867, %v866
        %v895 = vpack.c.bf16 %v869, %v868
        %v896 = vpack.c.bf16 %v871, %v870
        %v897 = vpack.c.bf16 %v873, %v872
        %v898 = vpack.c.bf16 %v875, %v874
        %v899 = vpack.c.bf16 %v877, %v876
        %v900 = vpack.c.bf16 %v879, %v878
        %v901 = vpack.c.bf16 %v881, %v880
        %v902 = vpack.c.bf16 %v883, %v882
        %v903 = vpack.c.bf16 %v885, %v884
        %v904 = vpack.c.bf16 %v887, %v886
        %v905 = vpack.c.bf16 %v889, %v888
        %s906 = scalar_lea.vmem %s1, 128
        %v907 = vld [vmem:[%s906] sm:$0xf]
        %v908 = vld [vmem:[%s906 + $0x4] sm:$0xf]
        %v909 = vld [vmem:[%s906 + $0x8] sm:$0xf]
        %v910 = vld [vmem:[%s906 + $0xc] sm:$0xf]
        %v911 = vld [vmem:[%s906 + $0x10] sm:$0xf]
        %v912 = vld [vmem:[%s906 + $0x14] sm:$0xf]
        %v913 = vld [vmem:[%s906 + $0x18] sm:$0xf]
        %v914 = vld [vmem:[%s906 + $0x1c] sm:$0xf]
        %v915 = vld [vmem:[%s906 + $0x20] sm:$0xf]
        %v916 = vld [vmem:[%s906 + $0x24] sm:$0xf]
        %v917 = vld [vmem:[%s906 + $0x28] sm:$0xf]
        %v918 = vld [vmem:[%s906 + $0x2c] sm:$0xf]
        %v919 = vld [vmem:[%s906 + $0x30] sm:$0xf]
        %v920 = vld [vmem:[%s906 + $0x34] sm:$0xf]
        %v921 = vld [vmem:[%s906 + $0x38] sm:$0xf]
        %v922 = vld [vmem:[%s906 + $0x3c] sm:$0xf]
        %v939 = vunpack.c.l.b16 %v907
        %v940 = vunpack.c.l.b16 %v908
        %v941 = vunpack.c.l.b16 %v909
        %v942 = vunpack.c.l.b16 %v910
        %v943 = vunpack.c.l.b16 %v911
        %v944 = vunpack.c.l.b16 %v912
        %v945 = vunpack.c.l.b16 %v913
        %v946 = vunpack.c.l.b16 %v914
        %v947 = vunpack.c.l.b16 %v915
        %v948 = vunpack.c.l.b16 %v916
        %v949 = vunpack.c.l.b16 %v917
        %v950 = vunpack.c.l.b16 %v918
        %v951 = vunpack.c.l.b16 %v919
        %v952 = vunpack.c.l.b16 %v920
        %v953 = vunpack.c.l.b16 %v921
        %v954 = vunpack.c.l.b16 %v922
        %v955 = vpack.c.b16 %v940, %v939
        %v956 = vpack.c.b16 %v942, %v941
        %v957 = vpack.c.b16 %v944, %v943
        %v958 = vpack.c.b16 %v946, %v945
        %v959 = vpack.c.b16 %v948, %v947
        %v960 = vpack.c.b16 %v950, %v949
        %v961 = vpack.c.b16 %v952, %v951
        %v962 = vpack.c.b16 %v954, %v953
        %971 = vmatprep.subr.bf16.mxu0 0
        %972 = vmatpush1.bf16.msra.mxu0 %v955
        %973 = vmatprep.subr.bf16.mxu0 0
        %974 = vmatpush1.bf16.msra.mxu0 %v956
        %975 = vmatprep.subr.bf16.mxu0 0
        %976 = vmatpush1.bf16.msra.mxu0 %v957
        %977 = vmatprep.subr.bf16.mxu0 0
        %978 = vmatpush1.bf16.msra.mxu0 %v958
        %979 = vmatprep.subr.bf16.mxu0 0
        %980 = vmatpush1.bf16.msra.mxu0 %v959
        %981 = vmatprep.subr.bf16.mxu0 0
        %982 = vmatpush1.bf16.msra.mxu0 %v960
        %983 = vmatprep.subr.bf16.mxu0 0
        %984 = vmatpush1.bf16.msra.mxu0 %v961
        %985 = vmatprep.subr.bf16.mxu0 0
        %986 = vmatpush1.bf16.msra.mxu0 %v962
        %987 = vmatprep.subr.bf16.mxu0 0
        %988 = vmatpush1.bf16.msra.mxu0 0
        %989 = vmatprep.subr.bf16.mxu0 0
        %990 = vmatpush1.bf16.msra.mxu0 0
        %991 = vmatprep.subr.bf16.mxu0 0
        %992 = vmatpush1.bf16.msra.mxu0 0
        %993 = vmatprep.subr.bf16.mxu0 0
        %994 = vmatpush1.bf16.msra.mxu0 0
        %995 = vmatprep.subr.bf16.mxu0 0
        %996 = vmatpush1.bf16.msra.mxu0 0
        %997 = vmatprep.subr.bf16.mxu0 0
        %998 = vmatpush1.bf16.msra.mxu0 0
        %999 = vmatprep.subr.bf16.mxu0 0
        %1000 = vmatpush1.bf16.msra.mxu0 0
        %1001 = vmatprep.subr.bf16.mxu0 0
        %1002 = vmatpush1.bf16.msra.mxu0 0
        %1003 = vmatprep.mubr.bf16.mxu0 0
        %1004 = vmatmul.mubr.bf16.gmra.mrb[0].mxu0 %v890
        %v1005 = vpop.f32.mrb[0].mxu0
        %v1006 = vadd.f32 0.0, %v1005
        %v1007 = vpop.f32.mrb[0].mxu0
        %v1008 = vpop.f32.mrb[0].mxu0
        %v1009 = vadd.f32 0.0, %v1008
        %v1010 = vpop.f32.mrb[0].mxu0
        %1011 = vmatprep.mubr.bf16.mxu0 0
        %1012 = vmatmul.mubr.bf16.gmra.mrb[0].mxu0 %v891
        %v1013 = vpop.f32.mrb[0].mxu0
        %v1014 = vadd.f32 0.0, %v1013
        %v1015 = vpop.f32.mrb[0].mxu0
        %v1016 = vpop.f32.mrb[0].mxu0
        %v1017 = vadd.f32 0.0, %v1016
        %v1018 = vpop.f32.mrb[0].mxu0
        %1019 = vmatprep.mubr.bf16.mxu0 0
        %1020 = vmatmul.mubr.bf16.gmra.mrb[0].mxu0 %v892
        %v1021 = vpop.f32.mrb[0].mxu0
        %v1022 = vadd.f32 0.0, %v1021
        %v1023 = vpop.f32.mrb[0].mxu0
        %v1024 = vpop.f32.mrb[0].mxu0
        %v1025 = vadd.f32 0.0, %v1024
        %v1026 = vpop.f32.mrb[0].mxu0
        %1027 = vmatprep.mubr.bf16.mxu0 0
        %1028 = vmatmul.mubr.bf16.gmra.mrb[0].mxu0 %v893
        %v1029 = vpop.f32.mrb[0].mxu0
        %v1030 = vadd.f32 0.0, %v1029
        %v1031 = vpop.f32.mrb[0].mxu0
        %v1032 = vpop.f32.mrb[0].mxu0
        %v1033 = vadd.f32 0.0, %v1032
        %v1034 = vpop.f32.mrb[0].mxu0
        %1035 = vmatprep.mubr.bf16.mxu0 0
        %1036 = vmatmul.mubr.bf16.gmra.mrb[0].mxu0 %v894
        %v1037 = vpop.f32.mrb[0].mxu0
        %v1038 = vadd.f32 0.0, %v1037
        %v1039 = vpop.f32.mrb[0].mxu0
        %v1040 = vpop.f32.mrb[0].mxu0
        %v1041 = vadd.f32 0.0, %v1040
        %v1042 = vpop.f32.mrb[0].mxu0
        %1043 = vmatprep.mubr.bf16.mxu0 0
        %1044 = vmatmul.mubr.bf16.gmra.mrb[0].mxu0 %v895
        %v1045 = vpop.f32.mrb[0].mxu0
        %v1046 = vadd.f32 0.0, %v1045
        %v1047 = vpop.f32.mrb[0].mxu0
        %v1048 = vpop.f32.mrb[0].mxu0
        %v1049 = vadd.f32 0.0, %v1048
        %v1050 = vpop.f32.mrb[0].mxu0
        %1051 = vmatprep.mubr.bf16.mxu0 0
        %1052 = vmatmul.mubr.bf16.gmra.mrb[0].mxu0 %v896
        %v1053 = vpop.f32.mrb[0].mxu0
        %v1054 = vadd.f32 0.0, %v1053
        %v1055 = vpop.f32.mrb[0].mxu0
        %v1056 = vpop.f32.mrb[0].mxu0
        %v1057 = vadd.f32 0.0, %v1056
        %v1058 = vpop.f32.mrb[0].mxu0
        %1059 = vmatprep.mubr.bf16.mxu0 0
        %1060 = vmatmul.mubr.bf16.gmra.mrb[0].mxu0 %v897
        %v1061 = vpop.f32.mrb[0].mxu0
        %v1062 = vadd.f32 0.0, %v1061
        %v1063 = vpop.f32.mrb[0].mxu0
        %v1064 = vpop.f32.mrb[0].mxu0
        %v1065 = vadd.f32 0.0, %v1064
        %v1066 = vpop.f32.mrb[0].mxu0
        %1067 = vmatprep.mubr.bf16.mxu0 0
        %1068 = vmatmul.mubr.bf16.gmra.mrb[0].mxu0 %v898
        %v1069 = vpop.f32.mrb[0].mxu0
        %v1070 = vadd.f32 0.0, %v1069
        %v1071 = vpop.f32.mrb[0].mxu0
        %v1072 = vpop.f32.mrb[0].mxu0
        %v1073 = vadd.f32 0.0, %v1072
        %v1074 = vpop.f32.mrb[0].mxu0
        %1075 = vmatprep.mubr.bf16.mxu0 0
        %1076 = vmatmul.mubr.bf16.gmra.mrb[0].mxu0 %v899
        %v1077 = vpop.f32.mrb[0].mxu0
        %v1078 = vadd.f32 0.0, %v1077
        %v1079 = vpop.f32.mrb[0].mxu0
        %v1080 = vpop.f32.mrb[0].mxu0
        %v1081 = vadd.f32 0.0, %v1080
        %v1082 = vpop.f32.mrb[0].mxu0
        %1083 = vmatprep.mubr.bf16.mxu0 0
        %1084 = vmatmul.mubr.bf16.gmra.mrb[0].mxu0 %v900
        %v1085 = vpop.f32.mrb[0].mxu0
        %v1086 = vadd.f32 0.0, %v1085
        %v1087 = vpop.f32.mrb[0].mxu0
        %v1088 = vpop.f32.mrb[0].mxu0
        %v1089 = vadd.f32 0.0, %v1088
        %v1090 = vpop.f32.mrb[0].mxu0
        %1091 = vmatprep.mubr.bf16.mxu0 0
        %1092 = vmatmul.mubr.bf16.gmra.mrb[0].mxu0 %v901
        %v1093 = vpop.f32.mrb[0].mxu0
        %v1094 = vadd.f32 0.0, %v1093
        %v1095 = vpop.f32.mrb[0].mxu0
        %v1096 = vpop.f32.mrb[0].mxu0
        %v1097 = vadd.f32 0.0, %v1096
        %v1098 = vpop.f32.mrb[0].mxu0
        %1099 = vmatprep.mubr.bf16.mxu0 0
        %1100 = vmatmul.mubr.bf16.gmra.mrb[0].mxu0 %v902
        %v1101 = vpop.f32.mrb[0].mxu0
        %v1102 = vadd.f32 0.0, %v1101
        %v1103 = vpop.f32.mrb[0].mxu0
        %v1104 = vpop.f32.mrb[0].mxu0
        %v1105 = vadd.f32 0.0, %v1104
        %v1106 = vpop.f32.mrb[0].mxu0
        %1107 = vmatprep.mubr.bf16.mxu0 0
        %1108 = vmatmul.mubr.bf16.gmra.mrb[0].mxu0 %v903
        %v1109 = vpop.f32.mrb[0].mxu0
        %v1110 = vadd.f32 0.0, %v1109
        %v1111 = vpop.f32.mrb[0].mxu0
        %v1112 = vpop.f32.mrb[0].mxu0
        %v1113 = vadd.f32 0.0, %v1112
        %v1114 = vpop.f32.mrb[0].mxu0
        %1115 = vmatprep.mubr.bf16.mxu0 0
        %1116 = vmatmul.mubr.bf16.gmra.mrb[0].mxu0 %v904
        %v1117 = vpop.f32.mrb[0].mxu0
        %v1118 = vadd.f32 0.0, %v1117
        %v1119 = vpop.f32.mrb[0].mxu0
        %v1120 = vpop.f32.mrb[0].mxu0
        %v1121 = vadd.f32 0.0, %v1120
        %v1122 = vpop.f32.mrb[0].mxu0
        %1123 = vmatprep.mubr.bf16.mxu0 0
        %1124 = vmatmul.mubr.bf16.gmra.mrb[0].mxu0 %v905
        %v1125 = vpop.f32.mrb[0].mxu0
        %v1126 = vadd.f32 0.0, %v1125
        %v1127 = vpop.f32.mrb[0].mxu0
        %v1128 = vpop.f32.mrb[0].mxu0
        %v1129 = vadd.f32 0.0, %v1128
        %v1130 = vpop.f32.mrb[0].mxu0
        %1131 = vdwg.mxu0
        %v1132 = vadd.f32 %v732, %v1006
        %v1133 = vadd.f32 %v735, %v1009
        %v1134 = vadd.f32 %v740, %v1014
        %v1135 = vadd.f32 %v743, %v1017
        %v1136 = vadd.f32 %v748, %v1022
        %v1137 = vadd.f32 %v751, %v1025
        %v1138 = vadd.f32 %v756, %v1030
        %v1139 = vadd.f32 %v759, %v1033
        %v1140 = vadd.f32 %v764, %v1038
        %v1141 = vadd.f32 %v767, %v1041
        %v1142 = vadd.f32 %v772, %v1046
        %v1143 = vadd.f32 %v775, %v1049
        %v1144 = vadd.f32 %v780, %v1054
        %v1145 = vadd.f32 %v783, %v1057
        %v1146 = vadd.f32 %v788, %v1062
        %v1147 = vadd.f32 %v791, %v1065
        %v1148 = vadd.f32 %v796, %v1070
        %v1149 = vadd.f32 %v799, %v1073
        %v1150 = vadd.f32 %v804, %v1078
        %v1151 = vadd.f32 %v807, %v1081
        %v1152 = vadd.f32 %v812, %v1086
        %v1153 = vadd.f32 %v815, %v1089
        %v1154 = vadd.f32 %v820, %v1094
        %v1155 = vadd.f32 %v823, %v1097
        %v1156 = vadd.f32 %v828, %v1102
        %v1157 = vadd.f32 %v831, %v1105
        %v1158 = vadd.f32 %v836, %v1110
        %v1159 = vadd.f32 %v839, %v1113
        %v1160 = vadd.f32 %v844, %v1118
        %v1161 = vadd.f32 %v847, %v1121
        %v1162 = vadd.f32 %v852, %v1126
        %v1163 = vadd.f32 %v855, %v1129
        %v1164 = vld [vmem:[%s3] sm:$0x1]
        %v1165 = vlaneseq
        %v1166 = vshrl.u32 %v1165, 7
        %v1167 = vsub.s32 0, %v1166
        %v1168 = vrot.slane %v1164, %v1167
        %v1169 = vmul.f32 %v1132, %v1168
        %v1170 = vmul.f32 %v1133, %v1168
        %v1171 = vmul.f32 %v1134, %v1168
        %v1172 = vmul.f32 %v1135, %v1168
        %v1173 = vmul.f32 %v1136, %v1168
        %v1174 = vmul.f32 %v1137, %v1168
        %v1175 = vmul.f32 %v1138, %v1168
        %v1176 = vmul.f32 %v1139, %v1168
        %v1177 = vmul.f32 %v1140, %v1168
        %v1178 = vmul.f32 %v1141, %v1168
        %v1179 = vmul.f32 %v1142, %v1168
        %v1180 = vmul.f32 %v1143, %v1168
        %v1181 = vmul.f32 %v1144, %v1168
        %v1182 = vmul.f32 %v1145, %v1168
        %v1183 = vmul.f32 %v1146, %v1168
        %v1184 = vmul.f32 %v1147, %v1168
        %v1185 = vmul.f32 %v1148, %v1168
        %v1186 = vmul.f32 %v1149, %v1168
        %v1187 = vmul.f32 %v1150, %v1168
        %v1188 = vmul.f32 %v1151, %v1168
        %v1189 = vmul.f32 %v1152, %v1168
        %v1190 = vmul.f32 %v1153, %v1168
        %v1191 = vmul.f32 %v1154, %v1168
        %v1192 = vmul.f32 %v1155, %v1168
        %v1193 = vmul.f32 %v1156, %v1168
        %v1194 = vmul.f32 %v1157, %v1168
        %v1195 = vmul.f32 %v1158, %v1168
        %v1196 = vmul.f32 %v1159, %v1168
        %v1197 = vmul.f32 %v1160, %v1168
        %v1198 = vmul.f32 %v1161, %v1168
        %v1199 = vmul.f32 %v1162, %v1168
        %v1200 = vmul.f32 %v1163, %v1168
        %v1201 = vld [vmem:[%s3 + $0x1] sm:$0x1]
        %v1202 = vlaneseq
        %v1203 = vshrl.u32 %v1202, 7
        %v1204 = vsub.s32 0, %v1203
        %v1205 = vrot.slane %v1201, %v1204
        %v1206 = vadd.f32 %v1169, %v1205
        %v1207 = vadd.f32 %v1170, %v1205
        %v1208 = vadd.f32 %v1171, %v1205
        %v1209 = vadd.f32 %v1172, %v1205
        %v1210 = vadd.f32 %v1173, %v1205
        %v1211 = vadd.f32 %v1174, %v1205
        %v1212 = vadd.f32 %v1175, %v1205
        %v1213 = vadd.f32 %v1176, %v1205
        %v1214 = vadd.f32 %v1177, %v1205
        %v1215 = vadd.f32 %v1178, %v1205
        %v1216 = vadd.f32 %v1179, %v1205
        %v1217 = vadd.f32 %v1180, %v1205
        %v1218 = vadd.f32 %v1181, %v1205
        %v1219 = vadd.f32 %v1182, %v1205
        %v1220 = vadd.f32 %v1183, %v1205
        %v1221 = vadd.f32 %v1184, %v1205
        %v1222 = vadd.f32 %v1185, %v1205
        %v1223 = vadd.f32 %v1186, %v1205
        %v1224 = vadd.f32 %v1187, %v1205
        %v1225 = vadd.f32 %v1188, %v1205
        %v1226 = vadd.f32 %v1189, %v1205
        %v1227 = vadd.f32 %v1190, %v1205
        %v1228 = vadd.f32 %v1191, %v1205
        %v1229 = vadd.f32 %v1192, %v1205
        %v1230 = vadd.f32 %v1193, %v1205
        %v1231 = vadd.f32 %v1194, %v1205
        %v1232 = vadd.f32 %v1195, %v1205
        %v1233 = vadd.f32 %v1196, %v1205
        %v1234 = vadd.f32 %v1197, %v1205
        %v1235 = vadd.f32 %v1198, %v1205
        %v1236 = vadd.f32 %v1199, %v1205
        %v1237 = vadd.f32 %v1200, %v1205
        %v1238 = vmax.f32 %v1206, 0.0
        %v1239 = vmax.f32 %v1207, 0.0
        %v1240 = vmax.f32 %v1208, 0.0
        %v1241 = vmax.f32 %v1209, 0.0
        %v1242 = vmax.f32 %v1210, 0.0
        %v1243 = vmax.f32 %v1211, 0.0
        %v1244 = vmax.f32 %v1212, 0.0
        %v1245 = vmax.f32 %v1213, 0.0
        %v1246 = vmax.f32 %v1214, 0.0
        %v1247 = vmax.f32 %v1215, 0.0
        %v1248 = vmax.f32 %v1216, 0.0
        %v1249 = vmax.f32 %v1217, 0.0
        %v1250 = vmax.f32 %v1218, 0.0
        %v1251 = vmax.f32 %v1219, 0.0
        %v1252 = vmax.f32 %v1220, 0.0
        %v1253 = vmax.f32 %v1221, 0.0
        %v1254 = vmax.f32 %v1222, 0.0
        %v1255 = vmax.f32 %v1223, 0.0
        %v1256 = vmax.f32 %v1224, 0.0
        %v1257 = vmax.f32 %v1225, 0.0
        %v1258 = vmax.f32 %v1226, 0.0
        %v1259 = vmax.f32 %v1227, 0.0
        %v1260 = vmax.f32 %v1228, 0.0
        %v1261 = vmax.f32 %v1229, 0.0
        %v1262 = vmax.f32 %v1230, 0.0
        %v1263 = vmax.f32 %v1231, 0.0
        %v1264 = vmax.f32 %v1232, 0.0
        %v1265 = vmax.f32 %v1233, 0.0
        %v1266 = vmax.f32 %v1234, 0.0
        %v1267 = vmax.f32 %v1235, 0.0
        %v1268 = vmax.f32 %v1236, 0.0
        %v1269 = vmax.f32 %v1237, 0.0
        %1270 = vst [vmem:[#allocation2] sm:$0x1] 0.0
        %1271 = vst [vmem:[#allocation2 + $0x10] sm:$0x1] 0.0
        %1272 = vst [vmem:[#allocation2 + $0x20] sm:$0x1] 0.0
        %1273 = vst [vmem:[#allocation2 + $0x30] sm:$0x1] 0.0
        %1274 = vst [vmem:[#allocation2 + $0x40] sm:$0x1] 0.0
        %1275 = vst [vmem:[#allocation2 + $0x50] sm:$0x1] 0.0
        %1276 = vst [vmem:[#allocation2 + $0x60] sm:$0x1] 0.0
        %1277 = vst [vmem:[#allocation2 + $0x70] sm:$0x1] 0.0
        %1278 = vst [vmem:[#allocation2 + $0x80] sm:$0x1] 0.0
        %1279 = vst [vmem:[#allocation2 + $0x90] sm:$0x1] 0.0
        %1280 = vst [vmem:[#allocation2 + $0xa0] sm:$0x1] 0.0
        %1281 = vst [vmem:[#allocation2 + $0xb0] sm:$0x1] 0.0
        %1282 = vst [vmem:[#allocation2 + $0xc0] sm:$0x1] 0.0
        %1283 = vst [vmem:[#allocation2 + $0xd0] sm:$0x1] 0.0
        %1284 = vst [vmem:[#allocation2 + $0xe0] sm:$0x1] 0.0
        %1285 = vst [vmem:[#allocation2 + $0xf0] sm:$0x1] 0.0
        %1286 = vst [vmem:[#allocation2 + $0x100] sm:$0x1] 0.0
        %1287 = vst [vmem:[#allocation2 + $0x110] sm:$0x1] 0.0
        %1288 = vst [vmem:[#allocation2 + $0x120] sm:$0x1] 0.0
        %1289 = vst [vmem:[#allocation2 + $0x130] sm:$0x1] 0.0
        %1290 = vst [vmem:[#allocation2 + $0x140] sm:$0x1] 0.0
        %1291 = vst [vmem:[#allocation2 + $0x150] sm:$0x1] 0.0
        %1292 = vst [vmem:[#allocation2 + $0x160] sm:$0x1] 0.0
        %1293 = vst [vmem:[#allocation2 + $0x170] sm:$0x1] 0.0
        %1294 = vst [vmem:[#allocation2 + $0x180] sm:$0x1] 0.0
        %1295 = vst [vmem:[#allocation2 + $0x190] sm:$0x1] 0.0
        %1296 = vst [vmem:[#allocation2 + $0x1a0] sm:$0x1] 0.0
        %1297 = vst [vmem:[#allocation2 + $0x1b0] sm:$0x1] 0.0
        %1298 = vst [vmem:[#allocation2 + $0x1c0] sm:$0x1] 0.0
        %1299 = vst [vmem:[#allocation2 + $0x1d0] sm:$0x1] 0.0
        %1300 = vst [vmem:[#allocation2 + $0x1e0] sm:$0x1] 0.0
        %1301 = vst [vmem:[#allocation2 + $0x1f0] sm:$0x1] 0.0
        %1302 = vst [vmem:[#allocation2 + $0x9] sm:$0x1] 0.0
        %1303 = vst [vmem:[#allocation2 + $0x19] sm:$0x1] 0.0
        %1304 = vst [vmem:[#allocation2 + $0x29] sm:$0x1] 0.0
        %1305 = vst [vmem:[#allocation2 + $0x39] sm:$0x1] 0.0
        %1306 = vst [vmem:[#allocation2 + $0x49] sm:$0x1] 0.0
        %1307 = vst [vmem:[#allocation2 + $0x59] sm:$0x1] 0.0
        %1308 = vst [vmem:[#allocation2 + $0x69] sm:$0x1] 0.0
        %1309 = vst [vmem:[#allocation2 + $0x79] sm:$0x1] 0.0
        %1310 = vst [vmem:[#allocation2 + $0x89] sm:$0x1] 0.0
        %1311 = vst [vmem:[#allocation2 + $0x99] sm:$0x1] 0.0
        %1312 = vst [vmem:[#allocation2 + $0xa9] sm:$0x1] 0.0
        %1313 = vst [vmem:[#allocation2 + $0xb9] sm:$0x1] 0.0
        %1314 = vst [vmem:[#allocation2 + $0xc9] sm:$0x1] 0.0
        %1315 = vst [vmem:[#allocation2 + $0xd9] sm:$0x1] 0.0
        %1316 = vst [vmem:[#allocation2 + $0xe9] sm:$0x1] 0.0
        %1317 = vst [vmem:[#allocation2 + $0xf9] sm:$0x1] 0.0
        %1318 = vst [vmem:[#allocation2 + $0x109] sm:$0x1] 0.0
        %1319 = vst [vmem:[#allocation2 + $0x119] sm:$0x1] 0.0
        %1320 = vst [vmem:[#allocation2 + $0x129] sm:$0x1] 0.0
        %1321 = vst [vmem:[#allocation2 + $0x139] sm:$0x1] 0.0
        %1322 = vst [vmem:[#allocation2 + $0x149] sm:$0x1] 0.0
        %1323 = vst [vmem:[#allocation2 + $0x159] sm:$0x1] 0.0
        %1324 = vst [vmem:[#allocation2 + $0x169] sm:$0x1] 0.0
        %1325 = vst [vmem:[#allocation2 + $0x179] sm:$0x1] 0.0
        %1326 = vst [vmem:[#allocation2 + $0x189] sm:$0x1] 0.0
        %1327 = vst [vmem:[#allocation2 + $0x199] sm:$0x1] 0.0
        %1328 = vst [vmem:[#allocation2 + $0x1a9] sm:$0x1] 0.0
        %1329 = vst [vmem:[#allocation2 + $0x1b9] sm:$0x1] 0.0
        %1330 = vst [vmem:[#allocation2 + $0x1c9] sm:$0x1] 0.0
        %1331 = vst [vmem:[#allocation2 + $0x1d9] sm:$0x1] 0.0
        %1332 = vst [vmem:[#allocation2 + $0x1e9] sm:$0x1] 0.0
        %1333 = vst [vmem:[#allocation2 + $0x1f9] sm:$0x1] 0.0
        %1334 = vst [vmem:[#allocation2 + $0x1] sm:$0xff] %v1238
        %1335 = vst [vmem:[#allocation2 + $0x11] sm:$0xff] %v1239
        %1336 = vst [vmem:[#allocation2 + $0x21] sm:$0xff] %v1240
        %1337 = vst [vmem:[#allocation2 + $0x31] sm:$0xff] %v1241
        %1338 = vst [vmem:[#allocation2 + $0x41] sm:$0xff] %v1242
        %1339 = vst [vmem:[#allocation2 + $0x51] sm:$0xff] %v1243
        %1340 = vst [vmem:[#allocation2 + $0x61] sm:$0xff] %v1244
        %1341 = vst [vmem:[#allocation2 + $0x71] sm:$0xff] %v1245
        %1342 = vst [vmem:[#allocation2 + $0x81] sm:$0xff] %v1246
        %1343 = vst [vmem:[#allocation2 + $0x91] sm:$0xff] %v1247
        %1344 = vst [vmem:[#allocation2 + $0xa1] sm:$0xff] %v1248
        %1345 = vst [vmem:[#allocation2 + $0xb1] sm:$0xff] %v1249
        %1346 = vst [vmem:[#allocation2 + $0xc1] sm:$0xff] %v1250
        %1347 = vst [vmem:[#allocation2 + $0xd1] sm:$0xff] %v1251
        %1348 = vst [vmem:[#allocation2 + $0xe1] sm:$0xff] %v1252
        %1349 = vst [vmem:[#allocation2 + $0xf1] sm:$0xff] %v1253
        %1350 = vst [vmem:[#allocation2 + $0x101] sm:$0xff] %v1254
        %1351 = vst [vmem:[#allocation2 + $0x111] sm:$0xff] %v1255
        %1352 = vst [vmem:[#allocation2 + $0x121] sm:$0xff] %v1256
        %1353 = vst [vmem:[#allocation2 + $0x131] sm:$0xff] %v1257
        %1354 = vst [vmem:[#allocation2 + $0x141] sm:$0xff] %v1258
        %1355 = vst [vmem:[#allocation2 + $0x151] sm:$0xff] %v1259
        %1356 = vst [vmem:[#allocation2 + $0x161] sm:$0xff] %v1260
        %1357 = vst [vmem:[#allocation2 + $0x171] sm:$0xff] %v1261
        %1358 = vst [vmem:[#allocation2 + $0x181] sm:$0xff] %v1262
        %1359 = vst [vmem:[#allocation2 + $0x191] sm:$0xff] %v1263
        %1360 = vst [vmem:[#allocation2 + $0x1a1] sm:$0xff] %v1264
        %1361 = vst [vmem:[#allocation2 + $0x1b1] sm:$0xff] %v1265
        %1362 = vst [vmem:[#allocation2 + $0x1c1] sm:$0xff] %v1266
        %1363 = vst [vmem:[#allocation2 + $0x1d1] sm:$0xff] %v1267
        %1364 = vst [vmem:[#allocation2 + $0x1e1] sm:$0xff] %v1268
        %1365 = vst [vmem:[#allocation2 + $0x1f1] sm:$0xff] %v1269
        %v1366 = vld [vmem:[#allocation2] sm:$0xff]
        %v1367 = vld [vmem:[#allocation2 + $0x10] sm:$0xff]
        %v1368 = vld [vmem:[#allocation2 + $0x20] sm:$0xff]
        %v1369 = vld [vmem:[#allocation2 + $0x30] sm:$0xff]
        %v1370 = vld [vmem:[#allocation2 + $0x40] sm:$0xff]
        %v1371 = vld [vmem:[#allocation2 + $0x50] sm:$0xff]
        %v1372 = vld [vmem:[#allocation2 + $0x60] sm:$0xff]
        %v1373 = vld [vmem:[#allocation2 + $0x70] sm:$0xff]
        %v1374 = vld [vmem:[#allocation2 + $0x80] sm:$0xff]
        %v1375 = vld [vmem:[#allocation2 + $0x90] sm:$0xff]
        %v1376 = vld [vmem:[#allocation2 + $0xa0] sm:$0xff]
        %v1377 = vld [vmem:[#allocation2 + $0xb0] sm:$0xff]
        %v1378 = vld [vmem:[#allocation2 + $0xc0] sm:$0xff]
        %v1379 = vld [vmem:[#allocation2 + $0xd0] sm:$0xff]
        %v1380 = vld [vmem:[#allocation2 + $0xe0] sm:$0xff]
        %v1381 = vld [vmem:[#allocation2 + $0xf0] sm:$0xff]
        %v1382 = vld [vmem:[#allocation2 + $0x100] sm:$0xff]
        %v1383 = vld [vmem:[#allocation2 + $0x110] sm:$0xff]
        %v1384 = vld [vmem:[#allocation2 + $0x120] sm:$0xff]
        %v1385 = vld [vmem:[#allocation2 + $0x130] sm:$0xff]
        %v1386 = vld [vmem:[#allocation2 + $0x140] sm:$0xff]
        %v1387 = vld [vmem:[#allocation2 + $0x150] sm:$0xff]
        %v1388 = vld [vmem:[#allocation2 + $0x160] sm:$0xff]
        %v1389 = vld [vmem:[#allocation2 + $0x170] sm:$0xff]
        %v1390 = vld [vmem:[#allocation2 + $0x180] sm:$0xff]
        %v1391 = vld [vmem:[#allocation2 + $0x190] sm:$0xff]
        %v1392 = vld [vmem:[#allocation2 + $0x1a0] sm:$0xff]
        %v1393 = vld [vmem:[#allocation2 + $0x1b0] sm:$0xff]
        %v1394 = vld [vmem:[#allocation2 + $0x1c0] sm:$0xff]
        %v1395 = vld [vmem:[#allocation2 + $0x1d0] sm:$0xff]
        %v1396 = vld [vmem:[#allocation2 + $0x1e0] sm:$0xff]
        %v1397 = vld [vmem:[#allocation2 + $0x1f0] sm:$0xff]
        %v1398 = vpack.c.bf16 %v1367, %v1366
        %v1399 = vpack.c.bf16 %v1369, %v1368
        %v1400 = vpack.c.bf16 %v1371, %v1370
        %v1401 = vpack.c.bf16 %v1373, %v1372
        %v1402 = vpack.c.bf16 %v1375, %v1374
        %v1403 = vpack.c.bf16 %v1377, %v1376
        %v1404 = vpack.c.bf16 %v1379, %v1378
        %v1405 = vpack.c.bf16 %v1381, %v1380
        %v1406 = vpack.c.bf16 %v1383, %v1382
        %v1407 = vpack.c.bf16 %v1385, %v1384
        %v1408 = vpack.c.bf16 %v1387, %v1386
        %v1409 = vpack.c.bf16 %v1389, %v1388
        %v1410 = vpack.c.bf16 %v1391, %v1390
        %v1411 = vpack.c.bf16 %v1393, %v1392
        %v1412 = vpack.c.bf16 %v1395, %v1394
        %v1413 = vpack.c.bf16 %v1397, %v1396
        %v1414 = vld [vmem:[%s2] sm:$0xf]
        %v1415 = vld [vmem:[%s2 + $0x4] sm:$0xf]
        %v1416 = vld [vmem:[%s2 + $0x8] sm:$0xf]
        %v1417 = vld [vmem:[%s2 + $0xc] sm:$0xf]
        %v1418 = vld [vmem:[%s2 + $0x10] sm:$0xf]
        %v1419 = vld [vmem:[%s2 + $0x14] sm:$0xf]
        %v1420 = vld [vmem:[%s2 + $0x18] sm:$0xf]
        %v1421 = vld [vmem:[%s2 + $0x1c] sm:$0xf]
        %v1422 = vld [vmem:[%s2 + $0x20] sm:$0xf]
        %v1423 = vld [vmem:[%s2 + $0x24] sm:$0xf]
        %v1424 = vld [vmem:[%s2 + $0x28] sm:$0xf]
        %v1425 = vld [vmem:[%s2 + $0x2c] sm:$0xf]
        %v1426 = vld [vmem:[%s2 + $0x30] sm:$0xf]
        %v1427 = vld [vmem:[%s2 + $0x34] sm:$0xf]
        %v1428 = vld [vmem:[%s2 + $0x38] sm:$0xf]
        %v1429 = vld [vmem:[%s2 + $0x3c] sm:$0xf]
        %v1430 = vld [vmem:[#allocation2 + $0x1] sm:$0xff]
        %v1431 = vld [vmem:[#allocation2 + $0x11] sm:$0xff]
        %v1432 = vld [vmem:[#allocation2 + $0x21] sm:$0xff]
        %v1433 = vld [vmem:[#allocation2 + $0x31] sm:$0xff]
        %v1434 = vld [vmem:[#allocation2 + $0x41] sm:$0xff]
        %v1435 = vld [vmem:[#allocation2 + $0x51] sm:$0xff]
        %v1436 = vld [vmem:[#allocation2 + $0x61] sm:$0xff]
        %v1437 = vld [vmem:[#allocation2 + $0x71] sm:$0xff]
        %v1438 = vld [vmem:[#allocation2 + $0x81] sm:$0xff]
        %v1439 = vld [vmem:[#allocation2 + $0x91] sm:$0xff]
        %v1440 = vld [vmem:[#allocation2 + $0xa1] sm:$0xff]
        %v1441 = vld [vmem:[#allocation2 + $0xb1] sm:$0xff]
        %v1442 = vld [vmem:[#allocation2 + $0xc1] sm:$0xff]
        %v1443 = vld [vmem:[#allocation2 + $0xd1] sm:$0xff]
        %v1444 = vld [vmem:[#allocation2 + $0xe1] sm:$0xff]
        %v1445 = vld [vmem:[#allocation2 + $0xf1] sm:$0xff]
        %v1446 = vld [vmem:[#allocation2 + $0x101] sm:$0xff]
        %v1447 = vld [vmem:[#allocation2 + $0x111] sm:$0xff]
        %v1448 = vld [vmem:[#allocation2 + $0x121] sm:$0xff]
        %v1449 = vld [vmem:[#allocation2 + $0x131] sm:$0xff]
        %v1450 = vld [vmem:[#allocation2 + $0x141] sm:$0xff]
        %v1451 = vld [vmem:[#allocation2 + $0x151] sm:$0xff]
        %v1452 = vld [vmem:[#allocation2 + $0x161] sm:$0xff]
        %v1453 = vld [vmem:[#allocation2 + $0x171] sm:$0xff]
        %v1454 = vld [vmem:[#allocation2 + $0x181] sm:$0xff]
        %v1455 = vld [vmem:[#allocation2 + $0x191] sm:$0xff]
        %v1456 = vld [vmem:[#allocation2 + $0x1a1] sm:$0xff]
        %v1457 = vld [vmem:[#allocation2 + $0x1b1] sm:$0xff]
        %v1458 = vld [vmem:[#allocation2 + $0x1c1] sm:$0xff]
        %v1459 = vld [vmem:[#allocation2 + $0x1d1] sm:$0xff]
        %v1460 = vld [vmem:[#allocation2 + $0x1e1] sm:$0xff]
        %v1461 = vld [vmem:[#allocation2 + $0x1f1] sm:$0xff]
        %v1462 = vpack.c.bf16 %v1431, %v1430
        %v1463 = vpack.c.bf16 %v1433, %v1432
        %v1464 = vpack.c.bf16 %v1435, %v1434
        %v1465 = vpack.c.bf16 %v1437, %v1436
        %v1466 = vpack.c.bf16 %v1439, %v1438
        %v1467 = vpack.c.bf16 %v1441, %v1440
        %v1468 = vpack.c.bf16 %v1443, %v1442
        %v1469 = vpack.c.bf16 %v1445, %v1444
        %v1470 = vpack.c.bf16 %v1447, %v1446
        %v1471 = vpack.c.bf16 %v1449, %v1448
        %v1472 = vpack.c.bf16 %v1451, %v1450
        %v1473 = vpack.c.bf16 %v1453, %v1452
        %v1474 = vpack.c.bf16 %v1455, %v1454
        %v1475 = vpack.c.bf16 %v1457, %v1456
        %v1476 = vpack.c.bf16 %v1459, %v1458
        %v1477 = vpack.c.bf16 %v1461, %v1460
        %s1478 = scalar_lea.vmem %s2, 64
        %v1479 = vld [vmem:[%s1478] sm:$0xf]
        %v1480 = vld [vmem:[%s1478 + $0x4] sm:$0xf]
        %v1481 = vld [vmem:[%s1478 + $0x8] sm:$0xf]
        %v1482 = vld [vmem:[%s1478 + $0xc] sm:$0xf]
        %v1483 = vld [vmem:[%s1478 + $0x10] sm:$0xf]
        %v1484 = vld [vmem:[%s1478 + $0x14] sm:$0xf]
        %v1485 = vld [vmem:[%s1478 + $0x18] sm:$0xf]
        %v1486 = vld [vmem:[%s1478 + $0x1c] sm:$0xf]
        %v1487 = vld [vmem:[%s1478 + $0x20] sm:$0xf]
        %v1488 = vld [vmem:[%s1478 + $0x24] sm:$0xf]
        %v1489 = vld [vmem:[%s1478 + $0x28] sm:$0xf]
        %v1490 = vld [vmem:[%s1478 + $0x2c] sm:$0xf]
        %v1491 = vld [vmem:[%s1478 + $0x30] sm:$0xf]
        %v1492 = vld [vmem:[%s1478 + $0x34] sm:$0xf]
        %v1493 = vld [vmem:[%s1478 + $0x38] sm:$0xf]
        %v1494 = vld [vmem:[%s1478 + $0x3c] sm:$0xf]
        %v1511 = vunpack.c.l.b16 %v1479
        %v1512 = vunpack.c.l.b16 %v1480
        %v1513 = vunpack.c.l.b16 %v1481
        %v1514 = vunpack.c.l.b16 %v1482
        %v1515 = vunpack.c.l.b16 %v1483
        %v1516 = vunpack.c.l.b16 %v1484
        %v1517 = vunpack.c.l.b16 %v1485
        %v1518 = vunpack.c.l.b16 %v1486
        %v1519 = vunpack.c.l.b16 %v1487
        %v1520 = vunpack.c.l.b16 %v1488
        %v1521 = vunpack.c.l.b16 %v1489
        %v1522 = vunpack.c.l.b16 %v1490
        %v1523 = vunpack.c.l.b16 %v1491
        %v1524 = vunpack.c.l.b16 %v1492
        %v1525 = vunpack.c.l.b16 %v1493
        %v1526 = vunpack.c.l.b16 %v1494
        %v1527 = vpack.c.b16 %v1512, %v1511
        %v1528 = vpack.c.b16 %v1514, %v1513
        %v1529 = vpack.c.b16 %v1516, %v1515
        %v1530 = vpack.c.b16 %v1518, %v1517
        %v1531 = vpack.c.b16 %v1520, %v1519
        %v1532 = vpack.c.b16 %v1522, %v1521
        %v1533 = vpack.c.b16 %v1524, %v1523
        %v1534 = vpack.c.b16 %v1526, %v1525
        %1543 = vmatprep.subr.bf16.mxu0 0
        %1544 = vmatpush1.bf16.msra.mxu0 %v1527
        %1545 = vmatprep.subr.bf16.mxu0 0
        %1546 = vmatpush1.bf16.msra.mxu0 %v1528
        %1547 = vmatprep.subr.bf16.mxu0 0
        %1548 = vmatpush1.bf16.msra.mxu0 %v1529
        %1549 = vmatprep.subr.bf16.mxu0 0
        %1550 = vmatpush1.bf16.msra.mxu0 %v1530
        %1551 = vmatprep.subr.bf16.mxu0 0
        %1552 = vmatpush1.bf16.msra.mxu0 %v1531
        %1553 = vmatprep.subr.bf16.mxu0 0
        %1554 = vmatpush1.bf16.msra.mxu0 %v1532
        %1555 = vmatprep.subr.bf16.mxu0 0
        %1556 = vmatpush1.bf16.msra.mxu0 %v1533
        %1557 = vmatprep.subr.bf16.mxu0 0
        %1558 = vmatpush1.bf16.msra.mxu0 %v1534
        %1559 = vmatprep.subr.bf16.mxu0 0
        %1560 = vmatpush1.bf16.msra.mxu0 0
        %1561 = vmatprep.subr.bf16.mxu0 0
        %1562 = vmatpush1.bf16.msra.mxu0 0
        %1563 = vmatprep.subr.bf16.mxu0 0
        %1564 = vmatpush1.bf16.msra.mxu0 0
        %1565 = vmatprep.subr.bf16.mxu0 0
        %1566 = vmatpush1.bf16.msra.mxu0 0
        %1567 = vmatprep.subr.bf16.mxu0 0
        %1568 = vmatpush1.bf16.msra.mxu0 0
        %1569 = vmatprep.subr.bf16.mxu0 0
        %1570 = vmatpush1.bf16.msra.mxu0 0
        %1571 = vmatprep.subr.bf16.mxu0 0
        %1572 = vmatpush1.bf16.msra.mxu0 0
        %1573 = vmatprep.subr.bf16.mxu0 0
        %1574 = vmatpush1.bf16.msra.mxu0 0
        %1575 = vmatprep.mubr.bf16.mxu0 0
        %1576 = vmatmul.mubr.bf16.gmra.mrb[0].mxu0 %v1462
        %v1577 = vpop.f32.mrb[0].mxu0
        %v1578 = vadd.f32 0.0, %v1577
        %v1579 = vpop.f32.mrb[0].mxu0
        %v1580 = vpop.f32.mrb[0].mxu0
        %v1581 = vadd.f32 0.0, %v1580
        %v1582 = vpop.f32.mrb[0].mxu0
        %1583 = vmatprep.mubr.bf16.mxu0 0
        %1584 = vmatmul.mubr.bf16.gmra.mrb[0].mxu0 %v1463
        %v1585 = vpop.f32.mrb[0].mxu0
        %v1586 = vadd.f32 0.0, %v1585
        %v1587 = vpop.f32.mrb[0].mxu0
        %v1588 = vpop.f32.mrb[0].mxu0
        %v1589 = vadd.f32 0.0, %v1588
        %v1590 = vpop.f32.mrb[0].mxu0
        %1591 = vmatprep.mubr.bf16.mxu0 0
        %1592 = vmatmul.mubr.bf16.gmra.mrb[0].mxu0 %v1464
        %v1593 = vpop.f32.mrb[0].mxu0
        %v1594 = vadd.f32 0.0, %v1593
        %v1595 = vpop.f32.mrb[0].mxu0
        %v1596 = vpop.f32.mrb[0].mxu0
        %v1597 = vadd.f32 0.0, %v1596
        %v1598 = vpop.f32.mrb[0].mxu0
        %1599 = vmatprep.mubr.bf16.mxu0 0
        %1600 = vmatmul.mubr.bf16.gmra.mrb[0].mxu0 %v1465
        %v1601 = vpop.f32.mrb[0].mxu0
        %v1602 = vadd.f32 0.0, %v1601
        %v1603 = vpop.f32.mrb[0].mxu0
        %v1604 = vpop.f32.mrb[0].mxu0
        %v1605 = vadd.f32 0.0, %v1604
        %v1606 = vpop.f32.mrb[0].mxu0
        %1607 = vmatprep.mubr.bf16.mxu0 0
        %1608 = vmatmul.mubr.bf16.gmra.mrb[0].mxu0 %v1466
        %v1609 = vpop.f32.mrb[0].mxu0
        %v1610 = vadd.f32 0.0, %v1609
        %v1611 = vpop.f32.mrb[0].mxu0
        %v1612 = vpop.f32.mrb[0].mxu0
        %v1613 = vadd.f32 0.0, %v1612
        %v1614 = vpop.f32.mrb[0].mxu0
        %1615 = vmatprep.mubr.bf16.mxu0 0
        %1616 = vmatmul.mubr.bf16.gmra.mrb[0].mxu0 %v1467
        %v1617 = vpop.f32.mrb[0].mxu0
        %v1618 = vadd.f32 0.0, %v1617
        %v1619 = vpop.f32.mrb[0].mxu0
        %v1620 = vpop.f32.mrb[0].mxu0
        %v1621 = vadd.f32 0.0, %v1620
        %v1622 = vpop.f32.mrb[0].mxu0
        %1623 = vmatprep.mubr.bf16.mxu0 0
        %1624 = vmatmul.mubr.bf16.gmra.mrb[0].mxu0 %v1468
        %v1625 = vpop.f32.mrb[0].mxu0
        %v1626 = vadd.f32 0.0, %v1625
        %v1627 = vpop.f32.mrb[0].mxu0
        %v1628 = vpop.f32.mrb[0].mxu0
        %v1629 = vadd.f32 0.0, %v1628
        %v1630 = vpop.f32.mrb[0].mxu0
        %1631 = vmatprep.mubr.bf16.mxu0 0
        %1632 = vmatmul.mubr.bf16.gmra.mrb[0].mxu0 %v1469
        %v1633 = vpop.f32.mrb[0].mxu0
        %v1634 = vadd.f32 0.0, %v1633
        %v1635 = vpop.f32.mrb[0].mxu0
        %v1636 = vpop.f32.mrb[0].mxu0
        %v1637 = vadd.f32 0.0, %v1636
        %v1638 = vpop.f32.mrb[0].mxu0
        %1639 = vmatprep.mubr.bf16.mxu0 0
        %1640 = vmatmul.mubr.bf16.gmra.mrb[0].mxu0 %v1470
        %v1641 = vpop.f32.mrb[0].mxu0
        %v1642 = vadd.f32 0.0, %v1641
        %v1643 = vpop.f32.mrb[0].mxu0
        %v1644 = vpop.f32.mrb[0].mxu0
        %v1645 = vadd.f32 0.0, %v1644
        %v1646 = vpop.f32.mrb[0].mxu0
        %1647 = vmatprep.mubr.bf16.mxu0 0
        %1648 = vmatmul.mubr.bf16.gmra.mrb[0].mxu0 %v1471
        %v1649 = vpop.f32.mrb[0].mxu0
        %v1650 = vadd.f32 0.0, %v1649
        %v1651 = vpop.f32.mrb[0].mxu0
        %v1652 = vpop.f32.mrb[0].mxu0
        %v1653 = vadd.f32 0.0, %v1652
        %v1654 = vpop.f32.mrb[0].mxu0
        %1655 = vmatprep.mubr.bf16.mxu0 0
        %1656 = vmatmul.mubr.bf16.gmra.mrb[0].mxu0 %v1472
        %v1657 = vpop.f32.mrb[0].mxu0
        %v1658 = vadd.f32 0.0, %v1657
        %v1659 = vpop.f32.mrb[0].mxu0
        %v1660 = vpop.f32.mrb[0].mxu0
        %v1661 = vadd.f32 0.0, %v1660
        %v1662 = vpop.f32.mrb[0].mxu0
        %1663 = vmatprep.mubr.bf16.mxu0 0
        %1664 = vmatmul.mubr.bf16.gmra.mrb[0].mxu0 %v1473
        %v1665 = vpop.f32.mrb[0].mxu0
        %v1666 = vadd.f32 0.0, %v1665
        %v1667 = vpop.f32.mrb[0].mxu0
        %v1668 = vpop.f32.mrb[0].mxu0
        %v1669 = vadd.f32 0.0, %v1668
        %v1670 = vpop.f32.mrb[0].mxu0
        %1671 = vmatprep.mubr.bf16.mxu0 0
        %1672 = vmatmul.mubr.bf16.gmra.mrb[0].mxu0 %v1474
        %v1673 = vpop.f32.mrb[0].mxu0
        %v1674 = vadd.f32 0.0, %v1673
        %v1675 = vpop.f32.mrb[0].mxu0
        %v1676 = vpop.f32.mrb[0].mxu0
        %v1677 = vadd.f32 0.0, %v1676
        %v1678 = vpop.f32.mrb[0].mxu0
        %1679 = vmatprep.mubr.bf16.mxu0 0
        %1680 = vmatmul.mubr.bf16.gmra.mrb[0].mxu0 %v1475
        %v1681 = vpop.f32.mrb[0].mxu0
        %v1682 = vadd.f32 0.0, %v1681
        %v1683 = vpop.f32.mrb[0].mxu0
        %v1684 = vpop.f32.mrb[0].mxu0
        %v1685 = vadd.f32 0.0, %v1684
        %v1686 = vpop.f32.mrb[0].mxu0
        %1687 = vmatprep.mubr.bf16.mxu0 0
        %1688 = vmatmul.mubr.bf16.gmra.mrb[0].mxu0 %v1476
        %v1689 = vpop.f32.mrb[0].mxu0
        %v1690 = vadd.f32 0.0, %v1689
        %v1691 = vpop.f32.mrb[0].mxu0
        %v1692 = vpop.f32.mrb[0].mxu0
        %v1693 = vadd.f32 0.0, %v1692
        %v1694 = vpop.f32.mrb[0].mxu0
        %1695 = vmatprep.mubr.bf16.mxu0 0
        %1696 = vmatmul.mubr.bf16.gmra.mrb[0].mxu0 %v1477
        %v1697 = vpop.f32.mrb[0].mxu0
        %v1698 = vadd.f32 0.0, %v1697
        %v1699 = vpop.f32.mrb[0].mxu0
        %v1700 = vpop.f32.mrb[0].mxu0
        %v1701 = vadd.f32 0.0, %v1700
        %v1702 = vpop.f32.mrb[0].mxu0
        %1703 = vdwg.mxu0
        %v1720 = vunpack.c.l.b16 %v1414
        %v1721 = vunpack.c.l.b16 %v1415
        %v1722 = vunpack.c.l.b16 %v1416
        %v1723 = vunpack.c.l.b16 %v1417
        %v1724 = vunpack.c.l.b16 %v1418
        %v1725 = vunpack.c.l.b16 %v1419
        %v1726 = vunpack.c.l.b16 %v1420
        %v1727 = vunpack.c.l.b16 %v1421
        %v1728 = vunpack.c.l.b16 %v1422
        %v1729 = vunpack.c.l.b16 %v1423
        %v1730 = vunpack.c.l.b16 %v1424
        %v1731 = vunpack.c.l.b16 %v1425
        %v1732 = vunpack.c.l.b16 %v1426
        %v1733 = vunpack.c.l.b16 %v1427
        %v1734 = vunpack.c.l.b16 %v1428
        %v1735 = vunpack.c.l.b16 %v1429
        %v1736 = vpack.c.b16 %v1721, %v1720
        %v1737 = vpack.c.b16 %v1723, %v1722
        %v1738 = vpack.c.b16 %v1725, %v1724
        %v1739 = vpack.c.b16 %v1727, %v1726
        %v1740 = vpack.c.b16 %v1729, %v1728
        %v1741 = vpack.c.b16 %v1731, %v1730
        %v1742 = vpack.c.b16 %v1733, %v1732
        %v1743 = vpack.c.b16 %v1735, %v1734
        %1752 = vmatprep.subr.bf16.mxu0 0
        %1753 = vmatpush1.bf16.msra.mxu0 %v1736
        %1754 = vmatprep.subr.bf16.mxu0 0
        %1755 = vmatpush1.bf16.msra.mxu0 %v1737
        %1756 = vmatprep.subr.bf16.mxu0 0
        %1757 = vmatpush1.bf16.msra.mxu0 %v1738
        %1758 = vmatprep.subr.bf16.mxu0 0
        %1759 = vmatpush1.bf16.msra.mxu0 %v1739
        %1760 = vmatprep.subr.bf16.mxu0 0
        %1761 = vmatpush1.bf16.msra.mxu0 %v1740
        %1762 = vmatprep.subr.bf16.mxu0 0
        %1763 = vmatpush1.bf16.msra.mxu0 %v1741
        %1764 = vmatprep.subr.bf16.mxu0 0
        %1765 = vmatpush1.bf16.msra.mxu0 %v1742
        %1766 = vmatprep.subr.bf16.mxu0 0
        %1767 = vmatpush1.bf16.msra.mxu0 %v1743
        %1768 = vmatprep.subr.bf16.mxu0 0
        %1769 = vmatpush1.bf16.msra.mxu0 0
        %1770 = vmatprep.subr.bf16.mxu0 0
        %1771 = vmatpush1.bf16.msra.mxu0 0
        %1772 = vmatprep.subr.bf16.mxu0 0
        %1773 = vmatpush1.bf16.msra.mxu0 0
        %1774 = vmatprep.subr.bf16.mxu0 0
        %1775 = vmatpush1.bf16.msra.mxu0 0
        %1776 = vmatprep.subr.bf16.mxu0 0
        %1777 = vmatpush1.bf16.msra.mxu0 0
        %1778 = vmatprep.subr.bf16.mxu0 0
        %1779 = vmatpush1.bf16.msra.mxu0 0
        %1780 = vmatprep.subr.bf16.mxu0 0
        %1781 = vmatpush1.bf16.msra.mxu0 0
        %1782 = vmatprep.subr.bf16.mxu0 0
        %1783 = vmatpush1.bf16.msra.mxu0 0
        %1784 = vmatprep.mubr.bf16.mxu0 0
        %1785 = vmatmul.mubr.bf16.gmra.mrb[0].mxu0 %v1398
        %v1786 = vpop.f32.mrb[0].mxu0
        %v1787 = vadd.f32 %v1578, %v1786
        %v1788 = vpop.f32.mrb[0].mxu0
        %v1789 = vpop.f32.mrb[0].mxu0
        %v1790 = vadd.f32 %v1581, %v1789
        %v1791 = vpop.f32.mrb[0].mxu0
        %1792 = vmatprep.mubr.bf16.mxu0 0
        %1793 = vmatmul.mubr.bf16.gmra.mrb[0].mxu0 %v1399
        %v1794 = vpop.f32.mrb[0].mxu0
        %v1795 = vadd.f32 %v1586, %v1794
        %v1796 = vpop.f32.mrb[0].mxu0
        %v1797 = vpop.f32.mrb[0].mxu0
        %v1798 = vadd.f32 %v1589, %v1797
        %v1799 = vpop.f32.mrb[0].mxu0
        %1800 = vmatprep.mubr.bf16.mxu0 0
        %1801 = vmatmul.mubr.bf16.gmra.mrb[0].mxu0 %v1400
        %v1802 = vpop.f32.mrb[0].mxu0
        %v1803 = vadd.f32 %v1594, %v1802
        %v1804 = vpop.f32.mrb[0].mxu0
        %v1805 = vpop.f32.mrb[0].mxu0
        %v1806 = vadd.f32 %v1597, %v1805
        %v1807 = vpop.f32.mrb[0].mxu0
        %1808 = vmatprep.mubr.bf16.mxu0 0
        %1809 = vmatmul.mubr.bf16.gmra.mrb[0].mxu0 %v1401
        %v1810 = vpop.f32.mrb[0].mxu0
        %v1811 = vadd.f32 %v1602, %v1810
        %v1812 = vpop.f32.mrb[0].mxu0
        %v1813 = vpop.f32.mrb[0].mxu0
        %v1814 = vadd.f32 %v1605, %v1813
        %v1815 = vpop.f32.mrb[0].mxu0
        %1816 = vmatprep.mubr.bf16.mxu0 0
        %1817 = vmatmul.mubr.bf16.gmra.mrb[0].mxu0 %v1402
        %v1818 = vpop.f32.mrb[0].mxu0
        %v1819 = vadd.f32 %v1610, %v1818
        %v1820 = vpop.f32.mrb[0].mxu0
        %v1821 = vpop.f32.mrb[0].mxu0
        %v1822 = vadd.f32 %v1613, %v1821
        %v1823 = vpop.f32.mrb[0].mxu0
        %1824 = vmatprep.mubr.bf16.mxu0 0
        %1825 = vmatmul.mubr.bf16.gmra.mrb[0].mxu0 %v1403
        %v1826 = vpop.f32.mrb[0].mxu0
        %v1827 = vadd.f32 %v1618, %v1826
        %v1828 = vpop.f32.mrb[0].mxu0
        %v1829 = vpop.f32.mrb[0].mxu0
        %v1830 = vadd.f32 %v1621, %v1829
        %v1831 = vpop.f32.mrb[0].mxu0
        %1832 = vmatprep.mubr.bf16.mxu0 0
        %1833 = vmatmul.mubr.bf16.gmra.mrb[0].mxu0 %v1404
        %v1834 = vpop.f32.mrb[0].mxu0
        %v1835 = vadd.f32 %v1626, %v1834
        %v1836 = vpop.f32.mrb[0].mxu0
        %v1837 = vpop.f32.mrb[0].mxu0
        %v1838 = vadd.f32 %v1629, %v1837
        %v1839 = vpop.f32.mrb[0].mxu0
        %1840 = vmatprep.mubr.bf16.mxu0 0
        %1841 = vmatmul.mubr.bf16.gmra.mrb[0].mxu0 %v1405
        %v1842 = vpop.f32.mrb[0].mxu0
        %v1843 = vadd.f32 %v1634, %v1842
        %v1844 = vpop.f32.mrb[0].mxu0
        %v1845 = vpop.f32.mrb[0].mxu0
        %v1846 = vadd.f32 %v1637, %v1845
        %v1847 = vpop.f32.mrb[0].mxu0
        %1848 = vmatprep.mubr.bf16.mxu0 0
        %1849 = vmatmul.mubr.bf16.gmra.mrb[0].mxu0 %v1406
        %v1850 = vpop.f32.mrb[0].mxu0
        %v1851 = vadd.f32 %v1642, %v1850
        %v1852 = vpop.f32.mrb[0].mxu0
        %v1853 = vpop.f32.mrb[0].mxu0
        %v1854 = vadd.f32 %v1645, %v1853
        %v1855 = vpop.f32.mrb[0].mxu0
        %1856 = vmatprep.mubr.bf16.mxu0 0
        %1857 = vmatmul.mubr.bf16.gmra.mrb[0].mxu0 %v1407
        %v1858 = vpop.f32.mrb[0].mxu0
        %v1859 = vadd.f32 %v1650, %v1858
        %v1860 = vpop.f32.mrb[0].mxu0
        %v1861 = vpop.f32.mrb[0].mxu0
        %v1862 = vadd.f32 %v1653, %v1861
        %v1863 = vpop.f32.mrb[0].mxu0
        %1864 = vmatprep.mubr.bf16.mxu0 0
        %1865 = vmatmul.mubr.bf16.gmra.mrb[0].mxu0 %v1408
        %v1866 = vpop.f32.mrb[0].mxu0
        %v1867 = vadd.f32 %v1658, %v1866
        %v1868 = vpop.f32.mrb[0].mxu0
        %v1869 = vpop.f32.mrb[0].mxu0
        %v1870 = vadd.f32 %v1661, %v1869
        %v1871 = vpop.f32.mrb[0].mxu0
        %1872 = vmatprep.mubr.bf16.mxu0 0
        %1873 = vmatmul.mubr.bf16.gmra.mrb[0].mxu0 %v1409
        %v1874 = vpop.f32.mrb[0].mxu0
        %v1875 = vadd.f32 %v1666, %v1874
        %v1876 = vpop.f32.mrb[0].mxu0
        %v1877 = vpop.f32.mrb[0].mxu0
        %v1878 = vadd.f32 %v1669, %v1877
        %v1879 = vpop.f32.mrb[0].mxu0
        %1880 = vmatprep.mubr.bf16.mxu0 0
        %1881 = vmatmul.mubr.bf16.gmra.mrb[0].mxu0 %v1410
        %v1882 = vpop.f32.mrb[0].mxu0
        %v1883 = vadd.f32 %v1674, %v1882
        %v1884 = vpop.f32.mrb[0].mxu0
        %v1885 = vpop.f32.mrb[0].mxu0
        %v1886 = vadd.f32 %v1677, %v1885
        %v1887 = vpop.f32.mrb[0].mxu0
        %1888 = vmatprep.mubr.bf16.mxu0 0
        %1889 = vmatmul.mubr.bf16.gmra.mrb[0].mxu0 %v1411
        %v1890 = vpop.f32.mrb[0].mxu0
        %v1891 = vadd.f32 %v1682, %v1890
        %v1892 = vpop.f32.mrb[0].mxu0
        %v1893 = vpop.f32.mrb[0].mxu0
        %v1894 = vadd.f32 %v1685, %v1893
        %v1895 = vpop.f32.mrb[0].mxu0
        %1896 = vmatprep.mubr.bf16.mxu0 0
        %1897 = vmatmul.mubr.bf16.gmra.mrb[0].mxu0 %v1412
        %v1898 = vpop.f32.mrb[0].mxu0
        %v1899 = vadd.f32 %v1690, %v1898
        %v1900 = vpop.f32.mrb[0].mxu0
        %v1901 = vpop.f32.mrb[0].mxu0
        %v1902 = vadd.f32 %v1693, %v1901
        %v1903 = vpop.f32.mrb[0].mxu0
        %1904 = vmatprep.mubr.bf16.mxu0 0
        %1905 = vmatmul.mubr.bf16.gmra.mrb[0].mxu0 %v1413
        %v1906 = vpop.f32.mrb[0].mxu0
        %v1907 = vadd.f32 %v1698, %v1906
        %v1908 = vpop.f32.mrb[0].mxu0
        %v1909 = vpop.f32.mrb[0].mxu0
        %v1910 = vadd.f32 %v1701, %v1909
        %v1911 = vpop.f32.mrb[0].mxu0
        %1912 = vdwg.mxu0
        %v1913 = vld [vmem:[#allocation2 + $0x2] sm:$0xff]
        %v1914 = vld [vmem:[#allocation2 + $0x12] sm:$0xff]
        %v1915 = vld [vmem:[#allocation2 + $0x22] sm:$0xff]
        %v1916 = vld [vmem:[#allocation2 + $0x32] sm:$0xff]
        %v1917 = vld [vmem:[#allocation2 + $0x42] sm:$0xff]
        %v1918 = vld [vmem:[#allocation2 + $0x52] sm:$0xff]
        %v1919 = vld [vmem:[#allocation2 + $0x62] sm:$0xff]
        %v1920 = vld [vmem:[#allocation2 + $0x72] sm:$0xff]
        %v1921 = vld [vmem:[#allocation2 + $0x82] sm:$0xff]
        %v1922 = vld [vmem:[#allocation2 + $0x92] sm:$0xff]
        %v1923 = vld [vmem:[#allocation2 + $0xa2] sm:$0xff]
        %v1924 = vld [vmem:[#allocation2 + $0xb2] sm:$0xff]
        %v1925 = vld [vmem:[#allocation2 + $0xc2] sm:$0xff]
        %v1926 = vld [vmem:[#allocation2 + $0xd2] sm:$0xff]
        %v1927 = vld [vmem:[#allocation2 + $0xe2] sm:$0xff]
        %v1928 = vld [vmem:[#allocation2 + $0xf2] sm:$0xff]
        %v1929 = vld [vmem:[#allocation2 + $0x102] sm:$0xff]
        %v1930 = vld [vmem:[#allocation2 + $0x112] sm:$0xff]
        %v1931 = vld [vmem:[#allocation2 + $0x122] sm:$0xff]
        %v1932 = vld [vmem:[#allocation2 + $0x132] sm:$0xff]
        %v1933 = vld [vmem:[#allocation2 + $0x142] sm:$0xff]
        %v1934 = vld [vmem:[#allocation2 + $0x152] sm:$0xff]
        %v1935 = vld [vmem:[#allocation2 + $0x162] sm:$0xff]
        %v1936 = vld [vmem:[#allocation2 + $0x172] sm:$0xff]
        %v1937 = vld [vmem:[#allocation2 + $0x182] sm:$0xff]
        %v1938 = vld [vmem:[#allocation2 + $0x192] sm:$0xff]
        %v1939 = vld [vmem:[#allocation2 + $0x1a2] sm:$0xff]
        %v1940 = vld [vmem:[#allocation2 + $0x1b2] sm:$0xff]
        %v1941 = vld [vmem:[#allocation2 + $0x1c2] sm:$0xff]
        %v1942 = vld [vmem:[#allocation2 + $0x1d2] sm:$0xff]
        %v1943 = vld [vmem:[#allocation2 + $0x1e2] sm:$0xff]
        %v1944 = vld [vmem:[#allocation2 + $0x1f2] sm:$0xff]
        %v1945 = vpack.c.bf16 %v1914, %v1913
        %v1946 = vpack.c.bf16 %v1916, %v1915
        %v1947 = vpack.c.bf16 %v1918, %v1917
        %v1948 = vpack.c.bf16 %v1920, %v1919
        %v1949 = vpack.c.bf16 %v1922, %v1921
        %v1950 = vpack.c.bf16 %v1924, %v1923
        %v1951 = vpack.c.bf16 %v1926, %v1925
        %v1952 = vpack.c.bf16 %v1928, %v1927
        %v1953 = vpack.c.bf16 %v1930, %v1929
        %v1954 = vpack.c.bf16 %v1932, %v1931
        %v1955 = vpack.c.bf16 %v1934, %v1933
        %v1956 = vpack.c.bf16 %v1936, %v1935
        %v1957 = vpack.c.bf16 %v1938, %v1937
        %v1958 = vpack.c.bf16 %v1940, %v1939
        %v1959 = vpack.c.bf16 %v1942, %v1941
        %v1960 = vpack.c.bf16 %v1944, %v1943
        %s1961 = scalar_lea.vmem %s2, 128
        %v1962 = vld [vmem:[%s1961] sm:$0xf]
        %v1963 = vld [vmem:[%s1961 + $0x4] sm:$0xf]
        %v1964 = vld [vmem:[%s1961 + $0x8] sm:$0xf]
        %v1965 = vld [vmem:[%s1961 + $0xc] sm:$0xf]
        %v1966 = vld [vmem:[%s1961 + $0x10] sm:$0xf]
        %v1967 = vld [vmem:[%s1961 + $0x14] sm:$0xf]
        %v1968 = vld [vmem:[%s1961 + $0x18] sm:$0xf]
        %v1969 = vld [vmem:[%s1961 + $0x1c] sm:$0xf]
        %v1970 = vld [vmem:[%s1961 + $0x20] sm:$0xf]
        %v1971 = vld [vmem:[%s1961 + $0x24] sm:$0xf]
        %v1972 = vld [vmem:[%s1961 + $0x28] sm:$0xf]
        %v1973 = vld [vmem:[%s1961 + $0x2c] sm:$0xf]
        %v1974 = vld [vmem:[%s1961 + $0x30] sm:$0xf]
        %v1975 = vld [vmem:[%s1961 + $0x34] sm:$0xf]
        %v1976 = vld [vmem:[%s1961 + $0x38] sm:$0xf]
        %v1977 = vld [vmem:[%s1961 + $0x3c] sm:$0xf]
        %v1994 = vunpack.c.l.b16 %v1962
        %v1995 = vunpack.c.l.b16 %v1963
        %v1996 = vunpack.c.l.b16 %v1964
        %v1997 = vunpack.c.l.b16 %v1965
        %v1998 = vunpack.c.l.b16 %v1966
        %v1999 = vunpack.c.l.b16 %v1967
        %v2000 = vunpack.c.l.b16 %v1968
        %v2001 = vunpack.c.l.b16 %v1969
        %v2002 = vunpack.c.l.b16 %v1970
        %v2003 = vunpack.c.l.b16 %v1971
        %v2004 = vunpack.c.l.b16 %v1972
        %v2005 = vunpack.c.l.b16 %v1973
        %v2006 = vunpack.c.l.b16 %v1974
        %v2007 = vunpack.c.l.b16 %v1975
        %v2008 = vunpack.c.l.b16 %v1976
        %v2009 = vunpack.c.l.b16 %v1977
        %v2010 = vpack.c.b16 %v1995, %v1994
        %v2011 = vpack.c.b16 %v1997, %v1996
        %v2012 = vpack.c.b16 %v1999, %v1998
        %v2013 = vpack.c.b16 %v2001, %v2000
        %v2014 = vpack.c.b16 %v2003, %v2002
        %v2015 = vpack.c.b16 %v2005, %v2004
        %v2016 = vpack.c.b16 %v2007, %v2006
        %v2017 = vpack.c.b16 %v2009, %v2008
        %2026 = vmatprep.subr.bf16.mxu0 0
        %2027 = vmatpush1.bf16.msra.mxu0 %v2010
        %2028 = vmatprep.subr.bf16.mxu0 0
        %2029 = vmatpush1.bf16.msra.mxu0 %v2011
        %2030 = vmatprep.subr.bf16.mxu0 0
        %2031 = vmatpush1.bf16.msra.mxu0 %v2012
        %2032 = vmatprep.subr.bf16.mxu0 0
        %2033 = vmatpush1.bf16.msra.mxu0 %v2013
        %2034 = vmatprep.subr.bf16.mxu0 0
        %2035 = vmatpush1.bf16.msra.mxu0 %v2014
        %2036 = vmatprep.subr.bf16.mxu0 0
        %2037 = vmatpush1.bf16.msra.mxu0 %v2015
        %2038 = vmatprep.subr.bf16.mxu0 0
        %2039 = vmatpush1.bf16.msra.mxu0 %v2016
        %2040 = vmatprep.subr.bf16.mxu0 0
        %2041 = vmatpush1.bf16.msra.mxu0 %v2017
        %2042 = vmatprep.subr.bf16.mxu0 0
        %2043 = vmatpush1.bf16.msra.mxu0 0
        %2044 = vmatprep.subr.bf16.mxu0 0
        %2045 = vmatpush1.bf16.msra.mxu0 0
        %2046 = vmatprep.subr.bf16.mxu0 0
        %2047 = vmatpush1.bf16.msra.mxu0 0
        %2048 = vmatprep.subr.bf16.mxu0 0
        %2049 = vmatpush1.bf16.msra.mxu0 0
        %2050 = vmatprep.subr.bf16.mxu0 0
        %2051 = vmatpush1.bf16.msra.mxu0 0
        %2052 = vmatprep.subr.bf16.mxu0 0
        %2053 = vmatpush1.bf16.msra.mxu0 0
        %2054 = vmatprep.subr.bf16.mxu0 0
        %2055 = vmatpush1.bf16.msra.mxu0 0
        %2056 = vmatprep.subr.bf16.mxu0 0
        %2057 = vmatpush1.bf16.msra.mxu0 0
        %2058 = vmatprep.mubr.bf16.mxu0 0
        %2059 = vmatmul.mubr.bf16.gmra.mrb[0].mxu0 %v1945
        %v2060 = vpop.f32.mrb[0].mxu0
        %v2061 = vadd.f32 0.0, %v2060
        %v2062 = vpop.f32.mrb[0].mxu0
        %v2063 = vpop.f32.mrb[0].mxu0
        %v2064 = vadd.f32 0.0, %v2063
        %v2065 = vpop.f32.mrb[0].mxu0
        %2066 = vmatprep.mubr.bf16.mxu0 0
        %2067 = vmatmul.mubr.bf16.gmra.mrb[0].mxu0 %v1946
        %v2068 = vpop.f32.mrb[0].mxu0
        %v2069 = vadd.f32 0.0, %v2068
        %v2070 = vpop.f32.mrb[0].mxu0
        %v2071 = vpop.f32.mrb[0].mxu0
        %v2072 = vadd.f32 0.0, %v2071
        %v2073 = vpop.f32.mrb[0].mxu0
        %2074 = vmatprep.mubr.bf16.mxu0 0
        %2075 = vmatmul.mubr.bf16.gmra.mrb[0].mxu0 %v1947
        %v2076 = vpop.f32.mrb[0].mxu0
        %v2077 = vadd.f32 0.0, %v2076
        %v2078 = vpop.f32.mrb[0].mxu0
        %v2079 = vpop.f32.mrb[0].mxu0
        %v2080 = vadd.f32 0.0, %v2079
        %v2081 = vpop.f32.mrb[0].mxu0
        %2082 = vmatprep.mubr.bf16.mxu0 0
        %2083 = vmatmul.mubr.bf16.gmra.mrb[0].mxu0 %v1948
        %v2084 = vpop.f32.mrb[0].mxu0
        %v2085 = vadd.f32 0.0, %v2084
        %v2086 = vpop.f32.mrb[0].mxu0
        %v2087 = vpop.f32.mrb[0].mxu0
        %v2088 = vadd.f32 0.0, %v2087
        %v2089 = vpop.f32.mrb[0].mxu0
        %2090 = vmatprep.mubr.bf16.mxu0 0
        %2091 = vmatmul.mubr.bf16.gmra.mrb[0].mxu0 %v1949
        %v2092 = vpop.f32.mrb[0].mxu0
        %v2093 = vadd.f32 0.0, %v2092
        %v2094 = vpop.f32.mrb[0].mxu0
        %v2095 = vpop.f32.mrb[0].mxu0
        %v2096 = vadd.f32 0.0, %v2095
        %v2097 = vpop.f32.mrb[0].mxu0
        %2098 = vmatprep.mubr.bf16.mxu0 0
        %2099 = vmatmul.mubr.bf16.gmra.mrb[0].mxu0 %v1950
        %v2100 = vpop.f32.mrb[0].mxu0
        %v2101 = vadd.f32 0.0, %v2100
        %v2102 = vpop.f32.mrb[0].mxu0
        %v2103 = vpop.f32.mrb[0].mxu0
        %v2104 = vadd.f32 0.0, %v2103
        %v2105 = vpop.f32.mrb[0].mxu0
        %2106 = vmatprep.mubr.bf16.mxu0 0
        %2107 = vmatmul.mubr.bf16.gmra.mrb[0].mxu0 %v1951
        %v2108 = vpop.f32.mrb[0].mxu0
        %v2109 = vadd.f32 0.0, %v2108
        %v2110 = vpop.f32.mrb[0].mxu0
        %v2111 = vpop.f32.mrb[0].mxu0
        %v2112 = vadd.f32 0.0, %v2111
        %v2113 = vpop.f32.mrb[0].mxu0
        %2114 = vmatprep.mubr.bf16.mxu0 0
        %2115 = vmatmul.mubr.bf16.gmra.mrb[0].mxu0 %v1952
        %v2116 = vpop.f32.mrb[0].mxu0
        %v2117 = vadd.f32 0.0, %v2116
        %v2118 = vpop.f32.mrb[0].mxu0
        %v2119 = vpop.f32.mrb[0].mxu0
        %v2120 = vadd.f32 0.0, %v2119
        %v2121 = vpop.f32.mrb[0].mxu0
        %2122 = vmatprep.mubr.bf16.mxu0 0
        %2123 = vmatmul.mubr.bf16.gmra.mrb[0].mxu0 %v1953
        %v2124 = vpop.f32.mrb[0].mxu0
        %v2125 = vadd.f32 0.0, %v2124
        %v2126 = vpop.f32.mrb[0].mxu0
        %v2127 = vpop.f32.mrb[0].mxu0
        %v2128 = vadd.f32 0.0, %v2127
        %v2129 = vpop.f32.mrb[0].mxu0
        %2130 = vmatprep.mubr.bf16.mxu0 0
        %2131 = vmatmul.mubr.bf16.gmra.mrb[0].mxu0 %v1954
        %v2132 = vpop.f32.mrb[0].mxu0
        %v2133 = vadd.f32 0.0, %v2132
        %v2134 = vpop.f32.mrb[0].mxu0
        %v2135 = vpop.f32.mrb[0].mxu0
        %v2136 = vadd.f32 0.0, %v2135
        %v2137 = vpop.f32.mrb[0].mxu0
        %2138 = vmatprep.mubr.bf16.mxu0 0
        %2139 = vmatmul.mubr.bf16.gmra.mrb[0].mxu0 %v1955
        %v2140 = vpop.f32.mrb[0].mxu0
        %v2141 = vadd.f32 0.0, %v2140
        %v2142 = vpop.f32.mrb[0].mxu0
        %v2143 = vpop.f32.mrb[0].mxu0
        %v2144 = vadd.f32 0.0, %v2143
        %v2145 = vpop.f32.mrb[0].mxu0
        %2146 = vmatprep.mubr.bf16.mxu0 0
        %2147 = vmatmul.mubr.bf16.gmra.mrb[0].mxu0 %v1956
        %v2148 = vpop.f32.mrb[0].mxu0
        %v2149 = vadd.f32 0.0, %v2148
        %v2150 = vpop.f32.mrb[0].mxu0
        %v2151 = vpop.f32.mrb[0].mxu0
        %v2152 = vadd.f32 0.0, %v2151
        %v2153 = vpop.f32.mrb[0].mxu0
        %2154 = vmatprep.mubr.bf16.mxu0 0
        %2155 = vmatmul.mubr.bf16.gmra.mrb[0].mxu0 %v1957
        %v2156 = vpop.f32.mrb[0].mxu0
        %v2157 = vadd.f32 0.0, %v2156
        %v2158 = vpop.f32.mrb[0].mxu0
        %v2159 = vpop.f32.mrb[0].mxu0
        %v2160 = vadd.f32 0.0, %v2159
        %v2161 = vpop.f32.mrb[0].mxu0
        %2162 = vmatprep.mubr.bf16.mxu0 0
        %2163 = vmatmul.mubr.bf16.gmra.mrb[0].mxu0 %v1958
        %v2164 = vpop.f32.mrb[0].mxu0
        %v2165 = vadd.f32 0.0, %v2164
        %v2166 = vpop.f32.mrb[0].mxu0
        %v2167 = vpop.f32.mrb[0].mxu0
        %v2168 = vadd.f32 0.0, %v2167
        %v2169 = vpop.f32.mrb[0].mxu0
        %2170 = vmatprep.mubr.bf16.mxu0 0
        %2171 = vmatmul.mubr.bf16.gmra.mrb[0].mxu0 %v1959
        %v2172 = vpop.f32.mrb[0].mxu0
        %v2173 = vadd.f32 0.0, %v2172
        %v2174 = vpop.f32.mrb[0].mxu0
        %v2175 = vpop.f32.mrb[0].mxu0
        %v2176 = vadd.f32 0.0, %v2175
        %v2177 = vpop.f32.mrb[0].mxu0
        %2178 = vmatprep.mubr.bf16.mxu0 0
        %2179 = vmatmul.mubr.bf16.gmra.mrb[0].mxu0 %v1960
        %v2180 = vpop.f32.mrb[0].mxu0
        %v2181 = vadd.f32 0.0, %v2180
        %v2182 = vpop.f32.mrb[0].mxu0
        %v2183 = vpop.f32.mrb[0].mxu0
        %v2184 = vadd.f32 0.0, %v2183
        %v2185 = vpop.f32.mrb[0].mxu0
        %2186 = vdwg.mxu0
        %v2187 = vadd.f32 %v1787, %v2061
        %v2188 = vadd.f32 %v1790, %v2064
        %v2189 = vadd.f32 %v1795, %v2069
        %v2190 = vadd.f32 %v1798, %v2072
        %v2191 = vadd.f32 %v1803, %v2077
        %v2192 = vadd.f32 %v1806, %v2080
        %v2193 = vadd.f32 %v1811, %v2085
        %v2194 = vadd.f32 %v1814, %v2088
        %v2195 = vadd.f32 %v1819, %v2093
        %v2196 = vadd.f32 %v1822, %v2096
        %v2197 = vadd.f32 %v1827, %v2101
        %v2198 = vadd.f32 %v1830, %v2104
        %v2199 = vadd.f32 %v1835, %v2109
        %v2200 = vadd.f32 %v1838, %v2112
        %v2201 = vadd.f32 %v1843, %v2117
        %v2202 = vadd.f32 %v1846, %v2120
        %v2203 = vadd.f32 %v1851, %v2125
        %v2204 = vadd.f32 %v1854, %v2128
        %v2205 = vadd.f32 %v1859, %v2133
        %v2206 = vadd.f32 %v1862, %v2136
        %v2207 = vadd.f32 %v1867, %v2141
        %v2208 = vadd.f32 %v1870, %v2144
        %v2209 = vadd.f32 %v1875, %v2149
        %v2210 = vadd.f32 %v1878, %v2152
        %v2211 = vadd.f32 %v1883, %v2157
        %v2212 = vadd.f32 %v1886, %v2160
        %v2213 = vadd.f32 %v1891, %v2165
        %v2214 = vadd.f32 %v1894, %v2168
        %v2215 = vadd.f32 %v1899, %v2173
        %v2216 = vadd.f32 %v1902, %v2176
        %v2217 = vadd.f32 %v1907, %v2181
        %v2218 = vadd.f32 %v1910, %v2184
        %v2219 = vld [vmem:[%s3 + $0x2] sm:$0x1]
        %v2220 = vlaneseq
        %v2221 = vshrl.u32 %v2220, 7
        %v2222 = vsub.s32 0, %v2221
        %v2223 = vrot.slane %v2219, %v2222
        %v2224 = vmul.f32 %v2187, %v2223
        %v2225 = vmul.f32 %v2188, %v2223
        %v2226 = vmul.f32 %v2189, %v2223
        %v2227 = vmul.f32 %v2190, %v2223
        %v2228 = vmul.f32 %v2191, %v2223
        %v2229 = vmul.f32 %v2192, %v2223
        %v2230 = vmul.f32 %v2193, %v2223
        %v2231 = vmul.f32 %v2194, %v2223
        %v2232 = vmul.f32 %v2195, %v2223
        %v2233 = vmul.f32 %v2196, %v2223
        %v2234 = vmul.f32 %v2197, %v2223
        %v2235 = vmul.f32 %v2198, %v2223
        %v2236 = vmul.f32 %v2199, %v2223
        %v2237 = vmul.f32 %v2200, %v2223
        %v2238 = vmul.f32 %v2201, %v2223
        %v2239 = vmul.f32 %v2202, %v2223
        %v2240 = vmul.f32 %v2203, %v2223
        %v2241 = vmul.f32 %v2204, %v2223
        %v2242 = vmul.f32 %v2205, %v2223
        %v2243 = vmul.f32 %v2206, %v2223
        %v2244 = vmul.f32 %v2207, %v2223
        %v2245 = vmul.f32 %v2208, %v2223
        %v2246 = vmul.f32 %v2209, %v2223
        %v2247 = vmul.f32 %v2210, %v2223
        %v2248 = vmul.f32 %v2211, %v2223
        %v2249 = vmul.f32 %v2212, %v2223
        %v2250 = vmul.f32 %v2213, %v2223
        %v2251 = vmul.f32 %v2214, %v2223
        %v2252 = vmul.f32 %v2215, %v2223
        %v2253 = vmul.f32 %v2216, %v2223
        %v2254 = vmul.f32 %v2217, %v2223
        %v2255 = vmul.f32 %v2218, %v2223
        %v2256 = vld [vmem:[%s3 + $0x3] sm:$0x1]
        %v2257 = vlaneseq
        %v2258 = vshrl.u32 %v2257, 7
        %v2259 = vsub.s32 0, %v2258
        %v2260 = vrot.slane %v2256, %v2259
        %v2261 = vadd.f32 %v2224, %v2260
        %v2262 = vadd.f32 %v2225, %v2260
        %v2263 = vadd.f32 %v2226, %v2260
        %v2264 = vadd.f32 %v2227, %v2260
        %v2265 = vadd.f32 %v2228, %v2260
        %v2266 = vadd.f32 %v2229, %v2260
        %v2267 = vadd.f32 %v2230, %v2260
        %v2268 = vadd.f32 %v2231, %v2260
        %v2269 = vadd.f32 %v2232, %v2260
        %v2270 = vadd.f32 %v2233, %v2260
        %v2271 = vadd.f32 %v2234, %v2260
        %v2272 = vadd.f32 %v2235, %v2260
        %v2273 = vadd.f32 %v2236, %v2260
        %v2274 = vadd.f32 %v2237, %v2260
        %v2275 = vadd.f32 %v2238, %v2260
        %v2276 = vadd.f32 %v2239, %v2260
        %v2277 = vadd.f32 %v2240, %v2260
        %v2278 = vadd.f32 %v2241, %v2260
        %v2279 = vadd.f32 %v2242, %v2260
        %v2280 = vadd.f32 %v2243, %v2260
        %v2281 = vadd.f32 %v2244, %v2260
        %v2282 = vadd.f32 %v2245, %v2260
        %v2283 = vadd.f32 %v2246, %v2260
        %v2284 = vadd.f32 %v2247, %v2260
        %v2285 = vadd.f32 %v2248, %v2260
        %v2286 = vadd.f32 %v2249, %v2260
        %v2287 = vadd.f32 %v2250, %v2260
        %v2288 = vadd.f32 %v2251, %v2260
        %v2289 = vadd.f32 %v2252, %v2260
        %v2290 = vadd.f32 %v2253, %v2260
        %v2291 = vadd.f32 %v2254, %v2260
        %v2292 = vadd.f32 %v2255, %v2260
        %v2293 = vrot.slane %v2261, 4
        %v2294 = vadd.f32 %v2261, %v2293
        %v2295 = vrot.slane %v2294, 2
        %v2296 = vadd.f32 %v2294, %v2295
        %v2297 = vrot.slane %v2296, 1
        %v2298 = vadd.f32 %v2296, %v2297
        %v2299 = vrot.slane %v2262, 4
        %v2300 = vadd.f32 %v2262, %v2299
        %v2301 = vrot.slane %v2300, 2
        %v2302 = vadd.f32 %v2300, %v2301
        %v2303 = vrot.slane %v2302, 1
        %v2304 = vadd.f32 %v2302, %v2303
        %v2305 = vrot.slane %v2263, 4
        %v2306 = vadd.f32 %v2263, %v2305
        %v2307 = vrot.slane %v2306, 2
        %v2308 = vadd.f32 %v2306, %v2307
        %v2309 = vrot.slane %v2308, 1
        %v2310 = vadd.f32 %v2308, %v2309
        %v2311 = vrot.slane %v2264, 4
        %v2312 = vadd.f32 %v2264, %v2311
        %v2313 = vrot.slane %v2312, 2
        %v2314 = vadd.f32 %v2312, %v2313
        %v2315 = vrot.slane %v2314, 1
        %v2316 = vadd.f32 %v2314, %v2315
        %v2317 = vrot.slane %v2265, 4
        %v2318 = vadd.f32 %v2265, %v2317
        %v2319 = vrot.slane %v2318, 2
        %v2320 = vadd.f32 %v2318, %v2319
        %v2321 = vrot.slane %v2320, 1
        %v2322 = vadd.f32 %v2320, %v2321
        %v2323 = vrot.slane %v2266, 4
        %v2324 = vadd.f32 %v2266, %v2323
        %v2325 = vrot.slane %v2324, 2
        %v2326 = vadd.f32 %v2324, %v2325
        %v2327 = vrot.slane %v2326, 1
        %v2328 = vadd.f32 %v2326, %v2327
        %v2329 = vrot.slane %v2267, 4
        %v2330 = vadd.f32 %v2267, %v2329
        %v2331 = vrot.slane %v2330, 2
        %v2332 = vadd.f32 %v2330, %v2331
        %v2333 = vrot.slane %v2332, 1
        %v2334 = vadd.f32 %v2332, %v2333
        %v2335 = vrot.slane %v2268, 4
        %v2336 = vadd.f32 %v2268, %v2335
        %v2337 = vrot.slane %v2336, 2
        %v2338 = vadd.f32 %v2336, %v2337
        %v2339 = vrot.slane %v2338, 1
        %v2340 = vadd.f32 %v2338, %v2339
        %v2341 = vrot.slane %v2269, 4
        %v2342 = vadd.f32 %v2269, %v2341
        %v2343 = vrot.slane %v2342, 2
        %v2344 = vadd.f32 %v2342, %v2343
        %v2345 = vrot.slane %v2344, 1
        %v2346 = vadd.f32 %v2344, %v2345
        %v2347 = vrot.slane %v2270, 4
        %v2348 = vadd.f32 %v2270, %v2347
        %v2349 = vrot.slane %v2348, 2
        %v2350 = vadd.f32 %v2348, %v2349
        %v2351 = vrot.slane %v2350, 1
        %v2352 = vadd.f32 %v2350, %v2351
        %v2353 = vrot.slane %v2271, 4
        %v2354 = vadd.f32 %v2271, %v2353
        %v2355 = vrot.slane %v2354, 2
        %v2356 = vadd.f32 %v2354, %v2355
        %v2357 = vrot.slane %v2356, 1
        %v2358 = vadd.f32 %v2356, %v2357
        %v2359 = vrot.slane %v2272, 4
        %v2360 = vadd.f32 %v2272, %v2359
        %v2361 = vrot.slane %v2360, 2
        %v2362 = vadd.f32 %v2360, %v2361
        %v2363 = vrot.slane %v2362, 1
        %v2364 = vadd.f32 %v2362, %v2363
        %v2365 = vrot.slane %v2273, 4
        %v2366 = vadd.f32 %v2273, %v2365
        %v2367 = vrot.slane %v2366, 2
        %v2368 = vadd.f32 %v2366, %v2367
        %v2369 = vrot.slane %v2368, 1
        %v2370 = vadd.f32 %v2368, %v2369
        %v2371 = vrot.slane %v2274, 4
        %v2372 = vadd.f32 %v2274, %v2371
        %v2373 = vrot.slane %v2372, 2
        %v2374 = vadd.f32 %v2372, %v2373
        %v2375 = vrot.slane %v2374, 1
        %v2376 = vadd.f32 %v2374, %v2375
        %v2377 = vrot.slane %v2275, 4
        %v2378 = vadd.f32 %v2275, %v2377
        %v2379 = vrot.slane %v2378, 2
        %v2380 = vadd.f32 %v2378, %v2379
        %v2381 = vrot.slane %v2380, 1
        %v2382 = vadd.f32 %v2380, %v2381
        %v2383 = vrot.slane %v2276, 4
        %v2384 = vadd.f32 %v2276, %v2383
        %v2385 = vrot.slane %v2384, 2
        %v2386 = vadd.f32 %v2384, %v2385
        %v2387 = vrot.slane %v2386, 1
        %v2388 = vadd.f32 %v2386, %v2387
        %v2389 = vrot.slane %v2277, 4
        %v2390 = vadd.f32 %v2277, %v2389
        %v2391 = vrot.slane %v2390, 2
        %v2392 = vadd.f32 %v2390, %v2391
        %v2393 = vrot.slane %v2392, 1
        %v2394 = vadd.f32 %v2392, %v2393
        %v2395 = vrot.slane %v2278, 4
        %v2396 = vadd.f32 %v2278, %v2395
        %v2397 = vrot.slane %v2396, 2
        %v2398 = vadd.f32 %v2396, %v2397
        %v2399 = vrot.slane %v2398, 1
        %v2400 = vadd.f32 %v2398, %v2399
        %v2401 = vrot.slane %v2279, 4
        %v2402 = vadd.f32 %v2279, %v2401
        %v2403 = vrot.slane %v2402, 2
        %v2404 = vadd.f32 %v2402, %v2403
        %v2405 = vrot.slane %v2404, 1
        %v2406 = vadd.f32 %v2404, %v2405
        %v2407 = vrot.slane %v2280, 4
        %v2408 = vadd.f32 %v2280, %v2407
        %v2409 = vrot.slane %v2408, 2
        %v2410 = vadd.f32 %v2408, %v2409
        %v2411 = vrot.slane %v2410, 1
        %v2412 = vadd.f32 %v2410, %v2411
        %v2413 = vrot.slane %v2281, 4
        %v2414 = vadd.f32 %v2281, %v2413
        %v2415 = vrot.slane %v2414, 2
        %v2416 = vadd.f32 %v2414, %v2415
        %v2417 = vrot.slane %v2416, 1
        %v2418 = vadd.f32 %v2416, %v2417
        %v2419 = vrot.slane %v2282, 4
        %v2420 = vadd.f32 %v2282, %v2419
        %v2421 = vrot.slane %v2420, 2
        %v2422 = vadd.f32 %v2420, %v2421
        %v2423 = vrot.slane %v2422, 1
        %v2424 = vadd.f32 %v2422, %v2423
        %v2425 = vrot.slane %v2283, 4
        %v2426 = vadd.f32 %v2283, %v2425
        %v2427 = vrot.slane %v2426, 2
        %v2428 = vadd.f32 %v2426, %v2427
        %v2429 = vrot.slane %v2428, 1
        %v2430 = vadd.f32 %v2428, %v2429
        %v2431 = vrot.slane %v2284, 4
        %v2432 = vadd.f32 %v2284, %v2431
        %v2433 = vrot.slane %v2432, 2
        %v2434 = vadd.f32 %v2432, %v2433
        %v2435 = vrot.slane %v2434, 1
        %v2436 = vadd.f32 %v2434, %v2435
        %v2437 = vrot.slane %v2285, 4
        %v2438 = vadd.f32 %v2285, %v2437
        %v2439 = vrot.slane %v2438, 2
        %v2440 = vadd.f32 %v2438, %v2439
        %v2441 = vrot.slane %v2440, 1
        %v2442 = vadd.f32 %v2440, %v2441
        %v2443 = vrot.slane %v2286, 4
        %v2444 = vadd.f32 %v2286, %v2443
        %v2445 = vrot.slane %v2444, 2
        %v2446 = vadd.f32 %v2444, %v2445
        %v2447 = vrot.slane %v2446, 1
        %v2448 = vadd.f32 %v2446, %v2447
        %v2449 = vrot.slane %v2287, 4
        %v2450 = vadd.f32 %v2287, %v2449
        %v2451 = vrot.slane %v2450, 2
        %v2452 = vadd.f32 %v2450, %v2451
        %v2453 = vrot.slane %v2452, 1
        %v2454 = vadd.f32 %v2452, %v2453
        %v2455 = vrot.slane %v2288, 4
        %v2456 = vadd.f32 %v2288, %v2455
        %v2457 = vrot.slane %v2456, 2
        %v2458 = vadd.f32 %v2456, %v2457
        %v2459 = vrot.slane %v2458, 1
        %v2460 = vadd.f32 %v2458, %v2459
        %v2461 = vrot.slane %v2289, 4
        %v2462 = vadd.f32 %v2289, %v2461
        %v2463 = vrot.slane %v2462, 2
        %v2464 = vadd.f32 %v2462, %v2463
        %v2465 = vrot.slane %v2464, 1
        %v2466 = vadd.f32 %v2464, %v2465
        %v2467 = vrot.slane %v2290, 4
        %v2468 = vadd.f32 %v2290, %v2467
        %v2469 = vrot.slane %v2468, 2
        %v2470 = vadd.f32 %v2468, %v2469
        %v2471 = vrot.slane %v2470, 1
        %v2472 = vadd.f32 %v2470, %v2471
        %v2473 = vrot.slane %v2291, 4
        %v2474 = vadd.f32 %v2291, %v2473
        %v2475 = vrot.slane %v2474, 2
        %v2476 = vadd.f32 %v2474, %v2475
        %v2477 = vrot.slane %v2476, 1
        %v2478 = vadd.f32 %v2476, %v2477
        %v2479 = vrot.slane %v2292, 4
        %v2480 = vadd.f32 %v2292, %v2479
        %v2481 = vrot.slane %v2480, 2
        %v2482 = vadd.f32 %v2480, %v2481
        %v2483 = vrot.slane %v2482, 1
        %v2484 = vadd.f32 %v2482, %v2483
        %v2485 = vld [vmem:[%s4] sm:$0xff]
        %v2486 = vld [vmem:[%s4 + $0x8] sm:$0xff]
        %v2487 = vld [vmem:[%s4 + $0x10] sm:$0xff]
        %v2488 = vld [vmem:[%s4 + $0x18] sm:$0xff]
        %v2489 = vld [vmem:[%s4 + $0x20] sm:$0xff]
        %v2490 = vld [vmem:[%s4 + $0x28] sm:$0xff]
        %v2491 = vld [vmem:[%s4 + $0x30] sm:$0xff]
        %v2492 = vld [vmem:[%s4 + $0x38] sm:$0xff]
        %v2493 = vld [vmem:[%s4 + $0x40] sm:$0xff]
        %v2494 = vld [vmem:[%s4 + $0x48] sm:$0xff]
        %v2495 = vld [vmem:[%s4 + $0x50] sm:$0xff]
        %v2496 = vld [vmem:[%s4 + $0x58] sm:$0xff]
        %v2497 = vld [vmem:[%s4 + $0x60] sm:$0xff]
        %v2498 = vld [vmem:[%s4 + $0x68] sm:$0xff]
        %v2499 = vld [vmem:[%s4 + $0x70] sm:$0xff]
        %v2500 = vld [vmem:[%s4 + $0x78] sm:$0xff]
        %vm2533 = vcmask 1041409
        %v2534 = vsel %vm2533, %v2304, %v2298
        %vm2535 = vcmask 1042434
        %v2536 = vsel %vm2535, %v2310, %v2534
        %vm2537 = vcmask 1043459
        %v2538 = vsel %vm2537, %v2316, %v2536
        %vm2539 = vcmask 1044484
        %v2540 = vsel %vm2539, %v2322, %v2538
        %vm2541 = vcmask 1045509
        %v2542 = vsel %vm2541, %v2328, %v2540
        %vm2543 = vcmask 1046534
        %v2544 = vsel %vm2543, %v2334, %v2542
        %vm2545 = vcmask 1047559
        %v2546 = vsel %vm2545, %v2340, %v2544
        %v2547 = vsel %vm2533, %v2352, %v2346
        %v2548 = vsel %vm2535, %v2358, %v2547
        %v2549 = vsel %vm2537, %v2364, %v2548
        %v2550 = vsel %vm2539, %v2370, %v2549
        %v2551 = vsel %vm2541, %v2376, %v2550
        %v2552 = vsel %vm2543, %v2382, %v2551
        %v2553 = vsel %vm2545, %v2388, %v2552
        %v2554 = vsel %vm2533, %v2400, %v2394
        %v2555 = vsel %vm2535, %v2406, %v2554
        %v2556 = vsel %vm2537, %v2412, %v2555
        %v2557 = vsel %vm2539, %v2418, %v2556
        %v2558 = vsel %vm2541, %v2424, %v2557
        %v2559 = vsel %vm2543, %v2430, %v2558
        %v2560 = vsel %vm2545, %v2436, %v2559
        %v2561 = vsel %vm2533, %v2448, %v2442
        %v2562 = vsel %vm2535, %v2454, %v2561
        %v2563 = vsel %vm2537, %v2460, %v2562
        %v2564 = vsel %vm2539, %v2466, %v2563
        %v2565 = vsel %vm2541, %v2472, %v2564
        %v2566 = vsel %vm2543, %v2478, %v2565
        %v2567 = vsel %vm2545, %v2484, %v2566
        %2572 = vmatprep.subr.mxu0 0.0
        %2573 = vmatpush1.msra.mxu0 %v2485
        %2574 = vmatprep.subr.mxu0 0.0
        %2575 = vmatpush1.msra.mxu0 %v2486
        %2576 = vmatprep.subr.mxu0 0.0
        %2577 = vmatpush1.msra.mxu0 %v2487
        %2578 = vmatprep.subr.mxu0 0.0
        %2579 = vmatpush1.msra.mxu0 %v2488
        %2580 = vmatprep.subr.mxu0 0.0
        %2581 = vmatpush1.msra.mxu0 %v2489
        %2582 = vmatprep.subr.mxu0 0.0
        %2583 = vmatpush1.msra.mxu0 %v2490
        %2584 = vmatprep.subr.mxu0 0.0
        %2585 = vmatpush1.msra.mxu0 %v2491
        %2586 = vmatprep.subr.mxu0 0.0
        %2587 = vmatpush1.msra.mxu0 %v2492
        %2588 = vmatprep.subr.mxu0 0.0
        %2589 = vmatpush1.msra.mxu0 %v2493
        %2590 = vmatprep.subr.mxu0 0.0
        %2591 = vmatpush1.msra.mxu0 %v2494
        %2592 = vmatprep.subr.mxu0 0.0
        %2593 = vmatpush1.msra.mxu0 %v2495
        %2594 = vmatprep.subr.mxu0 0.0
        %2595 = vmatpush1.msra.mxu0 %v2496
        %2596 = vmatprep.subr.mxu0 0.0
        %2597 = vmatpush1.msra.mxu0 %v2497
        %2598 = vmatprep.subr.mxu0 0.0
        %2599 = vmatpush1.msra.mxu0 %v2498
        %2600 = vmatprep.subr.mxu0 0.0
        %2601 = vmatpush1.msra.mxu0 %v2499
        %2602 = vmatprep.subr.mxu0 0.0
        %2603 = vmatpush1.msra.mxu0 %v2500
        %2604 = vmatprep.subr.mxu0 0.0
        %2605 = vmatpush1.msra.mxu0 0.0
        %2606 = vmatprep.subr.mxu0 0.0
        %2607 = vmatpush1.msra.mxu0 0.0
        %2608 = vmatprep.subr.mxu0 0.0
        %2609 = vmatpush1.msra.mxu0 0.0
        %2610 = vmatprep.subr.mxu0 0.0
        %2611 = vmatpush1.msra.mxu0 0.0
        %2612 = vmatprep.subr.mxu0 0.0
        %2613 = vmatpush1.msra.mxu0 0.0
        %2614 = vmatprep.subr.mxu0 0.0
        %2615 = vmatpush1.msra.mxu0 0.0
        %2616 = vmatprep.subr.mxu0 0.0
        %2617 = vmatpush1.msra.mxu0 0.0
        %2618 = vmatprep.subr.mxu0 0.0
        %2619 = vmatpush1.msra.mxu0 0.0
        %2620 = vmatprep.subr.mxu0 0.0
        %2621 = vmatpush1.msra.mxu0 0.0
        %2622 = vmatprep.subr.mxu0 0.0
        %2623 = vmatpush1.msra.mxu0 0.0
        %2624 = vmatprep.subr.mxu0 0.0
        %2625 = vmatpush1.msra.mxu0 0.0
        %2626 = vmatprep.subr.mxu0 0.0
        %2627 = vmatpush1.msra.mxu0 0.0
        %2628 = vmatprep.subr.mxu0 0.0
        %2629 = vmatpush1.msra.mxu0 0.0
        %2630 = vmatprep.subr.mxu0 0.0
        %2631 = vmatpush1.msra.mxu0 0.0
        %2632 = vmatprep.subr.mxu0 0.0
        %2633 = vmatpush1.msra.mxu0 0.0
        %2634 = vmatprep.subr.mxu0 0.0
        %2635 = vmatpush1.msra.mxu0 0.0
        %2636 = vmatprep.mubr.f32.mxu0 0.0
        %2637 = vmatmul.mubr.f32.gmra.mrb[0].mxu0 %v2546
        %v2638 = vpop.f32.mrb[0].mxu0
        %v2639 = vadd.f32 0.0, %v2638
        %v2640 = vpop.f32.mrb[0].mxu0
        %2641 = vmatprep.mubr.f32.mxu0 0.0
        %2642 = vmatmul.mubr.f32.gmra.mrb[0].mxu0 %v2553
        %v2643 = vpop.f32.mrb[0].mxu0
        %v2644 = vadd.f32 0.0, %v2643
        %v2645 = vpop.f32.mrb[0].mxu0
        %2646 = vmatprep.mubr.f32.mxu0 0.0
        %2647 = vmatmul.mubr.f32.gmra.mrb[0].mxu0 %v2560
        %v2648 = vpop.f32.mrb[0].mxu0
        %v2649 = vadd.f32 0.0, %v2648
        %v2650 = vpop.f32.mrb[0].mxu0
        %2651 = vmatprep.mubr.f32.mxu0 0.0
        %2652 = vmatmul.mubr.f32.gmra.mrb[0].mxu0 %v2567
        %v2653 = vpop.f32.mrb[0].mxu0
        %v2654 = vadd.f32 0.0, %v2653
        %v2655 = vpop.f32.mrb[0].mxu0
        %2656 = vdwg.mxu0
        %v2657 = vld [vmem:[%s6] sm:$0xff]
        %v2658 = vld [vmem:[%s6 + $0x8] sm:$0xff]
        %vm2659 = vcmask 130048
        %v2661 = vsel %vm2659, %v2639, 0
        %v2664 = vsel %vm2659, %v2644, 0
        %v2667 = vsel %vm2659, %v2649, 0
        %v2670 = vsel %vm2659, %v2654, 0
        %2672 = vmatprep.subr.mxu0 0.0
        %2673 = vmatpush1.msra.mxu0 %v2657
        %2674 = vmatprep.subr.mxu0 0.0
        %2675 = vmatpush1.msra.mxu0 %v2658
        %2676 = vmatprep.subr.mxu0 0.0
        %2677 = vmatpush1.msra.mxu0 0.0
        %2678 = vmatprep.subr.mxu0 0.0
        %2679 = vmatpush1.msra.mxu0 0.0
        %2680 = vmatprep.subr.mxu0 0.0
        %2681 = vmatpush1.msra.mxu0 0.0
        %2682 = vmatprep.subr.mxu0 0.0
        %2683 = vmatpush1.msra.mxu0 0.0
        %2684 = vmatprep.subr.mxu0 0.0
        %2685 = vmatpush1.msra.mxu0 0.0
        %2686 = vmatprep.subr.mxu0 0.0
        %2687 = vmatpush1.msra.mxu0 0.0
        %2688 = vmatprep.subr.mxu0 0.0
        %2689 = vmatpush1.msra.mxu0 0.0
        %2690 = vmatprep.subr.mxu0 0.0
        %2691 = vmatpush1.msra.mxu0 0.0
        %2692 = vmatprep.subr.mxu0 0.0
        %2693 = vmatpush1.msra.mxu0 0.0
        %2694 = vmatprep.subr.mxu0 0.0
        %2695 = vmatpush1.msra.mxu0 0.0
        %2696 = vmatprep.subr.mxu0 0.0
        %2697 = vmatpush1.msra.mxu0 0.0
        %2698 = vmatprep.subr.mxu0 0.0
        %2699 = vmatpush1.msra.mxu0 0.0
        %2700 = vmatprep.subr.mxu0 0.0
        %2701 = vmatpush1.msra.mxu0 0.0
        %2702 = vmatprep.subr.mxu0 0.0
        %2703 = vmatpush1.msra.mxu0 0.0
        %2704 = vmatprep.subr.mxu0 0.0
        %2705 = vmatpush1.msra.mxu0 0.0
        %2706 = vmatprep.subr.mxu0 0.0
        %2707 = vmatpush1.msra.mxu0 0.0
        %2708 = vmatprep.subr.mxu0 0.0
        %2709 = vmatpush1.msra.mxu0 0.0
        %2710 = vmatprep.subr.mxu0 0.0
        %2711 = vmatpush1.msra.mxu0 0.0
        %2712 = vmatprep.subr.mxu0 0.0
        %2713 = vmatpush1.msra.mxu0 0.0
        %2714 = vmatprep.subr.mxu0 0.0
        %2715 = vmatpush1.msra.mxu0 0.0
        %2716 = vmatprep.subr.mxu0 0.0
        %2717 = vmatpush1.msra.mxu0 0.0
        %2718 = vmatprep.subr.mxu0 0.0
        %2719 = vmatpush1.msra.mxu0 0.0
        %2720 = vmatprep.subr.mxu0 0.0
        %2721 = vmatpush1.msra.mxu0 0.0
        %2722 = vmatprep.subr.mxu0 0.0
        %2723 = vmatpush1.msra.mxu0 0.0
        %2724 = vmatprep.subr.mxu0 0.0
        %2725 = vmatpush1.msra.mxu0 0.0
        %2726 = vmatprep.subr.mxu0 0.0
        %2727 = vmatpush1.msra.mxu0 0.0
        %2728 = vmatprep.subr.mxu0 0.0
        %2729 = vmatpush1.msra.mxu0 0.0
        %2730 = vmatprep.subr.mxu0 0.0
        %2731 = vmatpush1.msra.mxu0 0.0
        %2732 = vmatprep.subr.mxu0 0.0
        %2733 = vmatpush1.msra.mxu0 0.0
        %2734 = vmatprep.subr.mxu0 0.0
        %2735 = vmatpush1.msra.mxu0 0.0
        %2736 = vmatprep.mubr.f32.mxu0 0.0
        %2737 = vmatmul.mubr.f32.gmra.mrb[0].mxu0 %v2661
        %v2738 = vpop.f32.mrb[0].mxu0
        %v2739 = vadd.f32 0.0, %v2738
        %v2740 = vpop.f32.mrb[0].mxu0
        %2741 = vmatprep.mubr.f32.mxu0 0.0
        %2742 = vmatmul.mubr.f32.gmra.mrb[0].mxu0 %v2664
        %v2743 = vpop.f32.mrb[0].mxu0
        %v2744 = vadd.f32 0.0, %v2743
        %v2745 = vpop.f32.mrb[0].mxu0
        %2746 = vmatprep.mubr.f32.mxu0 0.0
        %2747 = vmatmul.mubr.f32.gmra.mrb[0].mxu0 %v2667
        %v2748 = vpop.f32.mrb[0].mxu0
        %v2749 = vadd.f32 0.0, %v2748
        %v2750 = vpop.f32.mrb[0].mxu0
        %2751 = vmatprep.mubr.f32.mxu0 0.0
        %2752 = vmatmul.mubr.f32.gmra.mrb[0].mxu0 %v2670
        %v2753 = vpop.f32.mrb[0].mxu0
        %v2754 = vadd.f32 0.0, %v2753
        %v2755 = vpop.f32.mrb[0].mxu0
        %2756 = vdwg.mxu0
        %v2757 = vmax.f32 %v2739, 0.0
        %v2758 = vmax.f32 %v2744, 0.0
        %v2759 = vmax.f32 %v2749, 0.0
        %v2760 = vmax.f32 %v2754, 0.0
        %v2761 = vld [vmem:[%s7] sm:$0xf]
        %vm2762 = vcmask 31744
        %v2764 = vsel %vm2762, %v2757, 0
        %v2767 = vsel %vm2762, %v2758, 0
        %v2770 = vsel %vm2762, %v2759, 0
        %v2773 = vsel %vm2762, %v2760, 0
        %vm2775 = vcmask 1043456
        %v2777 = vsel %vm2775, %v2761, 0
        %2779 = vmatprep.subr.mxu0 0.0
        %2780 = vmatpush1.msra.mxu0 %v2777
        %2781 = vmatprep.subr.mxu0 0.0
        %2782 = vmatpush1.msra.mxu0 0.0
        %2783 = vmatprep.subr.mxu0 0.0
        %2784 = vmatpush1.msra.mxu0 0.0
        %2785 = vmatprep.subr.mxu0 0.0
        %2786 = vmatpush1.msra.mxu0 0.0
        %2787 = vmatprep.subr.mxu0 0.0
        %2788 = vmatpush1.msra.mxu0 0.0
        %2789 = vmatprep.subr.mxu0 0.0
        %2790 = vmatpush1.msra.mxu0 0.0
        %2791 = vmatprep.subr.mxu0 0.0
        %2792 = vmatpush1.msra.mxu0 0.0
        %2793 = vmatprep.subr.mxu0 0.0
        %2794 = vmatpush1.msra.mxu0 0.0
        %2795 = vmatprep.subr.mxu0 0.0
        %2796 = vmatpush1.msra.mxu0 0.0
        %2797 = vmatprep.subr.mxu0 0.0
        %2798 = vmatpush1.msra.mxu0 0.0
        %2799 = vmatprep.subr.mxu0 0.0
        %2800 = vmatpush1.msra.mxu0 0.0
        %2801 = vmatprep.subr.mxu0 0.0
        %2802 = vmatpush1.msra.mxu0 0.0
        %2803 = vmatprep.subr.mxu0 0.0
        %2804 = vmatpush1.msra.mxu0 0.0
        %2805 = vmatprep.subr.mxu0 0.0
        %2806 = vmatpush1.msra.mxu0 0.0
        %2807 = vmatprep.subr.mxu0 0.0
        %2808 = vmatpush1.msra.mxu0 0.0
        %2809 = vmatprep.subr.mxu0 0.0
        %2810 = vmatpush1.msra.mxu0 0.0
        %2811 = vmatprep.subr.mxu0 0.0
        %2812 = vmatpush1.msra.mxu0 0.0
        %2813 = vmatprep.subr.mxu0 0.0
        %2814 = vmatpush1.msra.mxu0 0.0
        %2815 = vmatprep.subr.mxu0 0.0
        %2816 = vmatpush1.msra.mxu0 0.0
        %2817 = vmatprep.subr.mxu0 0.0
        %2818 = vmatpush1.msra.mxu0 0.0
        %2819 = vmatprep.subr.mxu0 0.0
        %2820 = vmatpush1.msra.mxu0 0.0
        %2821 = vmatprep.subr.mxu0 0.0
        %2822 = vmatpush1.msra.mxu0 0.0
        %2823 = vmatprep.subr.mxu0 0.0
        %2824 = vmatpush1.msra.mxu0 0.0
        %2825 = vmatprep.subr.mxu0 0.0
        %2826 = vmatpush1.msra.mxu0 0.0
        %2827 = vmatprep.subr.mxu0 0.0
        %2828 = vmatpush1.msra.mxu0 0.0
        %2829 = vmatprep.subr.mxu0 0.0
        %2830 = vmatpush1.msra.mxu0 0.0
        %2831 = vmatprep.subr.mxu0 0.0
        %2832 = vmatpush1.msra.mxu0 0.0
        %2833 = vmatprep.subr.mxu0 0.0
        %2834 = vmatpush1.msra.mxu0 0.0
        %2835 = vmatprep.subr.mxu0 0.0
        %2836 = vmatpush1.msra.mxu0 0.0
        %2837 = vmatprep.subr.mxu0 0.0
        %2838 = vmatpush1.msra.mxu0 0.0
        %2839 = vmatprep.subr.mxu0 0.0
        %2840 = vmatpush1.msra.mxu0 0.0
        %2841 = vmatprep.subr.mxu0 0.0
        %2842 = vmatpush1.msra.mxu0 0.0
        %2843 = vmatprep.mubr.f32.mxu0 0.0
        %2844 = vmatmul.mubr.f32.gmra.mrb[0].mxu0 %v2764
        %v2845 = vpop.f32.mrb[0].mxu0
        %v2846 = vadd.f32 0.0, %v2845
        %v2847 = vpop.f32.mrb[0].mxu0
        %2848 = vmatprep.mubr.f32.mxu0 0.0
        %2849 = vmatmul.mubr.f32.gmra.mrb[0].mxu0 %v2767
        %v2850 = vpop.f32.mrb[0].mxu0
        %v2851 = vadd.f32 0.0, %v2850
        %v2852 = vpop.f32.mrb[0].mxu0
        %2853 = vmatprep.mubr.f32.mxu0 0.0
        %2854 = vmatmul.mubr.f32.gmra.mrb[0].mxu0 %v2770
        %v2855 = vpop.f32.mrb[0].mxu0
        %v2856 = vadd.f32 0.0, %v2855
        %v2857 = vpop.f32.mrb[0].mxu0
        %2858 = vmatprep.mubr.f32.mxu0 0.0
        %2859 = vmatmul.mubr.f32.gmra.mrb[0].mxu0 %v2773
        %v2860 = vpop.f32.mrb[0].mxu0
        %v2861 = vadd.f32 0.0, %v2860
        %v2862 = vpop.f32.mrb[0].mxu0
        %2863 = vdwg.mxu0
        %v2864 = vxor.u32 %v2846, 2147483648
        %v2865 = vxor.u32 %v2851, 2147483648
        %v2866 = vxor.u32 %v2856, 2147483648
        %v2867 = vxor.u32 %v2861, 2147483648
        %v2868 = vmul.f32 %v2864, 1.442695
        %v2869 = vpow.pop %v2868
        %v2870 = vmul.f32 %v2865, 1.442695
        %v2871 = vpow.pop %v2870
        %v2872 = vmul.f32 %v2866, 1.442695
        %v2873 = vpow.pop %v2872
        %v2874 = vmul.f32 %v2867, 1.442695
        %v2875 = vpow.pop %v2874
        %v2876 = vadd.f32 %v2869, 1.0
        %v2877 = vadd.f32 %v2871, 1.0
        %v2878 = vadd.f32 %v2873, 1.0
        %v2879 = vadd.f32 %v2875, 1.0
        %v2880 = vrcp.pop %v2876
        %v2881 = vmul.f32 1.0, %v2880
        %v2882 = vrcp.pop %v2877
        %v2883 = vmul.f32 1.0, %v2882
        %v2884 = vrcp.pop %v2878
        %v2885 = vmul.f32 1.0, %v2884
        %v2886 = vrcp.pop %v2879
        %v2887 = vmul.f32 1.0, %v2886
        %v2888 = vld [vmem:[%s5] sm:$0xff]
        %v2889 = vld [vmem:[%s5 + $0x8] sm:$0xff]
        %v2891 = vsel %vm2659, %v2881, 0
        %v2894 = vsel %vm2659, %v2883, 0
        %v2897 = vsel %vm2659, %v2885, 0
        %v2900 = vsel %vm2659, %v2887, 0
        %2902 = vmatprep.subr.mxu0 0.0
        %2903 = vmatpush1.msra.mxu0 %v2888
        %2904 = vmatprep.subr.mxu0 0.0
        %2905 = vmatpush1.msra.mxu0 %v2889
        %2906 = vmatprep.subr.mxu0 0.0
        %2907 = vmatpush1.msra.mxu0 0.0
        %2908 = vmatprep.subr.mxu0 0.0
        %2909 = vmatpush1.msra.mxu0 0.0
        %2910 = vmatprep.subr.mxu0 0.0
        %2911 = vmatpush1.msra.mxu0 0.0
        %2912 = vmatprep.subr.mxu0 0.0
        %2913 = vmatpush1.msra.mxu0 0.0
        %2914 = vmatprep.subr.mxu0 0.0
        %2915 = vmatpush1.msra.mxu0 0.0
        %2916 = vmatprep.subr.mxu0 0.0
        %2917 = vmatpush1.msra.mxu0 0.0
        %2918 = vmatprep.subr.mxu0 0.0
        %2919 = vmatpush1.msra.mxu0 0.0
        %2920 = vmatprep.subr.mxu0 0.0
        %2921 = vmatpush1.msra.mxu0 0.0
        %2922 = vmatprep.subr.mxu0 0.0
        %2923 = vmatpush1.msra.mxu0 0.0
        %2924 = vmatprep.subr.mxu0 0.0
        %2925 = vmatpush1.msra.mxu0 0.0
        %2926 = vmatprep.subr.mxu0 0.0
        %2927 = vmatpush1.msra.mxu0 0.0
        %2928 = vmatprep.subr.mxu0 0.0
        %2929 = vmatpush1.msra.mxu0 0.0
        %2930 = vmatprep.subr.mxu0 0.0
        %2931 = vmatpush1.msra.mxu0 0.0
        %2932 = vmatprep.subr.mxu0 0.0
        %2933 = vmatpush1.msra.mxu0 0.0
        %2934 = vmatprep.subr.mxu0 0.0
        %2935 = vmatpush1.msra.mxu0 0.0
        %2936 = vmatprep.subr.mxu0 0.0
        %2937 = vmatpush1.msra.mxu0 0.0
        %2938 = vmatprep.subr.mxu0 0.0
        %2939 = vmatpush1.msra.mxu0 0.0
        %2940 = vmatprep.subr.mxu0 0.0
        %2941 = vmatpush1.msra.mxu0 0.0
        %2942 = vmatprep.subr.mxu0 0.0
        %2943 = vmatpush1.msra.mxu0 0.0
        %2944 = vmatprep.subr.mxu0 0.0
        %2945 = vmatpush1.msra.mxu0 0.0
        %2946 = vmatprep.subr.mxu0 0.0
        %2947 = vmatpush1.msra.mxu0 0.0
        %2948 = vmatprep.subr.mxu0 0.0
        %2949 = vmatpush1.msra.mxu0 0.0
        %2950 = vmatprep.subr.mxu0 0.0
        %2951 = vmatpush1.msra.mxu0 0.0
        %2952 = vmatprep.subr.mxu0 0.0
        %2953 = vmatpush1.msra.mxu0 0.0
        %2954 = vmatprep.subr.mxu0 0.0
        %2955 = vmatpush1.msra.mxu0 0.0
        %2956 = vmatprep.subr.mxu0 0.0
        %2957 = vmatpush1.msra.mxu0 0.0
        %2958 = vmatprep.subr.mxu0 0.0
        %2959 = vmatpush1.msra.mxu0 0.0
        %2960 = vmatprep.subr.mxu0 0.0
        %2961 = vmatpush1.msra.mxu0 0.0
        %2962 = vmatprep.subr.mxu0 0.0
        %2963 = vmatpush1.msra.mxu0 0.0
        %2964 = vmatprep.subr.mxu0 0.0
        %2965 = vmatpush1.msra.mxu0 0.0
        %2966 = vmatprep.mubr.f32.mxu0 0.0
        %2967 = vmatmul.mubr.f32.gmra.mrb[0].mxu0 %v2891
        %v2968 = vpop.f32.mrb[0].mxu0
        %v2969 = vadd.f32 0.0, %v2968
        %v2970 = vpop.f32.mrb[0].mxu0
        %2971 = vmatprep.mubr.f32.mxu0 0.0
        %2972 = vmatmul.mubr.f32.gmra.mrb[0].mxu0 %v2894
        %v2973 = vpop.f32.mrb[0].mxu0
        %v2974 = vadd.f32 0.0, %v2973
        %v2975 = vpop.f32.mrb[0].mxu0
        %2976 = vmatprep.mubr.f32.mxu0 0.0
        %2977 = vmatmul.mubr.f32.gmra.mrb[0].mxu0 %v2897
        %v2978 = vpop.f32.mrb[0].mxu0
        %v2979 = vadd.f32 0.0, %v2978
        %v2980 = vpop.f32.mrb[0].mxu0
        %2981 = vmatprep.mubr.f32.mxu0 0.0
        %2982 = vmatmul.mubr.f32.gmra.mrb[0].mxu0 %v2900
        %v2983 = vpop.f32.mrb[0].mxu0
        %v2984 = vadd.f32 0.0, %v2983
        %v2985 = vpop.f32.mrb[0].mxu0
        %2986 = vdwg.mxu0
        %v2987 = vld [vmem:[%s307 + $0x1] sm:$0xff]
        %v2988 = vld [vmem:[%s307 + $0x11] sm:$0xff]
        %v2989 = vld [vmem:[%s307 + $0x21] sm:$0xff]
        %v2990 = vld [vmem:[%s307 + $0x31] sm:$0xff]
        %v2991 = vld [vmem:[%s307 + $0x41] sm:$0xff]
        %v2992 = vld [vmem:[%s307 + $0x51] sm:$0xff]
        %v2993 = vld [vmem:[%s307 + $0x61] sm:$0xff]
        %v2994 = vld [vmem:[%s307 + $0x71] sm:$0xff]
        %v2995 = vld [vmem:[%s307 + $0x81] sm:$0xff]
        %v2996 = vld [vmem:[%s307 + $0x91] sm:$0xff]
        %v2997 = vld [vmem:[%s307 + $0xa1] sm:$0xff]
        %v2998 = vld [vmem:[%s307 + $0xb1] sm:$0xff]
        %v2999 = vld [vmem:[%s307 + $0xc1] sm:$0xff]
        %v3000 = vld [vmem:[%s307 + $0xd1] sm:$0xff]
        %v3001 = vld [vmem:[%s307 + $0xe1] sm:$0xff]
        %v3002 = vld [vmem:[%s307 + $0xf1] sm:$0xff]
        %v3003 = vld [vmem:[%s307 + $0x101] sm:$0xff]
        %v3004 = vld [vmem:[%s307 + $0x111] sm:$0xff]
        %v3005 = vld [vmem:[%s307 + $0x121] sm:$0xff]
        %v3006 = vld [vmem:[%s307 + $0x131] sm:$0xff]
        %v3007 = vld [vmem:[%s307 + $0x141] sm:$0xff]
        %v3008 = vld [vmem:[%s307 + $0x151] sm:$0xff]
        %v3009 = vld [vmem:[%s307 + $0x161] sm:$0xff]
        %v3010 = vld [vmem:[%s307 + $0x171] sm:$0xff]
        %v3011 = vld [vmem:[%s307 + $0x181] sm:$0xff]
        %v3012 = vld [vmem:[%s307 + $0x191] sm:$0xff]
        %v3013 = vld [vmem:[%s307 + $0x1a1] sm:$0xff]
        %v3014 = vld [vmem:[%s307 + $0x1b1] sm:$0xff]
        %v3015 = vld [vmem:[%s307 + $0x1c1] sm:$0xff]
        %v3016 = vld [vmem:[%s307 + $0x1d1] sm:$0xff]
        %v3017 = vld [vmem:[%s307 + $0x1e1] sm:$0xff]
        %v3018 = vld [vmem:[%s307 + $0x1f1] sm:$0xff]
        %v3023 = vcombine.high %v2969, %v2969
        %v3025 = vunpack.c.l.s4 1966171168
        %v3026 = vunpack.c.0.s8 %v3025
        %v3027 = vlaneseq
        %v3028 = vshrl.u32 %v3027, 7
        %v3029 = vsub.s32 %v3026, %v3028
        %v3030 = vrot.slane %v2969, %v3029
        %v3032 = vunpack.c.l.s4 1966171168
        %v3033 = vunpack.c.0.s8 %v3032
        %v3034 = vlaneseq
        %v3035 = vshrl.u32 %v3034, 7
        %v3036 = vsub.s32 %v3033, %v3035
        %v3037 = vrot.slane %v3023, %v3036
        %v3038 = vcombine.high %v3030, %v3030
        %v3039 = vcombine.high %v3037, %v3037
        %v3041 = vunpack.c.l.s4 1966171168
        %v3042 = vunpack.c.0.s8 %v3041
        %v3043 = vlaneseq
        %v3044 = vshrl.u32 %v3043, 7
        %v3045 = vsub.s32 %v3042, %v3044
        %v3046 = vrot.slane %v3030, %v3045
        %v3048 = vunpack.c.l.s4 1966171168
        %v3049 = vunpack.c.0.s8 %v3048
        %v3050 = vlaneseq
        %v3051 = vshrl.u32 %v3050, 7
        %v3052 = vsub.s32 %v3049, %v3051
        %v3053 = vrot.slane %v3037, %v3052
        %v3055 = vunpack.c.l.s4 1966171168
        %v3056 = vunpack.c.0.s8 %v3055
        %v3057 = vlaneseq
        %v3058 = vshrl.u32 %v3057, 7
        %v3059 = vsub.s32 %v3056, %v3058
        %v3060 = vrot.slane %v3038, %v3059
        %v3062 = vunpack.c.l.s4 1966171168
        %v3063 = vunpack.c.0.s8 %v3062
        %v3064 = vlaneseq
        %v3065 = vshrl.u32 %v3064, 7
        %v3066 = vsub.s32 %v3063, %v3065
        %v3067 = vrot.slane %v3039, %v3066
        %v3068 = vcombine.high %v3046, %v3046
        %v3069 = vcombine.high %v3053, %v3053
        %v3070 = vcombine.high %v3060, %v3060
        %v3071 = vcombine.high %v3067, %v3067
        %v3072 = vcombine.high %v2974, %v2974
        %v3074 = vunpack.c.l.s4 1966171168
        %v3075 = vunpack.c.0.s8 %v3074
        %v3076 = vlaneseq
        %v3077 = vshrl.u32 %v3076, 7
        %v3078 = vsub.s32 %v3075, %v3077
        %v3079 = vrot.slane %v2974, %v3078
        %v3081 = vunpack.c.l.s4 1966171168
        %v3082 = vunpack.c.0.s8 %v3081
        %v3083 = vlaneseq
        %v3084 = vshrl.u32 %v3083, 7
        %v3085 = vsub.s32 %v3082, %v3084
        %v3086 = vrot.slane %v3072, %v3085
        %v3087 = vcombine.high %v3079, %v3079
        %v3088 = vcombine.high %v3086, %v3086
        %v3090 = vunpack.c.l.s4 1966171168
        %v3091 = vunpack.c.0.s8 %v3090
        %v3092 = vlaneseq
        %v3093 = vshrl.u32 %v3092, 7
        %v3094 = vsub.s32 %v3091, %v3093
        %v3095 = vrot.slane %v3079, %v3094
        %v3097 = vunpack.c.l.s4 1966171168
        %v3098 = vunpack.c.0.s8 %v3097
        %v3099 = vlaneseq
        %v3100 = vshrl.u32 %v3099, 7
        %v3101 = vsub.s32 %v3098, %v3100
        %v3102 = vrot.slane %v3086, %v3101
        %v3104 = vunpack.c.l.s4 1966171168
        %v3105 = vunpack.c.0.s8 %v3104
        %v3106 = vlaneseq
        %v3107 = vshrl.u32 %v3106, 7
        %v3108 = vsub.s32 %v3105, %v3107
        %v3109 = vrot.slane %v3087, %v3108
        %v3111 = vunpack.c.l.s4 1966171168
        %v3112 = vunpack.c.0.s8 %v3111
        %v3113 = vlaneseq
        %v3114 = vshrl.u32 %v3113, 7
        %v3115 = vsub.s32 %v3112, %v3114
        %v3116 = vrot.slane %v3088, %v3115
        %v3117 = vcombine.high %v3095, %v3095
        %v3118 = vcombine.high %v3102, %v3102
        %v3119 = vcombine.high %v3109, %v3109
        %v3120 = vcombine.high %v3116, %v3116
        %v3121 = vcombine.high %v2979, %v2979
        %v3123 = vunpack.c.l.s4 1966171168
        %v3124 = vunpack.c.0.s8 %v3123
        %v3125 = vlaneseq
        %v3126 = vshrl.u32 %v3125, 7
        %v3127 = vsub.s32 %v3124, %v3126
        %v3128 = vrot.slane %v2979, %v3127
        %v3130 = vunpack.c.l.s4 1966171168
        %v3131 = vunpack.c.0.s8 %v3130
        %v3132 = vlaneseq
        %v3133 = vshrl.u32 %v3132, 7
        %v3134 = vsub.s32 %v3131, %v3133
        %v3135 = vrot.slane %v3121, %v3134
        %v3136 = vcombine.high %v3128, %v3128
        %v3137 = vcombine.high %v3135, %v3135
        %v3139 = vunpack.c.l.s4 1966171168
        %v3140 = vunpack.c.0.s8 %v3139
        %v3141 = vlaneseq
        %v3142 = vshrl.u32 %v3141, 7
        %v3143 = vsub.s32 %v3140, %v3142
        %v3144 = vrot.slane %v3128, %v3143
        %v3146 = vunpack.c.l.s4 1966171168
        %v3147 = vunpack.c.0.s8 %v3146
        %v3148 = vlaneseq
        %v3149 = vshrl.u32 %v3148, 7
        %v3150 = vsub.s32 %v3147, %v3149
        %v3151 = vrot.slane %v3135, %v3150
        %v3153 = vunpack.c.l.s4 1966171168
        %v3154 = vunpack.c.0.s8 %v3153
        %v3155 = vlaneseq
        %v3156 = vshrl.u32 %v3155, 7
        %v3157 = vsub.s32 %v3154, %v3156
        %v3158 = vrot.slane %v3136, %v3157
        %v3160 = vunpack.c.l.s4 1966171168
        %v3161 = vunpack.c.0.s8 %v3160
        %v3162 = vlaneseq
        %v3163 = vshrl.u32 %v3162, 7
        %v3164 = vsub.s32 %v3161, %v3163
        %v3165 = vrot.slane %v3137, %v3164
        %v3166 = vcombine.high %v3144, %v3144
        %v3167 = vcombine.high %v3151, %v3151
        %v3168 = vcombine.high %v3158, %v3158
        %v3169 = vcombine.high %v3165, %v3165
        %v3170 = vcombine.high %v2984, %v2984
        %v3172 = vunpack.c.l.s4 1966171168
        %v3173 = vunpack.c.0.s8 %v3172
        %v3174 = vlaneseq
        %v3175 = vshrl.u32 %v3174, 7
        %v3176 = vsub.s32 %v3173, %v3175
        %v3177 = vrot.slane %v2984, %v3176
        %v3179 = vunpack.c.l.s4 1966171168
        %v3180 = vunpack.c.0.s8 %v3179
        %v3181 = vlaneseq
        %v3182 = vshrl.u32 %v3181, 7
        %v3183 = vsub.s32 %v3180, %v3182
        %v3184 = vrot.slane %v3170, %v3183
        %v3185 = vcombine.high %v3177, %v3177
        %v3186 = vcombine.high %v3184, %v3184
        %v3188 = vunpack.c.l.s4 1966171168
        %v3189 = vunpack.c.0.s8 %v3188
        %v3190 = vlaneseq
        %v3191 = vshrl.u32 %v3190, 7
        %v3192 = vsub.s32 %v3189, %v3191
        %v3193 = vrot.slane %v3177, %v3192
        %v3195 = vunpack.c.l.s4 1966171168
        %v3196 = vunpack.c.0.s8 %v3195
        %v3197 = vlaneseq
        %v3198 = vshrl.u32 %v3197, 7
        %v3199 = vsub.s32 %v3196, %v3198
        %v3200 = vrot.slane %v3184, %v3199
        %v3202 = vunpack.c.l.s4 1966171168
        %v3203 = vunpack.c.0.s8 %v3202
        %v3204 = vlaneseq
        %v3205 = vshrl.u32 %v3204, 7
        %v3206 = vsub.s32 %v3203, %v3205
        %v3207 = vrot.slane %v3185, %v3206
        %v3209 = vunpack.c.l.s4 1966171168
        %v3210 = vunpack.c.0.s8 %v3209
        %v3211 = vlaneseq
        %v3212 = vshrl.u32 %v3211, 7
        %v3213 = vsub.s32 %v3210, %v3212
        %v3214 = vrot.slane %v3186, %v3213
        %v3215 = vcombine.high %v3193, %v3193
        %v3216 = vcombine.high %v3200, %v3200
        %v3217 = vcombine.high %v3207, %v3207
        %v3218 = vcombine.high %v3214, %v3214
        %v3219 = vlaneseq
        %v3220 = vshrl.u32 %v3219, 7
        %v3221 = vsub.s32 0, %v3220
        %v3222 = vrot.slane %v3046, %v3221
        %v3223 = vlaneseq
        %v3224 = vshrl.u32 %v3223, 7
        %v3225 = vsub.s32 0, %v3224
        %v3226 = vrot.slane %v3060, %v3225
        %v3227 = vlaneseq
        %v3228 = vshrl.u32 %v3227, 7
        %v3229 = vsub.s32 0, %v3228
        %v3230 = vrot.slane %v3068, %v3229
        %v3231 = vlaneseq
        %v3232 = vshrl.u32 %v3231, 7
        %v3233 = vsub.s32 0, %v3232
        %v3234 = vrot.slane %v3070, %v3233
        %v3235 = vlaneseq
        %v3236 = vshrl.u32 %v3235, 7
        %v3237 = vsub.s32 0, %v3236
        %v3238 = vrot.slane %v3053, %v3237
        %v3239 = vlaneseq
        %v3240 = vshrl.u32 %v3239, 7
        %v3241 = vsub.s32 0, %v3240
        %v3242 = vrot.slane %v3067, %v3241
        %v3243 = vlaneseq
        %v3244 = vshrl.u32 %v3243, 7
        %v3245 = vsub.s32 0, %v3244
        %v3246 = vrot.slane %v3069, %v3245
        %v3247 = vlaneseq
        %v3248 = vshrl.u32 %v3247, 7
        %v3249 = vsub.s32 0, %v3248
        %v3250 = vrot.slane %v3071, %v3249
        %v3251 = vlaneseq
        %v3252 = vshrl.u32 %v3251, 7
        %v3253 = vsub.s32 0, %v3252
        %v3254 = vrot.slane %v3095, %v3253
        %v3255 = vlaneseq
        %v3256 = vshrl.u32 %v3255, 7
        %v3257 = vsub.s32 0, %v3256
        %v3258 = vrot.slane %v3109, %v3257
        %v3259 = vlaneseq
        %v3260 = vshrl.u32 %v3259, 7
        %v3261 = vsub.s32 0, %v3260
        %v3262 = vrot.slane %v3117, %v3261
        %v3263 = vlaneseq
        %v3264 = vshrl.u32 %v3263, 7
        %v3265 = vsub.s32 0, %v3264
        %v3266 = vrot.slane %v3119, %v3265
        %v3267 = vlaneseq
        %v3268 = vshrl.u32 %v3267, 7
        %v3269 = vsub.s32 0, %v3268
        %v3270 = vrot.slane %v3102, %v3269
        %v3271 = vlaneseq
        %v3272 = vshrl.u32 %v3271, 7
        %v3273 = vsub.s32 0, %v3272
        %v3274 = vrot.slane %v3116, %v3273
        %v3275 = vlaneseq
        %v3276 = vshrl.u32 %v3275, 7
        %v3277 = vsub.s32 0, %v3276
        %v3278 = vrot.slane %v3118, %v3277
        %v3279 = vlaneseq
        %v3280 = vshrl.u32 %v3279, 7
        %v3281 = vsub.s32 0, %v3280
        %v3282 = vrot.slane %v3120, %v3281
        %v3283 = vlaneseq
        %v3284 = vshrl.u32 %v3283, 7
        %v3285 = vsub.s32 0, %v3284
        %v3286 = vrot.slane %v3144, %v3285
        %v3287 = vlaneseq
        %v3288 = vshrl.u32 %v3287, 7
        %v3289 = vsub.s32 0, %v3288
        %v3290 = vrot.slane %v3158, %v3289
        %v3291 = vlaneseq
        %v3292 = vshrl.u32 %v3291, 7
        %v3293 = vsub.s32 0, %v3292
        %v3294 = vrot.slane %v3166, %v3293
        %v3295 = vlaneseq
        %v3296 = vshrl.u32 %v3295, 7
        %v3297 = vsub.s32 0, %v3296
        %v3298 = vrot.slane %v3168, %v3297
        %v3299 = vlaneseq
        %v3300 = vshrl.u32 %v3299, 7
        %v3301 = vsub.s32 0, %v3300
        %v3302 = vrot.slane %v3151, %v3301
        %v3303 = vlaneseq
        %v3304 = vshrl.u32 %v3303, 7
        %v3305 = vsub.s32 0, %v3304
        %v3306 = vrot.slane %v3165, %v3305
        %v3307 = vlaneseq
        %v3308 = vshrl.u32 %v3307, 7
        %v3309 = vsub.s32 0, %v3308
        %v3310 = vrot.slane %v3167, %v3309
        %v3311 = vlaneseq
        %v3312 = vshrl.u32 %v3311, 7
        %v3313 = vsub.s32 0, %v3312
        %v3314 = vrot.slane %v3169, %v3313
        %v3315 = vlaneseq
        %v3316 = vshrl.u32 %v3315, 7
        %v3317 = vsub.s32 0, %v3316
        %v3318 = vrot.slane %v3193, %v3317
        %v3319 = vlaneseq
        %v3320 = vshrl.u32 %v3319, 7
        %v3321 = vsub.s32 0, %v3320
        %v3322 = vrot.slane %v3207, %v3321
        %v3323 = vlaneseq
        %v3324 = vshrl.u32 %v3323, 7
        %v3325 = vsub.s32 0, %v3324
        %v3326 = vrot.slane %v3215, %v3325
        %v3327 = vlaneseq
        %v3328 = vshrl.u32 %v3327, 7
        %v3329 = vsub.s32 0, %v3328
        %v3330 = vrot.slane %v3217, %v3329
        %v3331 = vlaneseq
        %v3332 = vshrl.u32 %v3331, 7
        %v3333 = vsub.s32 0, %v3332
        %v3334 = vrot.slane %v3200, %v3333
        %v3335 = vlaneseq
        %v3336 = vshrl.u32 %v3335, 7
        %v3337 = vsub.s32 0, %v3336
        %v3338 = vrot.slane %v3214, %v3337
        %v3339 = vlaneseq
        %v3340 = vshrl.u32 %v3339, 7
        %v3341 = vsub.s32 0, %v3340
        %v3342 = vrot.slane %v3216, %v3341
        %v3343 = vlaneseq
        %v3344 = vshrl.u32 %v3343, 7
        %v3345 = vsub.s32 0, %v3344
        %v3346 = vrot.slane %v3218, %v3345
        %v3379 = vmul.f32 %v2261, %v3222
        %v3380 = vmul.f32 %v2262, %v3226
        %v3381 = vmul.f32 %v2263, %v3230
        %v3382 = vmul.f32 %v2264, %v3234
        %v3383 = vmul.f32 %v2265, %v3238
        %v3384 = vmul.f32 %v2266, %v3242
        %v3385 = vmul.f32 %v2267, %v3246
        %v3386 = vmul.f32 %v2268, %v3250
        %v3387 = vmul.f32 %v2269, %v3254
        %v3388 = vmul.f32 %v2270, %v3258
        %v3389 = vmul.f32 %v2271, %v3262
        %v3390 = vmul.f32 %v2272, %v3266
        %v3391 = vmul.f32 %v2273, %v3270
        %v3392 = vmul.f32 %v2274, %v3274
        %v3393 = vmul.f32 %v2275, %v3278
        %v3394 = vmul.f32 %v2276, %v3282
        %v3395 = vmul.f32 %v2277, %v3286
        %v3396 = vmul.f32 %v2278, %v3290
        %v3397 = vmul.f32 %v2279, %v3294
        %v3398 = vmul.f32 %v2280, %v3298
        %v3399 = vmul.f32 %v2281, %v3302
        %v3400 = vmul.f32 %v2282, %v3306
        %v3401 = vmul.f32 %v2283, %v3310
        %v3402 = vmul.f32 %v2284, %v3314
        %v3403 = vmul.f32 %v2285, %v3318
        %v3404 = vmul.f32 %v2286, %v3322
        %v3405 = vmul.f32 %v2287, %v3326
        %v3406 = vmul.f32 %v2288, %v3330
        %v3407 = vmul.f32 %v2289, %v3334
        %v3408 = vmul.f32 %v2290, %v3338
        %v3409 = vmul.f32 %v2291, %v3342
        %v3410 = vmul.f32 %v2292, %v3346
        %v3411 = vadd.f32 %v3379, %v2987
        %v3412 = vadd.f32 %v3380, %v2988
        %v3413 = vadd.f32 %v3381, %v2989
        %v3414 = vadd.f32 %v3382, %v2990
        %v3415 = vadd.f32 %v3383, %v2991
        %v3416 = vadd.f32 %v3384, %v2992
        %v3417 = vadd.f32 %v3385, %v2993
        %v3418 = vadd.f32 %v3386, %v2994
        %v3419 = vadd.f32 %v3387, %v2995
        %v3420 = vadd.f32 %v3388, %v2996
        %v3421 = vadd.f32 %v3389, %v2997
        %v3422 = vadd.f32 %v3390, %v2998
        %v3423 = vadd.f32 %v3391, %v2999
        %v3424 = vadd.f32 %v3392, %v3000
        %v3425 = vadd.f32 %v3393, %v3001
        %v3426 = vadd.f32 %v3394, %v3002
        %v3427 = vadd.f32 %v3395, %v3003
        %v3428 = vadd.f32 %v3396, %v3004
        %v3429 = vadd.f32 %v3397, %v3005
        %v3430 = vadd.f32 %v3398, %v3006
        %v3431 = vadd.f32 %v3399, %v3007
        %v3432 = vadd.f32 %v3400, %v3008
        %v3433 = vadd.f32 %v3401, %v3009
        %v3434 = vadd.f32 %v3402, %v3010
        %v3435 = vadd.f32 %v3403, %v3011
        %v3436 = vadd.f32 %v3404, %v3012
        %v3437 = vadd.f32 %v3405, %v3013
        %v3438 = vadd.f32 %v3406, %v3014
        %v3439 = vadd.f32 %v3407, %v3015
        %v3440 = vadd.f32 %v3408, %v3016
        %v3441 = vadd.f32 %v3409, %v3017
        %v3442 = vadd.f32 %v3410, %v3018
        %v3443 = vmax.f32 %v3411, 0.0
        %v3444 = vmax.f32 %v3412, 0.0
        %v3445 = vmax.f32 %v3413, 0.0
        %v3446 = vmax.f32 %v3414, 0.0
        %v3447 = vmax.f32 %v3415, 0.0
        %v3448 = vmax.f32 %v3416, 0.0
        %v3449 = vmax.f32 %v3417, 0.0
        %v3450 = vmax.f32 %v3418, 0.0
        %v3451 = vmax.f32 %v3419, 0.0
        %v3452 = vmax.f32 %v3420, 0.0
        %v3453 = vmax.f32 %v3421, 0.0
        %v3454 = vmax.f32 %v3422, 0.0
        %v3455 = vmax.f32 %v3423, 0.0
        %v3456 = vmax.f32 %v3424, 0.0
        %v3457 = vmax.f32 %v3425, 0.0
        %v3458 = vmax.f32 %v3426, 0.0
        %v3459 = vmax.f32 %v3427, 0.0
        %v3460 = vmax.f32 %v3428, 0.0
        %v3461 = vmax.f32 %v3429, 0.0
        %v3462 = vmax.f32 %v3430, 0.0
        %v3463 = vmax.f32 %v3431, 0.0
        %v3464 = vmax.f32 %v3432, 0.0
        %v3465 = vmax.f32 %v3433, 0.0
        %v3466 = vmax.f32 %v3434, 0.0
        %v3467 = vmax.f32 %v3435, 0.0
        %v3468 = vmax.f32 %v3436, 0.0
        %v3469 = vmax.f32 %v3437, 0.0
        %v3470 = vmax.f32 %v3438, 0.0
        %v3471 = vmax.f32 %v3439, 0.0
        %v3472 = vmax.f32 %v3440, 0.0
        %v3473 = vmax.f32 %v3441, 0.0
        %v3474 = vmax.f32 %v3442, 0.0
        %3475 = vst [vmem:[%s301] sm:$0xff] %v3443
        %3476 = vst [vmem:[%s301 + $0x8] sm:$0xff] %v3444
        %3477 = vst [vmem:[%s301 + $0x10] sm:$0xff] %v3445
        %3478 = vst [vmem:[%s301 + $0x18] sm:$0xff] %v3446
        %3479 = vst [vmem:[%s301 + $0x20] sm:$0xff] %v3447
        %3480 = vst [vmem:[%s301 + $0x28] sm:$0xff] %v3448
        %3481 = vst [vmem:[%s301 + $0x30] sm:$0xff] %v3449
        %3482 = vst [vmem:[%s301 + $0x38] sm:$0xff] %v3450
        %3483 = vst [vmem:[%s301 + $0x40] sm:$0xff] %v3451
        %3484 = vst [vmem:[%s301 + $0x48] sm:$0xff] %v3452
        %3485 = vst [vmem:[%s301 + $0x50] sm:$0xff] %v3453
        %3486 = vst [vmem:[%s301 + $0x58] sm:$0xff] %v3454
        %3487 = vst [vmem:[%s301 + $0x60] sm:$0xff] %v3455
        %3488 = vst [vmem:[%s301 + $0x68] sm:$0xff] %v3456
        %3489 = vst [vmem:[%s301 + $0x70] sm:$0xff] %v3457
        %3490 = vst [vmem:[%s301 + $0x78] sm:$0xff] %v3458
        %3491 = vst [vmem:[%s301 + $0x80] sm:$0xff] %v3459
        %3492 = vst [vmem:[%s301 + $0x88] sm:$0xff] %v3460
        %3493 = vst [vmem:[%s301 + $0x90] sm:$0xff] %v3461
        %3494 = vst [vmem:[%s301 + $0x98] sm:$0xff] %v3462
        %3495 = vst [vmem:[%s301 + $0xa0] sm:$0xff] %v3463
        %3496 = vst [vmem:[%s301 + $0xa8] sm:$0xff] %v3464
        %3497 = vst [vmem:[%s301 + $0xb0] sm:$0xff] %v3465
        %3498 = vst [vmem:[%s301 + $0xb8] sm:$0xff] %v3466
        %3499 = vst [vmem:[%s301 + $0xc0] sm:$0xff] %v3467
        %3500 = vst [vmem:[%s301 + $0xc8] sm:$0xff] %v3468
        %3501 = vst [vmem:[%s301 + $0xd0] sm:$0xff] %v3469
        %3502 = vst [vmem:[%s301 + $0xd8] sm:$0xff] %v3470
        %3503 = vst [vmem:[%s301 + $0xe0] sm:$0xff] %v3471
        %3504 = vst [vmem:[%s301 + $0xe8] sm:$0xff] %v3472
        %3505 = vst [vmem:[%s301 + $0xf0] sm:$0xff] %v3473
        %3506 = vst [vmem:[%s301 + $0xf8] sm:$0xff] %v3474
        %s3507 = sand.u32 %s203, 1
        %s3508 = scalar_lea.sflag [#allocation4], %s3507
        %s3509 = sand.u32 %s203, 1
        %s3510 = smul.addr %s3509, 256
        %s3511 = scalar_lea.vmem [#allocation3], %s3510
        // Predicated region
        $region53: #{tpu_custom_call.1} parent=51 // pred_check
          %p3512 = pneg %p213
        $region54: #{tpu_custom_call.1} parent=51 // pred_check_branch
          %3514 = sbr.rel (%p3512) target = $region56
        $region55: #{tpu_custom_call.1} parent=51 // pred_region
          %s3515 = smul.u32 32, %s22
          %s3517 = ssub.s32 4096, 4096
          %3518 = vsyncadd %s3508, %s3517
          %s3519 = smul.addr %s3515, 128
          %s3520 = scalar_lea.hbm %s8, %s3519
          %s3521 = sshll.u32 %s3511, 4
          %s3522 = int_to_ptr.vmem [resolvable:$true] %s3521
          %3527 = dma.vmem_to_hbm [thread:$0]  %s3522, 4096, %s3520, %s3508, 128, 128, 8
        $region56: #{tpu_custom_call.1} parent=51 // pred_fallthru
          _
      $region52: #{tpu_custom_call.1} parent=5 // pred_fallthru
        _
      %p3528 = scmp.le.s32.totalorder 2, %s17
      // Predicated region
      $region57: #{tpu_custom_call.1} parent=5 // pred_check
        %p3529 = pneg %p3528
      $region58: #{tpu_custom_call.1} parent=5 // pred_check_branch
        %3531 = sbr.rel (%p3529) target = $region60
      $region59: #{tpu_custom_call.1} parent=5 // pred_region
        %s3532 = ssub.s32 %s17, 2
        // Predicated region
        $region61: #{tpu_custom_call.1} parent=59 // pred_check
          %p3533 = pneg %p219
        $region62: #{tpu_custom_call.1} parent=59 // pred_check_branch
          %3535 = sbr.rel (%p3533) target = $region64
        $region63: #{tpu_custom_call.1} parent=59 // pred_region
          %s3536 = sand.u32 %s204, 1
          %s3537 = scalar_lea.sflag [#allocation4], %s3536
          %s3538 = sand.u32 %s204, 1
          %s3539 = smul.addr %s3538, 256
          %s3540 = scalar_lea.vmem [#allocation3], %s3539
          %3541 = dma.done %s3537, 4096
        $region64: #{tpu_custom_call.1} parent=59 // pred_fallthru
          _
      $region60: #{tpu_custom_call.1} parent=5 // pred_fallthru
        _
    $region6: #{tpu_custom_call.1} parent=1 // loop_footer
      %s21 = sadd.s32 1, %s17
    $region7: #{tpu_custom_call.1} parent=1 // loop_footer_branch
      %16 = sbr.rel target = $region3
    $region8: #{tpu_custom_call.1} parent=1 // loop_exit
      _
    %3542 = vsyncpa [#allocation4], 1
    %s3543 = scalar_lea.sflag [#allocation4], 1
    %3544 = vsyncpa %s3543, 1

// kernel: tpu_custom_call.1
$region0: #{tpu_custom_call.1}
  #allocation0 [shape = 'u32[]', space=smem, size = 0x4, offset = 0x4, fixed_abs, tag = 'smem constant byte address 0x4 - core index']
  #allocation1 [shape = 'u32[144,128]{1,0:T(1,128)}', space=vmem, size = 0x12000, scoped, tag = 'internal scratch']
  #allocation2 [shape = 'f32[32,10,128]{2,1,0:T(8,128)}', space=vmem, size = 0x40000, scoped, tag = 'scratch operand']
  %s0 = inlined_call_operand.vmem [shape: f32[64,10,128], index: 0, kind: input, shape index: {}]
  %s1 = inlined_call_operand.vmem [shape: bf16[3,128,128], index: 1, kind: input, shape index: {}]
  %s2 = inlined_call_operand.vmem [shape: bf16[3,128,128], index: 2, kind: input, shape index: {}]
  %s3 = inlined_call_operand.vmem [shape: f32[4,128], index: 3, kind: input, shape index: {}]
  %s4 = inlined_call_operand.vmem [shape: f32[128,16], index: 4, kind: input, shape index: {}]
  %s5 = inlined_call_operand.vmem [shape: f32[16,128], index: 5, kind: input, shape index: {}]
  %s6 = inlined_call_operand.vmem [shape: f32[16,4], index: 6, kind: input, shape index: {}]
  %s7 = inlined_call_operand.vmem [shape: f32[4,16], index: 7, kind: input, shape index: {}]
  %s8 = inlined_call_operand.hbm [shape: f32[64,8,128], index: 8, kind: output, shape index: {}]
  %s9 = sld [smem:[#allocation0]]
  $region65: #{tpu_custom_call.1} parent=0
    _
  %s11 = ssub.s32 1, %s9
  %s12 = scalar_select 0, %s11, %s9
  $region1: #{tpu_custom_call.1} parent=0
    #allocation3 [shape = 'u8[262144]{0}', space=vmem, size = 0x40000, scoped, tag = 'output window, operand 0']
    #allocation4 [shape = 's32[2]{0}', space=sflag, size = 0x8, scoped, tag = 'scoped memory for tpu_custom_call.1']
    %13 = vsyncpa [#allocation4], 0
    %s14 = scalar_lea.sflag [#allocation4], 1
    %15 = vsyncpa %s14, 0
    loop: start=0, step=1, limit=4
    $region2: #{tpu_custom_call.1} parent=1 // loop_pre_header
      _
    $region3: #{tpu_custom_call.1} parent=1 // loop_header
      %s17 = sphi 0, %s21
      %p18 = scmp.ge.s32.totalorder %s17, 4
      %s27 = sphi 0, %s29
      %s30 = sphi 0, %s27
      %s31 = sphi 0, %s30
      %s47 = sphi 0, %s31
      %s51 = sphi 0, %s51
      %s53 = sphi 0, %s51
      %s54 = sphi 0, %s53
      %s68 = sphi 0, %s54
      %s72 = sphi 0, %s72
      %s74 = sphi 0, %s72
      %s75 = sphi 0, %s74
      %s89 = sphi 0, %s75
      %s93 = sphi 0, %s93
      %s95 = sphi 0, %s93
      %s96 = sphi 0, %s95
      %s110 = sphi 0, %s96
      %s114 = sphi 0, %s114
      %s116 = sphi 0, %s114
      %s117 = sphi 0, %s116
      %s131 = sphi 0, %s117
      %s135 = sphi 0, %s135
      %s137 = sphi 0, %s135
      %s138 = sphi 0, %s137
      %s152 = sphi 0, %s138
      %s156 = sphi 0, %s156
      %s158 = sphi 0, %s156
      %s159 = sphi 0, %s158
      %s173 = sphi 0, %s159
      %s177 = sphi 0, %s177
      %s179 = sphi 0, %s177
      %s180 = sphi 0, %s179
      %s194 = sphi 0, %s180
      %s200 = sphi 0, %s202
      %s203 = sphi 0, %s200
      %s204 = sphi 0, %s203
      %s220 = sphi 0, %s204
    $region4: #{tpu_custom_call.1} parent=1 // loop_header_branch
      %20 = sbr.rel (%p18) target = $region8
    $region5: #{tpu_custom_call.1} parent=1 // loop_body
      %s22 = ssub.s32 %s17, 1
      %s23 = ssub.s32 %s17, 2
      %s24 = sadd.s32 %s17, 1
      %s25 = ssub.s32 %s17, %s24
      %p26 = scmp.eq.s32.totalorder %s25, 0
      %s28 = sadd.s32 %s27, 1
      %s29 = scalar_select %p26, %s27, %s28
      %p32 = pneg %p26
      %p33 = scmp.eq.s32.totalorder %s17, 1
      %p34 = por %p32, %p33
      %p35 = scmp.ne.s32.totalorder %s27, %s30
      %p36 = scmp.eq.s32.totalorder %s17, 0
      %p37 = por %p35, %p36
      %p38 = scmp.ne.s32.totalorder %s27, %s30
      %p39 = scmp.eq.s32.totalorder %s22, 1
      %p40 = por %p38, %p39
      %p41 = scmp.ne.s32.totalorder %s30, %s31
      %p42 = scmp.eq.s32.totalorder %s22, 0
      %p43 = por %p41, %p42
      %p44 = scmp.ne.s32.totalorder %s30, %s31
      %p45 = scmp.eq.s32.totalorder %s23, 1
      %p46 = por %p44, %p45
      %p48 = scmp.ne.s32.totalorder %s31, %s47
      %p49 = scmp.eq.s32.totalorder %s23, 0
      %p50 = por %p48, %p49
      %s52 = sadd.s32 %s51, 1
      %p55 = scmp.eq.s32.totalorder %s17, 1
      %p56 = scmp.ne.s32.totalorder %s51, %s53
      %p57 = scmp.eq.s32.totalorder %s17, 0
      %p58 = por %p56, %p57
      %p59 = scmp.ne.s32.totalorder %s51, %s53
      %p60 = scmp.eq.s32.totalorder %s22, 1
      %p61 = por %p59, %p60
      %p62 = scmp.ne.s32.totalorder %s53, %s54
      %p63 = scmp.eq.s32.totalorder %s22, 0
      %p64 = por %p62, %p63
      %p65 = scmp.ne.s32.totalorder %s53, %s54
      %p66 = scmp.eq.s32.totalorder %s23, 1
      %p67 = por %p65, %p66
      %p69 = scmp.ne.s32.totalorder %s54, %s68
      %p70 = scmp.eq.s32.totalorder %s23, 0
      %p71 = por %p69, %p70
      %s73 = sadd.s32 %s72, 1
      %p76 = scmp.eq.s32.totalorder %s17, 1
      %p77 = scmp.ne.s32.totalorder %s72, %s74
      %p78 = scmp.eq.s32.totalorder %s17, 0
      %p79 = por %p77, %p78
      %p80 = scmp.ne.s32.totalorder %s72, %s74
      %p81 = scmp.eq.s32.totalorder %s22, 1
      %p82 = por %p80, %p81
      %p83 = scmp.ne.s32.totalorder %s74, %s75
      %p84 = scmp.eq.s32.totalorder %s22, 0
      %p85 = por %p83, %p84
      %p86 = scmp.ne.s32.totalorder %s74, %s75
      %p87 = scmp.eq.s32.totalorder %s23, 1
      %p88 = por %p86, %p87
      %p90 = scmp.ne.s32.totalorder %s75, %s89
      %p91 = scmp.eq.s32.totalorder %s23, 0
      %p92 = por %p90, %p91
      %s94 = sadd.s32 %s93, 1
      %p97 = scmp.eq.s32.totalorder %s17, 1
      %p98 = scmp.ne.s32.totalorder %s93, %s95
      %p99 = scmp.eq.s32.totalorder %s17, 0
      %p100 = por %p98, %p99
      %p101 = scmp.ne.s32.totalorder %s93, %s95
      %p102 = scmp.eq.s32.totalorder %s22, 1
      %p103 = por %p101, %p102
      %p104 = scmp.ne.s32.totalorder %s95, %s96
      %p105 = scmp.eq.s32.totalorder %s22, 0
      %p106 = por %p104, %p105
      %p107 = scmp.ne.s32.totalorder %s95, %s96
      %p108 = scmp.eq.s32.totalorder %s23, 1
      %p109 = por %p107, %p108
      %p111 = scmp.ne.s32.totalorder %s96, %s110
      %p112 = scmp.eq.s32.totalorder %s23, 0
      %p113 = por %p111, %p112
      %s115 = sadd.s32 %s114, 1
      %p118 = scmp.eq.s32.totalorder %s17, 1
      %p119 = scmp.ne.s32.totalorder %s114, %s116
      %p120 = scmp.eq.s32.totalorder %s17, 0
      %p121 = por %p119, %p120
      %p122 = scmp.ne.s32.totalorder %s114, %s116
      %p123 = scmp.eq.s32.totalorder %s22, 1
      %p124 = por %p122, %p123
      %p125 = scmp.ne.s32.totalorder %s116, %s117
      %p126 = scmp.eq.s32.totalorder %s22, 0
      %p127 = por %p125, %p126
      %p128 = scmp.ne.s32.totalorder %s116, %s117
      %p129 = scmp.eq.s32.totalorder %s23, 1
      %p130 = por %p128, %p129
      %p132 = scmp.ne.s32.totalorder %s117, %s131
      %p133 = scmp.eq.s32.totalorder %s23, 0
      %p134 = por %p132, %p133
      %s136 = sadd.s32 %s135, 1
      %p139 = scmp.eq.s32.totalorder %s17, 1
      %p140 = scmp.ne.s32.totalorder %s135, %s137
      %p141 = scmp.eq.s32.totalorder %s17, 0
      %p142 = por %p140, %p141
      %p143 = scmp.ne.s32.totalorder %s135, %s137
      %p144 = scmp.eq.s32.totalorder %s22, 1
      %p145 = por %p143, %p144
      %p146 = scmp.ne.s32.totalorder %s137, %s138
      %p147 = scmp.eq.s32.totalorder %s22, 0
      %p148 = por %p146, %p147
      %p149 = scmp.ne.s32.totalorder %s137, %s138
      %p150 = scmp.eq.s32.totalorder %s23, 1
      %p151 = por %p149, %p150
      %p153 = scmp.ne.s32.totalorder %s138, %s152
      %p154 = scmp.eq.s32.totalorder %s23, 0
      %p155 = por %p153, %p154
      %s157 = sadd.s32 %s156, 1
      %p160 = scmp.eq.s32.totalorder %s17, 1
      %p161 = scmp.ne.s32.totalorder %s156, %s158
      %p162 = scmp.eq.s32.totalorder %s17, 0
      %p163 = por %p161, %p162
      %p164 = scmp.ne.s32.totalorder %s156, %s158
      %p165 = scmp.eq.s32.totalorder %s22, 1
      %p166 = por %p164, %p165
      %p167 = scmp.ne.s32.totalorder %s158, %s159
      %p168 = scmp.eq.s32.totalorder %s22, 0
      %p169 = por %p167, %p168
      %p170 = scmp.ne.s32.totalorder %s158, %s159
      %p171 = scmp.eq.s32.totalorder %s23, 1
      %p172 = por %p170, %p171
      %p174 = scmp.ne.s32.totalorder %s159, %s173
      %p175 = scmp.eq.s32.totalorder %s23, 0
      %p176 = por %p174, %p175
      %s178 = sadd.s32 %s177, 1
      %p181 = scmp.eq.s32.totalorder %s17, 1
      %p182 = scmp.ne.s32.totalorder %s177, %s179
      %p183 = scmp.eq.s32.totalorder %s17, 0
      %p184 = por %p182, %p183
      %p185 = scmp.ne.s32.totalorder %s177, %s179
      %p186 = scmp.eq.s32.totalorder %s22, 1
      %p187 = por %p185, %p186
      %p188 = scmp.ne.s32.totalorder %s179, %s180
      %p189 = scmp.eq.s32.totalorder %s22, 0
      %p190 = por %p188, %p189
      %p191 = scmp.ne.s32.totalorder %s179, %s180
      %p192 = scmp.eq.s32.totalorder %s23, 1
      %p193 = por %p191, %p192
      %p195 = scmp.ne.s32.totalorder %s180, %s194
      %p196 = scmp.eq.s32.totalorder %s23, 0
      %p197 = por %p195, %p196
      %s198 = ssub.s32 %s17, %s24
      %p199 = scmp.eq.s32.totalorder %s198, 0
      %s201 = sadd.s32 %s200, 1
      %s202 = scalar_select %p199, %s200, %s201
      %p205 = pneg %p199
      %p206 = scmp.eq.s32.totalorder %s17, 1
      %p207 = por %p205, %p206
      %p208 = scmp.ne.s32.totalorder %s200, %s203
      %p209 = scmp.eq.s32.totalorder %s17, 0
      %p210 = por %p208, %p209
      %p211 = scmp.ne.s32.totalorder %s200, %s203
      %p212 = scmp.eq.s32.totalorder %s22, 1
      %p213 = por %p211, %p212
      %p214 = scmp.ne.s32.totalorder %s203, %s204
      %p215 = scmp.eq.s32.totalorder %s22, 0
      %p216 = por %p214, %p215
      %p217 = scmp.ne.s32.totalorder %s203, %s204
      %p218 = scmp.eq.s32.totalorder %s23, 1
      %p219 = por %p217, %p218
      %p221 = scmp.ne.s32.totalorder %s204, %s220
      %p222 = scmp.eq.s32.totalorder %s23, 0
      %p223 = por %p221, %p222
      %p224 = scmp.le.s32.totalorder 1, %s17
      %p225 = scmp.lt.s32.totalorder %s17, 3
      %p226 = pnand %p224, %p225
      %p227 = pneg %p226
      // Predicated region
      $region9: #{tpu_custom_call.1} parent=5 // pred_check
        _
      $region10: #{tpu_custom_call.1} parent=5 // pred_check_branch
        %229 = sbr.rel (%p226) target = $region12
      $region11: #{tpu_custom_call.1} parent=5 // pred_region
        %s230 = ssub.s32 %s17, 1
        // Predicated region
        $region13: #{tpu_custom_call.1} parent=11 // pred_check
          %p231 = pneg %p64
        $region14: #{tpu_custom_call.1} parent=11 // pred_check_branch
          %233 = sbr.rel (%p231) target = $region16
        $region15: #{tpu_custom_call.1} parent=11 // pred_region
          _
        $region16: #{tpu_custom_call.1} parent=11 // pred_fallthru
          _
        // Predicated region
        $region17: #{tpu_custom_call.1} parent=11 // pred_check
          %p234 = pneg %p85
        $region18: #{tpu_custom_call.1} parent=11 // pred_check_branch
          %236 = sbr.rel (%p234) target = $region20
        $region19: #{tpu_custom_call.1} parent=11 // pred_region
          _
        $region20: #{tpu_custom_call.1} parent=11 // pred_fallthru
          _
        // Predicated region
        $region21: #{tpu_custom_call.1} parent=11 // pred_check
          %p237 = pneg %p106
        $region22: #{tpu_custom_call.1} parent=11 // pred_check_branch
          %239 = sbr.rel (%p237) target = $region24
        $region23: #{tpu_custom_call.1} parent=11 // pred_region
          _
        $region24: #{tpu_custom_call.1} parent=11 // pred_fallthru
          _
        // Predicated region
        $region25: #{tpu_custom_call.1} parent=11 // pred_check
          %p240 = pneg %p127
        $region26: #{tpu_custom_call.1} parent=11 // pred_check_branch
          %242 = sbr.rel (%p240) target = $region28
        $region27: #{tpu_custom_call.1} parent=11 // pred_region
          _
        $region28: #{tpu_custom_call.1} parent=11 // pred_fallthru
          _
        // Predicated region
        $region29: #{tpu_custom_call.1} parent=11 // pred_check
          %p243 = pneg %p148
        $region30: #{tpu_custom_call.1} parent=11 // pred_check_branch
          %245 = sbr.rel (%p243) target = $region32
        $region31: #{tpu_custom_call.1} parent=11 // pred_region
          _
        $region32: #{tpu_custom_call.1} parent=11 // pred_fallthru
          _
        // Predicated region
        $region33: #{tpu_custom_call.1} parent=11 // pred_check
          %p246 = pneg %p169
        $region34: #{tpu_custom_call.1} parent=11 // pred_check_branch
          %248 = sbr.rel (%p246) target = $region36
        $region35: #{tpu_custom_call.1} parent=11 // pred_region
          _
        $region36: #{tpu_custom_call.1} parent=11 // pred_fallthru
          _
        // Predicated region
        $region37: #{tpu_custom_call.1} parent=11 // pred_check
          %p249 = pneg %p190
        $region38: #{tpu_custom_call.1} parent=11 // pred_check_branch
          %251 = sbr.rel (%p249) target = $region40
        $region39: #{tpu_custom_call.1} parent=11 // pred_region
          _
        $region40: #{tpu_custom_call.1} parent=11 // pred_fallthru
          _
      $region12: #{tpu_custom_call.1} parent=5 // pred_fallthru
        _
      %p252 = scmp.lt.s32.totalorder %s17, 2
      // Predicated region
      $region41: #{tpu_custom_call.1} parent=5 // pred_check
        %p253 = pneg %p252
      $region42: #{tpu_custom_call.1} parent=5 // pred_check_branch
        %255 = sbr.rel (%p253) target = $region44
      $region43: #{tpu_custom_call.1} parent=5 // pred_region
        // Predicated region
        $region45: #{tpu_custom_call.1} parent=43 // pred_check
          %p256 = pneg %p37
        $region46: #{tpu_custom_call.1} parent=43 // pred_check_branch
          %258 = sbr.rel (%p256) target = $region48
        $region47: #{tpu_custom_call.1} parent=43 // pred_region
          %s259 = smul.u32 32, %s17
          %p260 = scmp.lt.s32.totalorder %s259, 63
          %s261 = scalar_select %p260, %s259, 63
          %s262 = smul.addr %s261, 2
          %s263 = smul.addr %s262, 8
          %s264 = scalar_lea.vmem %s0, %s263
          %s265 = smul.u32 32, %s17
        $region48: #{tpu_custom_call.1} parent=43 // pred_fallthru
          _
      $region44: #{tpu_custom_call.1} parent=5 // pred_fallthru
        _
      %p266 = scmp.le.s32.totalorder 1, %s17
      %p267 = scmp.lt.s32.totalorder %s17, 3
      %p268 = pnand %p266, %p267
      %p269 = pneg %p268
      // Predicated region
      $region49: #{tpu_custom_call.1} parent=5 // pred_check
        _
      $region50: #{tpu_custom_call.1} parent=5 // pred_check_branch
        %271 = sbr.rel (%p268) target = $region52
      $region51: #{tpu_custom_call.1} parent=5 // pred_region
        %s272 = ssub.s32 %s17, 1
        %s273 = smul.u32 32, %s22
        %p274 = scmp.lt.s32.totalorder %s273, 63
        %s275 = scalar_select %p274, %s273, 63
        %s276 = smul.addr %s275, 2
        %s277 = smul.addr %s276, 8
        %s278 = scalar_lea.vmem %s0, %s277
        %p279 = pneg %p43
        %p280 = pneg %p40
        %p281 = pneg %p64
        %p282 = pneg %p61
        %p283 = pneg %p85
        %p284 = pneg %p82
        %p285 = pneg %p106
        %p286 = pneg %p103
        %p287 = pneg %p127
        %p288 = pneg %p124
        %p289 = pneg %p148
        %p290 = pneg %p145
        %p291 = pneg %p169
        %p292 = pneg %p166
        %p293 = pneg %p190
        %p294 = pneg %p187
        %p295 = pneg %p216
        %p296 = pneg %p213
        %s297 = sand.u32 %s203, 1
        %s298 = scalar_lea.sflag [#allocation4], %s297
        %s299 = sand.u32 %s203, 1
        %s300 = smul.addr %s299, 256
        %s301 = scalar_lea.vmem [#allocation3], %s300
        %s302 = smul.u32 32, %s22
        %p303 = scmp.lt.s32.totalorder %s302, 63
        %s304 = scalar_select %p303, %s302, 63
        %s305 = smul.addr %s304, 2
        %s306 = smul.addr %s305, 8
        %s307 = scalar_lea.vmem %s0, %s306
        %s308 = smul.u32 32, %s22
        %s309 = smul.u32 32, %s22
        %v311 = vld [vmem:[%s307] sm:$0xff]
        %v312 = vld [vmem:[%s307 + $0x10] sm:$0xff]
        %v313 = vld [vmem:[%s307 + $0x20] sm:$0xff]
        %v314 = vld [vmem:[%s307 + $0x30] sm:$0xff]
        %v315 = vld [vmem:[%s307 + $0x40] sm:$0xff]
        %v316 = vld [vmem:[%s307 + $0x50] sm:$0xff]
        %v317 = vld [vmem:[%s307 + $0x60] sm:$0xff]
        %v318 = vld [vmem:[%s307 + $0x70] sm:$0xff]
        %v319 = vld [vmem:[%s307 + $0x80] sm:$0xff]
        %v320 = vld [vmem:[%s307 + $0x90] sm:$0xff]
        %v321 = vld [vmem:[%s307 + $0xa0] sm:$0xff]
        %v322 = vld [vmem:[%s307 + $0xb0] sm:$0xff]
        %v323 = vld [vmem:[%s307 + $0xc0] sm:$0xff]
        %v324 = vld [vmem:[%s307 + $0xd0] sm:$0xff]
        %v325 = vld [vmem:[%s307 + $0xe0] sm:$0xff]
        %v326 = vld [vmem:[%s307 + $0xf0] sm:$0xff]
        %v327 = vld [vmem:[%s307 + $0x100] sm:$0xff]
        %v328 = vld [vmem:[%s307 + $0x110] sm:$0xff]
        %v329 = vld [vmem:[%s307 + $0x120] sm:$0xff]
        %v330 = vld [vmem:[%s307 + $0x130] sm:$0xff]
        %v331 = vld [vmem:[%s307 + $0x140] sm:$0xff]
        %v332 = vld [vmem:[%s307 + $0x150] sm:$0xff]
        %v333 = vld [vmem:[%s307 + $0x160] sm:$0xff]
        %v334 = vld [vmem:[%s307 + $0x170] sm:$0xff]
        %v335 = vld [vmem:[%s307 + $0x180] sm:$0xff]
        %v336 = vld [vmem:[%s307 + $0x190] sm:$0xff]
        %v337 = vld [vmem:[%s307 + $0x1a0] sm:$0xff]
        %v338 = vld [vmem:[%s307 + $0x1b0] sm:$0xff]
        %v339 = vld [vmem:[%s307 + $0x1c0] sm:$0xff]
        %v340 = vld [vmem:[%s307 + $0x1d0] sm:$0xff]
        %v341 = vld [vmem:[%s307 + $0x1e0] sm:$0xff]
        %v342 = vld [vmem:[%s307 + $0x1f0] sm:$0xff]
        %v343 = vpack.c.bf16 %v312, %v311
        %v344 = vpack.c.bf16 %v314, %v313
        %v345 = vpack.c.bf16 %v316, %v315
        %v346 = vpack.c.bf16 %v318, %v317
        %v347 = vpack.c.bf16 %v320, %v319
        %v348 = vpack.c.bf16 %v322, %v321
        %v349 = vpack.c.bf16 %v324, %v323
        %v350 = vpack.c.bf16 %v326, %v325
        %v351 = vpack.c.bf16 %v328, %v327
        %v352 = vpack.c.bf16 %v330, %v329
        %v353 = vpack.c.bf16 %v332, %v331
        %v354 = vpack.c.bf16 %v334, %v333
        %v355 = vpack.c.bf16 %v336, %v335
        %v356 = vpack.c.bf16 %v338, %v337
        %v357 = vpack.c.bf16 %v340, %v339
        %v358 = vpack.c.bf16 %v342, %v341
        %v359 = vld [vmem:[%s1] sm:$0xf]
        %v360 = vld [vmem:[%s1 + $0x4] sm:$0xf]
        %v361 = vld [vmem:[%s1 + $0x8] sm:$0xf]
        %v362 = vld [vmem:[%s1 + $0xc] sm:$0xf]
        %v363 = vld [vmem:[%s1 + $0x10] sm:$0xf]
        %v364 = vld [vmem:[%s1 + $0x14] sm:$0xf]
        %v365 = vld [vmem:[%s1 + $0x18] sm:$0xf]
        %v366 = vld [vmem:[%s1 + $0x1c] sm:$0xf]
        %v367 = vld [vmem:[%s1 + $0x20] sm:$0xf]
        %v368 = vld [vmem:[%s1 + $0x24] sm:$0xf]
        %v369 = vld [vmem:[%s1 + $0x28] sm:$0xf]
        %v370 = vld [vmem:[%s1 + $0x2c] sm:$0xf]
        %v371 = vld [vmem:[%s1 + $0x30] sm:$0xf]
        %v372 = vld [vmem:[%s1 + $0x34] sm:$0xf]
        %v373 = vld [vmem:[%s1 + $0x38] sm:$0xf]
        %v374 = vld [vmem:[%s1 + $0x3c] sm:$0xf]
        %v375 = vld [vmem:[%s307 + $0x1] sm:$0xff]
        %v376 = vld [vmem:[%s307 + $0x11] sm:$0xff]
        %v377 = vld [vmem:[%s307 + $0x21] sm:$0xff]
        %v378 = vld [vmem:[%s307 + $0x31] sm:$0xff]
        %v379 = vld [vmem:[%s307 + $0x41] sm:$0xff]
        %v380 = vld [vmem:[%s307 + $0x51] sm:$0xff]
        %v381 = vld [vmem:[%s307 + $0x61] sm:$0xff]
        %v382 = vld [vmem:[%s307 + $0x71] sm:$0xff]
        %v383 = vld [vmem:[%s307 + $0x81] sm:$0xff]
        %v384 = vld [vmem:[%s307 + $0x91] sm:$0xff]
        %v385 = vld [vmem:[%s307 + $0xa1] sm:$0xff]
        %v386 = vld [vmem:[%s307 + $0xb1] sm:$0xff]
        %v387 = vld [vmem:[%s307 + $0xc1] sm:$0xff]
        %v388 = vld [vmem:[%s307 + $0xd1] sm:$0xff]
        %v389 = vld [vmem:[%s307 + $0xe1] sm:$0xff]
        %v390 = vld [vmem:[%s307 + $0xf1] sm:$0xff]
        %v391 = vld [vmem:[%s307 + $0x101] sm:$0xff]
        %v392 = vld [vmem:[%s307 + $0x111] sm:$0xff]
        %v393 = vld [vmem:[%s307 + $0x121] sm:$0xff]
        %v394 = vld [vmem:[%s307 + $0x131] sm:$0xff]
        %v395 = vld [vmem:[%s307 + $0x141] sm:$0xff]
        %v396 = vld [vmem:[%s307 + $0x151] sm:$0xff]
        %v397 = vld [vmem:[%s307 + $0x161] sm:$0xff]
        %v398 = vld [vmem:[%s307 + $0x171] sm:$0xff]
        %v399 = vld [vmem:[%s307 + $0x181] sm:$0xff]
        %v400 = vld [vmem:[%s307 + $0x191] sm:$0xff]
        %v401 = vld [vmem:[%s307 + $0x1a1] sm:$0xff]
        %v402 = vld [vmem:[%s307 + $0x1b1] sm:$0xff]
        %v403 = vld [vmem:[%s307 + $0x1c1] sm:$0xff]
        %v404 = vld [vmem:[%s307 + $0x1d1] sm:$0xff]
        %v405 = vld [vmem:[%s307 + $0x1e1] sm:$0xff]
        %v406 = vld [vmem:[%s307 + $0x1f1] sm:$0xff]
        %v407 = vpack.c.bf16 %v376, %v375
        %v408 = vpack.c.bf16 %v378, %v377
        %v409 = vpack.c.bf16 %v380, %v379
        %v410 = vpack.c.bf16 %v382, %v381
        %v411 = vpack.c.bf16 %v384, %v383
        %v412 = vpack.c.bf16 %v386, %v385
        %v413 = vpack.c.bf16 %v388, %v387
        %v414 = vpack.c.bf16 %v390, %v389
        %v415 = vpack.c.bf16 %v392, %v391
        %v416 = vpack.c.bf16 %v394, %v393
        %v417 = vpack.c.bf16 %v396, %v395
        %v418 = vpack.c.bf16 %v398, %v397
        %v419 = vpack.c.bf16 %v400, %v399
        %v420 = vpack.c.bf16 %v402, %v401
        %v421 = vpack.c.bf16 %v404, %v403
        %v422 = vpack.c.bf16 %v406, %v405
        %s423 = scalar_lea.vmem %s1, 64
        %v424 = vld [vmem:[%s423] sm:$0xf]
        %v425 = vld [vmem:[%s423 + $0x4] sm:$0xf]
        %v426 = vld [vmem:[%s423 + $0x8] sm:$0xf]
        %v427 = vld [vmem:[%s423 + $0xc] sm:$0xf]
        %v428 = vld [vmem:[%s423 + $0x10] sm:$0xf]
        %v429 = vld [vmem:[%s423 + $0x14] sm:$0xf]
        %v430 = vld [vmem:[%s423 + $0x18] sm:$0xf]
        %v431 = vld [vmem:[%s423 + $0x1c] sm:$0xf]
        %v432 = vld [vmem:[%s423 + $0x20] sm:$0xf]
        %v433 = vld [vmem:[%s423 + $0x24] sm:$0xf]
        %v434 = vld [vmem:[%s423 + $0x28] sm:$0xf]
        %v435 = vld [vmem:[%s423 + $0x2c] sm:$0xf]
        %v436 = vld [vmem:[%s423 + $0x30] sm:$0xf]
        %v437 = vld [vmem:[%s423 + $0x34] sm:$0xf]
        %v438 = vld [vmem:[%s423 + $0x38] sm:$0xf]
        %v439 = vld [vmem:[%s423 + $0x3c] sm:$0xf]
        %v456 = vunpack.c.l.b16 %v424
        %v457 = vunpack.c.l.b16 %v425
        %v458 = vunpack.c.l.b16 %v426
        %v459 = vunpack.c.l.b16 %v427
        %v460 = vunpack.c.l.b16 %v428
        %v461 = vunpack.c.l.b16 %v429
        %v462 = vunpack.c.l.b16 %v430
        %v463 = vunpack.c.l.b16 %v431
        %v464 = vunpack.c.l.b16 %v432
        %v465 = vunpack.c.l.b16 %v433
        %v466 = vunpack.c.l.b16 %v434
        %v467 = vunpack.c.l.b16 %v435
        %v468 = vunpack.c.l.b16 %v436
        %v469 = vunpack.c.l.b16 %v437
        %v470 = vunpack.c.l.b16 %v438
        %v471 = vunpack.c.l.b16 %v439
        %v472 = vpack.c.b16 %v457, %v456
        %v473 = vpack.c.b16 %v459, %v458
        %v474 = vpack.c.b16 %v461, %v460
        %v475 = vpack.c.b16 %v463, %v462
        %v476 = vpack.c.b16 %v465, %v464
        %v477 = vpack.c.b16 %v467, %v466
        %v478 = vpack.c.b16 %v469, %v468
        %v479 = vpack.c.b16 %v471, %v470
        %488 = vmatprep.subr.bf16.mxu0 0
        %489 = vmatpush1.bf16.msra.mxu0 %v472
        %490 = vmatprep.subr.bf16.mxu0 0
        %491 = vmatpush1.bf16.msra.mxu0 %v473
        %492 = vmatprep.subr.bf16.mxu0 0
        %493 = vmatpush1.bf16.msra.mxu0 %v474
        %494 = vmatprep.subr.bf16.mxu0 0
        %495 = vmatpush1.bf16.msra.mxu0 %v475
        %496 = vmatprep.subr.bf16.mxu0 0
        %497 = vmatpush1.bf16.msra.mxu0 %v476
        %498 = vmatprep.subr.bf16.mxu0 0
        %499 = vmatpush1.bf16.msra.mxu0 %v477
        %500 = vmatprep.subr.bf16.mxu0 0
        %501 = vmatpush1.bf16.msra.mxu0 %v478
        %502 = vmatprep.subr.bf16.mxu0 0
        %503 = vmatpush1.bf16.msra.mxu0 %v479
        %504 = vmatprep.subr.bf16.mxu0 0
        %505 = vmatpush1.bf16.msra.mxu0 0
        %506 = vmatprep.subr.bf16.mxu0 0
        %507 = vmatpush1.bf16.msra.mxu0 0
        %508 = vmatprep.subr.bf16.mxu0 0
        %509 = vmatpush1.bf16.msra.mxu0 0
        %510 = vmatprep.subr.bf16.mxu0 0
        %511 = vmatpush1.bf16.msra.mxu0 0
        %512 = vmatprep.subr.bf16.mxu0 0
        %513 = vmatpush1.bf16.msra.mxu0 0
        %514 = vmatprep.subr.bf16.mxu0 0
        %515 = vmatpush1.bf16.msra.mxu0 0
        %516 = vmatprep.subr.bf16.mxu0 0
        %517 = vmatpush1.bf16.msra.mxu0 0
        %518 = vmatprep.subr.bf16.mxu0 0
        %519 = vmatpush1.bf16.msra.mxu0 0
        %520 = vmatprep.mubr.bf16.mxu0 0
        %521 = vmatmul.mubr.bf16.gmra.mrb[0].mxu0 %v407
        %v522 = vpop.f32.mrb[0].mxu0
        %v523 = vadd.f32 0.0, %v522
        %v524 = vpop.f32.mrb[0].mxu0
        %v525 = vpop.f32.mrb[0].mxu0
        %v526 = vadd.f32 0.0, %v525
        %v527 = vpop.f32.mrb[0].mxu0
        %528 = vmatprep.mubr.bf16.mxu0 0
        %529 = vmatmul.mubr.bf16.gmra.mrb[0].mxu0 %v408
        %v530 = vpop.f32.mrb[0].mxu0
        %v531 = vadd.f32 0.0, %v530
        %v532 = vpop.f32.mrb[0].mxu0
        %v533 = vpop.f32.mrb[0].mxu0
        %v534 = vadd.f32 0.0, %v533
        %v535 = vpop.f32.mrb[0].mxu0
        %536 = vmatprep.mubr.bf16.mxu0 0
        %537 = vmatmul.mubr.bf16.gmra.mrb[0].mxu0 %v409
        %v538 = vpop.f32.mrb[0].mxu0
        %v539 = vadd.f32 0.0, %v538
        %v540 = vpop.f32.mrb[0].mxu0
        %v541 = vpop.f32.mrb[0].mxu0
        %v542 = vadd.f32 0.0, %v541
        %v543 = vpop.f32.mrb[0].mxu0
        %544 = vmatprep.mubr.bf16.mxu0 0
        %545 = vmatmul.mubr.bf16.gmra.mrb[0].mxu0 %v410
        %v546 = vpop.f32.mrb[0].mxu0
        %v547 = vadd.f32 0.0, %v546
        %v548 = vpop.f32.mrb[0].mxu0
        %v549 = vpop.f32.mrb[0].mxu0
        %v550 = vadd.f32 0.0, %v549
        %v551 = vpop.f32.mrb[0].mxu0
        %552 = vmatprep.mubr.bf16.mxu0 0
        %553 = vmatmul.mubr.bf16.gmra.mrb[0].mxu0 %v411
        %v554 = vpop.f32.mrb[0].mxu0
        %v555 = vadd.f32 0.0, %v554
        %v556 = vpop.f32.mrb[0].mxu0
        %v557 = vpop.f32.mrb[0].mxu0
        %v558 = vadd.f32 0.0, %v557
        %v559 = vpop.f32.mrb[0].mxu0
        %560 = vmatprep.mubr.bf16.mxu0 0
        %561 = vmatmul.mubr.bf16.gmra.mrb[0].mxu0 %v412
        %v562 = vpop.f32.mrb[0].mxu0
        %v563 = vadd.f32 0.0, %v562
        %v564 = vpop.f32.mrb[0].mxu0
        %v565 = vpop.f32.mrb[0].mxu0
        %v566 = vadd.f32 0.0, %v565
        %v567 = vpop.f32.mrb[0].mxu0
        %568 = vmatprep.mubr.bf16.mxu0 0
        %569 = vmatmul.mubr.bf16.gmra.mrb[0].mxu0 %v413
        %v570 = vpop.f32.mrb[0].mxu0
        %v571 = vadd.f32 0.0, %v570
        %v572 = vpop.f32.mrb[0].mxu0
        %v573 = vpop.f32.mrb[0].mxu0
        %v574 = vadd.f32 0.0, %v573
        %v575 = vpop.f32.mrb[0].mxu0
        %576 = vmatprep.mubr.bf16.mxu0 0
        %577 = vmatmul.mubr.bf16.gmra.mrb[0].mxu0 %v414
        %v578 = vpop.f32.mrb[0].mxu0
        %v579 = vadd.f32 0.0, %v578
        %v580 = vpop.f32.mrb[0].mxu0
        %v581 = vpop.f32.mrb[0].mxu0
        %v582 = vadd.f32 0.0, %v581
        %v583 = vpop.f32.mrb[0].mxu0
        %584 = vmatprep.mubr.bf16.mxu0 0
        %585 = vmatmul.mubr.bf16.gmra.mrb[0].mxu0 %v415
        %v586 = vpop.f32.mrb[0].mxu0
        %v587 = vadd.f32 0.0, %v586
        %v588 = vpop.f32.mrb[0].mxu0
        %v589 = vpop.f32.mrb[0].mxu0
        %v590 = vadd.f32 0.0, %v589
        %v591 = vpop.f32.mrb[0].mxu0
        %592 = vmatprep.mubr.bf16.mxu0 0
        %593 = vmatmul.mubr.bf16.gmra.mrb[0].mxu0 %v416
        %v594 = vpop.f32.mrb[0].mxu0
        %v595 = vadd.f32 0.0, %v594
        %v596 = vpop.f32.mrb[0].mxu0
        %v597 = vpop.f32.mrb[0].mxu0
        %v598 = vadd.f32 0.0, %v597
        %v599 = vpop.f32.mrb[0].mxu0
        %600 = vmatprep.mubr.bf16.mxu0 0
        %601 = vmatmul.mubr.bf16.gmra.mrb[0].mxu0 %v417
        %v602 = vpop.f32.mrb[0].mxu0
        %v603 = vadd.f32 0.0, %v602
        %v604 = vpop.f32.mrb[0].mxu0
        %v605 = vpop.f32.mrb[0].mxu0
        %v606 = vadd.f32 0.0, %v605
        %v607 = vpop.f32.mrb[0].mxu0
        %608 = vmatprep.mubr.bf16.mxu0 0
        %609 = vmatmul.mubr.bf16.gmra.mrb[0].mxu0 %v418
        %v610 = vpop.f32.mrb[0].mxu0
        %v611 = vadd.f32 0.0, %v610
        %v612 = vpop.f32.mrb[0].mxu0
        %v613 = vpop.f32.mrb[0].mxu0
        %v614 = vadd.f32 0.0, %v613
        %v615 = vpop.f32.mrb[0].mxu0
        %616 = vmatprep.mubr.bf16.mxu0 0
        %617 = vmatmul.mubr.bf16.gmra.mrb[0].mxu0 %v419
        %v618 = vpop.f32.mrb[0].mxu0
        %v619 = vadd.f32 0.0, %v618
        %v620 = vpop.f32.mrb[0].mxu0
        %v621 = vpop.f32.mrb[0].mxu0
        %v622 = vadd.f32 0.0, %v621
        %v623 = vpop.f32.mrb[0].mxu0
        %624 = vmatprep.mubr.bf16.mxu0 0
        %625 = vmatmul.mubr.bf16.gmra.mrb[0].mxu0 %v420
        %v626 = vpop.f32.mrb[0].mxu0
        %v627 = vadd.f32 0.0, %v626
        %v628 = vpop.f32.mrb[0].mxu0
        %v629 = vpop.f32.mrb[0].mxu0
        %v630 = vadd.f32 0.0, %v629
        %v631 = vpop.f32.mrb[0].mxu0
        %632 = vmatprep.mubr.bf16.mxu0 0
        %633 = vmatmul.mubr.bf16.gmra.mrb[0].mxu0 %v421
        %v634 = vpop.f32.mrb[0].mxu0
        %v635 = vadd.f32 0.0, %v634
        %v636 = vpop.f32.mrb[0].mxu0
        %v637 = vpop.f32.mrb[0].mxu0
        %v638 = vadd.f32 0.0, %v637
        %v639 = vpop.f32.mrb[0].mxu0
        %640 = vmatprep.mubr.bf16.mxu0 0
        %641 = vmatmul.mubr.bf16.gmra.mrb[0].mxu0 %v422
        %v642 = vpop.f32.mrb[0].mxu0
        %v643 = vadd.f32 0.0, %v642
        %v644 = vpop.f32.mrb[0].mxu0
        %v645 = vpop.f32.mrb[0].mxu0
        %v646 = vadd.f32 0.0, %v645
        %v647 = vpop.f32.mrb[0].mxu0
        %648 = vdwg.mxu0
        %v665 = vunpack.c.l.b16 %v359
        %v666 = vunpack.c.l.b16 %v360
        %v667 = vunpack.c.l.b16 %v361
        %v668 = vunpack.c.l.b16 %v362
        %v669 = vunpack.c.l.b16 %v363
        %v670 = vunpack.c.l.b16 %v364
        %v671 = vunpack.c.l.b16 %v365
        %v672 = vunpack.c.l.b16 %v366
        %v673 = vunpack.c.l.b16 %v367
        %v674 = vunpack.c.l.b16 %v368
        %v675 = vunpack.c.l.b16 %v369
        %v676 = vunpack.c.l.b16 %v370
        %v677 = vunpack.c.l.b16 %v371
        %v678 = vunpack.c.l.b16 %v372
        %v679 = vunpack.c.l.b16 %v373
        %v680 = vunpack.c.l.b16 %v374
        %v681 = vpack.c.b16 %v666, %v665
        %v682 = vpack.c.b16 %v668, %v667
        %v683 = vpack.c.b16 %v670, %v669
        %v684 = vpack.c.b16 %v672, %v671
        %v685 = vpack.c.b16 %v674, %v673
        %v686 = vpack.c.b16 %v676, %v675
        %v687 = vpack.c.b16 %v678, %v677
        %v688 = vpack.c.b16 %v680, %v679
        %697 = vmatprep.subr.bf16.mxu0 0
        %698 = vmatpush1.bf16.msra.mxu0 %v681
        %699 = vmatprep.subr.bf16.mxu0 0
        %700 = vmatpush1.bf16.msra.mxu0 %v682
        %701 = vmatprep.subr.bf16.mxu0 0
        %702 = vmatpush1.bf16.msra.mxu0 %v683
        %703 = vmatprep.subr.bf16.mxu0 0
        %704 = vmatpush1.bf16.msra.mxu0 %v684
        %705 = vmatprep.subr.bf16.mxu0 0
        %706 = vmatpush1.bf16.msra.mxu0 %v685
        %707 = vmatprep.subr.bf16.mxu0 0
        %708 = vmatpush1.bf16.msra.mxu0 %v686
        %709 = vmatprep.subr.bf16.mxu0 0
        %710 = vmatpush1.bf16.msra.mxu0 %v687
        %711 = vmatprep.subr.bf16.mxu0 0
        %712 = vmatpush1.bf16.msra.mxu0 %v688
        %713 = vmatprep.subr.bf16.mxu0 0
        %714 = vmatpush1.bf16.msra.mxu0 0
        %715 = vmatprep.subr.bf16.mxu0 0
        %716 = vmatpush1.bf16.msra.mxu0 0
        %717 = vmatprep.subr.bf16.mxu0 0
        %718 = vmatpush1.bf16.msra.mxu0 0
        %719 = vmatprep.subr.bf16.mxu0 0
        %720 = vmatpush1.bf16.msra.mxu0 0
        %721 = vmatprep.subr.bf16.mxu0 0
        %722 = vmatpush1.bf16.msra.mxu0 0
        %723 = vmatprep.subr.bf16.mxu0 0
        %724 = vmatpush1.bf16.msra.mxu0 0
        %725 = vmatprep.subr.bf16.mxu0 0
        %726 = vmatpush1.bf16.msra.mxu0 0
        %727 = vmatprep.subr.bf16.mxu0 0
        %728 = vmatpush1.bf16.msra.mxu0 0
        %729 = vmatprep.mubr.bf16.mxu0 0
        %730 = vmatmul.mubr.bf16.gmra.mrb[0].mxu0 %v343
        %v731 = vpop.f32.mrb[0].mxu0
        %v732 = vadd.f32 %v523, %v731
        %v733 = vpop.f32.mrb[0].mxu0
        %v734 = vpop.f32.mrb[0].mxu0
        %v735 = vadd.f32 %v526, %v734
        %v736 = vpop.f32.mrb[0].mxu0
        %737 = vmatprep.mubr.bf16.mxu0 0
        %738 = vmatmul.mubr.bf16.gmra.mrb[0].mxu0 %v344
        %v739 = vpop.f32.mrb[0].mxu0
        %v740 = vadd.f32 %v531, %v739
        %v741 = vpop.f32.mrb[0].mxu0
        %v742 = vpop.f32.mrb[0].mxu0
        %v743 = vadd.f32 %v534, %v742
        %v744 = vpop.f32.mrb[0].mxu0
        %745 = vmatprep.mubr.bf16.mxu0 0
        %746 = vmatmul.mubr.bf16.gmra.mrb[0].mxu0 %v345
        %v747 = vpop.f32.mrb[0].mxu0
        %v748 = vadd.f32 %v539, %v747
        %v749 = vpop.f32.mrb[0].mxu0
        %v750 = vpop.f32.mrb[0].mxu0
        %v751 = vadd.f32 %v542, %v750
        %v752 = vpop.f32.mrb[0].mxu0
        %753 = vmatprep.mubr.bf16.mxu0 0
        %754 = vmatmul.mubr.bf16.gmra.mrb[0].mxu0 %v346
        %v755 = vpop.f32.mrb[0].mxu0
        %v756 = vadd.f32 %v547, %v755
        %v757 = vpop.f32.mrb[0].mxu0
        %v758 = vpop.f32.mrb[0].mxu0
        %v759 = vadd.f32 %v550, %v758
        %v760 = vpop.f32.mrb[0].mxu0
        %761 = vmatprep.mubr.bf16.mxu0 0
        %762 = vmatmul.mubr.bf16.gmra.mrb[0].mxu0 %v347
        %v763 = vpop.f32.mrb[0].mxu0
        %v764 = vadd.f32 %v555, %v763
        %v765 = vpop.f32.mrb[0].mxu0
        %v766 = vpop.f32.mrb[0].mxu0
        %v767 = vadd.f32 %v558, %v766
        %v768 = vpop.f32.mrb[0].mxu0
        %769 = vmatprep.mubr.bf16.mxu0 0
        %770 = vmatmul.mubr.bf16.gmra.mrb[0].mxu0 %v348
        %v771 = vpop.f32.mrb[0].mxu0
        %v772 = vadd.f32 %v563, %v771
        %v773 = vpop.f32.mrb[0].mxu0
        %v774 = vpop.f32.mrb[0].mxu0
        %v775 = vadd.f32 %v566, %v774
        %v776 = vpop.f32.mrb[0].mxu0
        %777 = vmatprep.mubr.bf16.mxu0 0
        %778 = vmatmul.mubr.bf16.gmra.mrb[0].mxu0 %v349
        %v779 = vpop.f32.mrb[0].mxu0
        %v780 = vadd.f32 %v571, %v779
        %v781 = vpop.f32.mrb[0].mxu0
        %v782 = vpop.f32.mrb[0].mxu0
        %v783 = vadd.f32 %v574, %v782
        %v784 = vpop.f32.mrb[0].mxu0
        %785 = vmatprep.mubr.bf16.mxu0 0
        %786 = vmatmul.mubr.bf16.gmra.mrb[0].mxu0 %v350
        %v787 = vpop.f32.mrb[0].mxu0
        %v788 = vadd.f32 %v579, %v787
        %v789 = vpop.f32.mrb[0].mxu0
        %v790 = vpop.f32.mrb[0].mxu0
        %v791 = vadd.f32 %v582, %v790
        %v792 = vpop.f32.mrb[0].mxu0
        %793 = vmatprep.mubr.bf16.mxu0 0
        %794 = vmatmul.mubr.bf16.gmra.mrb[0].mxu0 %v351
        %v795 = vpop.f32.mrb[0].mxu0
        %v796 = vadd.f32 %v587, %v795
        %v797 = vpop.f32.mrb[0].mxu0
        %v798 = vpop.f32.mrb[0].mxu0
        %v799 = vadd.f32 %v590, %v798
        %v800 = vpop.f32.mrb[0].mxu0
        %801 = vmatprep.mubr.bf16.mxu0 0
        %802 = vmatmul.mubr.bf16.gmra.mrb[0].mxu0 %v352
        %v803 = vpop.f32.mrb[0].mxu0
        %v804 = vadd.f32 %v595, %v803
        %v805 = vpop.f32.mrb[0].mxu0
        %v806 = vpop.f32.mrb[0].mxu0
        %v807 = vadd.f32 %v598, %v806
        %v808 = vpop.f32.mrb[0].mxu0
        %809 = vmatprep.mubr.bf16.mxu0 0
        %810 = vmatmul.mubr.bf16.gmra.mrb[0].mxu0 %v353
        %v811 = vpop.f32.mrb[0].mxu0
        %v812 = vadd.f32 %v603, %v811
        %v813 = vpop.f32.mrb[0].mxu0
        %v814 = vpop.f32.mrb[0].mxu0
        %v815 = vadd.f32 %v606, %v814
        %v816 = vpop.f32.mrb[0].mxu0
        %817 = vmatprep.mubr.bf16.mxu0 0
        %818 = vmatmul.mubr.bf16.gmra.mrb[0].mxu0 %v354
        %v819 = vpop.f32.mrb[0].mxu0
        %v820 = vadd.f32 %v611, %v819
        %v821 = vpop.f32.mrb[0].mxu0
        %v822 = vpop.f32.mrb[0].mxu0
        %v823 = vadd.f32 %v614, %v822
        %v824 = vpop.f32.mrb[0].mxu0
        %825 = vmatprep.mubr.bf16.mxu0 0
        %826 = vmatmul.mubr.bf16.gmra.mrb[0].mxu0 %v355
        %v827 = vpop.f32.mrb[0].mxu0
        %v828 = vadd.f32 %v619, %v827
        %v829 = vpop.f32.mrb[0].mxu0
        %v830 = vpop.f32.mrb[0].mxu0
        %v831 = vadd.f32 %v622, %v830
        %v832 = vpop.f32.mrb[0].mxu0
        %833 = vmatprep.mubr.bf16.mxu0 0
        %834 = vmatmul.mubr.bf16.gmra.mrb[0].mxu0 %v356
        %v835 = vpop.f32.mrb[0].mxu0
        %v836 = vadd.f32 %v627, %v835
        %v837 = vpop.f32.mrb[0].mxu0
        %v838 = vpop.f32.mrb[0].mxu0
        %v839 = vadd.f32 %v630, %v838
        %v840 = vpop.f32.mrb[0].mxu0
        %841 = vmatprep.mubr.bf16.mxu0 0
        %842 = vmatmul.mubr.bf16.gmra.mrb[0].mxu0 %v357
        %v843 = vpop.f32.mrb[0].mxu0
        %v844 = vadd.f32 %v635, %v843
        %v845 = vpop.f32.mrb[0].mxu0
        %v846 = vpop.f32.mrb[0].mxu0
        %v847 = vadd.f32 %v638, %v846
        %v848 = vpop.f32.mrb[0].mxu0
        %849 = vmatprep.mubr.bf16.mxu0 0
        %850 = vmatmul.mubr.bf16.gmra.mrb[0].mxu0 %v358
        %v851 = vpop.f32.mrb[0].mxu0
        %v852 = vadd.f32 %v643, %v851
        %v853 = vpop.f32.mrb[0].mxu0
        %v854 = vpop.f32.mrb[0].mxu0
        %v855 = vadd.f32 %v646, %v854
        %v856 = vpop.f32.mrb[0].mxu0
        %857 = vdwg.mxu0
        %v858 = vld [vmem:[%s307 + $0x2] sm:$0xff]
        %v859 = vld [vmem:[%s307 + $0x12] sm:$0xff]
        %v860 = vld [vmem:[%s307 + $0x22] sm:$0xff]
        %v861 = vld [vmem:[%s307 + $0x32] sm:$0xff]
        %v862 = vld [vmem:[%s307 + $0x42] sm:$0xff]
        %v863 = vld [vmem:[%s307 + $0x52] sm:$0xff]
        %v864 = vld [vmem:[%s307 + $0x62] sm:$0xff]
        %v865 = vld [vmem:[%s307 + $0x72] sm:$0xff]
        %v866 = vld [vmem:[%s307 + $0x82] sm:$0xff]
        %v867 = vld [vmem:[%s307 + $0x92] sm:$0xff]
        %v868 = vld [vmem:[%s307 + $0xa2] sm:$0xff]
        %v869 = vld [vmem:[%s307 + $0xb2] sm:$0xff]
        %v870 = vld [vmem:[%s307 + $0xc2] sm:$0xff]
        %v871 = vld [vmem:[%s307 + $0xd2] sm:$0xff]
        %v872 = vld [vmem:[%s307 + $0xe2] sm:$0xff]
        %v873 = vld [vmem:[%s307 + $0xf2] sm:$0xff]
        %v874 = vld [vmem:[%s307 + $0x102] sm:$0xff]
        %v875 = vld [vmem:[%s307 + $0x112] sm:$0xff]
        %v876 = vld [vmem:[%s307 + $0x122] sm:$0xff]
        %v877 = vld [vmem:[%s307 + $0x132] sm:$0xff]
        %v878 = vld [vmem:[%s307 + $0x142] sm:$0xff]
        %v879 = vld [vmem:[%s307 + $0x152] sm:$0xff]
        %v880 = vld [vmem:[%s307 + $0x162] sm:$0xff]
        %v881 = vld [vmem:[%s307 + $0x172] sm:$0xff]
        %v882 = vld [vmem:[%s307 + $0x182] sm:$0xff]
        %v883 = vld [vmem:[%s307 + $0x192] sm:$0xff]
        %v884 = vld [vmem:[%s307 + $0x1a2] sm:$0xff]
        %v885 = vld [vmem:[%s307 + $0x1b2] sm:$0xff]
        %v886 = vld [vmem:[%s307 + $0x1c2] sm:$0xff]
        %v887 = vld [vmem:[%s307 + $0x1d2] sm:$0xff]
        %v888 = vld [vmem:[%s307 + $0x1e2] sm:$0xff]
        %v889 = vld [vmem:[%s307 + $0x1f2] sm:$0xff]
        %v890 = vpack.c.bf16 %v859, %v858
        %v891 = vpack.c.bf16 %v861, %v860
        %v892 = vpack.c.bf16 %v863, %v862
        %v893 = vpack.c.bf16 %v865, %v864
        %v894 = vpack.c.bf16 %v867, %v866
        %v895 = vpack.c.bf16 %v869, %v868
        %v896 = vpack.c.bf16 %v871, %v870
        %v897 = vpack.c.bf16 %v873, %v872
        %v898 = vpack.c.bf16 %v875, %v874
        %v899 = vpack.c.bf16 %v877, %v876
        %v900 = vpack.c.bf16 %v879, %v878
        %v901 = vpack.c.bf16 %v881, %v880
        %v902 = vpack.c.bf16 %v883, %v882
        %v903 = vpack.c.bf16 %v885, %v884
        %v904 = vpack.c.bf16 %v887, %v886
        %v905 = vpack.c.bf16 %v889, %v888
        %s906 = scalar_lea.vmem %s1, 128
        %v907 = vld [vmem:[%s906] sm:$0xf]
        %v908 = vld [vmem:[%s906 + $0x4] sm:$0xf]
        %v909 = vld [vmem:[%s906 + $0x8] sm:$0xf]
        %v910 = vld [vmem:[%s906 + $0xc] sm:$0xf]
        %v911 = vld [vmem:[%s906 + $0x10] sm:$0xf]
        %v912 = vld [vmem:[%s906 + $0x14] sm:$0xf]
        %v913 = vld [vmem:[%s906 + $0x18] sm:$0xf]
        %v914 = vld [vmem:[%s906 + $0x1c] sm:$0xf]
        %v915 = vld [vmem:[%s906 + $0x20] sm:$0xf]
        %v916 = vld [vmem:[%s906 + $0x24] sm:$0xf]
        %v917 = vld [vmem:[%s906 + $0x28] sm:$0xf]
        %v918 = vld [vmem:[%s906 + $0x2c] sm:$0xf]
        %v919 = vld [vmem:[%s906 + $0x30] sm:$0xf]
        %v920 = vld [vmem:[%s906 + $0x34] sm:$0xf]
        %v921 = vld [vmem:[%s906 + $0x38] sm:$0xf]
        %v922 = vld [vmem:[%s906 + $0x3c] sm:$0xf]
        %v939 = vunpack.c.l.b16 %v907
        %v940 = vunpack.c.l.b16 %v908
        %v941 = vunpack.c.l.b16 %v909
        %v942 = vunpack.c.l.b16 %v910
        %v943 = vunpack.c.l.b16 %v911
        %v944 = vunpack.c.l.b16 %v912
        %v945 = vunpack.c.l.b16 %v913
        %v946 = vunpack.c.l.b16 %v914
        %v947 = vunpack.c.l.b16 %v915
        %v948 = vunpack.c.l.b16 %v916
        %v949 = vunpack.c.l.b16 %v917
        %v950 = vunpack.c.l.b16 %v918
        %v951 = vunpack.c.l.b16 %v919
        %v952 = vunpack.c.l.b16 %v920
        %v953 = vunpack.c.l.b16 %v921
        %v954 = vunpack.c.l.b16 %v922
        %v955 = vpack.c.b16 %v940, %v939
        %v956 = vpack.c.b16 %v942, %v941
        %v957 = vpack.c.b16 %v944, %v943
        %v958 = vpack.c.b16 %v946, %v945
        %v959 = vpack.c.b16 %v948, %v947
        %v960 = vpack.c.b16 %v950, %v949
        %v961 = vpack.c.b16 %v952, %v951
        %v962 = vpack.c.b16 %v954, %v953
        %971 = vmatprep.subr.bf16.mxu0 0
        %972 = vmatpush1.bf16.msra.mxu0 %v955
        %973 = vmatprep.subr.bf16.mxu0 0
        %974 = vmatpush1.bf16.msra.mxu0 %v956
        %975 = vmatprep.subr.bf16.mxu0 0
        %976 = vmatpush1.bf16.msra.mxu0 %v957
        %977 = vmatprep.subr.bf16.mxu0 0
        %978 = vmatpush1.bf16.msra.mxu0 %v958
        %979 = vmatprep.subr.bf16.mxu0 0
        %980 = vmatpush1.bf16.msra.mxu0 %v959
        %981 = vmatprep.subr.bf16.mxu0 0
        %982 = vmatpush1.bf16.msra.mxu0 %v960
        %983 = vmatprep.subr.bf16.mxu0 0
        %984 = vmatpush1.bf16.msra.mxu0 %v961
        %985 = vmatprep.subr.bf16.mxu0 0
        %986 = vmatpush1.bf16.msra.mxu0 %v962
        %987 = vmatprep.subr.bf16.mxu0 0
        %988 = vmatpush1.bf16.msra.mxu0 0
        %989 = vmatprep.subr.bf16.mxu0 0
        %990 = vmatpush1.bf16.msra.mxu0 0
        %991 = vmatprep.subr.bf16.mxu0 0
        %992 = vmatpush1.bf16.msra.mxu0 0
        %993 = vmatprep.subr.bf16.mxu0 0
        %994 = vmatpush1.bf16.msra.mxu0 0
        %995 = vmatprep.subr.bf16.mxu0 0
        %996 = vmatpush1.bf16.msra.mxu0 0
        %997 = vmatprep.subr.bf16.mxu0 0
        %998 = vmatpush1.bf16.msra.mxu0 0
        %999 = vmatprep.subr.bf16.mxu0 0
        %1000 = vmatpush1.bf16.msra.mxu0 0
        %1001 = vmatprep.subr.bf16.mxu0 0
        %1002 = vmatpush1.bf16.msra.mxu0 0
        %1003 = vmatprep.mubr.bf16.mxu0 0
        %1004 = vmatmul.mubr.bf16.gmra.mrb[0].mxu0 %v890
        %v1005 = vpop.f32.mrb[0].mxu0
        %v1006 = vadd.f32 0.0, %v1005
        %v1007 = vpop.f32.mrb[0].mxu0
        %v1008 = vpop.f32.mrb[0].mxu0
        %v1009 = vadd.f32 0.0, %v1008
        %v1010 = vpop.f32.mrb[0].mxu0
        %1011 = vmatprep.mubr.bf16.mxu0 0
        %1012 = vmatmul.mubr.bf16.gmra.mrb[0].mxu0 %v891
        %v1013 = vpop.f32.mrb[0].mxu0
        %v1014 = vadd.f32 0.0, %v1013
        %v1015 = vpop.f32.mrb[0].mxu0
        %v1016 = vpop.f32.mrb[0].mxu0
        %v1017 = vadd.f32 0.0, %v1016
        %v1018 = vpop.f32.mrb[0].mxu0
        %1019 = vmatprep.mubr.bf16.mxu0 0
        %1020 = vmatmul.mubr.bf16.gmra.mrb[0].mxu0 %v892
        %v1021 = vpop.f32.mrb[0].mxu0
        %v1022 = vadd.f32 0.0, %v1021
        %v1023 = vpop.f32.mrb[0].mxu0
        %v1024 = vpop.f32.mrb[0].mxu0
        %v1025 = vadd.f32 0.0, %v1024
        %v1026 = vpop.f32.mrb[0].mxu0
        %1027 = vmatprep.mubr.bf16.mxu0 0
        %1028 = vmatmul.mubr.bf16.gmra.mrb[0].mxu0 %v893
        %v1029 = vpop.f32.mrb[0].mxu0
        %v1030 = vadd.f32 0.0, %v1029
        %v1031 = vpop.f32.mrb[0].mxu0
        %v1032 = vpop.f32.mrb[0].mxu0
        %v1033 = vadd.f32 0.0, %v1032
        %v1034 = vpop.f32.mrb[0].mxu0
        %1035 = vmatprep.mubr.bf16.mxu0 0
        %1036 = vmatmul.mubr.bf16.gmra.mrb[0].mxu0 %v894
        %v1037 = vpop.f32.mrb[0].mxu0
        %v1038 = vadd.f32 0.0, %v1037
        %v1039 = vpop.f32.mrb[0].mxu0
        %v1040 = vpop.f32.mrb[0].mxu0
        %v1041 = vadd.f32 0.0, %v1040
        %v1042 = vpop.f32.mrb[0].mxu0
        %1043 = vmatprep.mubr.bf16.mxu0 0
        %1044 = vmatmul.mubr.bf16.gmra.mrb[0].mxu0 %v895
        %v1045 = vpop.f32.mrb[0].mxu0
        %v1046 = vadd.f32 0.0, %v1045
        %v1047 = vpop.f32.mrb[0].mxu0
        %v1048 = vpop.f32.mrb[0].mxu0
        %v1049 = vadd.f32 0.0, %v1048
        %v1050 = vpop.f32.mrb[0].mxu0
        %1051 = vmatprep.mubr.bf16.mxu0 0
        %1052 = vmatmul.mubr.bf16.gmra.mrb[0].mxu0 %v896
        %v1053 = vpop.f32.mrb[0].mxu0
        %v1054 = vadd.f32 0.0, %v1053
        %v1055 = vpop.f32.mrb[0].mxu0
        %v1056 = vpop.f32.mrb[0].mxu0
        %v1057 = vadd.f32 0.0, %v1056
        %v1058 = vpop.f32.mrb[0].mxu0
        %1059 = vmatprep.mubr.bf16.mxu0 0
        %1060 = vmatmul.mubr.bf16.gmra.mrb[0].mxu0 %v897
        %v1061 = vpop.f32.mrb[0].mxu0
        %v1062 = vadd.f32 0.0, %v1061
        %v1063 = vpop.f32.mrb[0].mxu0
        %v1064 = vpop.f32.mrb[0].mxu0
        %v1065 = vadd.f32 0.0, %v1064
        %v1066 = vpop.f32.mrb[0].mxu0
        %1067 = vmatprep.mubr.bf16.mxu0 0
        %1068 = vmatmul.mubr.bf16.gmra.mrb[0].mxu0 %v898
        %v1069 = vpop.f32.mrb[0].mxu0
        %v1070 = vadd.f32 0.0, %v1069
        %v1071 = vpop.f32.mrb[0].mxu0
        %v1072 = vpop.f32.mrb[0].mxu0
        %v1073 = vadd.f32 0.0, %v1072
        %v1074 = vpop.f32.mrb[0].mxu0
        %1075 = vmatprep.mubr.bf16.mxu0 0
        %1076 = vmatmul.mubr.bf16.gmra.mrb[0].mxu0 %v899
        %v1077 = vpop.f32.mrb[0].mxu0
        %v1078 = vadd.f32 0.0, %v1077
        %v1079 = vpop.f32.mrb[0].mxu0
        %v1080 = vpop.f32.mrb[0].mxu0
        %v1081 = vadd.f32 0.0, %v1080
        %v1082 = vpop.f32.mrb[0].mxu0
        %1083 = vmatprep.mubr.bf16.mxu0 0
        %1084 = vmatmul.mubr.bf16.gmra.mrb[0].mxu0 %v900
        %v1085 = vpop.f32.mrb[0].mxu0
        %v1086 = vadd.f32 0.0, %v1085
        %v1087 = vpop.f32.mrb[0].mxu0
        %v1088 = vpop.f32.mrb[0].mxu0
        %v1089 = vadd.f32 0.0, %v1088
        %v1090 = vpop.f32.mrb[0].mxu0
        %1091 = vmatprep.mubr.bf16.mxu0 0
        %1092 = vmatmul.mubr.bf16.gmra.mrb[0].mxu0 %v901
        %v1093 = vpop.f32.mrb[0].mxu0
        %v1094 = vadd.f32 0.0, %v1093
        %v1095 = vpop.f32.mrb[0].mxu0
        %v1096 = vpop.f32.mrb[0].mxu0
        %v1097 = vadd.f32 0.0, %v1096
        %v1098 = vpop.f32.mrb[0].mxu0
        %1099 = vmatprep.mubr.bf16.mxu0 0
        %1100 = vmatmul.mubr.bf16.gmra.mrb[0].mxu0 %v902
        %v1101 = vpop.f32.mrb[0].mxu0
        %v1102 = vadd.f32 0.0, %v1101
        %v1103 = vpop.f32.mrb[0].mxu0
        %v1104 = vpop.f32.mrb[0].mxu0
        %v1105 = vadd.f32 0.0, %v1104
        %v1106 = vpop.f32.mrb[0].mxu0
        %1107 = vmatprep.mubr.bf16.mxu0 0
        %1108 = vmatmul.mubr.bf16.gmra.mrb[0].mxu0 %v903
        %v1109 = vpop.f32.mrb[0].mxu0
        %v1110 = vadd.f32 0.0, %v1109
        %v1111 = vpop.f32.mrb[0].mxu0
        %v1112 = vpop.f32.mrb[0].mxu0
        %v1113 = vadd.f32 0.0, %v1112
        %v1114 = vpop.f32.mrb[0].mxu0
        %1115 = vmatprep.mubr.bf16.mxu0 0
        %1116 = vmatmul.mubr.bf16.gmra.mrb[0].mxu0 %v904
        %v1117 = vpop.f32.mrb[0].mxu0
        %v1118 = vadd.f32 0.0, %v1117
        %v1119 = vpop.f32.mrb[0].mxu0
        %v1120 = vpop.f32.mrb[0].mxu0
        %v1121 = vadd.f32 0.0, %v1120
        %v1122 = vpop.f32.mrb[0].mxu0
        %1123 = vmatprep.mubr.bf16.mxu0 0
        %1124 = vmatmul.mubr.bf16.gmra.mrb[0].mxu0 %v905
        %v1125 = vpop.f32.mrb[0].mxu0
        %v1126 = vadd.f32 0.0, %v1125
        %v1127 = vpop.f32.mrb[0].mxu0
        %v1128 = vpop.f32.mrb[0].mxu0
        %v1129 = vadd.f32 0.0, %v1128
        %v1130 = vpop.f32.mrb[0].mxu0
        %1131 = vdwg.mxu0
        %v1132 = vadd.f32 %v732, %v1006
        %v1133 = vadd.f32 %v735, %v1009
        %v1134 = vadd.f32 %v740, %v1014
        %v1135 = vadd.f32 %v743, %v1017
        %v1136 = vadd.f32 %v748, %v1022
        %v1137 = vadd.f32 %v751, %v1025
        %v1138 = vadd.f32 %v756, %v1030
        %v1139 = vadd.f32 %v759, %v1033
        %v1140 = vadd.f32 %v764, %v1038
        %v1141 = vadd.f32 %v767, %v1041
        %v1142 = vadd.f32 %v772, %v1046
        %v1143 = vadd.f32 %v775, %v1049
        %v1144 = vadd.f32 %v780, %v1054
        %v1145 = vadd.f32 %v783, %v1057
        %v1146 = vadd.f32 %v788, %v1062
        %v1147 = vadd.f32 %v791, %v1065
        %v1148 = vadd.f32 %v796, %v1070
        %v1149 = vadd.f32 %v799, %v1073
        %v1150 = vadd.f32 %v804, %v1078
        %v1151 = vadd.f32 %v807, %v1081
        %v1152 = vadd.f32 %v812, %v1086
        %v1153 = vadd.f32 %v815, %v1089
        %v1154 = vadd.f32 %v820, %v1094
        %v1155 = vadd.f32 %v823, %v1097
        %v1156 = vadd.f32 %v828, %v1102
        %v1157 = vadd.f32 %v831, %v1105
        %v1158 = vadd.f32 %v836, %v1110
        %v1159 = vadd.f32 %v839, %v1113
        %v1160 = vadd.f32 %v844, %v1118
        %v1161 = vadd.f32 %v847, %v1121
        %v1162 = vadd.f32 %v852, %v1126
        %v1163 = vadd.f32 %v855, %v1129
        %v1164 = vld [vmem:[%s3] sm:$0x1]
        %v1165 = vlaneseq
        %v1166 = vshrl.u32 %v1165, 7
        %v1167 = vsub.s32 0, %v1166
        %v1168 = vrot.slane %v1164, %v1167
        %v1169 = vmul.f32 %v1132, %v1168
        %v1170 = vmul.f32 %v1133, %v1168
        %v1171 = vmul.f32 %v1134, %v1168
        %v1172 = vmul.f32 %v1135, %v1168
        %v1173 = vmul.f32 %v1136, %v1168
        %v1174 = vmul.f32 %v1137, %v1168
        %v1175 = vmul.f32 %v1138, %v1168
        %v1176 = vmul.f32 %v1139, %v1168
        %v1177 = vmul.f32 %v1140, %v1168
        %v1178 = vmul.f32 %v1141, %v1168
        %v1179 = vmul.f32 %v1142, %v1168
        %v1180 = vmul.f32 %v1143, %v1168
        %v1181 = vmul.f32 %v1144, %v1168
        %v1182 = vmul.f32 %v1145, %v1168
        %v1183 = vmul.f32 %v1146, %v1168
        %v1184 = vmul.f32 %v1147, %v1168
        %v1185 = vmul.f32 %v1148, %v1168
        %v1186 = vmul.f32 %v1149, %v1168
        %v1187 = vmul.f32 %v1150, %v1168
        %v1188 = vmul.f32 %v1151, %v1168
        %v1189 = vmul.f32 %v1152, %v1168
        %v1190 = vmul.f32 %v1153, %v1168
        %v1191 = vmul.f32 %v1154, %v1168
        %v1192 = vmul.f32 %v1155, %v1168
        %v1193 = vmul.f32 %v1156, %v1168
        %v1194 = vmul.f32 %v1157, %v1168
        %v1195 = vmul.f32 %v1158, %v1168
        %v1196 = vmul.f32 %v1159, %v1168
        %v1197 = vmul.f32 %v1160, %v1168
        %v1198 = vmul.f32 %v1161, %v1168
        %v1199 = vmul.f32 %v1162, %v1168
        %v1200 = vmul.f32 %v1163, %v1168
        %v1201 = vld [vmem:[%s3 + $0x1] sm:$0x1]
        %v1202 = vlaneseq
        %v1203 = vshrl.u32 %v1202, 7
        %v1204 = vsub.s32 0, %v1203
        %v1205 = vrot.slane %v1201, %v1204
        %v1206 = vadd.f32 %v1169, %v1205
        %v1207 = vadd.f32 %v1170, %v1205
        %v1208 = vadd.f32 %v1171, %v1205
        %v1209 = vadd.f32 %v1172, %v1205
        %v1210 = vadd.f32 %v1173, %v1205
        %v1211 = vadd.f32 %v1174, %v1205
        %v1212 = vadd.f32 %v1175, %v1205
        %v1213 = vadd.f32 %v1176, %v1205
        %v1214 = vadd.f32 %v1177, %v1205
        %v1215 = vadd.f32 %v1178, %v1205
        %v1216 = vadd.f32 %v1179, %v1205
        %v1217 = vadd.f32 %v1180, %v1205
        %v1218 = vadd.f32 %v1181, %v1205
        %v1219 = vadd.f32 %v1182, %v1205
        %v1220 = vadd.f32 %v1183, %v1205
        %v1221 = vadd.f32 %v1184, %v1205
        %v1222 = vadd.f32 %v1185, %v1205
        %v1223 = vadd.f32 %v1186, %v1205
        %v1224 = vadd.f32 %v1187, %v1205
        %v1225 = vadd.f32 %v1188, %v1205
        %v1226 = vadd.f32 %v1189, %v1205
        %v1227 = vadd.f32 %v1190, %v1205
        %v1228 = vadd.f32 %v1191, %v1205
        %v1229 = vadd.f32 %v1192, %v1205
        %v1230 = vadd.f32 %v1193, %v1205
        %v1231 = vadd.f32 %v1194, %v1205
        %v1232 = vadd.f32 %v1195, %v1205
        %v1233 = vadd.f32 %v1196, %v1205
        %v1234 = vadd.f32 %v1197, %v1205
        %v1235 = vadd.f32 %v1198, %v1205
        %v1236 = vadd.f32 %v1199, %v1205
        %v1237 = vadd.f32 %v1200, %v1205
        %v1238 = vmax.f32 %v1206, 0.0
        %v1239 = vmax.f32 %v1207, 0.0
        %v1240 = vmax.f32 %v1208, 0.0
        %v1241 = vmax.f32 %v1209, 0.0
        %v1242 = vmax.f32 %v1210, 0.0
        %v1243 = vmax.f32 %v1211, 0.0
        %v1244 = vmax.f32 %v1212, 0.0
        %v1245 = vmax.f32 %v1213, 0.0
        %v1246 = vmax.f32 %v1214, 0.0
        %v1247 = vmax.f32 %v1215, 0.0
        %v1248 = vmax.f32 %v1216, 0.0
        %v1249 = vmax.f32 %v1217, 0.0
        %v1250 = vmax.f32 %v1218, 0.0
        %v1251 = vmax.f32 %v1219, 0.0
        %v1252 = vmax.f32 %v1220, 0.0
        %v1253 = vmax.f32 %v1221, 0.0
        %v1254 = vmax.f32 %v1222, 0.0
        %v1255 = vmax.f32 %v1223, 0.0
        %v1256 = vmax.f32 %v1224, 0.0
        %v1257 = vmax.f32 %v1225, 0.0
        %v1258 = vmax.f32 %v1226, 0.0
        %v1259 = vmax.f32 %v1227, 0.0
        %v1260 = vmax.f32 %v1228, 0.0
        %v1261 = vmax.f32 %v1229, 0.0
        %v1262 = vmax.f32 %v1230, 0.0
        %v1263 = vmax.f32 %v1231, 0.0
        %v1264 = vmax.f32 %v1232, 0.0
        %v1265 = vmax.f32 %v1233, 0.0
        %v1266 = vmax.f32 %v1234, 0.0
        %v1267 = vmax.f32 %v1235, 0.0
        %v1268 = vmax.f32 %v1236, 0.0
        %v1269 = vmax.f32 %v1237, 0.0
        %1270 = vst [vmem:[#allocation2] sm:$0x1] 0.0
        %1271 = vst [vmem:[#allocation2 + $0x10] sm:$0x1] 0.0
        %1272 = vst [vmem:[#allocation2 + $0x20] sm:$0x1] 0.0
        %1273 = vst [vmem:[#allocation2 + $0x30] sm:$0x1] 0.0
        %1274 = vst [vmem:[#allocation2 + $0x40] sm:$0x1] 0.0
        %1275 = vst [vmem:[#allocation2 + $0x50] sm:$0x1] 0.0
        %1276 = vst [vmem:[#allocation2 + $0x60] sm:$0x1] 0.0
        %1277 = vst [vmem:[#allocation2 + $0x70] sm:$0x1] 0.0
        %1278 = vst [vmem:[#allocation2 + $0x80] sm:$0x1] 0.0
        %1279 = vst [vmem:[#allocation2 + $0x90] sm:$0x1] 0.0
        %1280 = vst [vmem:[#allocation2 + $0xa0] sm:$0x1] 0.0
        %1281 = vst [vmem:[#allocation2 + $0xb0] sm:$0x1] 0.0
        %1282 = vst [vmem:[#allocation2 + $0xc0] sm:$0x1] 0.0
        %1283 = vst [vmem:[#allocation2 + $0xd0] sm:$0x1] 0.0
        %1284 = vst [vmem:[#allocation2 + $0xe0] sm:$0x1] 0.0
        %1285 = vst [vmem:[#allocation2 + $0xf0] sm:$0x1] 0.0
        %1286 = vst [vmem:[#allocation2 + $0x100] sm:$0x1] 0.0
        %1287 = vst [vmem:[#allocation2 + $0x110] sm:$0x1] 0.0
        %1288 = vst [vmem:[#allocation2 + $0x120] sm:$0x1] 0.0
        %1289 = vst [vmem:[#allocation2 + $0x130] sm:$0x1] 0.0
        %1290 = vst [vmem:[#allocation2 + $0x140] sm:$0x1] 0.0
        %1291 = vst [vmem:[#allocation2 + $0x150] sm:$0x1] 0.0
        %1292 = vst [vmem:[#allocation2 + $0x160] sm:$0x1] 0.0
        %1293 = vst [vmem:[#allocation2 + $0x170] sm:$0x1] 0.0
        %1294 = vst [vmem:[#allocation2 + $0x180] sm:$0x1] 0.0
        %1295 = vst [vmem:[#allocation2 + $0x190] sm:$0x1] 0.0
        %1296 = vst [vmem:[#allocation2 + $0x1a0] sm:$0x1] 0.0
        %1297 = vst [vmem:[#allocation2 + $0x1b0] sm:$0x1] 0.0
        %1298 = vst [vmem:[#allocation2 + $0x1c0] sm:$0x1] 0.0
        %1299 = vst [vmem:[#allocation2 + $0x1d0] sm:$0x1] 0.0
        %1300 = vst [vmem:[#allocation2 + $0x1e0] sm:$0x1] 0.0
        %1301 = vst [vmem:[#allocation2 + $0x1f0] sm:$0x1] 0.0
        %1302 = vst [vmem:[#allocation2 + $0x9] sm:$0x1] 0.0
        %1303 = vst [vmem:[#allocation2 + $0x19] sm:$0x1] 0.0
        %1304 = vst [vmem:[#allocation2 + $0x29] sm:$0x1] 0.0
        %1305 = vst [vmem:[#allocation2 + $0x39] sm:$0x1] 0.0
        %1306 = vst [vmem:[#allocation2 + $0x49] sm:$0x1] 0.0
        %1307 = vst [vmem:[#allocation2 + $0x59] sm:$0x1] 0.0
        %1308 = vst [vmem:[#allocation2 + $0x69] sm:$0x1] 0.0
        %1309 = vst [vmem:[#allocation2 + $0x79] sm:$0x1] 0.0
        %1310 = vst [vmem:[#allocation2 + $0x89] sm:$0x1] 0.0
        %1311 = vst [vmem:[#allocation2 + $0x99] sm:$0x1] 0.0
        %1312 = vst [vmem:[#allocation2 + $0xa9] sm:$0x1] 0.0
        %1313 = vst [vmem:[#allocation2 + $0xb9] sm:$0x1] 0.0
        %1314 = vst [vmem:[#allocation2 + $0xc9] sm:$0x1] 0.0
        %1315 = vst [vmem:[#allocation2 + $0xd9] sm:$0x1] 0.0
        %1316 = vst [vmem:[#allocation2 + $0xe9] sm:$0x1] 0.0
        %1317 = vst [vmem:[#allocation2 + $0xf9] sm:$0x1] 0.0
        %1318 = vst [vmem:[#allocation2 + $0x109] sm:$0x1] 0.0
        %1319 = vst [vmem:[#allocation2 + $0x119] sm:$0x1] 0.0
        %1320 = vst [vmem:[#allocation2 + $0x129] sm:$0x1] 0.0
        %1321 = vst [vmem:[#allocation2 + $0x139] sm:$0x1] 0.0
        %1322 = vst [vmem:[#allocation2 + $0x149] sm:$0x1] 0.0
        %1323 = vst [vmem:[#allocation2 + $0x159] sm:$0x1] 0.0
        %1324 = vst [vmem:[#allocation2 + $0x169] sm:$0x1] 0.0
        %1325 = vst [vmem:[#allocation2 + $0x179] sm:$0x1] 0.0
        %1326 = vst [vmem:[#allocation2 + $0x189] sm:$0x1] 0.0
        %1327 = vst [vmem:[#allocation2 + $0x199] sm:$0x1] 0.0
        %1328 = vst [vmem:[#allocation2 + $0x1a9] sm:$0x1] 0.0
        %1329 = vst [vmem:[#allocation2 + $0x1b9] sm:$0x1] 0.0
        %1330 = vst [vmem:[#allocation2 + $0x1c9] sm:$0x1] 0.0
        %1331 = vst [vmem:[#allocation2 + $0x1d9] sm:$0x1] 0.0
        %1332 = vst [vmem:[#allocation2 + $0x1e9] sm:$0x1] 0.0
        %1333 = vst [vmem:[#allocation2 + $0x1f9] sm:$0x1] 0.0
        %1334 = vst [vmem:[#allocation2 + $0x1] sm:$0xff] %v1238
        %1335 = vst [vmem:[#allocation2 + $0x11] sm:$0xff] %v1239
        %1336 = vst [vmem:[#allocation2 + $0x21] sm:$0xff] %v1240
        %1337 = vst [vmem:[#allocation2 + $0x31] sm:$0xff] %v1241
        %1338 = vst [vmem:[#allocation2 + $0x41] sm:$0xff] %v1242
        %1339 = vst [vmem:[#allocation2 + $0x51] sm:$0xff] %v1243
        %1340 = vst [vmem:[#allocation2 + $0x61] sm:$0xff] %v1244
        %1341 = vst [vmem:[#allocation2 + $0x71] sm:$0xff] %v1245
        %1342 = vst [vmem:[#allocation2 + $0x81] sm:$0xff] %v1246
        %1343 = vst [vmem:[#allocation2 + $0x91] sm:$0xff] %v1247
        %1344 = vst [vmem:[#allocation2 + $0xa1] sm:$0xff] %v1248
        %1345 = vst [vmem:[#allocation2 + $0xb1] sm:$0xff] %v1249
        %1346 = vst [vmem:[#allocation2 + $0xc1] sm:$0xff] %v1250
        %1347 = vst [vmem:[#allocation2 + $0xd1] sm:$0xff] %v1251
        %1348 = vst [vmem:[#allocation2 + $0xe1] sm:$0xff] %v1252
        %1349 = vst [vmem:[#allocation2 + $0xf1] sm:$0xff] %v1253
        %1350 = vst [vmem:[#allocation2 + $0x101] sm:$0xff] %v1254
        %1351 = vst [vmem:[#allocation2 + $0x111] sm:$0xff] %v1255
        %1352 = vst [vmem:[#allocation2 + $0x121] sm:$0xff] %v1256
        %1353 = vst [vmem:[#allocation2 + $0x131] sm:$0xff] %v1257
        %1354 = vst [vmem:[#allocation2 + $0x141] sm:$0xff] %v1258
        %1355 = vst [vmem:[#allocation2 + $0x151] sm:$0xff] %v1259
        %1356 = vst [vmem:[#allocation2 + $0x161] sm:$0xff] %v1260
        %1357 = vst [vmem:[#allocation2 + $0x171] sm:$0xff] %v1261
        %1358 = vst [vmem:[#allocation2 + $0x181] sm:$0xff] %v1262
        %1359 = vst [vmem:[#allocation2 + $0x191] sm:$0xff] %v1263
        %1360 = vst [vmem:[#allocation2 + $0x1a1] sm:$0xff] %v1264
        %1361 = vst [vmem:[#allocation2 + $0x1b1] sm:$0xff] %v1265
        %1362 = vst [vmem:[#allocation2 + $0x1c1] sm:$0xff] %v1266
        %1363 = vst [vmem:[#allocation2 + $0x1d1] sm:$0xff] %v1267
        %1364 = vst [vmem:[#allocation2 + $0x1e1] sm:$0xff] %v1268
        %1365 = vst [vmem:[#allocation2 + $0x1f1] sm:$0xff] %v1269
        %v1366 = vld [vmem:[#allocation2] sm:$0xff]
        %v1367 = vld [vmem:[#allocation2 + $0x10] sm:$0xff]
        %v1368 = vld [vmem:[#allocation2 + $0x20] sm:$0xff]
        %v1369 = vld [vmem:[#allocation2 + $0x30] sm:$0xff]
        %v1370 = vld [vmem:[#allocation2 + $0x40] sm:$0xff]
        %v1371 = vld [vmem:[#allocation2 + $0x50] sm:$0xff]
        %v1372 = vld [vmem:[#allocation2 + $0x60] sm:$0xff]
        %v1373 = vld [vmem:[#allocation2 + $0x70] sm:$0xff]
        %v1374 = vld [vmem:[#allocation2 + $0x80] sm:$0xff]
        %v1375 = vld [vmem:[#allocation2 + $0x90] sm:$0xff]
        %v1376 = vld [vmem:[#allocation2 + $0xa0] sm:$0xff]
        %v1377 = vld [vmem:[#allocation2 + $0xb0] sm:$0xff]
        %v1378 = vld [vmem:[#allocation2 + $0xc0] sm:$0xff]
        %v1379 = vld [vmem:[#allocation2 + $0xd0] sm:$0xff]
        %v1380 = vld [vmem:[#allocation2 + $0xe0] sm:$0xff]
        %v1381 = vld [vmem:[#allocation2 + $0xf0] sm:$0xff]
        %v1382 = vld [vmem:[#allocation2 + $0x100] sm:$0xff]
        %v1383 = vld [vmem:[#allocation2 + $0x110] sm:$0xff]
        %v1384 = vld [vmem:[#allocation2 + $0x120] sm:$0xff]
        %v1385 = vld [vmem:[#allocation2 + $0x130] sm:$0xff]
        %v1386 = vld [vmem:[#allocation2 + $0x140] sm:$0xff]
        %v1387 = vld [vmem:[#allocation2 + $0x150] sm:$0xff]
        %v1388 = vld [vmem:[#allocation2 + $0x160] sm:$0xff]
        %v1389 = vld [vmem:[#allocation2 + $0x170] sm:$0xff]
        %v1390 = vld [vmem:[#allocation2 + $0x180] sm:$0xff]
        %v1391 = vld [vmem:[#allocation2 + $0x190] sm:$0xff]
        %v1392 = vld [vmem:[#allocation2 + $0x1a0] sm:$0xff]
        %v1393 = vld [vmem:[#allocation2 + $0x1b0] sm:$0xff]
        %v1394 = vld [vmem:[#allocation2 + $0x1c0] sm:$0xff]
        %v1395 = vld [vmem:[#allocation2 + $0x1d0] sm:$0xff]
        %v1396 = vld [vmem:[#allocation2 + $0x1e0] sm:$0xff]
        %v1397 = vld [vmem:[#allocation2 + $0x1f0] sm:$0xff]
        %v1398 = vpack.c.bf16 %v1367, %v1366
        %v1399 = vpack.c.bf16 %v1369, %v1368
        %v1400 = vpack.c.bf16 %v1371, %v1370
        %v1401 = vpack.c.bf16 %v1373, %v1372
        %v1402 = vpack.c.bf16 %v1375, %v1374
        %v1403 = vpack.c.bf16 %v1377, %v1376
        %v1404 = vpack.c.bf16 %v1379, %v1378
        %v1405 = vpack.c.bf16 %v1381, %v1380
        %v1406 = vpack.c.bf16 %v1383, %v1382
        %v1407 = vpack.c.bf16 %v1385, %v1384
        %v1408 = vpack.c.bf16 %v1387, %v1386
        %v1409 = vpack.c.bf16 %v1389, %v1388
        %v1410 = vpack.c.bf16 %v1391, %v1390
        %v1411 = vpack.c.bf16 %v1393, %v1392
        %v1412 = vpack.c.bf16 %v1395, %v1394
        %v1413 = vpack.c.bf16 %v1397, %v1396
        %v1414 = vld [vmem:[%s2] sm:$0xf]
        %v1415 = vld [vmem:[%s2 + $0x4] sm:$0xf]
        %v1416 = vld [vmem:[%s2 + $0x8] sm:$0xf]
        %v1417 = vld [vmem:[%s2 + $0xc] sm:$0xf]
        %v1418 = vld [vmem:[%s2 + $0x10] sm:$0xf]
        %v1419 = vld [vmem:[%s2 + $0x14] sm:$0xf]
        %v1420 = vld [vmem:[%s2 + $0x18] sm:$0xf]
        %v1421 = vld [vmem:[%s2 + $0x1c] sm:$0xf]
        %v1422 = vld [vmem:[%s2 + $0x20] sm:$0xf]
        %v1423 = vld [vmem:[%s2 + $0x24] sm:$0xf]
        %v1424 = vld [vmem:[%s2 + $0x28] sm:$0xf]
        %v1425 = vld [vmem:[%s2 + $0x2c] sm:$0xf]
        %v1426 = vld [vmem:[%s2 + $0x30] sm:$0xf]
        %v1427 = vld [vmem:[%s2 + $0x34] sm:$0xf]
        %v1428 = vld [vmem:[%s2 + $0x38] sm:$0xf]
        %v1429 = vld [vmem:[%s2 + $0x3c] sm:$0xf]
        %v1430 = vld [vmem:[#allocation2 + $0x1] sm:$0xff]
        %v1431 = vld [vmem:[#allocation2 + $0x11] sm:$0xff]
        %v1432 = vld [vmem:[#allocation2 + $0x21] sm:$0xff]
        %v1433 = vld [vmem:[#allocation2 + $0x31] sm:$0xff]
        %v1434 = vld [vmem:[#allocation2 + $0x41] sm:$0xff]
        %v1435 = vld [vmem:[#allocation2 + $0x51] sm:$0xff]
        %v1436 = vld [vmem:[#allocation2 + $0x61] sm:$0xff]
        %v1437 = vld [vmem:[#allocation2 + $0x71] sm:$0xff]
        %v1438 = vld [vmem:[#allocation2 + $0x81] sm:$0xff]
        %v1439 = vld [vmem:[#allocation2 + $0x91] sm:$0xff]
        %v1440 = vld [vmem:[#allocation2 + $0xa1] sm:$0xff]
        %v1441 = vld [vmem:[#allocation2 + $0xb1] sm:$0xff]
        %v1442 = vld [vmem:[#allocation2 + $0xc1] sm:$0xff]
        %v1443 = vld [vmem:[#allocation2 + $0xd1] sm:$0xff]
        %v1444 = vld [vmem:[#allocation2 + $0xe1] sm:$0xff]
        %v1445 = vld [vmem:[#allocation2 + $0xf1] sm:$0xff]
        %v1446 = vld [vmem:[#allocation2 + $0x101] sm:$0xff]
        %v1447 = vld [vmem:[#allocation2 + $0x111] sm:$0xff]
        %v1448 = vld [vmem:[#allocation2 + $0x121] sm:$0xff]
        %v1449 = vld [vmem:[#allocation2 + $0x131] sm:$0xff]
        %v1450 = vld [vmem:[#allocation2 + $0x141] sm:$0xff]
        %v1451 = vld [vmem:[#allocation2 + $0x151] sm:$0xff]
        %v1452 = vld [vmem:[#allocation2 + $0x161] sm:$0xff]
        %v1453 = vld [vmem:[#allocation2 + $0x171] sm:$0xff]
        %v1454 = vld [vmem:[#allocation2 + $0x181] sm:$0xff]
        %v1455 = vld [vmem:[#allocation2 + $0x191] sm:$0xff]
        %v1456 = vld [vmem:[#allocation2 + $0x1a1] sm:$0xff]
        %v1457 = vld [vmem:[#allocation2 + $0x1b1] sm:$0xff]
        %v1458 = vld [vmem:[#allocation2 + $0x1c1] sm:$0xff]
        %v1459 = vld [vmem:[#allocation2 + $0x1d1] sm:$0xff]
        %v1460 = vld [vmem:[#allocation2 + $0x1e1] sm:$0xff]
        %v1461 = vld [vmem:[#allocation2 + $0x1f1] sm:$0xff]
        %v1462 = vpack.c.bf16 %v1431, %v1430
        %v1463 = vpack.c.bf16 %v1433, %v1432
        %v1464 = vpack.c.bf16 %v1435, %v1434
        %v1465 = vpack.c.bf16 %v1437, %v1436
        %v1466 = vpack.c.bf16 %v1439, %v1438
        %v1467 = vpack.c.bf16 %v1441, %v1440
        %v1468 = vpack.c.bf16 %v1443, %v1442
        %v1469 = vpack.c.bf16 %v1445, %v1444
        %v1470 = vpack.c.bf16 %v1447, %v1446
        %v1471 = vpack.c.bf16 %v1449, %v1448
        %v1472 = vpack.c.bf16 %v1451, %v1450
        %v1473 = vpack.c.bf16 %v1453, %v1452
        %v1474 = vpack.c.bf16 %v1455, %v1454
        %v1475 = vpack.c.bf16 %v1457, %v1456
        %v1476 = vpack.c.bf16 %v1459, %v1458
        %v1477 = vpack.c.bf16 %v1461, %v1460
        %s1478 = scalar_lea.vmem %s2, 64
        %v1479 = vld [vmem:[%s1478] sm:$0xf]
        %v1480 = vld [vmem:[%s1478 + $0x4] sm:$0xf]
        %v1481 = vld [vmem:[%s1478 + $0x8] sm:$0xf]
        %v1482 = vld [vmem:[%s1478 + $0xc] sm:$0xf]
        %v1483 = vld [vmem:[%s1478 + $0x10] sm:$0xf]
        %v1484 = vld [vmem:[%s1478 + $0x14] sm:$0xf]
        %v1485 = vld [vmem:[%s1478 + $0x18] sm:$0xf]
        %v1486 = vld [vmem:[%s1478 + $0x1c] sm:$0xf]
        %v1487 = vld [vmem:[%s1478 + $0x20] sm:$0xf]
        %v1488 = vld [vmem:[%s1478 + $0x24] sm:$0xf]
        %v1489 = vld [vmem:[%s1478 + $0x28] sm:$0xf]
        %v1490 = vld [vmem:[%s1478 + $0x2c] sm:$0xf]
        %v1491 = vld [vmem:[%s1478 + $0x30] sm:$0xf]
        %v1492 = vld [vmem:[%s1478 + $0x34] sm:$0xf]
        %v1493 = vld [vmem:[%s1478 + $0x38] sm:$0xf]
        %v1494 = vld [vmem:[%s1478 + $0x3c] sm:$0xf]
        %v1511 = vunpack.c.l.b16 %v1479
        %v1512 = vunpack.c.l.b16 %v1480
        %v1513 = vunpack.c.l.b16 %v1481
        %v1514 = vunpack.c.l.b16 %v1482
        %v1515 = vunpack.c.l.b16 %v1483
        %v1516 = vunpack.c.l.b16 %v1484
        %v1517 = vunpack.c.l.b16 %v1485
        %v1518 = vunpack.c.l.b16 %v1486
        %v1519 = vunpack.c.l.b16 %v1487
        %v1520 = vunpack.c.l.b16 %v1488
        %v1521 = vunpack.c.l.b16 %v1489
        %v1522 = vunpack.c.l.b16 %v1490
        %v1523 = vunpack.c.l.b16 %v1491
        %v1524 = vunpack.c.l.b16 %v1492
        %v1525 = vunpack.c.l.b16 %v1493
        %v1526 = vunpack.c.l.b16 %v1494
        %v1527 = vpack.c.b16 %v1512, %v1511
        %v1528 = vpack.c.b16 %v1514, %v1513
        %v1529 = vpack.c.b16 %v1516, %v1515
        %v1530 = vpack.c.b16 %v1518, %v1517
        %v1531 = vpack.c.b16 %v1520, %v1519
        %v1532 = vpack.c.b16 %v1522, %v1521
        %v1533 = vpack.c.b16 %v1524, %v1523
        %v1534 = vpack.c.b16 %v1526, %v1525
        %1543 = vmatprep.subr.bf16.mxu0 0
        %1544 = vmatpush1.bf16.msra.mxu0 %v1527
        %1545 = vmatprep.subr.bf16.mxu0 0
        %1546 = vmatpush1.bf16.msra.mxu0 %v1528
        %1547 = vmatprep.subr.bf16.mxu0 0
        %1548 = vmatpush1.bf16.msra.mxu0 %v1529
        %1549 = vmatprep.subr.bf16.mxu0 0
        %1550 = vmatpush1.bf16.msra.mxu0 %v1530
        %1551 = vmatprep.subr.bf16.mxu0 0
        %1552 = vmatpush1.bf16.msra.mxu0 %v1531
        %1553 = vmatprep.subr.bf16.mxu0 0
        %1554 = vmatpush1.bf16.msra.mxu0 %v1532
        %1555 = vmatprep.subr.bf16.mxu0 0
        %1556 = vmatpush1.bf16.msra.mxu0 %v1533
        %1557 = vmatprep.subr.bf16.mxu0 0
        %1558 = vmatpush1.bf16.msra.mxu0 %v1534
        %1559 = vmatprep.subr.bf16.mxu0 0
        %1560 = vmatpush1.bf16.msra.mxu0 0
        %1561 = vmatprep.subr.bf16.mxu0 0
        %1562 = vmatpush1.bf16.msra.mxu0 0
        %1563 = vmatprep.subr.bf16.mxu0 0
        %1564 = vmatpush1.bf16.msra.mxu0 0
        %1565 = vmatprep.subr.bf16.mxu0 0
        %1566 = vmatpush1.bf16.msra.mxu0 0
        %1567 = vmatprep.subr.bf16.mxu0 0
        %1568 = vmatpush1.bf16.msra.mxu0 0
        %1569 = vmatprep.subr.bf16.mxu0 0
        %1570 = vmatpush1.bf16.msra.mxu0 0
        %1571 = vmatprep.subr.bf16.mxu0 0
        %1572 = vmatpush1.bf16.msra.mxu0 0
        %1573 = vmatprep.subr.bf16.mxu0 0
        %1574 = vmatpush1.bf16.msra.mxu0 0
        %1575 = vmatprep.mubr.bf16.mxu0 0
        %1576 = vmatmul.mubr.bf16.gmra.mrb[0].mxu0 %v1462
        %v1577 = vpop.f32.mrb[0].mxu0
        %v1578 = vadd.f32 0.0, %v1577
        %v1579 = vpop.f32.mrb[0].mxu0
        %v1580 = vpop.f32.mrb[0].mxu0
        %v1581 = vadd.f32 0.0, %v1580
        %v1582 = vpop.f32.mrb[0].mxu0
        %1583 = vmatprep.mubr.bf16.mxu0 0
        %1584 = vmatmul.mubr.bf16.gmra.mrb[0].mxu0 %v1463
        %v1585 = vpop.f32.mrb[0].mxu0
        %v1586 = vadd.f32 0.0, %v1585
        %v1587 = vpop.f32.mrb[0].mxu0
        %v1588 = vpop.f32.mrb[0].mxu0
        %v1589 = vadd.f32 0.0, %v1588
        %v1590 = vpop.f32.mrb[0].mxu0
        %1591 = vmatprep.mubr.bf16.mxu0 0
        %1592 = vmatmul.mubr.bf16.gmra.mrb[0].mxu0 %v1464
        %v1593 = vpop.f32.mrb[0].mxu0
        %v1594 = vadd.f32 0.0, %v1593
        %v1595 = vpop.f32.mrb[0].mxu0
        %v1596 = vpop.f32.mrb[0].mxu0
        %v1597 = vadd.f32 0.0, %v1596
        %v1598 = vpop.f32.mrb[0].mxu0
        %1599 = vmatprep.mubr.bf16.mxu0 0
        %1600 = vmatmul.mubr.bf16.gmra.mrb[0].mxu0 %v1465
        %v1601 = vpop.f32.mrb[0].mxu0
        %v1602 = vadd.f32 0.0, %v1601
        %v1603 = vpop.f32.mrb[0].mxu0
        %v1604 = vpop.f32.mrb[0].mxu0
        %v1605 = vadd.f32 0.0, %v1604
        %v1606 = vpop.f32.mrb[0].mxu0
        %1607 = vmatprep.mubr.bf16.mxu0 0
        %1608 = vmatmul.mubr.bf16.gmra.mrb[0].mxu0 %v1466
        %v1609 = vpop.f32.mrb[0].mxu0
        %v1610 = vadd.f32 0.0, %v1609
        %v1611 = vpop.f32.mrb[0].mxu0
        %v1612 = vpop.f32.mrb[0].mxu0
        %v1613 = vadd.f32 0.0, %v1612
        %v1614 = vpop.f32.mrb[0].mxu0
        %1615 = vmatprep.mubr.bf16.mxu0 0
        %1616 = vmatmul.mubr.bf16.gmra.mrb[0].mxu0 %v1467
        %v1617 = vpop.f32.mrb[0].mxu0
        %v1618 = vadd.f32 0.0, %v1617
        %v1619 = vpop.f32.mrb[0].mxu0
        %v1620 = vpop.f32.mrb[0].mxu0
        %v1621 = vadd.f32 0.0, %v1620
        %v1622 = vpop.f32.mrb[0].mxu0
        %1623 = vmatprep.mubr.bf16.mxu0 0
        %1624 = vmatmul.mubr.bf16.gmra.mrb[0].mxu0 %v1468
        %v1625 = vpop.f32.mrb[0].mxu0
        %v1626 = vadd.f32 0.0, %v1625
        %v1627 = vpop.f32.mrb[0].mxu0
        %v1628 = vpop.f32.mrb[0].mxu0
        %v1629 = vadd.f32 0.0, %v1628
        %v1630 = vpop.f32.mrb[0].mxu0
        %1631 = vmatprep.mubr.bf16.mxu0 0
        %1632 = vmatmul.mubr.bf16.gmra.mrb[0].mxu0 %v1469
        %v1633 = vpop.f32.mrb[0].mxu0
        %v1634 = vadd.f32 0.0, %v1633
        %v1635 = vpop.f32.mrb[0].mxu0
        %v1636 = vpop.f32.mrb[0].mxu0
        %v1637 = vadd.f32 0.0, %v1636
        %v1638 = vpop.f32.mrb[0].mxu0
        %1639 = vmatprep.mubr.bf16.mxu0 0
        %1640 = vmatmul.mubr.bf16.gmra.mrb[0].mxu0 %v1470
        %v1641 = vpop.f32.mrb[0].mxu0
        %v1642 = vadd.f32 0.0, %v1641
        %v1643 = vpop.f32.mrb[0].mxu0
        %v1644 = vpop.f32.mrb[0].mxu0
        %v1645 = vadd.f32 0.0, %v1644
        %v1646 = vpop.f32.mrb[0].mxu0
        %1647 = vmatprep.mubr.bf16.mxu0 0
        %1648 = vmatmul.mubr.bf16.gmra.mrb[0].mxu0 %v1471
        %v1649 = vpop.f32.mrb[0].mxu0
        %v1650 = vadd.f32 0.0, %v1649
        %v1651 = vpop.f32.mrb[0].mxu0
        %v1652 = vpop.f32.mrb[0].mxu0
        %v1653 = vadd.f32 0.0, %v1652
        %v1654 = vpop.f32.mrb[0].mxu0
        %1655 = vmatprep.mubr.bf16.mxu0 0
        %1656 = vmatmul.mubr.bf16.gmra.mrb[0].mxu0 %v1472
        %v1657 = vpop.f32.mrb[0].mxu0
        %v1658 = vadd.f32 0.0, %v1657
        %v1659 = vpop.f32.mrb[0].mxu0
        %v1660 = vpop.f32.mrb[0].mxu0
        %v1661 = vadd.f32 0.0, %v1660
        %v1662 = vpop.f32.mrb[0].mxu0
        %1663 = vmatprep.mubr.bf16.mxu0 0
        %1664 = vmatmul.mubr.bf16.gmra.mrb[0].mxu0 %v1473
        %v1665 = vpop.f32.mrb[0].mxu0
        %v1666 = vadd.f32 0.0, %v1665
        %v1667 = vpop.f32.mrb[0].mxu0
        %v1668 = vpop.f32.mrb[0].mxu0
        %v1669 = vadd.f32 0.0, %v1668
        %v1670 = vpop.f32.mrb[0].mxu0
        %1671 = vmatprep.mubr.bf16.mxu0 0
        %1672 = vmatmul.mubr.bf16.gmra.mrb[0].mxu0 %v1474
        %v1673 = vpop.f32.mrb[0].mxu0
        %v1674 = vadd.f32 0.0, %v1673
        %v1675 = vpop.f32.mrb[0].mxu0
        %v1676 = vpop.f32.mrb[0].mxu0
        %v1677 = vadd.f32 0.0, %v1676
        %v1678 = vpop.f32.mrb[0].mxu0
        %1679 = vmatprep.mubr.bf16.mxu0 0
        %1680 = vmatmul.mubr.bf16.gmra.mrb[0].mxu0 %v1475
        %v1681 = vpop.f32.mrb[0].mxu0
        %v1682 = vadd.f32 0.0, %v1681
        %v1683 = vpop.f32.mrb[0].mxu0
        %v1684 = vpop.f32.mrb[0].mxu0
        %v1685 = vadd.f32 0.0, %v1684
        %v1686 = vpop.f32.mrb[0].mxu0
        %1687 = vmatprep.mubr.bf16.mxu0 0
        %1688 = vmatmul.mubr.bf16.gmra.mrb[0].mxu0 %v1476
        %v1689 = vpop.f32.mrb[0].mxu0
        %v1690 = vadd.f32 0.0, %v1689
        %v1691 = vpop.f32.mrb[0].mxu0
        %v1692 = vpop.f32.mrb[0].mxu0
        %v1693 = vadd.f32 0.0, %v1692
        %v1694 = vpop.f32.mrb[0].mxu0
        %1695 = vmatprep.mubr.bf16.mxu0 0
        %1696 = vmatmul.mubr.bf16.gmra.mrb[0].mxu0 %v1477
        %v1697 = vpop.f32.mrb[0].mxu0
        %v1698 = vadd.f32 0.0, %v1697
        %v1699 = vpop.f32.mrb[0].mxu0
        %v1700 = vpop.f32.mrb[0].mxu0
        %v1701 = vadd.f32 0.0, %v1700
        %v1702 = vpop.f32.mrb[0].mxu0
        %1703 = vdwg.mxu0
        %v1720 = vunpack.c.l.b16 %v1414
        %v1721 = vunpack.c.l.b16 %v1415
        %v1722 = vunpack.c.l.b16 %v1416
        %v1723 = vunpack.c.l.b16 %v1417
        %v1724 = vunpack.c.l.b16 %v1418
        %v1725 = vunpack.c.l.b16 %v1419
        %v1726 = vunpack.c.l.b16 %v1420
        %v1727 = vunpack.c.l.b16 %v1421
        %v1728 = vunpack.c.l.b16 %v1422
        %v1729 = vunpack.c.l.b16 %v1423
        %v1730 = vunpack.c.l.b16 %v1424
        %v1731 = vunpack.c.l.b16 %v1425
        %v1732 = vunpack.c.l.b16 %v1426
        %v1733 = vunpack.c.l.b16 %v1427
        %v1734 = vunpack.c.l.b16 %v1428
        %v1735 = vunpack.c.l.b16 %v1429
        %v1736 = vpack.c.b16 %v1721, %v1720
        %v1737 = vpack.c.b16 %v1723, %v1722
        %v1738 = vpack.c.b16 %v1725, %v1724
        %v1739 = vpack.c.b16 %v1727, %v1726
        %v1740 = vpack.c.b16 %v1729, %v1728
        %v1741 = vpack.c.b16 %v1731, %v1730
        %v1742 = vpack.c.b16 %v1733, %v1732
        %v1743 = vpack.c.b16 %v1735, %v1734
        %1752 = vmatprep.subr.bf16.mxu0 0
        %1753 = vmatpush1.bf16.msra.mxu0 %v1736
        %1754 = vmatprep.subr.bf16.mxu0 0
        %1755 = vmatpush1.bf16.msra.mxu0 %v1737
        %1756 = vmatprep.subr.bf16.mxu0 0
        %1757 = vmatpush1.bf16.msra.mxu0 %v1738
        %1758 = vmatprep.subr.bf16.mxu0 0
        %1759 = vmatpush1.bf16.msra.mxu0 %v1739
        %1760 = vmatprep.subr.bf16.mxu0 0
        %1761 = vmatpush1.bf16.msra.mxu0 %v1740
        %1762 = vmatprep.subr.bf16.mxu0 0
        %1763 = vmatpush1.bf16.msra.mxu0 %v1741
        %1764 = vmatprep.subr.bf16.mxu0 0
        %1765 = vmatpush1.bf16.msra.mxu0 %v1742
        %1766 = vmatprep.subr.bf16.mxu0 0
        %1767 = vmatpush1.bf16.msra.mxu0 %v1743
        %1768 = vmatprep.subr.bf16.mxu0 0
        %1769 = vmatpush1.bf16.msra.mxu0 0
        %1770 = vmatprep.subr.bf16.mxu0 0
        %1771 = vmatpush1.bf16.msra.mxu0 0
        %1772 = vmatprep.subr.bf16.mxu0 0
        %1773 = vmatpush1.bf16.msra.mxu0 0
        %1774 = vmatprep.subr.bf16.mxu0 0
        %1775 = vmatpush1.bf16.msra.mxu0 0
        %1776 = vmatprep.subr.bf16.mxu0 0
        %1777 = vmatpush1.bf16.msra.mxu0 0
        %1778 = vmatprep.subr.bf16.mxu0 0
        %1779 = vmatpush1.bf16.msra.mxu0 0
        %1780 = vmatprep.subr.bf16.mxu0 0
        %1781 = vmatpush1.bf16.msra.mxu0 0
        %1782 = vmatprep.subr.bf16.mxu0 0
        %1783 = vmatpush1.bf16.msra.mxu0 0
        %1784 = vmatprep.mubr.bf16.mxu0 0
        %1785 = vmatmul.mubr.bf16.gmra.mrb[0].mxu0 %v1398
        %v1786 = vpop.f32.mrb[0].mxu0
        %v1787 = vadd.f32 %v1578, %v1786
        %v1788 = vpop.f32.mrb[0].mxu0
        %v1789 = vpop.f32.mrb[0].mxu0
        %v1790 = vadd.f32 %v1581, %v1789
        %v1791 = vpop.f32.mrb[0].mxu0
        %1792 = vmatprep.mubr.bf16.mxu0 0
        %1793 = vmatmul.mubr.bf16.gmra.mrb[0].mxu0 %v1399
        %v1794 = vpop.f32.mrb[0].mxu0
        %v1795 = vadd.f32 %v1586, %v1794
        %v1796 = vpop.f32.mrb[0].mxu0
        %v1797 = vpop.f32.mrb[0].mxu0
        %v1798 = vadd.f32 %v1589, %v1797
        %v1799 = vpop.f32.mrb[0].mxu0
        %1800 = vmatprep.mubr.bf16.mxu0 0
        %1801 = vmatmul.mubr.bf16.gmra.mrb[0].mxu0 %v1400
        %v1802 = vpop.f32.mrb[0].mxu0
        %v1803 = vadd.f32 %v1594, %v1802
        %v1804 = vpop.f32.mrb[0].mxu0
        %v1805 = vpop.f32.mrb[0].mxu0
        %v1806 = vadd.f32 %v1597, %v1805
        %v1807 = vpop.f32.mrb[0].mxu0
        %1808 = vmatprep.mubr.bf16.mxu0 0
        %1809 = vmatmul.mubr.bf16.gmra.mrb[0].mxu0 %v1401
        %v1810 = vpop.f32.mrb[0].mxu0
        %v1811 = vadd.f32 %v1602, %v1810
        %v1812 = vpop.f32.mrb[0].mxu0
        %v1813 = vpop.f32.mrb[0].mxu0
        %v1814 = vadd.f32 %v1605, %v1813
        %v1815 = vpop.f32.mrb[0].mxu0
        %1816 = vmatprep.mubr.bf16.mxu0 0
        %1817 = vmatmul.mubr.bf16.gmra.mrb[0].mxu0 %v1402
        %v1818 = vpop.f32.mrb[0].mxu0
        %v1819 = vadd.f32 %v1610, %v1818
        %v1820 = vpop.f32.mrb[0].mxu0
        %v1821 = vpop.f32.mrb[0].mxu0
        %v1822 = vadd.f32 %v1613, %v1821
        %v1823 = vpop.f32.mrb[0].mxu0
        %1824 = vmatprep.mubr.bf16.mxu0 0
        %1825 = vmatmul.mubr.bf16.gmra.mrb[0].mxu0 %v1403
        %v1826 = vpop.f32.mrb[0].mxu0
        %v1827 = vadd.f32 %v1618, %v1826
        %v1828 = vpop.f32.mrb[0].mxu0
        %v1829 = vpop.f32.mrb[0].mxu0
        %v1830 = vadd.f32 %v1621, %v1829
        %v1831 = vpop.f32.mrb[0].mxu0
        %1832 = vmatprep.mubr.bf16.mxu0 0
        %1833 = vmatmul.mubr.bf16.gmra.mrb[0].mxu0 %v1404
        %v1834 = vpop.f32.mrb[0].mxu0
        %v1835 = vadd.f32 %v1626, %v1834
        %v1836 = vpop.f32.mrb[0].mxu0
        %v1837 = vpop.f32.mrb[0].mxu0
        %v1838 = vadd.f32 %v1629, %v1837
        %v1839 = vpop.f32.mrb[0].mxu0
        %1840 = vmatprep.mubr.bf16.mxu0 0
        %1841 = vmatmul.mubr.bf16.gmra.mrb[0].mxu0 %v1405
        %v1842 = vpop.f32.mrb[0].mxu0
        %v1843 = vadd.f32 %v1634, %v1842
        %v1844 = vpop.f32.mrb[0].mxu0
        %v1845 = vpop.f32.mrb[0].mxu0
        %v1846 = vadd.f32 %v1637, %v1845
        %v1847 = vpop.f32.mrb[0].mxu0
        %1848 = vmatprep.mubr.bf16.mxu0 0
        %1849 = vmatmul.mubr.bf16.gmra.mrb[0].mxu0 %v1406
        %v1850 = vpop.f32.mrb[0].mxu0
        %v1851 = vadd.f32 %v1642, %v1850
        %v1852 = vpop.f32.mrb[0].mxu0
        %v1853 = vpop.f32.mrb[0].mxu0
        %v1854 = vadd.f32 %v1645, %v1853
        %v1855 = vpop.f32.mrb[0].mxu0
        %1856 = vmatprep.mubr.bf16.mxu0 0
        %1857 = vmatmul.mubr.bf16.gmra.mrb[0].mxu0 %v1407
        %v1858 = vpop.f32.mrb[0].mxu0
        %v1859 = vadd.f32 %v1650, %v1858
        %v1860 = vpop.f32.mrb[0].mxu0
        %v1861 = vpop.f32.mrb[0].mxu0
        %v1862 = vadd.f32 %v1653, %v1861
        %v1863 = vpop.f32.mrb[0].mxu0
        %1864 = vmatprep.mubr.bf16.mxu0 0
        %1865 = vmatmul.mubr.bf16.gmra.mrb[0].mxu0 %v1408
        %v1866 = vpop.f32.mrb[0].mxu0
        %v1867 = vadd.f32 %v1658, %v1866
        %v1868 = vpop.f32.mrb[0].mxu0
        %v1869 = vpop.f32.mrb[0].mxu0
        %v1870 = vadd.f32 %v1661, %v1869
        %v1871 = vpop.f32.mrb[0].mxu0
        %1872 = vmatprep.mubr.bf16.mxu0 0
        %1873 = vmatmul.mubr.bf16.gmra.mrb[0].mxu0 %v1409
        %v1874 = vpop.f32.mrb[0].mxu0
        %v1875 = vadd.f32 %v1666, %v1874
        %v1876 = vpop.f32.mrb[0].mxu0
        %v1877 = vpop.f32.mrb[0].mxu0
        %v1878 = vadd.f32 %v1669, %v1877
        %v1879 = vpop.f32.mrb[0].mxu0
        %1880 = vmatprep.mubr.bf16.mxu0 0
        %1881 = vmatmul.mubr.bf16.gmra.mrb[0].mxu0 %v1410
        %v1882 = vpop.f32.mrb[0].mxu0
        %v1883 = vadd.f32 %v1674, %v1882
        %v1884 = vpop.f32.mrb[0].mxu0
        %v1885 = vpop.f32.mrb[0].mxu0
        %v1886 = vadd.f32 %v1677, %v1885
        %v1887 = vpop.f32.mrb[0].mxu0
        %1888 = vmatprep.mubr.bf16.mxu0 0
        %1889 = vmatmul.mubr.bf16.gmra.mrb[0].mxu0 %v1411
        %v1890 = vpop.f32.mrb[0].mxu0
        %v1891 = vadd.f32 %v1682, %v1890
        %v1892 = vpop.f32.mrb[0].mxu0
        %v1893 = vpop.f32.mrb[0].mxu0
        %v1894 = vadd.f32 %v1685, %v1893
        %v1895 = vpop.f32.mrb[0].mxu0
        %1896 = vmatprep.mubr.bf16.mxu0 0
        %1897 = vmatmul.mubr.bf16.gmra.mrb[0].mxu0 %v1412
        %v1898 = vpop.f32.mrb[0].mxu0
        %v1899 = vadd.f32 %v1690, %v1898
        %v1900 = vpop.f32.mrb[0].mxu0
        %v1901 = vpop.f32.mrb[0].mxu0
        %v1902 = vadd.f32 %v1693, %v1901
        %v1903 = vpop.f32.mrb[0].mxu0
        %1904 = vmatprep.mubr.bf16.mxu0 0
        %1905 = vmatmul.mubr.bf16.gmra.mrb[0].mxu0 %v1413
        %v1906 = vpop.f32.mrb[0].mxu0
        %v1907 = vadd.f32 %v1698, %v1906
        %v1908 = vpop.f32.mrb[0].mxu0
        %v1909 = vpop.f32.mrb[0].mxu0
        %v1910 = vadd.f32 %v1701, %v1909
        %v1911 = vpop.f32.mrb[0].mxu0
        %1912 = vdwg.mxu0
        %v1913 = vld [vmem:[#allocation2 + $0x2] sm:$0xff]
        %v1914 = vld [vmem:[#allocation2 + $0x12] sm:$0xff]
        %v1915 = vld [vmem:[#allocation2 + $0x22] sm:$0xff]
        %v1916 = vld [vmem:[#allocation2 + $0x32] sm:$0xff]
        %v1917 = vld [vmem:[#allocation2 + $0x42] sm:$0xff]
        %v1918 = vld [vmem:[#allocation2 + $0x52] sm:$0xff]
        %v1919 = vld [vmem:[#allocation2 + $0x62] sm:$0xff]
        %v1920 = vld [vmem:[#allocation2 + $0x72] sm:$0xff]
        %v1921 = vld [vmem:[#allocation2 + $0x82] sm:$0xff]
        %v1922 = vld [vmem:[#allocation2 + $0x92] sm:$0xff]
        %v1923 = vld [vmem:[#allocation2 + $0xa2] sm:$0xff]
        %v1924 = vld [vmem:[#allocation2 + $0xb2] sm:$0xff]
        %v1925 = vld [vmem:[#allocation2 + $0xc2] sm:$0xff]
        %v1926 = vld [vmem:[#allocation2 + $0xd2] sm:$0xff]
        %v1927 = vld [vmem:[#allocation2 + $0xe2] sm:$0xff]
        %v1928 = vld [vmem:[#allocation2 + $0xf2] sm:$0xff]
        %v1929 = vld [vmem:[#allocation2 + $0x102] sm:$0xff]
        %v1930 = vld [vmem:[#allocation2 + $0x112] sm:$0xff]
        %v1931 = vld [vmem:[#allocation2 + $0x122] sm:$0xff]
        %v1932 = vld [vmem:[#allocation2 + $0x132] sm:$0xff]
        %v1933 = vld [vmem:[#allocation2 + $0x142] sm:$0xff]
        %v1934 = vld [vmem:[#allocation2 + $0x152] sm:$0xff]
        %v1935 = vld [vmem:[#allocation2 + $0x162] sm:$0xff]
        %v1936 = vld [vmem:[#allocation2 + $0x172] sm:$0xff]
        %v1937 = vld [vmem:[#allocation2 + $0x182] sm:$0xff]
        %v1938 = vld [vmem:[#allocation2 + $0x192] sm:$0xff]
        %v1939 = vld [vmem:[#allocation2 + $0x1a2] sm:$0xff]
        %v1940 = vld [vmem:[#allocation2 + $0x1b2] sm:$0xff]
        %v1941 = vld [vmem:[#allocation2 + $0x1c2] sm:$0xff]
        %v1942 = vld [vmem:[#allocation2 + $0x1d2] sm:$0xff]
        %v1943 = vld [vmem:[#allocation2 + $0x1e2] sm:$0xff]
        %v1944 = vld [vmem:[#allocation2 + $0x1f2] sm:$0xff]
        %v1945 = vpack.c.bf16 %v1914, %v1913
        %v1946 = vpack.c.bf16 %v1916, %v1915
        %v1947 = vpack.c.bf16 %v1918, %v1917
        %v1948 = vpack.c.bf16 %v1920, %v1919
        %v1949 = vpack.c.bf16 %v1922, %v1921
        %v1950 = vpack.c.bf16 %v1924, %v1923
        %v1951 = vpack.c.bf16 %v1926, %v1925
        %v1952 = vpack.c.bf16 %v1928, %v1927
        %v1953 = vpack.c.bf16 %v1930, %v1929
        %v1954 = vpack.c.bf16 %v1932, %v1931
        %v1955 = vpack.c.bf16 %v1934, %v1933
        %v1956 = vpack.c.bf16 %v1936, %v1935
        %v1957 = vpack.c.bf16 %v1938, %v1937
        %v1958 = vpack.c.bf16 %v1940, %v1939
        %v1959 = vpack.c.bf16 %v1942, %v1941
        %v1960 = vpack.c.bf16 %v1944, %v1943
        %s1961 = scalar_lea.vmem %s2, 128
        %v1962 = vld [vmem:[%s1961] sm:$0xf]
        %v1963 = vld [vmem:[%s1961 + $0x4] sm:$0xf]
        %v1964 = vld [vmem:[%s1961 + $0x8] sm:$0xf]
        %v1965 = vld [vmem:[%s1961 + $0xc] sm:$0xf]
        %v1966 = vld [vmem:[%s1961 + $0x10] sm:$0xf]
        %v1967 = vld [vmem:[%s1961 + $0x14] sm:$0xf]
        %v1968 = vld [vmem:[%s1961 + $0x18] sm:$0xf]
        %v1969 = vld [vmem:[%s1961 + $0x1c] sm:$0xf]
        %v1970 = vld [vmem:[%s1961 + $0x20] sm:$0xf]
        %v1971 = vld [vmem:[%s1961 + $0x24] sm:$0xf]
        %v1972 = vld [vmem:[%s1961 + $0x28] sm:$0xf]
        %v1973 = vld [vmem:[%s1961 + $0x2c] sm:$0xf]
        %v1974 = vld [vmem:[%s1961 + $0x30] sm:$0xf]
        %v1975 = vld [vmem:[%s1961 + $0x34] sm:$0xf]
        %v1976 = vld [vmem:[%s1961 + $0x38] sm:$0xf]
        %v1977 = vld [vmem:[%s1961 + $0x3c] sm:$0xf]
        %v1994 = vunpack.c.l.b16 %v1962
        %v1995 = vunpack.c.l.b16 %v1963
        %v1996 = vunpack.c.l.b16 %v1964
        %v1997 = vunpack.c.l.b16 %v1965
        %v1998 = vunpack.c.l.b16 %v1966
        %v1999 = vunpack.c.l.b16 %v1967
        %v2000 = vunpack.c.l.b16 %v1968
        %v2001 = vunpack.c.l.b16 %v1969
        %v2002 = vunpack.c.l.b16 %v1970
        %v2003 = vunpack.c.l.b16 %v1971
        %v2004 = vunpack.c.l.b16 %v1972
        %v2005 = vunpack.c.l.b16 %v1973
        %v2006 = vunpack.c.l.b16 %v1974
        %v2007 = vunpack.c.l.b16 %v1975
        %v2008 = vunpack.c.l.b16 %v1976
        %v2009 = vunpack.c.l.b16 %v1977
        %v2010 = vpack.c.b16 %v1995, %v1994
        %v2011 = vpack.c.b16 %v1997, %v1996
        %v2012 = vpack.c.b16 %v1999, %v1998
        %v2013 = vpack.c.b16 %v2001, %v2000
        %v2014 = vpack.c.b16 %v2003, %v2002
        %v2015 = vpack.c.b16 %v2005, %v2004
        %v2016 = vpack.c.b16 %v2007, %v2006
        %v2017 = vpack.c.b16 %v2009, %v2008
        %2026 = vmatprep.subr.bf16.mxu0 0
        %2027 = vmatpush1.bf16.msra.mxu0 %v2010
        %2028 = vmatprep.subr.bf16.mxu0 0
        %2029 = vmatpush1.bf16.msra.mxu0 %v2011
        %2030 = vmatprep.subr.bf16.mxu0 0
        %2031 = vmatpush1.bf16.msra.mxu0 %v2012
        %2032 = vmatprep.subr.bf16.mxu0 0
        %2033 = vmatpush1.bf16.msra.mxu0 %v2013
        %2034 = vmatprep.subr.bf16.mxu0 0
        %2035 = vmatpush1.bf16.msra.mxu0 %v2014
        %2036 = vmatprep.subr.bf16.mxu0 0
        %2037 = vmatpush1.bf16.msra.mxu0 %v2015
        %2038 = vmatprep.subr.bf16.mxu0 0
        %2039 = vmatpush1.bf16.msra.mxu0 %v2016
        %2040 = vmatprep.subr.bf16.mxu0 0
        %2041 = vmatpush1.bf16.msra.mxu0 %v2017
        %2042 = vmatprep.subr.bf16.mxu0 0
        %2043 = vmatpush1.bf16.msra.mxu0 0
        %2044 = vmatprep.subr.bf16.mxu0 0
        %2045 = vmatpush1.bf16.msra.mxu0 0
        %2046 = vmatprep.subr.bf16.mxu0 0
        %2047 = vmatpush1.bf16.msra.mxu0 0
        %2048 = vmatprep.subr.bf16.mxu0 0
        %2049 = vmatpush1.bf16.msra.mxu0 0
        %2050 = vmatprep.subr.bf16.mxu0 0
        %2051 = vmatpush1.bf16.msra.mxu0 0
        %2052 = vmatprep.subr.bf16.mxu0 0
        %2053 = vmatpush1.bf16.msra.mxu0 0
        %2054 = vmatprep.subr.bf16.mxu0 0
        %2055 = vmatpush1.bf16.msra.mxu0 0
        %2056 = vmatprep.subr.bf16.mxu0 0
        %2057 = vmatpush1.bf16.msra.mxu0 0
        %2058 = vmatprep.mubr.bf16.mxu0 0
        %2059 = vmatmul.mubr.bf16.gmra.mrb[0].mxu0 %v1945
        %v2060 = vpop.f32.mrb[0].mxu0
        %v2061 = vadd.f32 0.0, %v2060
        %v2062 = vpop.f32.mrb[0].mxu0
        %v2063 = vpop.f32.mrb[0].mxu0
        %v2064 = vadd.f32 0.0, %v2063
        %v2065 = vpop.f32.mrb[0].mxu0
        %2066 = vmatprep.mubr.bf16.mxu0 0
        %2067 = vmatmul.mubr.bf16.gmra.mrb[0].mxu0 %v1946
        %v2068 = vpop.f32.mrb[0].mxu0
        %v2069 = vadd.f32 0.0, %v2068
        %v2070 = vpop.f32.mrb[0].mxu0
        %v2071 = vpop.f32.mrb[0].mxu0
        %v2072 = vadd.f32 0.0, %v2071
        %v2073 = vpop.f32.mrb[0].mxu0
        %2074 = vmatprep.mubr.bf16.mxu0 0
        %2075 = vmatmul.mubr.bf16.gmra.mrb[0].mxu0 %v1947
        %v2076 = vpop.f32.mrb[0].mxu0
        %v2077 = vadd.f32 0.0, %v2076
        %v2078 = vpop.f32.mrb[0].mxu0
        %v2079 = vpop.f32.mrb[0].mxu0
        %v2080 = vadd.f32 0.0, %v2079
        %v2081 = vpop.f32.mrb[0].mxu0
        %2082 = vmatprep.mubr.bf16.mxu0 0
        %2083 = vmatmul.mubr.bf16.gmra.mrb[0].mxu0 %v1948
        %v2084 = vpop.f32.mrb[0].mxu0
        %v2085 = vadd.f32 0.0, %v2084
        %v2086 = vpop.f32.mrb[0].mxu0
        %v2087 = vpop.f32.mrb[0].mxu0
        %v2088 = vadd.f32 0.0, %v2087
        %v2089 = vpop.f32.mrb[0].mxu0
        %2090 = vmatprep.mubr.bf16.mxu0 0
        %2091 = vmatmul.mubr.bf16.gmra.mrb[0].mxu0 %v1949
        %v2092 = vpop.f32.mrb[0].mxu0
        %v2093 = vadd.f32 0.0, %v2092
        %v2094 = vpop.f32.mrb[0].mxu0
        %v2095 = vpop.f32.mrb[0].mxu0
        %v2096 = vadd.f32 0.0, %v2095
        %v2097 = vpop.f32.mrb[0].mxu0
        %2098 = vmatprep.mubr.bf16.mxu0 0
        %2099 = vmatmul.mubr.bf16.gmra.mrb[0].mxu0 %v1950
        %v2100 = vpop.f32.mrb[0].mxu0
        %v2101 = vadd.f32 0.0, %v2100
        %v2102 = vpop.f32.mrb[0].mxu0
        %v2103 = vpop.f32.mrb[0].mxu0
        %v2104 = vadd.f32 0.0, %v2103
        %v2105 = vpop.f32.mrb[0].mxu0
        %2106 = vmatprep.mubr.bf16.mxu0 0
        %2107 = vmatmul.mubr.bf16.gmra.mrb[0].mxu0 %v1951
        %v2108 = vpop.f32.mrb[0].mxu0
        %v2109 = vadd.f32 0.0, %v2108
        %v2110 = vpop.f32.mrb[0].mxu0
        %v2111 = vpop.f32.mrb[0].mxu0
        %v2112 = vadd.f32 0.0, %v2111
        %v2113 = vpop.f32.mrb[0].mxu0
        %2114 = vmatprep.mubr.bf16.mxu0 0
        %2115 = vmatmul.mubr.bf16.gmra.mrb[0].mxu0 %v1952
        %v2116 = vpop.f32.mrb[0].mxu0
        %v2117 = vadd.f32 0.0, %v2116
        %v2118 = vpop.f32.mrb[0].mxu0
        %v2119 = vpop.f32.mrb[0].mxu0
        %v2120 = vadd.f32 0.0, %v2119
        %v2121 = vpop.f32.mrb[0].mxu0
        %2122 = vmatprep.mubr.bf16.mxu0 0
        %2123 = vmatmul.mubr.bf16.gmra.mrb[0].mxu0 %v1953
        %v2124 = vpop.f32.mrb[0].mxu0
        %v2125 = vadd.f32 0.0, %v2124
        %v2126 = vpop.f32.mrb[0].mxu0
        %v2127 = vpop.f32.mrb[0].mxu0
        %v2128 = vadd.f32 0.0, %v2127
        %v2129 = vpop.f32.mrb[0].mxu0
        %2130 = vmatprep.mubr.bf16.mxu0 0
        %2131 = vmatmul.mubr.bf16.gmra.mrb[0].mxu0 %v1954
        %v2132 = vpop.f32.mrb[0].mxu0
        %v2133 = vadd.f32 0.0, %v2132
        %v2134 = vpop.f32.mrb[0].mxu0
        %v2135 = vpop.f32.mrb[0].mxu0
        %v2136 = vadd.f32 0.0, %v2135
        %v2137 = vpop.f32.mrb[0].mxu0
        %2138 = vmatprep.mubr.bf16.mxu0 0
        %2139 = vmatmul.mubr.bf16.gmra.mrb[0].mxu0 %v1955
        %v2140 = vpop.f32.mrb[0].mxu0
        %v2141 = vadd.f32 0.0, %v2140
        %v2142 = vpop.f32.mrb[0].mxu0
        %v2143 = vpop.f32.mrb[0].mxu0
        %v2144 = vadd.f32 0.0, %v2143
        %v2145 = vpop.f32.mrb[0].mxu0
        %2146 = vmatprep.mubr.bf16.mxu0 0
        %2147 = vmatmul.mubr.bf16.gmra.mrb[0].mxu0 %v1956
        %v2148 = vpop.f32.mrb[0].mxu0
        %v2149 = vadd.f32 0.0, %v2148
        %v2150 = vpop.f32.mrb[0].mxu0
        %v2151 = vpop.f32.mrb[0].mxu0
        %v2152 = vadd.f32 0.0, %v2151
        %v2153 = vpop.f32.mrb[0].mxu0
        %2154 = vmatprep.mubr.bf16.mxu0 0
        %2155 = vmatmul.mubr.bf16.gmra.mrb[0].mxu0 %v1957
        %v2156 = vpop.f32.mrb[0].mxu0
        %v2157 = vadd.f32 0.0, %v2156
        %v2158 = vpop.f32.mrb[0].mxu0
        %v2159 = vpop.f32.mrb[0].mxu0
        %v2160 = vadd.f32 0.0, %v2159
        %v2161 = vpop.f32.mrb[0].mxu0
        %2162 = vmatprep.mubr.bf16.mxu0 0
        %2163 = vmatmul.mubr.bf16.gmra.mrb[0].mxu0 %v1958
        %v2164 = vpop.f32.mrb[0].mxu0
        %v2165 = vadd.f32 0.0, %v2164
        %v2166 = vpop.f32.mrb[0].mxu0
        %v2167 = vpop.f32.mrb[0].mxu0
        %v2168 = vadd.f32 0.0, %v2167
        %v2169 = vpop.f32.mrb[0].mxu0
        %2170 = vmatprep.mubr.bf16.mxu0 0
        %2171 = vmatmul.mubr.bf16.gmra.mrb[0].mxu0 %v1959
        %v2172 = vpop.f32.mrb[0].mxu0
        %v2173 = vadd.f32 0.0, %v2172
        %v2174 = vpop.f32.mrb[0].mxu0
        %v2175 = vpop.f32.mrb[0].mxu0
        %v2176 = vadd.f32 0.0, %v2175
        %v2177 = vpop.f32.mrb[0].mxu0
        %2178 = vmatprep.mubr.bf16.mxu0 0
        %2179 = vmatmul.mubr.bf16.gmra.mrb[0].mxu0 %v1960
        %v2180 = vpop.f32.mrb[0].mxu0
        %v2181 = vadd.f32 0.0, %v2180
        %v2182 = vpop.f32.mrb[0].mxu0
        %v2183 = vpop.f32.mrb[0].mxu0
        %v2184 = vadd.f32 0.0, %v2183
        %v2185 = vpop.f32.mrb[0].mxu0
        %2186 = vdwg.mxu0
        %v2187 = vadd.f32 %v1787, %v2061
        %v2188 = vadd.f32 %v1790, %v2064
        %v2189 = vadd.f32 %v1795, %v2069
        %v2190 = vadd.f32 %v1798, %v2072
        %v2191 = vadd.f32 %v1803, %v2077
        %v2192 = vadd.f32 %v1806, %v2080
        %v2193 = vadd.f32 %v1811, %v2085
        %v2194 = vadd.f32 %v1814, %v2088
        %v2195 = vadd.f32 %v1819, %v2093
        %v2196 = vadd.f32 %v1822, %v2096
        %v2197 = vadd.f32 %v1827, %v2101
        %v2198 = vadd.f32 %v1830, %v2104
        %v2199 = vadd.f32 %v1835, %v2109
        %v2200 = vadd.f32 %v1838, %v2112
        %v2201 = vadd.f32 %v1843, %v2117
        %v2202 = vadd.f32 %v1846, %v2120
        %v2203 = vadd.f32 %v1851, %v2125
        %v2204 = vadd.f32 %v1854, %v2128
        %v2205 = vadd.f32 %v1859, %v2133
        %v2206 = vadd.f32 %v1862, %v2136
        %v2207 = vadd.f32 %v1867, %v2141
        %v2208 = vadd.f32 %v1870, %v2144
        %v2209 = vadd.f32 %v1875, %v2149
        %v2210 = vadd.f32 %v1878, %v2152
        %v2211 = vadd.f32 %v1883, %v2157
        %v2212 = vadd.f32 %v1886, %v2160
        %v2213 = vadd.f32 %v1891, %v2165
        %v2214 = vadd.f32 %v1894, %v2168
        %v2215 = vadd.f32 %v1899, %v2173
        %v2216 = vadd.f32 %v1902, %v2176
        %v2217 = vadd.f32 %v1907, %v2181
        %v2218 = vadd.f32 %v1910, %v2184
        %v2219 = vld [vmem:[%s3 + $0x2] sm:$0x1]
        %v2220 = vlaneseq
        %v2221 = vshrl.u32 %v2220, 7
        %v2222 = vsub.s32 0, %v2221
        %v2223 = vrot.slane %v2219, %v2222
        %v2224 = vmul.f32 %v2187, %v2223
        %v2225 = vmul.f32 %v2188, %v2223
        %v2226 = vmul.f32 %v2189, %v2223
        %v2227 = vmul.f32 %v2190, %v2223
        %v2228 = vmul.f32 %v2191, %v2223
        %v2229 = vmul.f32 %v2192, %v2223
        %v2230 = vmul.f32 %v2193, %v2223
        %v2231 = vmul.f32 %v2194, %v2223
        %v2232 = vmul.f32 %v2195, %v2223
        %v2233 = vmul.f32 %v2196, %v2223
        %v2234 = vmul.f32 %v2197, %v2223
        %v2235 = vmul.f32 %v2198, %v2223
        %v2236 = vmul.f32 %v2199, %v2223
        %v2237 = vmul.f32 %v2200, %v2223
        %v2238 = vmul.f32 %v2201, %v2223
        %v2239 = vmul.f32 %v2202, %v2223
        %v2240 = vmul.f32 %v2203, %v2223
        %v2241 = vmul.f32 %v2204, %v2223
        %v2242 = vmul.f32 %v2205, %v2223
        %v2243 = vmul.f32 %v2206, %v2223
        %v2244 = vmul.f32 %v2207, %v2223
        %v2245 = vmul.f32 %v2208, %v2223
        %v2246 = vmul.f32 %v2209, %v2223
        %v2247 = vmul.f32 %v2210, %v2223
        %v2248 = vmul.f32 %v2211, %v2223
        %v2249 = vmul.f32 %v2212, %v2223
        %v2250 = vmul.f32 %v2213, %v2223
        %v2251 = vmul.f32 %v2214, %v2223
        %v2252 = vmul.f32 %v2215, %v2223
        %v2253 = vmul.f32 %v2216, %v2223
        %v2254 = vmul.f32 %v2217, %v2223
        %v2255 = vmul.f32 %v2218, %v2223
        %v2256 = vld [vmem:[%s3 + $0x3] sm:$0x1]
        %v2257 = vlaneseq
        %v2258 = vshrl.u32 %v2257, 7
        %v2259 = vsub.s32 0, %v2258
        %v2260 = vrot.slane %v2256, %v2259
        %v2261 = vadd.f32 %v2224, %v2260
        %v2262 = vadd.f32 %v2225, %v2260
        %v2263 = vadd.f32 %v2226, %v2260
        %v2264 = vadd.f32 %v2227, %v2260
        %v2265 = vadd.f32 %v2228, %v2260
        %v2266 = vadd.f32 %v2229, %v2260
        %v2267 = vadd.f32 %v2230, %v2260
        %v2268 = vadd.f32 %v2231, %v2260
        %v2269 = vadd.f32 %v2232, %v2260
        %v2270 = vadd.f32 %v2233, %v2260
        %v2271 = vadd.f32 %v2234, %v2260
        %v2272 = vadd.f32 %v2235, %v2260
        %v2273 = vadd.f32 %v2236, %v2260
        %v2274 = vadd.f32 %v2237, %v2260
        %v2275 = vadd.f32 %v2238, %v2260
        %v2276 = vadd.f32 %v2239, %v2260
        %v2277 = vadd.f32 %v2240, %v2260
        %v2278 = vadd.f32 %v2241, %v2260
        %v2279 = vadd.f32 %v2242, %v2260
        %v2280 = vadd.f32 %v2243, %v2260
        %v2281 = vadd.f32 %v2244, %v2260
        %v2282 = vadd.f32 %v2245, %v2260
        %v2283 = vadd.f32 %v2246, %v2260
        %v2284 = vadd.f32 %v2247, %v2260
        %v2285 = vadd.f32 %v2248, %v2260
        %v2286 = vadd.f32 %v2249, %v2260
        %v2287 = vadd.f32 %v2250, %v2260
        %v2288 = vadd.f32 %v2251, %v2260
        %v2289 = vadd.f32 %v2252, %v2260
        %v2290 = vadd.f32 %v2253, %v2260
        %v2291 = vadd.f32 %v2254, %v2260
        %v2292 = vadd.f32 %v2255, %v2260
        %v2293 = vrot.slane %v2261, 4
        %v2294 = vadd.f32 %v2261, %v2293
        %v2295 = vrot.slane %v2294, 2
        %v2296 = vadd.f32 %v2294, %v2295
        %v2297 = vrot.slane %v2296, 1
        %v2298 = vadd.f32 %v2296, %v2297
        %v2299 = vrot.slane %v2262, 4
        %v2300 = vadd.f32 %v2262, %v2299
        %v2301 = vrot.slane %v2300, 2
        %v2302 = vadd.f32 %v2300, %v2301
        %v2303 = vrot.slane %v2302, 1
        %v2304 = vadd.f32 %v2302, %v2303
        %v2305 = vrot.slane %v2263, 4
        %v2306 = vadd.f32 %v2263, %v2305
        %v2307 = vrot.slane %v2306, 2
        %v2308 = vadd.f32 %v2306, %v2307
        %v2309 = vrot.slane %v2308, 1
        %v2310 = vadd.f32 %v2308, %v2309
        %v2311 = vrot.slane %v2264, 4
        %v2312 = vadd.f32 %v2264, %v2311
        %v2313 = vrot.slane %v2312, 2
        %v2314 = vadd.f32 %v2312, %v2313
        %v2315 = vrot.slane %v2314, 1
        %v2316 = vadd.f32 %v2314, %v2315
        %v2317 = vrot.slane %v2265, 4
        %v2318 = vadd.f32 %v2265, %v2317
        %v2319 = vrot.slane %v2318, 2
        %v2320 = vadd.f32 %v2318, %v2319
        %v2321 = vrot.slane %v2320, 1
        %v2322 = vadd.f32 %v2320, %v2321
        %v2323 = vrot.slane %v2266, 4
        %v2324 = vadd.f32 %v2266, %v2323
        %v2325 = vrot.slane %v2324, 2
        %v2326 = vadd.f32 %v2324, %v2325
        %v2327 = vrot.slane %v2326, 1
        %v2328 = vadd.f32 %v2326, %v2327
        %v2329 = vrot.slane %v2267, 4
        %v2330 = vadd.f32 %v2267, %v2329
        %v2331 = vrot.slane %v2330, 2
        %v2332 = vadd.f32 %v2330, %v2331
        %v2333 = vrot.slane %v2332, 1
        %v2334 = vadd.f32 %v2332, %v2333
        %v2335 = vrot.slane %v2268, 4
        %v2336 = vadd.f32 %v2268, %v2335
        %v2337 = vrot.slane %v2336, 2
        %v2338 = vadd.f32 %v2336, %v2337
        %v2339 = vrot.slane %v2338, 1
        %v2340 = vadd.f32 %v2338, %v2339
        %v2341 = vrot.slane %v2269, 4
        %v2342 = vadd.f32 %v2269, %v2341
        %v2343 = vrot.slane %v2342, 2
        %v2344 = vadd.f32 %v2342, %v2343
        %v2345 = vrot.slane %v2344, 1
        %v2346 = vadd.f32 %v2344, %v2345
        %v2347 = vrot.slane %v2270, 4
        %v2348 = vadd.f32 %v2270, %v2347
        %v2349 = vrot.slane %v2348, 2
        %v2350 = vadd.f32 %v2348, %v2349
        %v2351 = vrot.slane %v2350, 1
        %v2352 = vadd.f32 %v2350, %v2351
        %v2353 = vrot.slane %v2271, 4
        %v2354 = vadd.f32 %v2271, %v2353
        %v2355 = vrot.slane %v2354, 2
        %v2356 = vadd.f32 %v2354, %v2355
        %v2357 = vrot.slane %v2356, 1
        %v2358 = vadd.f32 %v2356, %v2357
        %v2359 = vrot.slane %v2272, 4
        %v2360 = vadd.f32 %v2272, %v2359
        %v2361 = vrot.slane %v2360, 2
        %v2362 = vadd.f32 %v2360, %v2361
        %v2363 = vrot.slane %v2362, 1
        %v2364 = vadd.f32 %v2362, %v2363
        %v2365 = vrot.slane %v2273, 4
        %v2366 = vadd.f32 %v2273, %v2365
        %v2367 = vrot.slane %v2366, 2
        %v2368 = vadd.f32 %v2366, %v2367
        %v2369 = vrot.slane %v2368, 1
        %v2370 = vadd.f32 %v2368, %v2369
        %v2371 = vrot.slane %v2274, 4
        %v2372 = vadd.f32 %v2274, %v2371
        %v2373 = vrot.slane %v2372, 2
        %v2374 = vadd.f32 %v2372, %v2373
        %v2375 = vrot.slane %v2374, 1
        %v2376 = vadd.f32 %v2374, %v2375
        %v2377 = vrot.slane %v2275, 4
        %v2378 = vadd.f32 %v2275, %v2377
        %v2379 = vrot.slane %v2378, 2
        %v2380 = vadd.f32 %v2378, %v2379
        %v2381 = vrot.slane %v2380, 1
        %v2382 = vadd.f32 %v2380, %v2381
        %v2383 = vrot.slane %v2276, 4
        %v2384 = vadd.f32 %v2276, %v2383
        %v2385 = vrot.slane %v2384, 2
        %v2386 = vadd.f32 %v2384, %v2385
        %v2387 = vrot.slane %v2386, 1
        %v2388 = vadd.f32 %v2386, %v2387
        %v2389 = vrot.slane %v2277, 4
        %v2390 = vadd.f32 %v2277, %v2389
        %v2391 = vrot.slane %v2390, 2
        %v2392 = vadd.f32 %v2390, %v2391
        %v2393 = vrot.slane %v2392, 1
        %v2394 = vadd.f32 %v2392, %v2393
        %v2395 = vrot.slane %v2278, 4
        %v2396 = vadd.f32 %v2278, %v2395
        %v2397 = vrot.slane %v2396, 2
        %v2398 = vadd.f32 %v2396, %v2397
        %v2399 = vrot.slane %v2398, 1
        %v2400 = vadd.f32 %v2398, %v2399
        %v2401 = vrot.slane %v2279, 4
        %v2402 = vadd.f32 %v2279, %v2401
        %v2403 = vrot.slane %v2402, 2
        %v2404 = vadd.f32 %v2402, %v2403
        %v2405 = vrot.slane %v2404, 1
        %v2406 = vadd.f32 %v2404, %v2405
        %v2407 = vrot.slane %v2280, 4
        %v2408 = vadd.f32 %v2280, %v2407
        %v2409 = vrot.slane %v2408, 2
        %v2410 = vadd.f32 %v2408, %v2409
        %v2411 = vrot.slane %v2410, 1
        %v2412 = vadd.f32 %v2410, %v2411
        %v2413 = vrot.slane %v2281, 4
        %v2414 = vadd.f32 %v2281, %v2413
        %v2415 = vrot.slane %v2414, 2
        %v2416 = vadd.f32 %v2414, %v2415
        %v2417 = vrot.slane %v2416, 1
        %v2418 = vadd.f32 %v2416, %v2417
        %v2419 = vrot.slane %v2282, 4
        %v2420 = vadd.f32 %v2282, %v2419
        %v2421 = vrot.slane %v2420, 2
        %v2422 = vadd.f32 %v2420, %v2421
        %v2423 = vrot.slane %v2422, 1
        %v2424 = vadd.f32 %v2422, %v2423
        %v2425 = vrot.slane %v2283, 4
        %v2426 = vadd.f32 %v2283, %v2425
        %v2427 = vrot.slane %v2426, 2
        %v2428 = vadd.f32 %v2426, %v2427
        %v2429 = vrot.slane %v2428, 1
        %v2430 = vadd.f32 %v2428, %v2429
        %v2431 = vrot.slane %v2284, 4
        %v2432 = vadd.f32 %v2284, %v2431
        %v2433 = vrot.slane %v2432, 2
        %v2434 = vadd.f32 %v2432, %v2433
        %v2435 = vrot.slane %v2434, 1
        %v2436 = vadd.f32 %v2434, %v2435
        %v2437 = vrot.slane %v2285, 4
        %v2438 = vadd.f32 %v2285, %v2437
        %v2439 = vrot.slane %v2438, 2
        %v2440 = vadd.f32 %v2438, %v2439
        %v2441 = vrot.slane %v2440, 1
        %v2442 = vadd.f32 %v2440, %v2441
        %v2443 = vrot.slane %v2286, 4
        %v2444 = vadd.f32 %v2286, %v2443
        %v2445 = vrot.slane %v2444, 2
        %v2446 = vadd.f32 %v2444, %v2445
        %v2447 = vrot.slane %v2446, 1
        %v2448 = vadd.f32 %v2446, %v2447
        %v2449 = vrot.slane %v2287, 4
        %v2450 = vadd.f32 %v2287, %v2449
        %v2451 = vrot.slane %v2450, 2
        %v2452 = vadd.f32 %v2450, %v2451
        %v2453 = vrot.slane %v2452, 1
        %v2454 = vadd.f32 %v2452, %v2453
        %v2455 = vrot.slane %v2288, 4
        %v2456 = vadd.f32 %v2288, %v2455
        %v2457 = vrot.slane %v2456, 2
        %v2458 = vadd.f32 %v2456, %v2457
        %v2459 = vrot.slane %v2458, 1
        %v2460 = vadd.f32 %v2458, %v2459
        %v2461 = vrot.slane %v2289, 4
        %v2462 = vadd.f32 %v2289, %v2461
        %v2463 = vrot.slane %v2462, 2
        %v2464 = vadd.f32 %v2462, %v2463
        %v2465 = vrot.slane %v2464, 1
        %v2466 = vadd.f32 %v2464, %v2465
        %v2467 = vrot.slane %v2290, 4
        %v2468 = vadd.f32 %v2290, %v2467
        %v2469 = vrot.slane %v2468, 2
        %v2470 = vadd.f32 %v2468, %v2469
        %v2471 = vrot.slane %v2470, 1
        %v2472 = vadd.f32 %v2470, %v2471
        %v2473 = vrot.slane %v2291, 4
        %v2474 = vadd.f32 %v2291, %v2473
        %v2475 = vrot.slane %v2474, 2
        %v2476 = vadd.f32 %v2474, %v2475
        %v2477 = vrot.slane %v2476, 1
        %v2478 = vadd.f32 %v2476, %v2477
        %v2479 = vrot.slane %v2292, 4
        %v2480 = vadd.f32 %v2292, %v2479
        %v2481 = vrot.slane %v2480, 2
        %v2482 = vadd.f32 %v2480, %v2481
        %v2483 = vrot.slane %v2482, 1
        %v2484 = vadd.f32 %v2482, %v2483
        %v2485 = vld [vmem:[%s4] sm:$0xff]
        %v2486 = vld [vmem:[%s4 + $0x8] sm:$0xff]
        %v2487 = vld [vmem:[%s4 + $0x10] sm:$0xff]
        %v2488 = vld [vmem:[%s4 + $0x18] sm:$0xff]
        %v2489 = vld [vmem:[%s4 + $0x20] sm:$0xff]
        %v2490 = vld [vmem:[%s4 + $0x28] sm:$0xff]
        %v2491 = vld [vmem:[%s4 + $0x30] sm:$0xff]
        %v2492 = vld [vmem:[%s4 + $0x38] sm:$0xff]
        %v2493 = vld [vmem:[%s4 + $0x40] sm:$0xff]
        %v2494 = vld [vmem:[%s4 + $0x48] sm:$0xff]
        %v2495 = vld [vmem:[%s4 + $0x50] sm:$0xff]
        %v2496 = vld [vmem:[%s4 + $0x58] sm:$0xff]
        %v2497 = vld [vmem:[%s4 + $0x60] sm:$0xff]
        %v2498 = vld [vmem:[%s4 + $0x68] sm:$0xff]
        %v2499 = vld [vmem:[%s4 + $0x70] sm:$0xff]
        %v2500 = vld [vmem:[%s4 + $0x78] sm:$0xff]
        %vm2533 = vcmask 1041409
        %v2534 = vsel %vm2533, %v2304, %v2298
        %vm2535 = vcmask 1042434
        %v2536 = vsel %vm2535, %v2310, %v2534
        %vm2537 = vcmask 1043459
        %v2538 = vsel %vm2537, %v2316, %v2536
        %vm2539 = vcmask 1044484
        %v2540 = vsel %vm2539, %v2322, %v2538
        %vm2541 = vcmask 1045509
        %v2542 = vsel %vm2541, %v2328, %v2540
        %vm2543 = vcmask 1046534
        %v2544 = vsel %vm2543, %v2334, %v2542
        %vm2545 = vcmask 1047559
        %v2546 = vsel %vm2545, %v2340, %v2544
        %v2547 = vsel %vm2533, %v2352, %v2346
        %v2548 = vsel %vm2535, %v2358, %v2547
        %v2549 = vsel %vm2537, %v2364, %v2548
        %v2550 = vsel %vm2539, %v2370, %v2549
        %v2551 = vsel %vm2541, %v2376, %v2550
        %v2552 = vsel %vm2543, %v2382, %v2551
        %v2553 = vsel %vm2545, %v2388, %v2552
        %v2554 = vsel %vm2533, %v2400, %v2394
        %v2555 = vsel %vm2535, %v2406, %v2554
        %v2556 = vsel %vm2537, %v2412, %v2555
        %v2557 = vsel %vm2539, %v2418, %v2556
        %v2558 = vsel %vm2541, %v2424, %v2557
        %v2559 = vsel %vm2543, %v2430, %v2558
        %v2560 = vsel %vm2545, %v2436, %v2559
        %v2561 = vsel %vm2533, %v2448, %v2442
        %v2562 = vsel %vm2535, %v2454, %v2561
        %v2563 = vsel %vm2537, %v2460, %v2562
        %v2564 = vsel %vm2539, %v2466, %v2563
        %v2565 = vsel %vm2541, %v2472, %v2564
        %v2566 = vsel %vm2543, %v2478, %v2565
        %v2567 = vsel %vm2545, %v2484, %v2566
        %2572 = vmatprep.subr.mxu0 0.0
        %2573 = vmatpush1.msra.mxu0 %v2485
        %2574 = vmatprep.subr.mxu0 0.0
        %2575 = vmatpush1.msra.mxu0 %v2486
        %2576 = vmatprep.subr.mxu0 0.0
        %2577 = vmatpush1.msra.mxu0 %v2487
        %2578 = vmatprep.subr.mxu0 0.0
        %2579 = vmatpush1.msra.mxu0 %v2488
        %2580 = vmatprep.subr.mxu0 0.0
        %2581 = vmatpush1.msra.mxu0 %v2489
        %2582 = vmatprep.subr.mxu0 0.0
        %2583 = vmatpush1.msra.mxu0 %v2490
        %2584 = vmatprep.subr.mxu0 0.0
        %2585 = vmatpush1.msra.mxu0 %v2491
        %2586 = vmatprep.subr.mxu0 0.0
        %2587 = vmatpush1.msra.mxu0 %v2492
        %2588 = vmatprep.subr.mxu0 0.0
        %2589 = vmatpush1.msra.mxu0 %v2493
        %2590 = vmatprep.subr.mxu0 0.0
        %2591 = vmatpush1.msra.mxu0 %v2494
        %2592 = vmatprep.subr.mxu0 0.0
        %2593 = vmatpush1.msra.mxu0 %v2495
        %2594 = vmatprep.subr.mxu0 0.0
        %2595 = vmatpush1.msra.mxu0 %v2496
        %2596 = vmatprep.subr.mxu0 0.0
        %2597 = vmatpush1.msra.mxu0 %v2497
        %2598 = vmatprep.subr.mxu0 0.0
        %2599 = vmatpush1.msra.mxu0 %v2498
        %2600 = vmatprep.subr.mxu0 0.0
        %2601 = vmatpush1.msra.mxu0 %v2499
        %2602 = vmatprep.subr.mxu0 0.0
        %2603 = vmatpush1.msra.mxu0 %v2500
        %2604 = vmatprep.subr.mxu0 0.0
        %2605 = vmatpush1.msra.mxu0 0.0
        %2606 = vmatprep.subr.mxu0 0.0
        %2607 = vmatpush1.msra.mxu0 0.0
        %2608 = vmatprep.subr.mxu0 0.0
        %2609 = vmatpush1.msra.mxu0 0.0
        %2610 = vmatprep.subr.mxu0 0.0
        %2611 = vmatpush1.msra.mxu0 0.0
        %2612 = vmatprep.subr.mxu0 0.0
        %2613 = vmatpush1.msra.mxu0 0.0
        %2614 = vmatprep.subr.mxu0 0.0
        %2615 = vmatpush1.msra.mxu0 0.0
        %2616 = vmatprep.subr.mxu0 0.0
        %2617 = vmatpush1.msra.mxu0 0.0
        %2618 = vmatprep.subr.mxu0 0.0
        %2619 = vmatpush1.msra.mxu0 0.0
        %2620 = vmatprep.subr.mxu0 0.0
        %2621 = vmatpush1.msra.mxu0 0.0
        %2622 = vmatprep.subr.mxu0 0.0
        %2623 = vmatpush1.msra.mxu0 0.0
        %2624 = vmatprep.subr.mxu0 0.0
        %2625 = vmatpush1.msra.mxu0 0.0
        %2626 = vmatprep.subr.mxu0 0.0
        %2627 = vmatpush1.msra.mxu0 0.0
        %2628 = vmatprep.subr.mxu0 0.0
        %2629 = vmatpush1.msra.mxu0 0.0
        %2630 = vmatprep.subr.mxu0 0.0
        %2631 = vmatpush1.msra.mxu0 0.0
        %2632 = vmatprep.subr.mxu0 0.0
        %2633 = vmatpush1.msra.mxu0 0.0
        %2634 = vmatprep.subr.mxu0 0.0
        %2635 = vmatpush1.msra.mxu0 0.0
        %2636 = vmatprep.mubr.f32.mxu0 0.0
        %2637 = vmatmul.mubr.f32.gmra.mrb[0].mxu0 %v2546
        %v2638 = vpop.f32.mrb[0].mxu0
        %v2639 = vadd.f32 0.0, %v2638
        %v2640 = vpop.f32.mrb[0].mxu0
        %2641 = vmatprep.mubr.f32.mxu0 0.0
        %2642 = vmatmul.mubr.f32.gmra.mrb[0].mxu0 %v2553
        %v2643 = vpop.f32.mrb[0].mxu0
        %v2644 = vadd.f32 0.0, %v2643
        %v2645 = vpop.f32.mrb[0].mxu0
        %2646 = vmatprep.mubr.f32.mxu0 0.0
        %2647 = vmatmul.mubr.f32.gmra.mrb[0].mxu0 %v2560
        %v2648 = vpop.f32.mrb[0].mxu0
        %v2649 = vadd.f32 0.0, %v2648
        %v2650 = vpop.f32.mrb[0].mxu0
        %2651 = vmatprep.mubr.f32.mxu0 0.0
        %2652 = vmatmul.mubr.f32.gmra.mrb[0].mxu0 %v2567
        %v2653 = vpop.f32.mrb[0].mxu0
        %v2654 = vadd.f32 0.0, %v2653
        %v2655 = vpop.f32.mrb[0].mxu0
        %2656 = vdwg.mxu0
        %v2657 = vld [vmem:[%s6] sm:$0xff]
        %v2658 = vld [vmem:[%s6 + $0x8] sm:$0xff]
        %vm2659 = vcmask 130048
        %v2661 = vsel %vm2659, %v2639, 0
        %v2664 = vsel %vm2659, %v2644, 0
        %v2667 = vsel %vm2659, %v2649, 0
        %v2670 = vsel %vm2659, %v2654, 0
        %2672 = vmatprep.subr.mxu0 0.0
        %2673 = vmatpush1.msra.mxu0 %v2657
        %2674 = vmatprep.subr.mxu0 0.0
        %2675 = vmatpush1.msra.mxu0 %v2658
        %2676 = vmatprep.subr.mxu0 0.0
        %2677 = vmatpush1.msra.mxu0 0.0
        %2678 = vmatprep.subr.mxu0 0.0
        %2679 = vmatpush1.msra.mxu0 0.0
        %2680 = vmatprep.subr.mxu0 0.0
        %2681 = vmatpush1.msra.mxu0 0.0
        %2682 = vmatprep.subr.mxu0 0.0
        %2683 = vmatpush1.msra.mxu0 0.0
        %2684 = vmatprep.subr.mxu0 0.0
        %2685 = vmatpush1.msra.mxu0 0.0
        %2686 = vmatprep.subr.mxu0 0.0
        %2687 = vmatpush1.msra.mxu0 0.0
        %2688 = vmatprep.subr.mxu0 0.0
        %2689 = vmatpush1.msra.mxu0 0.0
        %2690 = vmatprep.subr.mxu0 0.0
        %2691 = vmatpush1.msra.mxu0 0.0
        %2692 = vmatprep.subr.mxu0 0.0
        %2693 = vmatpush1.msra.mxu0 0.0
        %2694 = vmatprep.subr.mxu0 0.0
        %2695 = vmatpush1.msra.mxu0 0.0
        %2696 = vmatprep.subr.mxu0 0.0
        %2697 = vmatpush1.msra.mxu0 0.0
        %2698 = vmatprep.subr.mxu0 0.0
        %2699 = vmatpush1.msra.mxu0 0.0
        %2700 = vmatprep.subr.mxu0 0.0
        %2701 = vmatpush1.msra.mxu0 0.0
        %2702 = vmatprep.subr.mxu0 0.0
        %2703 = vmatpush1.msra.mxu0 0.0
        %2704 = vmatprep.subr.mxu0 0.0
        %2705 = vmatpush1.msra.mxu0 0.0
        %2706 = vmatprep.subr.mxu0 0.0
        %2707 = vmatpush1.msra.mxu0 0.0
        %2708 = vmatprep.subr.mxu0 0.0
        %2709 = vmatpush1.msra.mxu0 0.0
        %2710 = vmatprep.subr.mxu0 0.0
        %2711 = vmatpush1.msra.mxu0 0.0
        %2712 = vmatprep.subr.mxu0 0.0
        %2713 = vmatpush1.msra.mxu0 0.0
        %2714 = vmatprep.subr.mxu0 0.0
        %2715 = vmatpush1.msra.mxu0 0.0
        %2716 = vmatprep.subr.mxu0 0.0
        %2717 = vmatpush1.msra.mxu0 0.0
        %2718 = vmatprep.subr.mxu0 0.0
        %2719 = vmatpush1.msra.mxu0 0.0
        %2720 = vmatprep.subr.mxu0 0.0
        %2721 = vmatpush1.msra.mxu0 0.0
        %2722 = vmatprep.subr.mxu0 0.0
        %2723 = vmatpush1.msra.mxu0 0.0
        %2724 = vmatprep.subr.mxu0 0.0
        %2725 = vmatpush1.msra.mxu0 0.0
        %2726 = vmatprep.subr.mxu0 0.0
        %2727 = vmatpush1.msra.mxu0 0.0
        %2728 = vmatprep.subr.mxu0 0.0
        %2729 = vmatpush1.msra.mxu0 0.0
        %2730 = vmatprep.subr.mxu0 0.0
        %2731 = vmatpush1.msra.mxu0 0.0
        %2732 = vmatprep.subr.mxu0 0.0
        %2733 = vmatpush1.msra.mxu0 0.0
        %2734 = vmatprep.subr.mxu0 0.0
        %2735 = vmatpush1.msra.mxu0 0.0
        %2736 = vmatprep.mubr.f32.mxu0 0.0
        %2737 = vmatmul.mubr.f32.gmra.mrb[0].mxu0 %v2661
        %v2738 = vpop.f32.mrb[0].mxu0
        %v2739 = vadd.f32 0.0, %v2738
        %v2740 = vpop.f32.mrb[0].mxu0
        %2741 = vmatprep.mubr.f32.mxu0 0.0
        %2742 = vmatmul.mubr.f32.gmra.mrb[0].mxu0 %v2664
        %v2743 = vpop.f32.mrb[0].mxu0
        %v2744 = vadd.f32 0.0, %v2743
        %v2745 = vpop.f32.mrb[0].mxu0
        %2746 = vmatprep.mubr.f32.mxu0 0.0
        %2747 = vmatmul.mubr.f32.gmra.mrb[0].mxu0 %v2667
        %v2748 = vpop.f32.mrb[0].mxu0
        %v2749 = vadd.f32 0.0, %v2748
        %v2750 = vpop.f32.mrb[0].mxu0
        %2751 = vmatprep.mubr.f32.mxu0 0.0
        %2752 = vmatmul.mubr.f32.gmra.mrb[0].mxu0 %v2670
        %v2753 = vpop.f32.mrb[0].mxu0
        %v2754 = vadd.f32 0.0, %v2753
        %v2755 = vpop.f32.mrb[0].mxu0
        %2756 = vdwg.mxu0
        %v2757 = vmax.f32 %v2739, 0.0
        %v2758 = vmax.f32 %v2744, 0.0
        %v2759 = vmax.f32 %v2749, 0.0
        %v2760 = vmax.f32 %v2754, 0.0
        %v2761 = vld [vmem:[%s7] sm:$0xf]
        %vm2762 = vcmask 31744
        %v2764 = vsel %vm2762, %v2757, 0
        %v2767 = vsel %vm2762, %v2758, 0
        %v2770 = vsel %vm2762, %v2759, 0
        %v2773 = vsel %vm2762, %v2760, 0
        %vm2775 = vcmask 1043456
        %v2777 = vsel %vm2775, %v2761, 0
        %2779 = vmatprep.subr.mxu0 0.0
        %2780 = vmatpush1.msra.mxu0 %v2777
        %2781 = vmatprep.subr.mxu0 0.0
        %2782 = vmatpush1.msra.mxu0 0.0
        %2783 = vmatprep.subr.mxu0 0.0
        %2784 = vmatpush1.msra.mxu0 0.0
        %2785 = vmatprep.subr.mxu0 0.0
        %2786 = vmatpush1.msra.mxu0 0.0
        %2787 = vmatprep.subr.mxu0 0.0
        %2788 = vmatpush1.msra.mxu0 0.0
        %2789 = vmatprep.subr.mxu0 0.0
        %2790 = vmatpush1.msra.mxu0 0.0
        %2791 = vmatprep.subr.mxu0 0.0
        %2792 = vmatpush1.msra.mxu0 0.0
        %2793 = vmatprep.subr.mxu0 0.0
        %2794 = vmatpush1.msra.mxu0 0.0
        %2795 = vmatprep.subr.mxu0 0.0
        %2796 = vmatpush1.msra.mxu0 0.0
        %2797 = vmatprep.subr.mxu0 0.0
        %2798 = vmatpush1.msra.mxu0 0.0
        %2799 = vmatprep.subr.mxu0 0.0
        %2800 = vmatpush1.msra.mxu0 0.0
        %2801 = vmatprep.subr.mxu0 0.0
        %2802 = vmatpush1.msra.mxu0 0.0
        %2803 = vmatprep.subr.mxu0 0.0
        %2804 = vmatpush1.msra.mxu0 0.0
        %2805 = vmatprep.subr.mxu0 0.0
        %2806 = vmatpush1.msra.mxu0 0.0
        %2807 = vmatprep.subr.mxu0 0.0
        %2808 = vmatpush1.msra.mxu0 0.0
        %2809 = vmatprep.subr.mxu0 0.0
        %2810 = vmatpush1.msra.mxu0 0.0
        %2811 = vmatprep.subr.mxu0 0.0
        %2812 = vmatpush1.msra.mxu0 0.0
        %2813 = vmatprep.subr.mxu0 0.0
        %2814 = vmatpush1.msra.mxu0 0.0
        %2815 = vmatprep.subr.mxu0 0.0
        %2816 = vmatpush1.msra.mxu0 0.0
        %2817 = vmatprep.subr.mxu0 0.0
        %2818 = vmatpush1.msra.mxu0 0.0
        %2819 = vmatprep.subr.mxu0 0.0
        %2820 = vmatpush1.msra.mxu0 0.0
        %2821 = vmatprep.subr.mxu0 0.0
        %2822 = vmatpush1.msra.mxu0 0.0
        %2823 = vmatprep.subr.mxu0 0.0
        %2824 = vmatpush1.msra.mxu0 0.0
        %2825 = vmatprep.subr.mxu0 0.0
        %2826 = vmatpush1.msra.mxu0 0.0
        %2827 = vmatprep.subr.mxu0 0.0
        %2828 = vmatpush1.msra.mxu0 0.0
        %2829 = vmatprep.subr.mxu0 0.0
        %2830 = vmatpush1.msra.mxu0 0.0
        %2831 = vmatprep.subr.mxu0 0.0
        %2832 = vmatpush1.msra.mxu0 0.0
        %2833 = vmatprep.subr.mxu0 0.0
        %2834 = vmatpush1.msra.mxu0 0.0
        %2835 = vmatprep.subr.mxu0 0.0
        %2836 = vmatpush1.msra.mxu0 0.0
        %2837 = vmatprep.subr.mxu0 0.0
        %2838 = vmatpush1.msra.mxu0 0.0
        %2839 = vmatprep.subr.mxu0 0.0
        %2840 = vmatpush1.msra.mxu0 0.0
        %2841 = vmatprep.subr.mxu0 0.0
        %2842 = vmatpush1.msra.mxu0 0.0
        %2843 = vmatprep.mubr.f32.mxu0 0.0
        %2844 = vmatmul.mubr.f32.gmra.mrb[0].mxu0 %v2764
        %v2845 = vpop.f32.mrb[0].mxu0
        %v2846 = vadd.f32 0.0, %v2845
        %v2847 = vpop.f32.mrb[0].mxu0
        %2848 = vmatprep.mubr.f32.mxu0 0.0
        %2849 = vmatmul.mubr.f32.gmra.mrb[0].mxu0 %v2767
        %v2850 = vpop.f32.mrb[0].mxu0
        %v2851 = vadd.f32 0.0, %v2850
        %v2852 = vpop.f32.mrb[0].mxu0
        %2853 = vmatprep.mubr.f32.mxu0 0.0
        %2854 = vmatmul.mubr.f32.gmra.mrb[0].mxu0 %v2770
        %v2855 = vpop.f32.mrb[0].mxu0
        %v2856 = vadd.f32 0.0, %v2855
        %v2857 = vpop.f32.mrb[0].mxu0
        %2858 = vmatprep.mubr.f32.mxu0 0.0
        %2859 = vmatmul.mubr.f32.gmra.mrb[0].mxu0 %v2773
        %v2860 = vpop.f32.mrb[0].mxu0
        %v2861 = vadd.f32 0.0, %v2860
        %v2862 = vpop.f32.mrb[0].mxu0
        %2863 = vdwg.mxu0
        %v2864 = vxor.u32 %v2846, 2147483648
        %v2865 = vxor.u32 %v2851, 2147483648
        %v2866 = vxor.u32 %v2856, 2147483648
        %v2867 = vxor.u32 %v2861, 2147483648
        %v2868 = vmul.f32 %v2864, 1.442695
        %v2869 = vpow.pop %v2868
        %v2870 = vmul.f32 %v2865, 1.442695
        %v2871 = vpow.pop %v2870
        %v2872 = vmul.f32 %v2866, 1.442695
        %v2873 = vpow.pop %v2872
        %v2874 = vmul.f32 %v2867, 1.442695
        %v2875 = vpow.pop %v2874
        %v2876 = vadd.f32 %v2869, 1.0
        %v2877 = vadd.f32 %v2871, 1.0
        %v2878 = vadd.f32 %v2873, 1.0
        %v2879 = vadd.f32 %v2875, 1.0
        %v2880 = vrcp.pop %v2876
        %v2881 = vmul.f32 1.0, %v2880
        %v2882 = vrcp.pop %v2877
        %v2883 = vmul.f32 1.0, %v2882
        %v2884 = vrcp.pop %v2878
        %v2885 = vmul.f32 1.0, %v2884
        %v2886 = vrcp.pop %v2879
        %v2887 = vmul.f32 1.0, %v2886
        %v2888 = vld [vmem:[%s5] sm:$0xff]
        %v2889 = vld [vmem:[%s5 + $0x8] sm:$0xff]
        %v2891 = vsel %vm2659, %v2881, 0
        %v2894 = vsel %vm2659, %v2883, 0
        %v2897 = vsel %vm2659, %v2885, 0
        %v2900 = vsel %vm2659, %v2887, 0
        %2902 = vmatprep.subr.mxu0 0.0
        %2903 = vmatpush1.msra.mxu0 %v2888
        %2904 = vmatprep.subr.mxu0 0.0
        %2905 = vmatpush1.msra.mxu0 %v2889
        %2906 = vmatprep.subr.mxu0 0.0
        %2907 = vmatpush1.msra.mxu0 0.0
        %2908 = vmatprep.subr.mxu0 0.0
        %2909 = vmatpush1.msra.mxu0 0.0
        %2910 = vmatprep.subr.mxu0 0.0
        %2911 = vmatpush1.msra.mxu0 0.0
        %2912 = vmatprep.subr.mxu0 0.0
        %2913 = vmatpush1.msra.mxu0 0.0
        %2914 = vmatprep.subr.mxu0 0.0
        %2915 = vmatpush1.msra.mxu0 0.0
        %2916 = vmatprep.subr.mxu0 0.0
        %2917 = vmatpush1.msra.mxu0 0.0
        %2918 = vmatprep.subr.mxu0 0.0
        %2919 = vmatpush1.msra.mxu0 0.0
        %2920 = vmatprep.subr.mxu0 0.0
        %2921 = vmatpush1.msra.mxu0 0.0
        %2922 = vmatprep.subr.mxu0 0.0
        %2923 = vmatpush1.msra.mxu0 0.0
        %2924 = vmatprep.subr.mxu0 0.0
        %2925 = vmatpush1.msra.mxu0 0.0
        %2926 = vmatprep.subr.mxu0 0.0
        %2927 = vmatpush1.msra.mxu0 0.0
        %2928 = vmatprep.subr.mxu0 0.0
        %2929 = vmatpush1.msra.mxu0 0.0
        %2930 = vmatprep.subr.mxu0 0.0
        %2931 = vmatpush1.msra.mxu0 0.0
        %2932 = vmatprep.subr.mxu0 0.0
        %2933 = vmatpush1.msra.mxu0 0.0
        %2934 = vmatprep.subr.mxu0 0.0
        %2935 = vmatpush1.msra.mxu0 0.0
        %2936 = vmatprep.subr.mxu0 0.0
        %2937 = vmatpush1.msra.mxu0 0.0
        %2938 = vmatprep.subr.mxu0 0.0
        %2939 = vmatpush1.msra.mxu0 0.0
        %2940 = vmatprep.subr.mxu0 0.0
        %2941 = vmatpush1.msra.mxu0 0.0
        %2942 = vmatprep.subr.mxu0 0.0
        %2943 = vmatpush1.msra.mxu0 0.0
        %2944 = vmatprep.subr.mxu0 0.0
        %2945 = vmatpush1.msra.mxu0 0.0
        %2946 = vmatprep.subr.mxu0 0.0
        %2947 = vmatpush1.msra.mxu0 0.0
        %2948 = vmatprep.subr.mxu0 0.0
        %2949 = vmatpush1.msra.mxu0 0.0
        %2950 = vmatprep.subr.mxu0 0.0
        %2951 = vmatpush1.msra.mxu0 0.0
        %2952 = vmatprep.subr.mxu0 0.0
        %2953 = vmatpush1.msra.mxu0 0.0
        %2954 = vmatprep.subr.mxu0 0.0
        %2955 = vmatpush1.msra.mxu0 0.0
        %2956 = vmatprep.subr.mxu0 0.0
        %2957 = vmatpush1.msra.mxu0 0.0
        %2958 = vmatprep.subr.mxu0 0.0
        %2959 = vmatpush1.msra.mxu0 0.0
        %2960 = vmatprep.subr.mxu0 0.0
        %2961 = vmatpush1.msra.mxu0 0.0
        %2962 = vmatprep.subr.mxu0 0.0
        %2963 = vmatpush1.msra.mxu0 0.0
        %2964 = vmatprep.subr.mxu0 0.0
        %2965 = vmatpush1.msra.mxu0 0.0
        %2966 = vmatprep.mubr.f32.mxu0 0.0
        %2967 = vmatmul.mubr.f32.gmra.mrb[0].mxu0 %v2891
        %v2968 = vpop.f32.mrb[0].mxu0
        %v2969 = vadd.f32 0.0, %v2968
        %v2970 = vpop.f32.mrb[0].mxu0
        %2971 = vmatprep.mubr.f32.mxu0 0.0
        %2972 = vmatmul.mubr.f32.gmra.mrb[0].mxu0 %v2894
        %v2973 = vpop.f32.mrb[0].mxu0
        %v2974 = vadd.f32 0.0, %v2973
        %v2975 = vpop.f32.mrb[0].mxu0
        %2976 = vmatprep.mubr.f32.mxu0 0.0
        %2977 = vmatmul.mubr.f32.gmra.mrb[0].mxu0 %v2897
        %v2978 = vpop.f32.mrb[0].mxu0
        %v2979 = vadd.f32 0.0, %v2978
        %v2980 = vpop.f32.mrb[0].mxu0
        %2981 = vmatprep.mubr.f32.mxu0 0.0
        %2982 = vmatmul.mubr.f32.gmra.mrb[0].mxu0 %v2900
        %v2983 = vpop.f32.mrb[0].mxu0
        %v2984 = vadd.f32 0.0, %v2983
        %v2985 = vpop.f32.mrb[0].mxu0
        %2986 = vdwg.mxu0
        %v2987 = vld [vmem:[%s307 + $0x1] sm:$0xff]
        %v2988 = vld [vmem:[%s307 + $0x11] sm:$0xff]
        %v2989 = vld [vmem:[%s307 + $0x21] sm:$0xff]
        %v2990 = vld [vmem:[%s307 + $0x31] sm:$0xff]
        %v2991 = vld [vmem:[%s307 + $0x41] sm:$0xff]
        %v2992 = vld [vmem:[%s307 + $0x51] sm:$0xff]
        %v2993 = vld [vmem:[%s307 + $0x61] sm:$0xff]
        %v2994 = vld [vmem:[%s307 + $0x71] sm:$0xff]
        %v2995 = vld [vmem:[%s307 + $0x81] sm:$0xff]
        %v2996 = vld [vmem:[%s307 + $0x91] sm:$0xff]
        %v2997 = vld [vmem:[%s307 + $0xa1] sm:$0xff]
        %v2998 = vld [vmem:[%s307 + $0xb1] sm:$0xff]
        %v2999 = vld [vmem:[%s307 + $0xc1] sm:$0xff]
        %v3000 = vld [vmem:[%s307 + $0xd1] sm:$0xff]
        %v3001 = vld [vmem:[%s307 + $0xe1] sm:$0xff]
        %v3002 = vld [vmem:[%s307 + $0xf1] sm:$0xff]
        %v3003 = vld [vmem:[%s307 + $0x101] sm:$0xff]
        %v3004 = vld [vmem:[%s307 + $0x111] sm:$0xff]
        %v3005 = vld [vmem:[%s307 + $0x121] sm:$0xff]
        %v3006 = vld [vmem:[%s307 + $0x131] sm:$0xff]
        %v3007 = vld [vmem:[%s307 + $0x141] sm:$0xff]
        %v3008 = vld [vmem:[%s307 + $0x151] sm:$0xff]
        %v3009 = vld [vmem:[%s307 + $0x161] sm:$0xff]
        %v3010 = vld [vmem:[%s307 + $0x171] sm:$0xff]
        %v3011 = vld [vmem:[%s307 + $0x181] sm:$0xff]
        %v3012 = vld [vmem:[%s307 + $0x191] sm:$0xff]
        %v3013 = vld [vmem:[%s307 + $0x1a1] sm:$0xff]
        %v3014 = vld [vmem:[%s307 + $0x1b1] sm:$0xff]
        %v3015 = vld [vmem:[%s307 + $0x1c1] sm:$0xff]
        %v3016 = vld [vmem:[%s307 + $0x1d1] sm:$0xff]
        %v3017 = vld [vmem:[%s307 + $0x1e1] sm:$0xff]
        %v3018 = vld [vmem:[%s307 + $0x1f1] sm:$0xff]
        %v3023 = vcombine.high %v2969, %v2969
        %v3025 = vunpack.c.l.s4 1966171168
        %v3026 = vunpack.c.0.s8 %v3025
        %v3027 = vlaneseq
        %v3028 = vshrl.u32 %v3027, 7
        %v3029 = vsub.s32 %v3026, %v3028
        %v3030 = vrot.slane %v2969, %v3029
        %v3032 = vunpack.c.l.s4 1966171168
        %v3033 = vunpack.c.0.s8 %v3032
        %v3034 = vlaneseq
        %v3035 = vshrl.u32 %v3034, 7
        %v3036 = vsub.s32 %v3033, %v3035
        %v3037 = vrot.slane %v3023, %v3036
        %v3038 = vcombine.high %v3030, %v3030
        %v3039 = vcombine.high %v3037, %v3037
        %v3041 = vunpack.c.l.s4 1966171168
        %v3042 = vunpack.c.0.s8 %v3041
        %v3043 = vlaneseq
        %v3044 = vshrl.u32 %v3043, 7
        %v3045 = vsub.s32 %v3042, %v3044
        %v3046 = vrot.slane %v3030, %v3045
        %v3048 = vunpack.c.l.s4 1966171168
        %v3049 = vunpack.c.0.s8 %v3048
        %v3050 = vlaneseq
        %v3051 = vshrl.u32 %v3050, 7
        %v3052 = vsub.s32 %v3049, %v3051
        %v3053 = vrot.slane %v3037, %v3052
        %v3055 = vunpack.c.l.s4 1966171168
        %v3056 = vunpack.c.0.s8 %v3055
        %v3057 = vlaneseq
        %v3058 = vshrl.u32 %v3057, 7
        %v3059 = vsub.s32 %v3056, %v3058
        %v3060 = vrot.slane %v3038, %v3059
        %v3062 = vunpack.c.l.s4 1966171168
        %v3063 = vunpack.c.0.s8 %v3062
        %v3064 = vlaneseq
        %v3065 = vshrl.u32 %v3064, 7
        %v3066 = vsub.s32 %v3063, %v3065
        %v3067 = vrot.slane %v3039, %v3066
        %v3068 = vcombine.high %v3046, %v3046
        %v3069 = vcombine.high %v3053, %v3053
        %v3070 = vcombine.high %v3060, %v3060
        %v3071 = vcombine.high %v3067, %v3067
        %v3072 = vcombine.high %v2974, %v2974
        %v3074 = vunpack.c.l.s4 1966171168
        %v3075 = vunpack.c.0.s8 %v3074
        %v3076 = vlaneseq
        %v3077 = vshrl.u32 %v3076, 7
        %v3078 = vsub.s32 %v3075, %v3077
        %v3079 = vrot.slane %v2974, %v3078
        %v3081 = vunpack.c.l.s4 1966171168
        %v3082 = vunpack.c.0.s8 %v3081
        %v3083 = vlaneseq
        %v3084 = vshrl.u32 %v3083, 7
        %v3085 = vsub.s32 %v3082, %v3084
        %v3086 = vrot.slane %v3072, %v3085
        %v3087 = vcombine.high %v3079, %v3079
        %v3088 = vcombine.high %v3086, %v3086
        %v3090 = vunpack.c.l.s4 1966171168
        %v3091 = vunpack.c.0.s8 %v3090
        %v3092 = vlaneseq
        %v3093 = vshrl.u32 %v3092, 7
        %v3094 = vsub.s32 %v3091, %v3093
        %v3095 = vrot.slane %v3079, %v3094
        %v3097 = vunpack.c.l.s4 1966171168
        %v3098 = vunpack.c.0.s8 %v3097
        %v3099 = vlaneseq
        %v3100 = vshrl.u32 %v3099, 7
        %v3101 = vsub.s32 %v3098, %v3100
        %v3102 = vrot.slane %v3086, %v3101
        %v3104 = vunpack.c.l.s4 1966171168
        %v3105 = vunpack.c.0.s8 %v3104
        %v3106 = vlaneseq
        %v3107 = vshrl.u32 %v3106, 7
        %v3108 = vsub.s32 %v3105, %v3107
        %v3109 = vrot.slane %v3087, %v3108
        %v3111 = vunpack.c.l.s4 1966171168
        %v3112 = vunpack.c.0.s8 %v3111
        %v3113 = vlaneseq
        %v3114 = vshrl.u32 %v3113, 7
        %v3115 = vsub.s32 %v3112, %v3114
        %v3116 = vrot.slane %v3088, %v3115
        %v3117 = vcombine.high %v3095, %v3095
        %v3118 = vcombine.high %v3102, %v3102
        %v3119 = vcombine.high %v3109, %v3109
        %v3120 = vcombine.high %v3116, %v3116
        %v3121 = vcombine.high %v2979, %v2979
        %v3123 = vunpack.c.l.s4 1966171168
        %v3124 = vunpack.c.0.s8 %v3123
        %v3125 = vlaneseq
        %v3126 = vshrl.u32 %v3125, 7
        %v3127 = vsub.s32 %v3124, %v3126
        %v3128 = vrot.slane %v2979, %v3127
        %v3130 = vunpack.c.l.s4 1966171168
        %v3131 = vunpack.c.0.s8 %v3130
        %v3132 = vlaneseq
        %v3133 = vshrl.u32 %v3132, 7
        %v3134 = vsub.s32 %v3131, %v3133
        %v3135 = vrot.slane %v3121, %v3134
        %v3136 = vcombine.high %v3128, %v3128
        %v3137 = vcombine.high %v3135, %v3135
        %v3139 = vunpack.c.l.s4 1966171168
        %v3140 = vunpack.c.0.s8 %v3139
        %v3141 = vlaneseq
        %v3142 = vshrl.u32 %v3141, 7
        %v3143 = vsub.s32 %v3140, %v3142
        %v3144 = vrot.slane %v3128, %v3143
        %v3146 = vunpack.c.l.s4 1966171168
        %v3147 = vunpack.c.0.s8 %v3146
        %v3148 = vlaneseq
        %v3149 = vshrl.u32 %v3148, 7
        %v3150 = vsub.s32 %v3147, %v3149
        %v3151 = vrot.slane %v3135, %v3150
        %v3153 = vunpack.c.l.s4 1966171168
        %v3154 = vunpack.c.0.s8 %v3153
        %v3155 = vlaneseq
        %v3156 = vshrl.u32 %v3155, 7
        %v3157 = vsub.s32 %v3154, %v3156
        %v3158 = vrot.slane %v3136, %v3157
        %v3160 = vunpack.c.l.s4 1966171168
        %v3161 = vunpack.c.0.s8 %v3160
        %v3162 = vlaneseq
        %v3163 = vshrl.u32 %v3162, 7
        %v3164 = vsub.s32 %v3161, %v3163
        %v3165 = vrot.slane %v3137, %v3164
        %v3166 = vcombine.high %v3144, %v3144
        %v3167 = vcombine.high %v3151, %v3151
        %v3168 = vcombine.high %v3158, %v3158
        %v3169 = vcombine.high %v3165, %v3165
        %v3170 = vcombine.high %v2984, %v2984
        %v3172 = vunpack.c.l.s4 1966171168
        %v3173 = vunpack.c.0.s8 %v3172
        %v3174 = vlaneseq
        %v3175 = vshrl.u32 %v3174, 7
        %v3176 = vsub.s32 %v3173, %v3175
        %v3177 = vrot.slane %v2984, %v3176
        %v3179 = vunpack.c.l.s4 1966171168
        %v3180 = vunpack.c.0.s8 %v3179
        %v3181 = vlaneseq
        %v3182 = vshrl.u32 %v3181, 7
        %v3183 = vsub.s32 %v3180, %v3182
        %v3184 = vrot.slane %v3170, %v3183
        %v3185 = vcombine.high %v3177, %v3177
        %v3186 = vcombine.high %v3184, %v3184
        %v3188 = vunpack.c.l.s4 1966171168
        %v3189 = vunpack.c.0.s8 %v3188
        %v3190 = vlaneseq
        %v3191 = vshrl.u32 %v3190, 7
        %v3192 = vsub.s32 %v3189, %v3191
        %v3193 = vrot.slane %v3177, %v3192
        %v3195 = vunpack.c.l.s4 1966171168
        %v3196 = vunpack.c.0.s8 %v3195
        %v3197 = vlaneseq
        %v3198 = vshrl.u32 %v3197, 7
        %v3199 = vsub.s32 %v3196, %v3198
        %v3200 = vrot.slane %v3184, %v3199
        %v3202 = vunpack.c.l.s4 1966171168
        %v3203 = vunpack.c.0.s8 %v3202
        %v3204 = vlaneseq
        %v3205 = vshrl.u32 %v3204, 7
        %v3206 = vsub.s32 %v3203, %v3205
        %v3207 = vrot.slane %v3185, %v3206
        %v3209 = vunpack.c.l.s4 1966171168
        %v3210 = vunpack.c.0.s8 %v3209
        %v3211 = vlaneseq
        %v3212 = vshrl.u32 %v3211, 7
        %v3213 = vsub.s32 %v3210, %v3212
        %v3214 = vrot.slane %v3186, %v3213
        %v3215 = vcombine.high %v3193, %v3193
        %v3216 = vcombine.high %v3200, %v3200
        %v3217 = vcombine.high %v3207, %v3207
        %v3218 = vcombine.high %v3214, %v3214
        %v3219 = vlaneseq
        %v3220 = vshrl.u32 %v3219, 7
        %v3221 = vsub.s32 0, %v3220
        %v3222 = vrot.slane %v3046, %v3221
        %v3223 = vlaneseq
        %v3224 = vshrl.u32 %v3223, 7
        %v3225 = vsub.s32 0, %v3224
        %v3226 = vrot.slane %v3060, %v3225
        %v3227 = vlaneseq
        %v3228 = vshrl.u32 %v3227, 7
        %v3229 = vsub.s32 0, %v3228
        %v3230 = vrot.slane %v3068, %v3229
        %v3231 = vlaneseq
        %v3232 = vshrl.u32 %v3231, 7
        %v3233 = vsub.s32 0, %v3232
        %v3234 = vrot.slane %v3070, %v3233
        %v3235 = vlaneseq
        %v3236 = vshrl.u32 %v3235, 7
        %v3237 = vsub.s32 0, %v3236
        %v3238 = vrot.slane %v3053, %v3237
        %v3239 = vlaneseq
        %v3240 = vshrl.u32 %v3239, 7
        %v3241 = vsub.s32 0, %v3240
        %v3242 = vrot.slane %v3067, %v3241
        %v3243 = vlaneseq
        %v3244 = vshrl.u32 %v3243, 7
        %v3245 = vsub.s32 0, %v3244
        %v3246 = vrot.slane %v3069, %v3245
        %v3247 = vlaneseq
        %v3248 = vshrl.u32 %v3247, 7
        %v3249 = vsub.s32 0, %v3248
        %v3250 = vrot.slane %v3071, %v3249
        %v3251 = vlaneseq
        %v3252 = vshrl.u32 %v3251, 7
        %v3253 = vsub.s32 0, %v3252
        %v3254 = vrot.slane %v3095, %v3253
        %v3255 = vlaneseq
        %v3256 = vshrl.u32 %v3255, 7
        %v3257 = vsub.s32 0, %v3256
        %v3258 = vrot.slane %v3109, %v3257
        %v3259 = vlaneseq
        %v3260 = vshrl.u32 %v3259, 7
        %v3261 = vsub.s32 0, %v3260
        %v3262 = vrot.slane %v3117, %v3261
        %v3263 = vlaneseq
        %v3264 = vshrl.u32 %v3263, 7
        %v3265 = vsub.s32 0, %v3264
        %v3266 = vrot.slane %v3119, %v3265
        %v3267 = vlaneseq
        %v3268 = vshrl.u32 %v3267, 7
        %v3269 = vsub.s32 0, %v3268
        %v3270 = vrot.slane %v3102, %v3269
        %v3271 = vlaneseq
        %v3272 = vshrl.u32 %v3271, 7
        %v3273 = vsub.s32 0, %v3272
        %v3274 = vrot.slane %v3116, %v3273
        %v3275 = vlaneseq
        %v3276 = vshrl.u32 %v3275, 7
        %v3277 = vsub.s32 0, %v3276
        %v3278 = vrot.slane %v3118, %v3277
        %v3279 = vlaneseq
        %v3280 = vshrl.u32 %v3279, 7
        %v3281 = vsub.s32 0, %v3280
        %v3282 = vrot.slane %v3120, %v3281
        %v3283 = vlaneseq
        %v3284 = vshrl.u32 %v3283, 7
        %v3285 = vsub.s32 0, %v3284
        %v3286 = vrot.slane %v3144, %v3285
        %v3287 = vlaneseq
        %v3288 = vshrl.u32 %v3287, 7
        %v3289 = vsub.s32 0, %v3288
        %v3290 = vrot.slane %v3158, %v3289
        %v3291 = vlaneseq
        %v3292 = vshrl.u32 %v3291, 7
        %v3293 = vsub.s32 0, %v3292
        %v3294 = vrot.slane %v3166, %v3293
        %v3295 = vlaneseq
        %v3296 = vshrl.u32 %v3295, 7
        %v3297 = vsub.s32 0, %v3296
        %v3298 = vrot.slane %v3168, %v3297
        %v3299 = vlaneseq
        %v3300 = vshrl.u32 %v3299, 7
        %v3301 = vsub.s32 0, %v3300
        %v3302 = vrot.slane %v3151, %v3301
        %v3303 = vlaneseq
        %v3304 = vshrl.u32 %v3303, 7
        %v3305 = vsub.s32 0, %v3304
        %v3306 = vrot.slane %v3165, %v3305
        %v3307 = vlaneseq
        %v3308 = vshrl.u32 %v3307, 7
        %v3309 = vsub.s32 0, %v3308
        %v3310 = vrot.slane %v3167, %v3309
        %v3311 = vlaneseq
        %v3312 = vshrl.u32 %v3311, 7
        %v3313 = vsub.s32 0, %v3312
        %v3314 = vrot.slane %v3169, %v3313
        %v3315 = vlaneseq
        %v3316 = vshrl.u32 %v3315, 7
        %v3317 = vsub.s32 0, %v3316
        %v3318 = vrot.slane %v3193, %v3317
        %v3319 = vlaneseq
        %v3320 = vshrl.u32 %v3319, 7
        %v3321 = vsub.s32 0, %v3320
        %v3322 = vrot.slane %v3207, %v3321
        %v3323 = vlaneseq
        %v3324 = vshrl.u32 %v3323, 7
        %v3325 = vsub.s32 0, %v3324
        %v3326 = vrot.slane %v3215, %v3325
        %v3327 = vlaneseq
        %v3328 = vshrl.u32 %v3327, 7
        %v3329 = vsub.s32 0, %v3328
        %v3330 = vrot.slane %v3217, %v3329
        %v3331 = vlaneseq
        %v3332 = vshrl.u32 %v3331, 7
        %v3333 = vsub.s32 0, %v3332
        %v3334 = vrot.slane %v3200, %v3333
        %v3335 = vlaneseq
        %v3336 = vshrl.u32 %v3335, 7
        %v3337 = vsub.s32 0, %v3336
        %v3338 = vrot.slane %v3214, %v3337
        %v3339 = vlaneseq
        %v3340 = vshrl.u32 %v3339, 7
        %v3341 = vsub.s32 0, %v3340
        %v3342 = vrot.slane %v3216, %v3341
        %v3343 = vlaneseq
        %v3344 = vshrl.u32 %v3343, 7
        %v3345 = vsub.s32 0, %v3344
        %v3346 = vrot.slane %v3218, %v3345
        %v3379 = vmul.f32 %v2261, %v3222
        %v3380 = vmul.f32 %v2262, %v3226
        %v3381 = vmul.f32 %v2263, %v3230
        %v3382 = vmul.f32 %v2264, %v3234
        %v3383 = vmul.f32 %v2265, %v3238
        %v3384 = vmul.f32 %v2266, %v3242
        %v3385 = vmul.f32 %v2267, %v3246
        %v3386 = vmul.f32 %v2268, %v3250
        %v3387 = vmul.f32 %v2269, %v3254
        %v3388 = vmul.f32 %v2270, %v3258
        %v3389 = vmul.f32 %v2271, %v3262
        %v3390 = vmul.f32 %v2272, %v3266
        %v3391 = vmul.f32 %v2273, %v3270
        %v3392 = vmul.f32 %v2274, %v3274
        %v3393 = vmul.f32 %v2275, %v3278
        %v3394 = vmul.f32 %v2276, %v3282
        %v3395 = vmul.f32 %v2277, %v3286
        %v3396 = vmul.f32 %v2278, %v3290
        %v3397 = vmul.f32 %v2279, %v3294
        %v3398 = vmul.f32 %v2280, %v3298
        %v3399 = vmul.f32 %v2281, %v3302
        %v3400 = vmul.f32 %v2282, %v3306
        %v3401 = vmul.f32 %v2283, %v3310
        %v3402 = vmul.f32 %v2284, %v3314
        %v3403 = vmul.f32 %v2285, %v3318
        %v3404 = vmul.f32 %v2286, %v3322
        %v3405 = vmul.f32 %v2287, %v3326
        %v3406 = vmul.f32 %v2288, %v3330
        %v3407 = vmul.f32 %v2289, %v3334
        %v3408 = vmul.f32 %v2290, %v3338
        %v3409 = vmul.f32 %v2291, %v3342
        %v3410 = vmul.f32 %v2292, %v3346
        %v3411 = vadd.f32 %v3379, %v2987
        %v3412 = vadd.f32 %v3380, %v2988
        %v3413 = vadd.f32 %v3381, %v2989
        %v3414 = vadd.f32 %v3382, %v2990
        %v3415 = vadd.f32 %v3383, %v2991
        %v3416 = vadd.f32 %v3384, %v2992
        %v3417 = vadd.f32 %v3385, %v2993
        %v3418 = vadd.f32 %v3386, %v2994
        %v3419 = vadd.f32 %v3387, %v2995
        %v3420 = vadd.f32 %v3388, %v2996
        %v3421 = vadd.f32 %v3389, %v2997
        %v3422 = vadd.f32 %v3390, %v2998
        %v3423 = vadd.f32 %v3391, %v2999
        %v3424 = vadd.f32 %v3392, %v3000
        %v3425 = vadd.f32 %v3393, %v3001
        %v3426 = vadd.f32 %v3394, %v3002
        %v3427 = vadd.f32 %v3395, %v3003
        %v3428 = vadd.f32 %v3396, %v3004
        %v3429 = vadd.f32 %v3397, %v3005
        %v3430 = vadd.f32 %v3398, %v3006
        %v3431 = vadd.f32 %v3399, %v3007
        %v3432 = vadd.f32 %v3400, %v3008
        %v3433 = vadd.f32 %v3401, %v3009
        %v3434 = vadd.f32 %v3402, %v3010
        %v3435 = vadd.f32 %v3403, %v3011
        %v3436 = vadd.f32 %v3404, %v3012
        %v3437 = vadd.f32 %v3405, %v3013
        %v3438 = vadd.f32 %v3406, %v3014
        %v3439 = vadd.f32 %v3407, %v3015
        %v3440 = vadd.f32 %v3408, %v3016
        %v3441 = vadd.f32 %v3409, %v3017
        %v3442 = vadd.f32 %v3410, %v3018
        %v3443 = vmax.f32 %v3411, 0.0
        %v3444 = vmax.f32 %v3412, 0.0
        %v3445 = vmax.f32 %v3413, 0.0
        %v3446 = vmax.f32 %v3414, 0.0
        %v3447 = vmax.f32 %v3415, 0.0
        %v3448 = vmax.f32 %v3416, 0.0
        %v3449 = vmax.f32 %v3417, 0.0
        %v3450 = vmax.f32 %v3418, 0.0
        %v3451 = vmax.f32 %v3419, 0.0
        %v3452 = vmax.f32 %v3420, 0.0
        %v3453 = vmax.f32 %v3421, 0.0
        %v3454 = vmax.f32 %v3422, 0.0
        %v3455 = vmax.f32 %v3423, 0.0
        %v3456 = vmax.f32 %v3424, 0.0
        %v3457 = vmax.f32 %v3425, 0.0
        %v3458 = vmax.f32 %v3426, 0.0
        %v3459 = vmax.f32 %v3427, 0.0
        %v3460 = vmax.f32 %v3428, 0.0
        %v3461 = vmax.f32 %v3429, 0.0
        %v3462 = vmax.f32 %v3430, 0.0
        %v3463 = vmax.f32 %v3431, 0.0
        %v3464 = vmax.f32 %v3432, 0.0
        %v3465 = vmax.f32 %v3433, 0.0
        %v3466 = vmax.f32 %v3434, 0.0
        %v3467 = vmax.f32 %v3435, 0.0
        %v3468 = vmax.f32 %v3436, 0.0
        %v3469 = vmax.f32 %v3437, 0.0
        %v3470 = vmax.f32 %v3438, 0.0
        %v3471 = vmax.f32 %v3439, 0.0
        %v3472 = vmax.f32 %v3440, 0.0
        %v3473 = vmax.f32 %v3441, 0.0
        %v3474 = vmax.f32 %v3442, 0.0
        %3475 = vst [vmem:[%s301] sm:$0xff] %v3443
        %3476 = vst [vmem:[%s301 + $0x8] sm:$0xff] %v3444
        %3477 = vst [vmem:[%s301 + $0x10] sm:$0xff] %v3445
        %3478 = vst [vmem:[%s301 + $0x18] sm:$0xff] %v3446
        %3479 = vst [vmem:[%s301 + $0x20] sm:$0xff] %v3447
        %3480 = vst [vmem:[%s301 + $0x28] sm:$0xff] %v3448
        %3481 = vst [vmem:[%s301 + $0x30] sm:$0xff] %v3449
        %3482 = vst [vmem:[%s301 + $0x38] sm:$0xff] %v3450
        %3483 = vst [vmem:[%s301 + $0x40] sm:$0xff] %v3451
        %3484 = vst [vmem:[%s301 + $0x48] sm:$0xff] %v3452
        %3485 = vst [vmem:[%s301 + $0x50] sm:$0xff] %v3453
        %3486 = vst [vmem:[%s301 + $0x58] sm:$0xff] %v3454
        %3487 = vst [vmem:[%s301 + $0x60] sm:$0xff] %v3455
        %3488 = vst [vmem:[%s301 + $0x68] sm:$0xff] %v3456
        %3489 = vst [vmem:[%s301 + $0x70] sm:$0xff] %v3457
        %3490 = vst [vmem:[%s301 + $0x78] sm:$0xff] %v3458
        %3491 = vst [vmem:[%s301 + $0x80] sm:$0xff] %v3459
        %3492 = vst [vmem:[%s301 + $0x88] sm:$0xff] %v3460
        %3493 = vst [vmem:[%s301 + $0x90] sm:$0xff] %v3461
        %3494 = vst [vmem:[%s301 + $0x98] sm:$0xff] %v3462
        %3495 = vst [vmem:[%s301 + $0xa0] sm:$0xff] %v3463
        %3496 = vst [vmem:[%s301 + $0xa8] sm:$0xff] %v3464
        %3497 = vst [vmem:[%s301 + $0xb0] sm:$0xff] %v3465
        %3498 = vst [vmem:[%s301 + $0xb8] sm:$0xff] %v3466
        %3499 = vst [vmem:[%s301 + $0xc0] sm:$0xff] %v3467
        %3500 = vst [vmem:[%s301 + $0xc8] sm:$0xff] %v3468
        %3501 = vst [vmem:[%s301 + $0xd0] sm:$0xff] %v3469
        %3502 = vst [vmem:[%s301 + $0xd8] sm:$0xff] %v3470
        %3503 = vst [vmem:[%s301 + $0xe0] sm:$0xff] %v3471
        %3504 = vst [vmem:[%s301 + $0xe8] sm:$0xff] %v3472
        %3505 = vst [vmem:[%s301 + $0xf0] sm:$0xff] %v3473
        %3506 = vst [vmem:[%s301 + $0xf8] sm:$0xff] %v3474
        %s3507 = sand.u32 %s203, 1
        %s3508 = scalar_lea.sflag [#allocation4], %s3507
        %s3509 = sand.u32 %s203, 1
        %s3510 = smul.addr %s3509, 256
        %s3511 = scalar_lea.vmem [#allocation3], %s3510
        // Predicated region
        $region53: #{tpu_custom_call.1} parent=51 // pred_check
          %p3512 = pneg %p213
        $region54: #{tpu_custom_call.1} parent=51 // pred_check_branch
          %3514 = sbr.rel (%p3512) target = $region56
        $region55: #{tpu_custom_call.1} parent=51 // pred_region
          %s3515 = smul.u32 32, %s22
          %s3517 = ssub.s32 4096, 4096
          %3518 = vsyncadd %s3508, %s3517
          %s3519 = smul.addr %s3515, 128
          %s3520 = scalar_lea.hbm %s8, %s3519
          %s3521 = sshll.u32 %s3511, 4
          %s3522 = int_to_ptr.vmem [resolvable:$true] %s3521
          %3527 = dma.vmem_to_hbm [thread:$0]  %s3522, 4096, %s3520, %s3508, 128, 128, 8
        $region56: #{tpu_custom_call.1} parent=51 // pred_fallthru
          _
      $region52: #{tpu_custom_call.1} parent=5 // pred_fallthru
        _
      %p3528 = scmp.le.s32.totalorder 2, %s17
      // Predicated region
      $region57: #{tpu_custom_call.1} parent=5 // pred_check
        %p3529 = pneg %p3528
      $region58: #{tpu_custom_call.1} parent=5 // pred_check_branch
        %3531 = sbr.rel (%p3529) target = $region60
      $region59: #{tpu_custom_call.1} parent=5 // pred_region
        %s3532 = ssub.s32 %s17, 2
        // Predicated region
        $region61: #{tpu_custom_call.1} parent=59 // pred_check
          %p3533 = pneg %p219
        $region62: #{tpu_custom_call.1} parent=59 // pred_check_branch
          %3535 = sbr.rel (%p3533) target = $region64
        $region63: #{tpu_custom_call.1} parent=59 // pred_region
          %s3536 = sand.u32 %s204, 1
          %s3537 = scalar_lea.sflag [#allocation4], %s3536
          %s3538 = sand.u32 %s204, 1
          %s3539 = smul.addr %s3538, 256
          %s3540 = scalar_lea.vmem [#allocation3], %s3539
          %3541 = dma.done %s3537, 4096
        $region64: #{tpu_custom_call.1} parent=59 // pred_fallthru
          _
      $region60: #{tpu_custom_call.1} parent=5 // pred_fallthru
        _
    $region6: #{tpu_custom_call.1} parent=1 // loop_footer
      %s21 = sadd.s32 1, %s17
    $region7: #{tpu_custom_call.1} parent=1 // loop_footer_branch
      %16 = sbr.rel target = $region3
    $region8: #{tpu_custom_call.1} parent=1 // loop_exit
      _
    %3542 = vsyncpa [#allocation4], 1
    %s3543 = scalar_lea.sflag [#allocation4], 1
    %3544 = vsyncpa %s3543, 1

</llo_original>
